<compile_context>
chip_gen: v6e
topology: v6e:2x2x1
jax: 0.10.0
libtpu: 0.0.40
codegen_flags: <defaults>
</compile_context>

<pallas_src>
import functools

import jax
import jax.numpy as jnp
from jax.experimental import pallas as pl
from jax.experimental.pallas import tpu as pltpu

BN_EPS = 1e-5


def _round_up(x, m):
    return ((x + m - 1) // m) * m


# ----------------------------- Pallas kernels ------------------------------


def _conv_epilogue_kernel(a_ref, b_ref, scale_ref, shift_ref, *rest,
                          relu, has_residual):
    """o = [relu]((A @ B) * scale + shift) [+ residual]; bf16 MXU, f32 accumulate."""
    if has_residual:
        res_ref, o_ref = rest
    else:
        (o_ref,) = rest
    acc = jnp.dot(a_ref[...], b_ref[...], preferred_element_type=jnp.float32)
    y = acc * scale_ref[...] + shift_ref[...]
    if relu:
        y = jnp.maximum(y, 0.0)
    if has_residual:
        y = y + res_ref[...].astype(jnp.float32)
    o_ref[...] = y.astype(o_ref.dtype)


def _bn_relu_kernel(x_ref, scale_ref, shift_ref, o_ref):
    y = x_ref[...].astype(jnp.float32) * scale_ref[...] + shift_ref[...]
    o_ref[...] = jnp.maximum(y, 0.0).astype(o_ref.dtype)


# ----------------------------- Pallas wrappers ------------------------------


def fused_conv_matmul(a, b, scale, shift, residual=None, relu=False,
                      out_dtype=jnp.float32):
    """(M,K)@(K,N) on the MXU with a fused scale/shift/ReLU/residual epilogue.

    a: (M, K) im2col patches, b: (K, N) weights, scale/shift: (N,), residual: (M, N).
    """
    M, K = a.shape
    K2, N = b.shape
    assert K == K2
    a = a.astype(jnp.bfloat16)
    b = b.astype(jnp.bfloat16)
    scale = scale.reshape(1, N).astype(jnp.float32)
    shift = shift.reshape(1, N).astype(jnp.float32)

    # Round K up to the bf16 sublane packing (only conv0's K=27 actually pads).
    Kp = _round_up(K, 16)
    if Kp != K:
        a = jnp.pad(a, ((0, 0), (0, Kp - K)))
        b = jnp.pad(b, ((0, Kp - K), (0, 0)))
        K = Kp

    # M tiling: keep >=2 row blocks when M is large enough (v7x megacore); otherwise
    # a single full-extent block.
    if M <= 256:
        TM = _round_up(M, 8)
    elif M % 256 == 0:
        TM = 256
    else:
        TM = 128
    Mp = _round_up(M, TM)
    if Mp != M:
        a = jnp.pad(a, ((0, Mp - M), (0, 0)))
        if residual is not None:
            residual = jnp.pad(residual, ((0, Mp - M), (0, 0)))

    # N tiling: channel counts here are <=128, so a single full-extent lane block.
    if N <= 256:
        TN = N
    elif N % 256 == 0:
        TN = 256
    elif N % 128 == 0:
        TN = 128
    else:
        TN = N

    grid = (Mp // TM, N // TN)
    in_specs = [
        pl.BlockSpec((TM, K), lambda i, j: (i, 0)),
        pl.BlockSpec((K, TN), lambda i, j: (0, j)),
        pl.BlockSpec((1, TN), lambda i, j: (0, j)),
        pl.BlockSpec((1, TN), lambda i, j: (0, j)),
    ]
    operands = [a, b, scale, shift]
    if residual is not None:
        in_specs.append(pl.BlockSpec((TM, TN), lambda i, j: (i, j)))
        operands.append(residual.astype(jnp.float32))

    out = pl.pallas_call(
        functools.partial(_conv_epilogue_kernel, relu=relu,
                          has_residual=residual is not None),
        out_shape=jax.ShapeDtypeStruct((Mp, N), out_dtype),
        grid_spec=pltpu.PrefetchScalarGridSpec(
            num_scalar_prefetch=0,
            grid=grid,
            in_specs=in_specs,
            out_specs=pl.BlockSpec((TM, TN), lambda i, j: (i, j))),
        compiler_params=pltpu.CompilerParams(
            dimension_semantics=("parallel", "parallel")),
    )(*operands)
    return out if Mp == M else out[:M]


def pallas_bn_relu(x_nhwc, bn, out_dtype=jnp.bfloat16):
    """relu(batchnorm_eval(x)) as one (rows, C) elementwise pass with big row blocks."""
    scale = bn["gamma"] * jax.lax.rsqrt(bn["var"] + BN_EPS)
    shift = bn["beta"] - bn["mean"] * scale
    N, H, W, C = x_nhwc.shape
    M = N * H * W
    x2d = x_nhwc.reshape(M, C).astype(jnp.float32)

    Mp = _round_up(M, 8)
    if Mp <= 1024:
        BM = Mp                       # whole slab, one grid step
    elif Mp % 1024 == 0:
        BM = 1024
    else:
        BM = 512
        Mp = _round_up(Mp, BM)
    if Mp != M:
        x2d = jnp.pad(x2d, ((0, Mp - M), (0, 0)))

    out = pl.pallas_call(
        _bn_relu_kernel,
        out_shape=jax.ShapeDtypeStruct((Mp, C), out_dtype),
        grid_spec=pltpu.PrefetchScalarGridSpec(
            num_scalar_prefetch=0,
            grid=(Mp // BM,),
            in_specs=[pl.BlockSpec((BM, C), lambda i: (i, 0)),
                      pl.BlockSpec((1, C), lambda i: (0, 0)),
                      pl.BlockSpec((1, C), lambda i: (0, 0))],
            out_specs=pl.BlockSpec((BM, C), lambda i: (i, 0))),
        compiler_params=pltpu.CompilerParams(
            dimension_semantics=("parallel",)),
    )(x2d, scale.reshape(1, C).astype(jnp.float32),
      shift.reshape(1, C).astype(jnp.float32))
    out = out if Mp == M else out[:M]
    return out.reshape(N, H, W, C)


# ----------------------------- model building blocks ------------------------------


def conv2d_fused(x, w_oihw, stride, padding, scale, shift,
                 residual=None, relu=False, out_dtype=jnp.float32):
    """PyTorch-semantics Conv2d (NHWC activations) with fused epilogue.

    x: (N,H,W,Cin); w_oihw: (Cout,Cin,kh,kw) [PyTorch layout]; scale/shift: (Cout,)
    applied as relu?(conv_nobias*scale + shift) [+ residual]. The conv bias must
    already be folded into `shift`.
    """
    N, H, W, C = x.shape
    O, Ci, kh, kw = w_oihw.shape
    assert Ci == C
    xb = x.astype(jnp.bfloat16)
    if padding:
        xb = jnp.pad(xb, ((0, 0), (padding, padding), (padding, padding), (0, 0)))
    OH = (H + 2 * padding - kh) // stride + 1
    OW = (W + 2 * padding - kw) // stride + 1
    # im2col (XLA glue, bf16 to halve bytes); patch channel order is (di, dj, c)
    # to match the weight reshape below.
    # TODO(synk): for large images accumulate the 9 taps inside the kernel instead of
    # materializing the 9x patch tensor; not worth it at these shapes.
    patches = [xb[:, di:di + OH * stride:stride, dj:dj + OW * stride:stride, :]
               for di in range(kh) for dj in range(kw)]
    pat = patches[0] if len(patches) == 1 else jnp.concatenate(patches, axis=-1)
    a = pat.reshape(N * OH * OW, kh * kw * C)
    w_mat = jnp.transpose(w_oihw, (2, 3, 1, 0)).reshape(kh * kw * C, O)
    res2d = None if residual is None else residual.reshape(N * OH * OW, O)
    y = fused_conv_matmul(a, w_mat, scale, shift, residual=res2d, relu=relu,
                          out_dtype=out_dtype)
    return y.reshape(N, OH, OW, O)


def _fold_bn_after_conv(bn, conv_bias):
    """scale/shift such that bn_eval(conv_nobias + bias) == conv_nobias*scale + shift."""
    s = bn["gamma"] * jax.lax.rsqrt(bn["var"] + BN_EPS)
    t = bn["beta"] + (conv_bias - bn["mean"]) * s
    return s, t


def wide_basic_block(x, blk):
    stride = blk["stride"]
    # inputs = relu(bn0(x))
    inputs = pallas_bn_relu(x, blk["bn0"], out_dtype=jnp.bfloat16)

    # c0 = relu(bn1(conv0(inputs)))  -> one fused MXU kernel (bias + BN folded)
    s, t = _fold_bn_after_conv(blk["bn1"], blk["conv0"]["b"])
    c0 = conv2d_fused(inputs, blk["conv0"]["w"], stride, 1, s, t,
                      relu=True, out_dtype=jnp.bfloat16)

    # residual path
    if blk["shortcut"] is None:
        outs2 = x
    else:
        o_sc = blk["shortcut"]["w"].shape[0]
        outs2 = conv2d_fused(inputs, blk["shortcut"]["w"], stride, 0,
                             jnp.ones((o_sc,), jnp.float32),
                             blk["shortcut"]["b"], out_dtype=jnp.float32)

    # conv1(c0) + bias + residual  -> one fused MXU kernel
    o1 = blk["conv1"]["w"].shape[0]
    return conv2d_fused(c0, blk["conv1"]["w"], 1, 1,
                        jnp.ones((o1,), jnp.float32), blk["conv1"]["b"],
                        residual=outs2, relu=False, out_dtype=jnp.float32)


def wide_resnet_forward(params, x_nchw):
    # PyTorch feeds NCHW; convert to NHWC for the TPU kernels.
    x = jnp.transpose(x_nchw.astype(jnp.float32), (0, 2, 3, 1))
    o0 = params["conv0"]["w"].shape[0]
    x = conv2d_fused(x, params["conv0"]["w"], 1, 1,
                     jnp.ones((o0,), jnp.float32), params["conv0"]["b"],
                     out_dtype=jnp.float32)
    for blocks in params["groups"]:
        for blk in blocks:
            x = wide_basic_block(x, blk)
    x = pallas_bn_relu(x, params["bn"], out_dtype=jnp.float32)
    # AdaptiveAvgPool2d((1,1)).flatten(1)
    features = jnp.mean(x, axis=(1, 2))                   # (N, 64*width)
    # Final FC is 2x128 @ 128x10: launch/pad overhead would dominate -> keep in XLA.
    logits = features @ params["fc"]["w"].T + params["fc"]["b"]
    # eval-mode PyTorch module returns only `outs`
    return logits


# ----------------------------- parameter init ------------------------------


def _bn_p(c):
    return {"gamma": jnp.ones((c,), jnp.float32),
            "beta": jnp.zeros((c,), jnp.float32),
            "mean": jnp.zeros((c,), jnp.float32),
            "var": jnp.ones((c,), jnp.float32)}


def init_wide_resnet(key, depth=10, width=2, num_classes=10):
    assert (depth - 4) % 6 == 0, "depth should be 6n+4"
    num_blocks = (depth - 4) // 6
    keys = list(jax.random.split(key, 512))
    kit = iter(keys)

    def conv_p(out_c, in_c, k):
        # kaiming_normal_, mode='fan_out', relu: std = sqrt(2 / (out_c*k*k))
        std = (2.0 / (out_c * k * k)) ** 0.5
        w = std * jax.random.normal(next(kit), (out_c, in_c, k, k), jnp.float32)
        b = 0.01 * jax.random.normal(next(kit), (out_c,), jnp.float32)
        return {"w": w, "b": b}

    params = {"conv0": conv_p(16, 3, 3)}
    cur = 16
    groups = []
    for out_c, g_stride in [(16 * width, 1), (32 * width, 2), (64 * width, 2)]:
        blocks = []
        for bi in range(num_blocks):
            stride = g_stride if bi == 0 else 1
            in_c = cur if bi == 0 else out_c
            need_sc = (bi == 0) and (stride != 1 or in_c != out_c)
            blocks.append({
                "stride": stride,
                "bn0": _bn_p(in_c),
                "conv0": conv_p(out_c, in_c, 3),
                "bn1": _bn_p(out_c),
                "conv1": conv_p(out_c, out_c, 3),
                "shortcut": conv_p(out_c, in_c, 1) if need_sc else None,
            })
        cur = out_c
        groups.append(blocks)
    params["groups"] = groups
    params["bn"] = _bn_p(64 * width)
    fc_std = (1.0 / (64 * width)) ** 0.5
    params["fc"] = {
        "w": fc_std * jax.random.normal(next(kit), (num_classes, 64 * width),
                                        jnp.float32),
        "b": fc_std * jax.random.normal(next(kit), (num_classes,), jnp.float32),
    }
    return params


# ----------------------------- main ------------------------------


if __name__ == "__main__":
    key = jax.random.PRNGKey(0)
    pkey, xkey = jax.random.split(key)

    # Small configuration consistent with the module: depth=6*1+4=10, width=2.
    params = init_wide_resnet(pkey, depth=10, width=2, num_classes=10)

    # PyTorch-style NCHW input.
    x = jax.random.normal(xkey, (2, 3, 16, 16), jnp.float32)

    # jit a closure: params (and strides) are static/constant, glue ops fuse.
    fwd = jax.jit(lambda inp: wide_resnet_forward(params, inp))
    out = jax.block_until_ready(fwd(x))
    assert out.shape == (2, 10), out.shape
    assert bool(jnp.all(jnp.isfinite(out)))
    print("KERNEL_OK")
</pallas_src>

<mosaic_0001>
module attributes {stable_mosaic.version = 11 : i64} {
  func.func @_conv_epilogue_kernel(%arg0: i32, %arg1: i32, %arg2: memref<256x32xbf16, #tpu.memory_space<vmem>>, %arg3: memref<32x16xbf16, #tpu.memory_space<vmem>>, %arg4: memref<1x16xf32, #tpu.memory_space<vmem>>, %arg5: memref<1x16xf32, #tpu.memory_space<vmem>>, %arg6: memref<256x16xf32, #tpu.memory_space<vmem>>) attributes {dimension_semantics = [#tpu.dimension_semantics<parallel>, #tpu.dimension_semantics<parallel>], iteration_bounds = array<i64: 2, 1>, scalar_prefetch = 0 : i64, scratch_operands = 0 : i64, tpu.core_type = #tpu.core_type<tc>, window_params = [{transform_indices = @transform_0, window_bounds = array<i64: 256, 32>}, {transform_indices = @transform_1, window_bounds = array<i64: 32, 16>}, {transform_indices = @transform_2, window_bounds = array<i64: 1, 16>}, {transform_indices = @transform_3, window_bounds = array<i64: 1, 16>}, {transform_indices = @transform_4, window_bounds = array<i64: 256, 16>}]} {
    %c0 = arith.constant 0 : index
    %c0_0 = arith.constant 0 : index
    %0 = vector.load %arg2[%c0, %c0_0] : memref<256x32xbf16, #tpu.memory_space<vmem>>, vector<256x32xbf16>
    %c0_1 = arith.constant 0 : index
    %c0_2 = arith.constant 0 : index
    %1 = vector.load %arg3[%c0_1, %c0_2] : memref<32x16xbf16, #tpu.memory_space<vmem>>, vector<32x16xbf16>
    %cst = arith.constant dense<0.000000e+00> : vector<256x16xf32>
    %2 = tpu.matmul %0, %1, %cst {dimension_numbers = #tpu.dot_dimension_numbers<[1], [0], [0], [1], [0, 0, 1, 1], [], []>} : vector<256x32xbf16>, vector<32x16xbf16>, vector<256x16xf32> -> vector<256x16xf32>
    %c0_3 = arith.constant 0 : index
    %c0_4 = arith.constant 0 : index
    %3 = vector.load %arg4[%c0_3, %c0_4] : memref<1x16xf32, #tpu.memory_space<vmem>>, vector<1x16xf32>
    %4 = vector.broadcast %3 : vector<1x16xf32> to vector<256x16xf32>
    %5 = arith.mulf %2, %4 : vector<256x16xf32>
    %c0_5 = arith.constant 0 : index
    %c0_6 = arith.constant 0 : index
    %6 = vector.load %arg5[%c0_5, %c0_6] : memref<1x16xf32, #tpu.memory_space<vmem>>, vector<1x16xf32>
    %7 = vector.broadcast %6 : vector<1x16xf32> to vector<256x16xf32>
    %8 = arith.addf %5, %7 : vector<256x16xf32>
    %c0_7 = arith.constant 0 : index
    %c0_8 = arith.constant 0 : index
    %9 = vector.load %arg6[%c0_7, %c0_8] : memref<256x16xf32, #tpu.memory_space<vmem>>, vector<256x16xf32>
    tpu.vector_store %arg6[%c0_7, %c0_8], %8 {strides = array<i32>} : memref<256x16xf32, #tpu.memory_space<vmem>>, vector<256x16xf32>,
    return
  }
  func.func @transform_0(%arg0: i32, %arg1: i32) -> (i32, i32) {
    %c0_i32 = arith.constant 0 : i32
    %c0_i32_0 = arith.constant 0 : i32
    return %arg0, %c0_i32 : i32, i32
  }
  func.func @transform_1(%arg0: i32, %arg1: i32) -> (i32, i32) {
    %c0_i32 = arith.constant 0 : i32
    %c0_i32_0 = arith.constant 0 : i32
    return %c0_i32, %arg1 : i32, i32
  }
  func.func @transform_2(%arg0: i32, %arg1: i32) -> (i32, i32) {
    %c0_i32 = arith.constant 0 : i32
    %c0_i32_0 = arith.constant 0 : i32
    return %c0_i32, %arg1 : i32, i32
  }
  func.func @transform_3(%arg0: i32, %arg1: i32) -> (i32, i32) {
    %c0_i32 = arith.constant 0 : i32
    %c0_i32_0 = arith.constant 0 : i32
    return %c0_i32, %arg1 : i32, i32
  }
  func.func @transform_4(%arg0: i32, %arg1: i32) -> (i32, i32) {
    %c0_i32 = arith.constant 0 : i32
    return %arg0, %arg1 : i32, i32
  }
}

module attributes {stable_mosaic.version = 11 : i64} {
  func.func @_bn_relu_kernel(%arg0: i32, %arg1: memref<512x16xf32, #tpu.memory_space<vmem>>, %arg2: memref<1x16xf32, #tpu.memory_space<vmem>>, %arg3: memref<1x16xf32, #tpu.memory_space<vmem>>, %arg4: memref<512x16xbf16, #tpu.memory_space<vmem>>) attributes {dimension_semantics = [#tpu.dimension_semantics<parallel>], iteration_bounds = array<i64: 1>, scalar_prefetch = 0 : i64, scratch_operands = 0 : i64, tpu.core_type = #tpu.core_type<tc>, window_params = [{transform_indices = @transform_0, window_bounds = array<i64: 512, 16>}, {pipeline_mode = #tpu.pipeline_mode<synchronous>, transform_indices = @transform_1, window_bounds = array<i64: 1, 16>}, {pipeline_mode = #tpu.pipeline_mode<synchronous>, transform_indices = @transform_2, window_bounds = array<i64: 1, 16>}, {transform_indices = @transform_3, window_bounds = array<i64: 512, 16>}]} {
    %c0 = arith.constant 0 : index
    %c0_0 = arith.constant 0 : index
    %0 = vector.load %arg1[%c0, %c0_0] : memref<512x16xf32, #tpu.memory_space<vmem>>, vector<512x16xf32>
    %c0_1 = arith.constant 0 : index
    %c0_2 = arith.constant 0 : index
    %1 = vector.load %arg2[%c0_1, %c0_2] : memref<1x16xf32, #tpu.memory_space<vmem>>, vector<1x16xf32>
    %2 = vector.broadcast %1 : vector<1x16xf32> to vector<512x16xf32>
    %3 = arith.mulf %0, %2 : vector<512x16xf32>
    %c0_3 = arith.constant 0 : index
    %c0_4 = arith.constant 0 : index
    %4 = vector.load %arg3[%c0_3, %c0_4] : memref<1x16xf32, #tpu.memory_space<vmem>>, vector<1x16xf32>
    %5 = vector.broadcast %4 : vector<1x16xf32> to vector<512x16xf32>
    %6 = arith.addf %3, %5 : vector<512x16xf32>
    %cst = arith.constant 0.000000e+00 : f32
    %7 = vector.broadcast %cst : f32 to vector<512x16xf32>
    %8 = arith.maximumf %6, %7 : vector<512x16xf32>
    %9 = arith.truncf %8 : vector<512x16xf32> to vector<512x16xbf16>
    %c0_5 = arith.constant 0 : index
    %c0_6 = arith.constant 0 : index
    %10 = vector.load %arg4[%c0_5, %c0_6] : memref<512x16xbf16, #tpu.memory_space<vmem>>, vector<512x16xbf16>
    tpu.vector_store %arg4[%c0_5, %c0_6], %9 {strides = array<i32>} : memref<512x16xbf16, #tpu.memory_space<vmem>>, vector<512x16xbf16>,
    return
  }
  func.func @transform_0(%arg0: i32) -> (i32, i32) {
    %c0_i32 = arith.constant 0 : i32
    %c0_i32_0 = arith.constant 0 : i32
    return %arg0, %c0_i32 : i32, i32
  }
  func.func @transform_1(%arg0: i32) -> (i32, i32) {
    %c0_i32 = arith.constant 0 : i32
    %c0_i32_0 = arith.constant 0 : i32
    %c0_i32_1 = arith.constant 0 : i32
    return %c0_i32, %c0_i32_0 : i32, i32
  }
  func.func @transform_2(%arg0: i32) -> (i32, i32) {
    %c0_i32 = arith.constant 0 : i32
    %c0_i32_0 = arith.constant 0 : i32
    %c0_i32_1 = arith.constant 0 : i32
    return %c0_i32, %c0_i32_0 : i32, i32
  }
  func.func @transform_3(%arg0: i32) -> (i32, i32) {
    %c0_i32 = arith.constant 0 : i32
    %c0_i32_0 = arith.constant 0 : i32
    return %arg0, %c0_i32 : i32, i32
  }
}

module attributes {stable_mosaic.version = 11 : i64} {
  func.func @_conv_epilogue_kernel(%arg0: i32, %arg1: i32, %arg2: memref<256x144xbf16, #tpu.memory_space<vmem>>, %arg3: memref<144x32xbf16, #tpu.memory_space<vmem>>, %arg4: memref<1x32xf32, #tpu.memory_space<vmem>>, %arg5: memref<1x32xf32, #tpu.memory_space<vmem>>, %arg6: memref<256x32xbf16, #tpu.memory_space<vmem>>) attributes {dimension_semantics = [#tpu.dimension_semantics<parallel>, #tpu.dimension_semantics<parallel>], iteration_bounds = array<i64: 2, 1>, scalar_prefetch = 0 : i64, scratch_operands = 0 : i64, tpu.core_type = #tpu.core_type<tc>, window_params = [{transform_indices = @transform_0, window_bounds = array<i64: 256, 144>}, {transform_indices = @transform_1, window_bounds = array<i64: 144, 32>}, {transform_indices = @transform_2, window_bounds = array<i64: 1, 32>}, {transform_indices = @transform_3, window_bounds = array<i64: 1, 32>}, {transform_indices = @transform_4, window_bounds = array<i64: 256, 32>}]} {
    %c0 = arith.constant 0 : index
    %c0_0 = arith.constant 0 : index
    %0 = vector.load %arg2[%c0, %c0_0] : memref<256x144xbf16, #tpu.memory_space<vmem>>, vector<256x144xbf16>
    %c0_1 = arith.constant 0 : index
    %c0_2 = arith.constant 0 : index
    %1 = vector.load %arg3[%c0_1, %c0_2] : memref<144x32xbf16, #tpu.memory_space<vmem>>, vector<144x32xbf16>
    %cst = arith.constant dense<0.000000e+00> : vector<256x32xf32>
    %2 = tpu.matmul %0, %1, %cst {dimension_numbers = #tpu.dot_dimension_numbers<[1], [0], [0], [1], [0, 0, 1, 1], [], []>} : vector<256x144xbf16>, vector<144x32xbf16>, vector<256x32xf32> -> vector<256x32xf32>
    %c0_3 = arith.constant 0 : index
    %c0_4 = arith.constant 0 : index
    %3 = vector.load %arg4[%c0_3, %c0_4] : memref<1x32xf32, #tpu.memory_space<vmem>>, vector<1x32xf32>
    %4 = vector.broadcast %3 : vector<1x32xf32> to vector<256x32xf32>
    %5 = arith.mulf %2, %4 : vector<256x32xf32>
    %c0_5 = arith.constant 0 : index
    %c0_6 = arith.constant 0 : index
    %6 = vector.load %arg5[%c0_5, %c0_6] : memref<1x32xf32, #tpu.memory_space<vmem>>, vector<1x32xf32>
    %7 = vector.broadcast %6 : vector<1x32xf32> to vector<256x32xf32>
    %8 = arith.addf %5, %7 : vector<256x32xf32>
    %cst_7 = arith.constant 0.000000e+00 : f32
    %9 = vector.broadcast %cst_7 : f32 to vector<256x32xf32>
    %10 = arith.maximumf %8, %9 : vector<256x32xf32>
    %11 = arith.truncf %10 : vector<256x32xf32> to vector<256x32xbf16>
    %c0_8 = arith.constant 0 : index
    %c0_9 = arith.constant 0 : index
    %12 = vector.load %arg6[%c0_8, %c0_9] : memref<256x32xbf16, #tpu.memory_space<vmem>>, vector<256x32xbf16>
    tpu.vector_store %arg6[%c0_8, %c0_9], %11 {strides = array<i32>} : memref<256x32xbf16, #tpu.memory_space<vmem>>, vector<256x32xbf16>,
    return
  }
  func.func @transform_0(%arg0: i32, %arg1: i32) -> (i32, i32) {
    %c0_i32 = arith.constant 0 : i32
    %c0_i32_0 = arith.constant 0 : i32
    return %arg0, %c0_i32 : i32, i32
  }
  func.func @transform_1(%arg0: i32, %arg1: i32) -> (i32, i32) {
    %c0_i32 = arith.constant 0 : i32
    %c0_i32_0 = arith.constant 0 : i32
    return %c0_i32, %arg1 : i32, i32
  }
  func.func @transform_2(%arg0: i32, %arg1: i32) -> (i32, i32) {
    %c0_i32 = arith.constant 0 : i32
    %c0_i32_0 = arith.constant 0 : i32
    return %c0_i32, %arg1 : i32, i32
  }
  func.func @transform_3(%arg0: i32, %arg1: i32) -> (i32, i32) {
    %c0_i32 = arith.constant 0 : i32
    %c0_i32_0 = arith.constant 0 : i32
    return %c0_i32, %arg1 : i32, i32
  }
  func.func @transform_4(%arg0: i32, %arg1: i32) -> (i32, i32) {
    %c0_i32 = arith.constant 0 : i32
    return %arg0, %arg1 : i32, i32
  }
}

module attributes {stable_mosaic.version = 11 : i64} {
  func.func @_conv_epilogue_kernel(%arg0: i32, %arg1: i32, %arg2: memref<256x16xbf16, #tpu.memory_space<vmem>>, %arg3: memref<16x32xbf16, #tpu.memory_space<vmem>>, %arg4: memref<1x32xf32, #tpu.memory_space<vmem>>, %arg5: memref<1x32xf32, #tpu.memory_space<vmem>>, %arg6: memref<256x32xf32, #tpu.memory_space<vmem>>) attributes {dimension_semantics = [#tpu.dimension_semantics<parallel>, #tpu.dimension_semantics<parallel>], iteration_bounds = array<i64: 2, 1>, scalar_prefetch = 0 : i64, scratch_operands = 0 : i64, tpu.core_type = #tpu.core_type<tc>, window_params = [{transform_indices = @transform_0, window_bounds = array<i64: 256, 16>}, {transform_indices = @transform_1, window_bounds = array<i64: 16, 32>}, {transform_indices = @transform_2, window_bounds = array<i64: 1, 32>}, {transform_indices = @transform_3, window_bounds = array<i64: 1, 32>}, {transform_indices = @transform_4, window_bounds = array<i64: 256, 32>}]} {
    %c0 = arith.constant 0 : index
    %c0_0 = arith.constant 0 : index
    %0 = vector.load %arg2[%c0, %c0_0] : memref<256x16xbf16, #tpu.memory_space<vmem>>, vector<256x16xbf16>
    %c0_1 = arith.constant 0 : index
    %c0_2 = arith.constant 0 : index
    %1 = vector.load %arg3[%c0_1, %c0_2] : memref<16x32xbf16, #tpu.memory_space<vmem>>, vector<16x32xbf16>
    %cst = arith.constant dense<0.000000e+00> : vector<256x32xf32>
    %2 = tpu.matmul %0, %1, %cst {dimension_numbers = #tpu.dot_dimension_numbers<[1], [0], [0], [1], [0, 0, 1, 1], [], []>} : vector<256x16xbf16>, vector<16x32xbf16>, vector<256x32xf32> -> vector<256x32xf32>
    %c0_3 = arith.constant 0 : index
    %c0_4 = arith.constant 0 : index
    %3 = vector.load %arg4[%c0_3, %c0_4] : memref<1x32xf32, #tpu.memory_space<vmem>>, vector<1x32xf32>
    %4 = vector.broadcast %3 : vector<1x32xf32> to vector<256x32xf32>
    %5 = arith.mulf %2, %4 : vector<256x32xf32>
    %c0_5 = arith.constant 0 : index
    %c0_6 = arith.constant 0 : index
    %6 = vector.load %arg5[%c0_5, %c0_6] : memref<1x32xf32, #tpu.memory_space<vmem>>, vector<1x32xf32>
    %7 = vector.broadcast %6 : vector<1x32xf32> to vector<256x32xf32>
    %8 = arith.addf %5, %7 : vector<256x32xf32>
    %c0_7 = arith.constant 0 : index
    %c0_8 = arith.constant 0 : index
    %9 = vector.load %arg6[%c0_7, %c0_8] : memref<256x32xf32, #tpu.memory_space<vmem>>, vector<256x32xf32>
    tpu.vector_store %arg6[%c0_7, %c0_8], %8 {strides = array<i32>} : memref<256x32xf32, #tpu.memory_space<vmem>>, vector<256x32xf32>,
    return
  }
  func.func @transform_0(%arg0: i32, %arg1: i32) -> (i32, i32) {
    %c0_i32 = arith.constant 0 : i32
    %c0_i32_0 = arith.constant 0 : i32
    return %arg0, %c0_i32 : i32, i32
  }
  func.func @transform_1(%arg0: i32, %arg1: i32) -> (i32, i32) {
    %c0_i32 = arith.constant 0 : i32
    %c0_i32_0 = arith.constant 0 : i32
    return %c0_i32, %arg1 : i32, i32
  }
  func.func @transform_2(%arg0: i32, %arg1: i32) -> (i32, i32) {
    %c0_i32 = arith.constant 0 : i32
    %c0_i32_0 = arith.constant 0 : i32
    return %c0_i32, %arg1 : i32, i32
  }
  func.func @transform_3(%arg0: i32, %arg1: i32) -> (i32, i32) {
    %c0_i32 = arith.constant 0 : i32
    %c0_i32_0 = arith.constant 0 : i32
    return %c0_i32, %arg1 : i32, i32
  }
  func.func @transform_4(%arg0: i32, %arg1: i32) -> (i32, i32) {
    %c0_i32 = arith.constant 0 : i32
    return %arg0, %arg1 : i32, i32
  }
}

module attributes {stable_mosaic.version = 11 : i64} {
  func.func @_conv_epilogue_kernel(%arg0: i32, %arg1: i32, %arg2: memref<256x288xbf16, #tpu.memory_space<vmem>>, %arg3: memref<288x32xbf16, #tpu.memory_space<vmem>>, %arg4: memref<1x32xf32, #tpu.memory_space<vmem>>, %arg5: memref<1x32xf32, #tpu.memory_space<vmem>>, %arg6: memref<256x32xf32, #tpu.memory_space<vmem>>, %arg7: memref<256x32xf32, #tpu.memory_space<vmem>>) attributes {dimension_semantics = [#tpu.dimension_semantics<parallel>, #tpu.dimension_semantics<parallel>], iteration_bounds = array<i64: 2, 1>, scalar_prefetch = 0 : i64, scratch_operands = 0 : i64, tpu.core_type = #tpu.core_type<tc>, window_params = [{transform_indices = @transform_0, window_bounds = array<i64: 256, 288>}, {transform_indices = @transform_1, window_bounds = array<i64: 288, 32>}, {transform_indices = @transform_2, window_bounds = array<i64: 1, 32>}, {transform_indices = @transform_3, window_bounds = array<i64: 1, 32>}, {transform_indices = @transform_4, window_bounds = array<i64: 256, 32>}, {transform_indices = @transform_5, window_bounds = array<i64: 256, 32>}]} {
    %c0 = arith.constant 0 : index
    %c0_0 = arith.constant 0 : index
    %0 = vector.load %arg2[%c0, %c0_0] : memref<256x288xbf16, #tpu.memory_space<vmem>>, vector<256x288xbf16>
    %c0_1 = arith.constant 0 : index
    %c0_2 = arith.constant 0 : index
    %1 = vector.load %arg3[%c0_1, %c0_2] : memref<288x32xbf16, #tpu.memory_space<vmem>>, vector<288x32xbf16>
    %cst = arith.constant dense<0.000000e+00> : vector<256x32xf32>
    %2 = tpu.matmul %0, %1, %cst {dimension_numbers = #tpu.dot_dimension_numbers<[1], [0], [0], [1], [0, 0, 1, 1], [], []>} : vector<256x288xbf16>, vector<288x32xbf16>, vector<256x32xf32> -> vector<256x32xf32>
    %c0_3 = arith.constant 0 : index
    %c0_4 = arith.constant 0 : index
    %3 = vector.load %arg4[%c0_3, %c0_4] : memref<1x32xf32, #tpu.memory_space<vmem>>, vector<1x32xf32>
    %4 = vector.broadcast %3 : vector<1x32xf32> to vector<256x32xf32>
    %5 = arith.mulf %2, %4 : vector<256x32xf32>
    %c0_5 = arith.constant 0 : index
    %c0_6 = arith.constant 0 : index
    %6 = vector.load %arg5[%c0_5, %c0_6] : memref<1x32xf32, #tpu.memory_space<vmem>>, vector<1x32xf32>
    %7 = vector.broadcast %6 : vector<1x32xf32> to vector<256x32xf32>
    %8 = arith.addf %5, %7 : vector<256x32xf32>
    %c0_7 = arith.constant 0 : index
    %c0_8 = arith.constant 0 : index
    %9 = vector.load %arg6[%c0_7, %c0_8] : memref<256x32xf32, #tpu.memory_space<vmem>>, vector<256x32xf32>
    %10 = arith.addf %8, %9 : vector<256x32xf32>
    %c0_9 = arith.constant 0 : index
    %c0_10 = arith.constant 0 : index
    %11 = vector.load %arg7[%c0_9, %c0_10] : memref<256x32xf32, #tpu.memory_space<vmem>>, vector<256x32xf32>
    tpu.vector_store %arg7[%c0_9, %c0_10], %10 {strides = array<i32>} : memref<256x32xf32, #tpu.memory_space<vmem>>, vector<256x32xf32>,
    return
  }
  func.func @transform_0(%arg0: i32, %arg1: i32) -> (i32, i32) {
    %c0_i32 = arith.constant 0 : i32
    %c0_i32_0 = arith.constant 0 : i32
    return %arg0, %c0_i32 : i32, i32
  }
  func.func @transform_1(%arg0: i32, %arg1: i32) -> (i32, i32) {
    %c0_i32 = arith.constant 0 : i32
    %c0_i32_0 = arith.constant 0 : i32
    return %c0_i32, %arg1 : i32, i32
  }
  func.func @transform_2(%arg0: i32, %arg1: i32) -> (i32, i32) {
    %c0_i32 = arith.constant 0 : i32
    %c0_i32_0 = arith.constant 0 : i32
    return %c0_i32, %arg1 : i32, i32
  }
  func.func @transform_3(%arg0: i32, %arg1: i32) -> (i32, i32) {
    %c0_i32 = arith.constant 0 : i32
    %c0_i32_0 = arith.constant 0 : i32
    return %c0_i32, %arg1 : i32, i32
  }
  func.func @transform_4(%arg0: i32, %arg1: i32) -> (i32, i32) {
    %c0_i32 = arith.constant 0 : i32
    return %arg0, %arg1 : i32, i32
  }
  func.func @transform_5(%arg0: i32, %arg1: i32) -> (i32, i32) {
    %c0_i32 = arith.constant 0 : i32
    return %arg0, %arg1 : i32, i32
  }
}

module attributes {stable_mosaic.version = 11 : i64} {
  func.func @_bn_relu_kernel(%arg0: i32, %arg1: memref<512x32xf32, #tpu.memory_space<vmem>>, %arg2: memref<1x32xf32, #tpu.memory_space<vmem>>, %arg3: memref<1x32xf32, #tpu.memory_space<vmem>>, %arg4: memref<512x32xbf16, #tpu.memory_space<vmem>>) attributes {dimension_semantics = [#tpu.dimension_semantics<parallel>], iteration_bounds = array<i64: 1>, scalar_prefetch = 0 : i64, scratch_operands = 0 : i64, tpu.core_type = #tpu.core_type<tc>, window_params = [{transform_indices = @transform_0, window_bounds = array<i64: 512, 32>}, {pipeline_mode = #tpu.pipeline_mode<synchronous>, transform_indices = @transform_1, window_bounds = array<i64: 1, 32>}, {pipeline_mode = #tpu.pipeline_mode<synchronous>, transform_indices = @transform_2, window_bounds = array<i64: 1, 32>}, {transform_indices = @transform_3, window_bounds = array<i64: 512, 32>}]} {
    %c0 = arith.constant 0 : index
    %c0_0 = arith.constant 0 : index
    %0 = vector.load %arg1[%c0, %c0_0] : memref<512x32xf32, #tpu.memory_space<vmem>>, vector<512x32xf32>
    %c0_1 = arith.constant 0 : index
    %c0_2 = arith.constant 0 : index
    %1 = vector.load %arg2[%c0_1, %c0_2] : memref<1x32xf32, #tpu.memory_space<vmem>>, vector<1x32xf32>
    %2 = vector.broadcast %1 : vector<1x32xf32> to vector<512x32xf32>
    %3 = arith.mulf %0, %2 : vector<512x32xf32>
    %c0_3 = arith.constant 0 : index
    %c0_4 = arith.constant 0 : index
    %4 = vector.load %arg3[%c0_3, %c0_4] : memref<1x32xf32, #tpu.memory_space<vmem>>, vector<1x32xf32>
    %5 = vector.broadcast %4 : vector<1x32xf32> to vector<512x32xf32>
    %6 = arith.addf %3, %5 : vector<512x32xf32>
    %cst = arith.constant 0.000000e+00 : f32
    %7 = vector.broadcast %cst : f32 to vector<512x32xf32>
    %8 = arith.maximumf %6, %7 : vector<512x32xf32>
    %9 = arith.truncf %8 : vector<512x32xf32> to vector<512x32xbf16>
    %c0_5 = arith.constant 0 : index
    %c0_6 = arith.constant 0 : index
    %10 = vector.load %arg4[%c0_5, %c0_6] : memref<512x32xbf16, #tpu.memory_space<vmem>>, vector<512x32xbf16>
    tpu.vector_store %arg4[%c0_5, %c0_6], %9 {strides = array<i32>} : memref<512x32xbf16, #tpu.memory_space<vmem>>, vector<512x32xbf16>,
    return
  }
  func.func @transform_0(%arg0: i32) -> (i32, i32) {
    %c0_i32 = arith.constant 0 : i32
    %c0_i32_0 = arith.constant 0 : i32
    return %arg0, %c0_i32 : i32, i32
  }
  func.func @transform_1(%arg0: i32) -> (i32, i32) {
    %c0_i32 = arith.constant 0 : i32
    %c0_i32_0 = arith.constant 0 : i32
    %c0_i32_1 = arith.constant 0 : i32
    return %c0_i32, %c0_i32_0 : i32, i32
  }
  func.func @transform_2(%arg0: i32) -> (i32, i32) {
    %c0_i32 = arith.constant 0 : i32
    %c0_i32_0 = arith.constant 0 : i32
    %c0_i32_1 = arith.constant 0 : i32
    return %c0_i32, %c0_i32_0 : i32, i32
  }
  func.func @transform_3(%arg0: i32) -> (i32, i32) {
    %c0_i32 = arith.constant 0 : i32
    %c0_i32_0 = arith.constant 0 : i32
    return %arg0, %c0_i32 : i32, i32
  }
}

module attributes {stable_mosaic.version = 11 : i64} {
  func.func @_conv_epilogue_kernel(%arg0: i32, %arg1: i32, %arg2: memref<128x288xbf16, #tpu.memory_space<vmem>>, %arg3: memref<288x64xbf16, #tpu.memory_space<vmem>>, %arg4: memref<1x64xf32, #tpu.memory_space<vmem>>, %arg5: memref<1x64xf32, #tpu.memory_space<vmem>>, %arg6: memref<128x64xbf16, #tpu.memory_space<vmem>>) attributes {dimension_semantics = [#tpu.dimension_semantics<parallel>, #tpu.dimension_semantics<parallel>], iteration_bounds = array<i64: 1, 1>, scalar_prefetch = 0 : i64, scratch_operands = 0 : i64, tpu.core_type = #tpu.core_type<tc>, window_params = [{transform_indices = @transform_0, window_bounds = array<i64: 128, 288>}, {transform_indices = @transform_1, window_bounds = array<i64: 288, 64>}, {transform_indices = @transform_2, window_bounds = array<i64: 1, 64>}, {transform_indices = @transform_3, window_bounds = array<i64: 1, 64>}, {transform_indices = @transform_4, window_bounds = array<i64: 128, 64>}]} {
    %c0 = arith.constant 0 : index
    %c0_0 = arith.constant 0 : index
    %0 = vector.load %arg2[%c0, %c0_0] : memref<128x288xbf16, #tpu.memory_space<vmem>>, vector<128x288xbf16>
    %c0_1 = arith.constant 0 : index
    %c0_2 = arith.constant 0 : index
    %1 = vector.load %arg3[%c0_1, %c0_2] : memref<288x64xbf16, #tpu.memory_space<vmem>>, vector<288x64xbf16>
    %cst = arith.constant dense<0.000000e+00> : vector<128x64xf32>
    %2 = tpu.matmul %0, %1, %cst {dimension_numbers = #tpu.dot_dimension_numbers<[1], [0], [0], [1], [0, 0, 1, 1], [], []>} : vector<128x288xbf16>, vector<288x64xbf16>, vector<128x64xf32> -> vector<128x64xf32>
    %c0_3 = arith.constant 0 : index
    %c0_4 = arith.constant 0 : index
    %3 = vector.load %arg4[%c0_3, %c0_4] : memref<1x64xf32, #tpu.memory_space<vmem>>, vector<1x64xf32>
    %4 = vector.broadcast %3 : vector<1x64xf32> to vector<128x64xf32>
    %5 = arith.mulf %2, %4 : vector<128x64xf32>
    %c0_5 = arith.constant 0 : index
    %c0_6 = arith.constant 0 : index
    %6 = vector.load %arg5[%c0_5, %c0_6] : memref<1x64xf32, #tpu.memory_space<vmem>>, vector<1x64xf32>
    %7 = vector.broadcast %6 : vector<1x64xf32> to vector<128x64xf32>
    %8 = arith.addf %5, %7 : vector<128x64xf32>
    %cst_7 = arith.constant 0.000000e+00 : f32
    %9 = vector.broadcast %cst_7 : f32 to vector<128x64xf32>
    %10 = arith.maximumf %8, %9 : vector<128x64xf32>
    %11 = arith.truncf %10 : vector<128x64xf32> to vector<128x64xbf16>
    %c0_8 = arith.constant 0 : index
    %c0_9 = arith.constant 0 : index
    %12 = vector.load %arg6[%c0_8, %c0_9] : memref<128x64xbf16, #tpu.memory_space<vmem>>, vector<128x64xbf16>
    tpu.vector_store %arg6[%c0_8, %c0_9], %11 {strides = array<i32>} : memref<128x64xbf16, #tpu.memory_space<vmem>>, vector<128x64xbf16>,
    return
  }
  func.func @transform_0(%arg0: i32, %arg1: i32) -> (i32, i32) {
    %c0_i32 = arith.constant 0 : i32
    %c0_i32_0 = arith.constant 0 : i32
    return %arg0, %c0_i32 : i32, i32
  }
  func.func @transform_1(%arg0: i32, %arg1: i32) -> (i32, i32) {
    %c0_i32 = arith.constant 0 : i32
    %c0_i32_0 = arith.constant 0 : i32
    return %c0_i32, %arg1 : i32, i32
  }
  func.func @transform_2(%arg0: i32, %arg1: i32) -> (i32, i32) {
    %c0_i32 = arith.constant 0 : i32
    %c0_i32_0 = arith.constant 0 : i32
    return %c0_i32, %arg1 : i32, i32
  }
  func.func @transform_3(%arg0: i32, %arg1: i32) -> (i32, i32) {
    %c0_i32 = arith.constant 0 : i32
    %c0_i32_0 = arith.constant 0 : i32
    return %c0_i32, %arg1 : i32, i32
  }
  func.func @transform_4(%arg0: i32, %arg1: i32) -> (i32, i32) {
    %c0_i32 = arith.constant 0 : i32
    return %arg0, %arg1 : i32, i32
  }
}

module attributes {stable_mosaic.version = 11 : i64} {
  func.func @_conv_epilogue_kernel(%arg0: i32, %arg1: i32, %arg2: memref<128x32xbf16, #tpu.memory_space<vmem>>, %arg3: memref<32x64xbf16, #tpu.memory_space<vmem>>, %arg4: memref<1x64xf32, #tpu.memory_space<vmem>>, %arg5: memref<1x64xf32, #tpu.memory_space<vmem>>, %arg6: memref<128x64xf32, #tpu.memory_space<vmem>>) attributes {dimension_semantics = [#tpu.dimension_semantics<parallel>, #tpu.dimension_semantics<parallel>], iteration_bounds = array<i64: 1, 1>, scalar_prefetch = 0 : i64, scratch_operands = 0 : i64, tpu.core_type = #tpu.core_type<tc>, window_params = [{transform_indices = @transform_0, window_bounds = array<i64: 128, 32>}, {transform_indices = @transform_1, window_bounds = array<i64: 32, 64>}, {transform_indices = @transform_2, window_bounds = array<i64: 1, 64>}, {transform_indices = @transform_3, window_bounds = array<i64: 1, 64>}, {transform_indices = @transform_4, window_bounds = array<i64: 128, 64>}]} {
    %c0 = arith.constant 0 : index
    %c0_0 = arith.constant 0 : index
    %0 = vector.load %arg2[%c0, %c0_0] : memref<128x32xbf16, #tpu.memory_space<vmem>>, vector<128x32xbf16>
    %c0_1 = arith.constant 0 : index
    %c0_2 = arith.constant 0 : index
    %1 = vector.load %arg3[%c0_1, %c0_2] : memref<32x64xbf16, #tpu.memory_space<vmem>>, vector<32x64xbf16>
    %cst = arith.constant dense<0.000000e+00> : vector<128x64xf32>
    %2 = tpu.matmul %0, %1, %cst {dimension_numbers = #tpu.dot_dimension_numbers<[1], [0], [0], [1], [0, 0, 1, 1], [], []>} : vector<128x32xbf16>, vector<32x64xbf16>, vector<128x64xf32> -> vector<128x64xf32>
    %c0_3 = arith.constant 0 : index
    %c0_4 = arith.constant 0 : index
    %3 = vector.load %arg4[%c0_3, %c0_4] : memref<1x64xf32, #tpu.memory_space<vmem>>, vector<1x64xf32>
    %4 = vector.broadcast %3 : vector<1x64xf32> to vector<128x64xf32>
    %5 = arith.mulf %2, %4 : vector<128x64xf32>
    %c0_5 = arith.constant 0 : index
    %c0_6 = arith.constant 0 : index
    %6 = vector.load %arg5[%c0_5, %c0_6] : memref<1x64xf32, #tpu.memory_space<vmem>>, vector<1x64xf32>
    %7 = vector.broadcast %6 : vector<1x64xf32> to vector<128x64xf32>
    %8 = arith.addf %5, %7 : vector<128x64xf32>
    %c0_7 = arith.constant 0 : index
    %c0_8 = arith.constant 0 : index
    %9 = vector.load %arg6[%c0_7, %c0_8] : memref<128x64xf32, #tpu.memory_space<vmem>>, vector<128x64xf32>
    tpu.vector_store %arg6[%c0_7, %c0_8], %8 {strides = array<i32>} : memref<128x64xf32, #tpu.memory_space<vmem>>, vector<128x64xf32>,
    return
  }
  func.func @transform_0(%arg0: i32, %arg1: i32) -> (i32, i32) {
    %c0_i32 = arith.constant 0 : i32
    %c0_i32_0 = arith.constant 0 : i32
    return %arg0, %c0_i32 : i32, i32
  }
  func.func @transform_1(%arg0: i32, %arg1: i32) -> (i32, i32) {
    %c0_i32 = arith.constant 0 : i32
    %c0_i32_0 = arith.constant 0 : i32
    return %c0_i32, %arg1 : i32, i32
  }
  func.func @transform_2(%arg0: i32, %arg1: i32) -> (i32, i32) {
    %c0_i32 = arith.constant 0 : i32
    %c0_i32_0 = arith.constant 0 : i32
    return %c0_i32, %arg1 : i32, i32
  }
  func.func @transform_3(%arg0: i32, %arg1: i32) -> (i32, i32) {
    %c0_i32 = arith.constant 0 : i32
    %c0_i32_0 = arith.constant 0 : i32
    return %c0_i32, %arg1 : i32, i32
  }
  func.func @transform_4(%arg0: i32, %arg1: i32) -> (i32, i32) {
    %c0_i32 = arith.constant 0 : i32
    return %arg0, %arg1 : i32, i32
  }
}

module attributes {stable_mosaic.version = 11 : i64} {
  func.func @_bn_relu_kernel(%arg0: i32, %arg1: memref<128x64xf32, #tpu.memory_space<vmem>>, %arg2: memref<1x64xf32, #tpu.memory_space<vmem>>, %arg3: memref<1x64xf32, #tpu.memory_space<vmem>>, %arg4: memref<128x64xbf16, #tpu.memory_space<vmem>>) attributes {dimension_semantics = [#tpu.dimension_semantics<parallel>], iteration_bounds = array<i64: 1>, scalar_prefetch = 0 : i64, scratch_operands = 0 : i64, tpu.core_type = #tpu.core_type<tc>, window_params = [{transform_indices = @transform_0, window_bounds = array<i64: 128, 64>}, {pipeline_mode = #tpu.pipeline_mode<synchronous>, transform_indices = @transform_1, window_bounds = array<i64: 1, 64>}, {pipeline_mode = #tpu.pipeline_mode<synchronous>, transform_indices = @transform_2, window_bounds = array<i64: 1, 64>}, {transform_indices = @transform_3, window_bounds = array<i64: 128, 64>}]} {
    %c0 = arith.constant 0 : index
    %c0_0 = arith.constant 0 : index
    %0 = vector.load %arg1[%c0, %c0_0] : memref<128x64xf32, #tpu.memory_space<vmem>>, vector<128x64xf32>
    %c0_1 = arith.constant 0 : index
    %c0_2 = arith.constant 0 : index
    %1 = vector.load %arg2[%c0_1, %c0_2] : memref<1x64xf32, #tpu.memory_space<vmem>>, vector<1x64xf32>
    %2 = vector.broadcast %1 : vector<1x64xf32> to vector<128x64xf32>
    %3 = arith.mulf %0, %2 : vector<128x64xf32>
    %c0_3 = arith.constant 0 : index
    %c0_4 = arith.constant 0 : index
    %4 = vector.load %arg3[%c0_3, %c0_4] : memref<1x64xf32, #tpu.memory_space<vmem>>, vector<1x64xf32>
    %5 = vector.broadcast %4 : vector<1x64xf32> to vector<128x64xf32>
    %6 = arith.addf %3, %5 : vector<128x64xf32>
    %cst = arith.constant 0.000000e+00 : f32
    %7 = vector.broadcast %cst : f32 to vector<128x64xf32>
    %8 = arith.maximumf %6, %7 : vector<128x64xf32>
    %9 = arith.truncf %8 : vector<128x64xf32> to vector<128x64xbf16>
    %c0_5 = arith.constant 0 : index
    %c0_6 = arith.constant 0 : index
    %10 = vector.load %arg4[%c0_5, %c0_6] : memref<128x64xbf16, #tpu.memory_space<vmem>>, vector<128x64xbf16>
    tpu.vector_store %arg4[%c0_5, %c0_6], %9 {strides = array<i32>} : memref<128x64xbf16, #tpu.memory_space<vmem>>, vector<128x64xbf16>,
    return
  }
  func.func @transform_0(%arg0: i32) -> (i32, i32) {
    %c0_i32 = arith.constant 0 : i32
    %c0_i32_0 = arith.constant 0 : i32
    return %arg0, %c0_i32 : i32, i32
  }
  func.func @transform_1(%arg0: i32) -> (i32, i32) {
    %c0_i32 = arith.constant 0 : i32
    %c0_i32_0 = arith.constant 0 : i32
    %c0_i32_1 = arith.constant 0 : i32
    return %c0_i32, %c0_i32_0 : i32, i32
  }
  func.func @transform_2(%arg0: i32) -> (i32, i32) {
    %c0_i32 = arith.constant 0 : i32
    %c0_i32_0 = arith.constant 0 : i32
    %c0_i32_1 = arith.constant 0 : i32
    return %c0_i32, %c0_i32_0 : i32, i32
  }
  func.func @transform_3(%arg0: i32) -> (i32, i32) {
    %c0_i32 = arith.constant 0 : i32
    %c0_i32_0 = arith.constant 0 : i32
    return %arg0, %c0_i32 : i32, i32
  }
}

module attributes {stable_mosaic.version = 11 : i64} {
  func.func @_conv_epilogue_kernel(%arg0: i32, %arg1: i32, %arg2: memref<128x576xbf16, #tpu.memory_space<vmem>>, %arg3: memref<576x64xbf16, #tpu.memory_space<vmem>>, %arg4: memref<1x64xf32, #tpu.memory_space<vmem>>, %arg5: memref<1x64xf32, #tpu.memory_space<vmem>>, %arg6: memref<128x64xf32, #tpu.memory_space<vmem>>, %arg7: memref<128x64xf32, #tpu.memory_space<vmem>>) attributes {dimension_semantics = [#tpu.dimension_semantics<parallel>, #tpu.dimension_semantics<parallel>], iteration_bounds = array<i64: 1, 1>, scalar_prefetch = 0 : i64, scratch_operands = 0 : i64, tpu.core_type = #tpu.core_type<tc>, window_params = [{transform_indices = @transform_0, window_bounds = array<i64: 128, 576>}, {transform_indices = @transform_1, window_bounds = array<i64: 576, 64>}, {transform_indices = @transform_2, window_bounds = array<i64: 1, 64>}, {transform_indices = @transform_3, window_bounds = array<i64: 1, 64>}, {transform_indices = @transform_4, window_bounds = array<i64: 128, 64>}, {transform_indices = @transform_5, window_bounds = array<i64: 128, 64>}]} {
    %c0 = arith.constant 0 : index
    %c0_0 = arith.constant 0 : index
    %0 = vector.load %arg2[%c0, %c0_0] : memref<128x576xbf16, #tpu.memory_space<vmem>>, vector<128x576xbf16>
    %c0_1 = arith.constant 0 : index
    %c0_2 = arith.constant 0 : index
    %1 = vector.load %arg3[%c0_1, %c0_2] : memref<576x64xbf16, #tpu.memory_space<vmem>>, vector<576x64xbf16>
    %cst = arith.constant dense<0.000000e+00> : vector<128x64xf32>
    %2 = tpu.matmul %0, %1, %cst {dimension_numbers = #tpu.dot_dimension_numbers<[1], [0], [0], [1], [0, 0, 1, 1], [], []>} : vector<128x576xbf16>, vector<576x64xbf16>, vector<128x64xf32> -> vector<128x64xf32>
    %c0_3 = arith.constant 0 : index
    %c0_4 = arith.constant 0 : index
    %3 = vector.load %arg4[%c0_3, %c0_4] : memref<1x64xf32, #tpu.memory_space<vmem>>, vector<1x64xf32>
    %4 = vector.broadcast %3 : vector<1x64xf32> to vector<128x64xf32>
    %5 = arith.mulf %2, %4 : vector<128x64xf32>
    %c0_5 = arith.constant 0 : index
    %c0_6 = arith.constant 0 : index
    %6 = vector.load %arg5[%c0_5, %c0_6] : memref<1x64xf32, #tpu.memory_space<vmem>>, vector<1x64xf32>
    %7 = vector.broadcast %6 : vector<1x64xf32> to vector<128x64xf32>
    %8 = arith.addf %5, %7 : vector<128x64xf32>
    %c0_7 = arith.constant 0 : index
    %c0_8 = arith.constant 0 : index
    %9 = vector.load %arg6[%c0_7, %c0_8] : memref<128x64xf32, #tpu.memory_space<vmem>>, vector<128x64xf32>
    %10 = arith.addf %8, %9 : vector<128x64xf32>
    %c0_9 = arith.constant 0 : index
    %c0_10 = arith.constant 0 : index
    %11 = vector.load %arg7[%c0_9, %c0_10] : memref<128x64xf32, #tpu.memory_space<vmem>>, vector<128x64xf32>
    tpu.vector_store %arg7[%c0_9, %c0_10], %10 {strides = array<i32>} : memref<128x64xf32, #tpu.memory_space<vmem>>, vector<128x64xf32>,
    return
  }
  func.func @transform_0(%arg0: i32, %arg1: i32) -> (i32, i32) {
    %c0_i32 = arith.constant 0 : i32
    %c0_i32_0 = arith.constant 0 : i32
    return %arg0, %c0_i32 : i32, i32
  }
  func.func @transform_1(%arg0: i32, %arg1: i32) -> (i32, i32) {
    %c0_i32 = arith.constant 0 : i32
    %c0_i32_0 = arith.constant 0 : i32
    return %c0_i32, %arg1 : i32, i32
  }
  func.func @transform_2(%arg0: i32, %arg1: i32) -> (i32, i32) {
    %c0_i32 = arith.constant 0 : i32
    %c0_i32_0 = arith.constant 0 : i32
    return %c0_i32, %arg1 : i32, i32
  }
  func.func @transform_3(%arg0: i32, %arg1: i32) -> (i32, i32) {
    %c0_i32 = arith.constant 0 : i32
    %c0_i32_0 = arith.constant 0 : i32
    return %c0_i32, %arg1 : i32, i32
  }
  func.func @transform_4(%arg0: i32, %arg1: i32) -> (i32, i32) {
    %c0_i32 = arith.constant 0 : i32
    return %arg0, %arg1 : i32, i32
  }
  func.func @transform_5(%arg0: i32, %arg1: i32) -> (i32, i32) {
    %c0_i32 = arith.constant 0 : i32
    return %arg0, %arg1 : i32, i32
  }
}

module attributes {stable_mosaic.version = 11 : i64} {
  func.func @_conv_epilogue_kernel(%arg0: i32, %arg1: i32, %arg2: memref<32x576xbf16, #tpu.memory_space<vmem>>, %arg3: memref<576x128xbf16, #tpu.memory_space<vmem>>, %arg4: memref<1x128xf32, #tpu.memory_space<vmem>>, %arg5: memref<1x128xf32, #tpu.memory_space<vmem>>, %arg6: memref<32x128xbf16, #tpu.memory_space<vmem>>) attributes {dimension_semantics = [#tpu.dimension_semantics<parallel>, #tpu.dimension_semantics<parallel>], iteration_bounds = array<i64: 1, 1>, scalar_prefetch = 0 : i64, scratch_operands = 0 : i64, tpu.core_type = #tpu.core_type<tc>, window_params = [{transform_indices = @transform_0, window_bounds = array<i64: 32, 576>}, {transform_indices = @transform_1, window_bounds = array<i64: 576, 128>}, {transform_indices = @transform_2, window_bounds = array<i64: 1, 128>}, {transform_indices = @transform_3, window_bounds = array<i64: 1, 128>}, {transform_indices = @transform_4, window_bounds = array<i64: 32, 128>}]} {
    %c0 = arith.constant 0 : index
    %c0_0 = arith.constant 0 : index
    %0 = vector.load %arg2[%c0, %c0_0] : memref<32x576xbf16, #tpu.memory_space<vmem>>, vector<32x576xbf16>
    %c0_1 = arith.constant 0 : index
    %c0_2 = arith.constant 0 : index
    %1 = vector.load %arg3[%c0_1, %c0_2] : memref<576x128xbf16, #tpu.memory_space<vmem>>, vector<576x128xbf16>
    %cst = arith.constant dense<0.000000e+00> : vector<32x128xf32>
    %2 = tpu.matmul %0, %1, %cst {dimension_numbers = #tpu.dot_dimension_numbers<[1], [0], [0], [1], [0, 0, 1, 1], [], []>} : vector<32x576xbf16>, vector<576x128xbf16>, vector<32x128xf32> -> vector<32x128xf32>
    %c0_3 = arith.constant 0 : index
    %c0_4 = arith.constant 0 : index
    %3 = vector.load %arg4[%c0_3, %c0_4] : memref<1x128xf32, #tpu.memory_space<vmem>>, vector<1x128xf32>
    %4 = vector.broadcast %3 : vector<1x128xf32> to vector<32x128xf32>
    %5 = arith.mulf %2, %4 : vector<32x128xf32>
    %c0_5 = arith.constant 0 : index
    %c0_6 = arith.constant 0 : index
    %6 = vector.load %arg5[%c0_5, %c0_6] : memref<1x128xf32, #tpu.memory_space<vmem>>, vector<1x128xf32>
    %7 = vector.broadcast %6 : vector<1x128xf32> to vector<32x128xf32>
    %8 = arith.addf %5, %7 : vector<32x128xf32>
    %cst_7 = arith.constant 0.000000e+00 : f32
    %9 = vector.broadcast %cst_7 : f32 to vector<32x128xf32>
    %10 = arith.maximumf %8, %9 : vector<32x128xf32>
    %11 = arith.truncf %10 : vector<32x128xf32> to vector<32x128xbf16>
    %c0_8 = arith.constant 0 : index
    %c0_9 = arith.constant 0 : index
    %12 = vector.load %arg6[%c0_8, %c0_9] : memref<32x128xbf16, #tpu.memory_space<vmem>>, vector<32x128xbf16>
    tpu.vector_store %arg6[%c0_8, %c0_9], %11 {strides = array<i32>} : memref<32x128xbf16, #tpu.memory_space<vmem>>, vector<32x128xbf16>,
    return
  }
  func.func @transform_0(%arg0: i32, %arg1: i32) -> (i32, i32) {
    %c0_i32 = arith.constant 0 : i32
    %c0_i32_0 = arith.constant 0 : i32
    return %arg0, %c0_i32 : i32, i32
  }
  func.func @transform_1(%arg0: i32, %arg1: i32) -> (i32, i32) {
    %c0_i32 = arith.constant 0 : i32
    %c0_i32_0 = arith.constant 0 : i32
    return %c0_i32, %arg1 : i32, i32
  }
  func.func @transform_2(%arg0: i32, %arg1: i32) -> (i32, i32) {
    %c0_i32 = arith.constant 0 : i32
    %c0_i32_0 = arith.constant 0 : i32
    return %c0_i32, %arg1 : i32, i32
  }
  func.func @transform_3(%arg0: i32, %arg1: i32) -> (i32, i32) {
    %c0_i32 = arith.constant 0 : i32
    %c0_i32_0 = arith.constant 0 : i32
    return %c0_i32, %arg1 : i32, i32
  }
  func.func @transform_4(%arg0: i32, %arg1: i32) -> (i32, i32) {
    %c0_i32 = arith.constant 0 : i32
    return %arg0, %arg1 : i32, i32
  }
}

module attributes {stable_mosaic.version = 11 : i64} {
  func.func @_conv_epilogue_kernel(%arg0: i32, %arg1: i32, %arg2: memref<32x1152xbf16, #tpu.memory_space<vmem>>, %arg3: memref<1152x128xbf16, #tpu.memory_space<vmem>>, %arg4: memref<1x128xf32, #tpu.memory_space<vmem>>, %arg5: memref<1x128xf32, #tpu.memory_space<vmem>>, %arg6: memref<32x128xf32, #tpu.memory_space<vmem>>, %arg7: memref<32x128xf32, #tpu.memory_space<vmem>>) attributes {dimension_semantics = [#tpu.dimension_semantics<parallel>, #tpu.dimension_semantics<parallel>], iteration_bounds = array<i64: 1, 1>, scalar_prefetch = 0 : i64, scratch_operands = 0 : i64, tpu.core_type = #tpu.core_type<tc>, window_params = [{transform_indices = @transform_0, window_bounds = array<i64: 32, 1152>}, {transform_indices = @transform_1, window_bounds = array<i64: 1152, 128>}, {transform_indices = @transform_2, window_bounds = array<i64: 1, 128>}, {transform_indices = @transform_3, window_bounds = array<i64: 1, 128>}, {transform_indices = @transform_4, window_bounds = array<i64: 32, 128>}, {transform_indices = @transform_5, window_bounds = array<i64: 32, 128>}]} {
    %c0 = arith.constant 0 : index
    %c0_0 = arith.constant 0 : index
    %0 = vector.load %arg2[%c0, %c0_0] : memref<32x1152xbf16, #tpu.memory_space<vmem>>, vector<32x1152xbf16>
    %c0_1 = arith.constant 0 : index
    %c0_2 = arith.constant 0 : index
    %1 = vector.load %arg3[%c0_1, %c0_2] : memref<1152x128xbf16, #tpu.memory_space<vmem>>, vector<1152x128xbf16>
    %cst = arith.constant dense<0.000000e+00> : vector<32x128xf32>
    %2 = tpu.matmul %0, %1, %cst {dimension_numbers = #tpu.dot_dimension_numbers<[1], [0], [0], [1], [0, 0, 1, 1], [], []>} : vector<32x1152xbf16>, vector<1152x128xbf16>, vector<32x128xf32> -> vector<32x128xf32>
    %c0_3 = arith.constant 0 : index
    %c0_4 = arith.constant 0 : index
    %3 = vector.load %arg4[%c0_3, %c0_4] : memref<1x128xf32, #tpu.memory_space<vmem>>, vector<1x128xf32>
    %4 = vector.broadcast %3 : vector<1x128xf32> to vector<32x128xf32>
    %5 = arith.mulf %2, %4 : vector<32x128xf32>
    %c0_5 = arith.constant 0 : index
    %c0_6 = arith.constant 0 : index
    %6 = vector.load %arg5[%c0_5, %c0_6] : memref<1x128xf32, #tpu.memory_space<vmem>>, vector<1x128xf32>
    %7 = vector.broadcast %6 : vector<1x128xf32> to vector<32x128xf32>
    %8 = arith.addf %5, %7 : vector<32x128xf32>
    %c0_7 = arith.constant 0 : index
    %c0_8 = arith.constant 0 : index
    %9 = vector.load %arg6[%c0_7, %c0_8] : memref<32x128xf32, #tpu.memory_space<vmem>>, vector<32x128xf32>
    %10 = arith.addf %8, %9 : vector<32x128xf32>
    %c0_9 = arith.constant 0 : index
    %c0_10 = arith.constant 0 : index
    %11 = vector.load %arg7[%c0_9, %c0_10] : memref<32x128xf32, #tpu.memory_space<vmem>>, vector<32x128xf32>
    tpu.vector_store %arg7[%c0_9, %c0_10], %10 {strides = array<i32>} : memref<32x128xf32, #tpu.memory_space<vmem>>, vector<32x128xf32>,
    return
  }
  func.func @transform_0(%arg0: i32, %arg1: i32) -> (i32, i32) {
    %c0_i32 = arith.constant 0 : i32
    %c0_i32_0 = arith.constant 0 : i32
    return %arg0, %c0_i32 : i32, i32
  }
  func.func @transform_1(%arg0: i32, %arg1: i32) -> (i32, i32) {
    %c0_i32 = arith.constant 0 : i32
    %c0_i32_0 = arith.constant 0 : i32
    return %c0_i32, %arg1 : i32, i32
  }
  func.func @transform_2(%arg0: i32, %arg1: i32) -> (i32, i32) {
    %c0_i32 = arith.constant 0 : i32
    %c0_i32_0 = arith.constant 0 : i32
    return %c0_i32, %arg1 : i32, i32
  }
  func.func @transform_3(%arg0: i32, %arg1: i32) -> (i32, i32) {
    %c0_i32 = arith.constant 0 : i32
    %c0_i32_0 = arith.constant 0 : i32
    return %c0_i32, %arg1 : i32, i32
  }
  func.func @transform_4(%arg0: i32, %arg1: i32) -> (i32, i32) {
    %c0_i32 = arith.constant 0 : i32
    return %arg0, %arg1 : i32, i32
  }
  func.func @transform_5(%arg0: i32, %arg1: i32) -> (i32, i32) {
    %c0_i32 = arith.constant 0 : i32
    return %arg0, %arg1 : i32, i32
  }
}

module attributes {stable_mosaic.version = 11 : i64} {
  func.func @_conv_epilogue_kernel(%arg0: i32, %arg1: i32, %arg2: memref<32x64xbf16, #tpu.memory_space<vmem>>, %arg3: memref<64x128xbf16, #tpu.memory_space<vmem>>, %arg4: memref<1x128xf32, #tpu.memory_space<vmem>>, %arg5: memref<1x128xf32, #tpu.memory_space<vmem>>, %arg6: memref<32x128xf32, #tpu.memory_space<vmem>>) attributes {dimension_semantics = [#tpu.dimension_semantics<parallel>, #tpu.dimension_semantics<parallel>], iteration_bounds = array<i64: 1, 1>, scalar_prefetch = 0 : i64, scratch_operands = 0 : i64, tpu.core_type = #tpu.core_type<tc>, window_params = [{transform_indices = @transform_0, window_bounds = array<i64: 32, 64>}, {transform_indices = @transform_1, window_bounds = array<i64: 64, 128>}, {transform_indices = @transform_2, window_bounds = array<i64: 1, 128>}, {transform_indices = @transform_3, window_bounds = array<i64: 1, 128>}, {transform_indices = @transform_4, window_bounds = array<i64: 32, 128>}]} {
    %c0 = arith.constant 0 : index
    %c0_0 = arith.constant 0 : index
    %0 = vector.load %arg2[%c0, %c0_0] : memref<32x64xbf16, #tpu.memory_space<vmem>>, vector<32x64xbf16>
    %c0_1 = arith.constant 0 : index
    %c0_2 = arith.constant 0 : index
    %1 = vector.load %arg3[%c0_1, %c0_2] : memref<64x128xbf16, #tpu.memory_space<vmem>>, vector<64x128xbf16>
    %cst = arith.constant dense<0.000000e+00> : vector<32x128xf32>
    %2 = tpu.matmul %0, %1, %cst {dimension_numbers = #tpu.dot_dimension_numbers<[1], [0], [0], [1], [0, 0, 1, 1], [], []>} : vector<32x64xbf16>, vector<64x128xbf16>, vector<32x128xf32> -> vector<32x128xf32>
    %c0_3 = arith.constant 0 : index
    %c0_4 = arith.constant 0 : index
    %3 = vector.load %arg4[%c0_3, %c0_4] : memref<1x128xf32, #tpu.memory_space<vmem>>, vector<1x128xf32>
    %4 = vector.broadcast %3 : vector<1x128xf32> to vector<32x128xf32>
    %5 = arith.mulf %2, %4 : vector<32x128xf32>
    %c0_5 = arith.constant 0 : index
    %c0_6 = arith.constant 0 : index
    %6 = vector.load %arg5[%c0_5, %c0_6] : memref<1x128xf32, #tpu.memory_space<vmem>>, vector<1x128xf32>
    %7 = vector.broadcast %6 : vector<1x128xf32> to vector<32x128xf32>
    %8 = arith.addf %5, %7 : vector<32x128xf32>
    %c0_7 = arith.constant 0 : index
    %c0_8 = arith.constant 0 : index
    %9 = vector.load %arg6[%c0_7, %c0_8] : memref<32x128xf32, #tpu.memory_space<vmem>>, vector<32x128xf32>
    tpu.vector_store %arg6[%c0_7, %c0_8], %8 {strides = array<i32>} : memref<32x128xf32, #tpu.memory_space<vmem>>, vector<32x128xf32>,
    return
  }
  func.func @transform_0(%arg0: i32, %arg1: i32) -> (i32, i32) {
    %c0_i32 = arith.constant 0 : i32
    %c0_i32_0 = arith.constant 0 : i32
    return %arg0, %c0_i32 : i32, i32
  }
  func.func @transform_1(%arg0: i32, %arg1: i32) -> (i32, i32) {
    %c0_i32 = arith.constant 0 : i32
    %c0_i32_0 = arith.constant 0 : i32
    return %c0_i32, %arg1 : i32, i32
  }
  func.func @transform_2(%arg0: i32, %arg1: i32) -> (i32, i32) {
    %c0_i32 = arith.constant 0 : i32
    %c0_i32_0 = arith.constant 0 : i32
    return %c0_i32, %arg1 : i32, i32
  }
  func.func @transform_3(%arg0: i32, %arg1: i32) -> (i32, i32) {
    %c0_i32 = arith.constant 0 : i32
    %c0_i32_0 = arith.constant 0 : i32
    return %c0_i32, %arg1 : i32, i32
  }
  func.func @transform_4(%arg0: i32, %arg1: i32) -> (i32, i32) {
    %c0_i32 = arith.constant 0 : i32
    return %arg0, %arg1 : i32, i32
  }
}

module attributes {stable_mosaic.version = 11 : i64} {
  func.func @_bn_relu_kernel(%arg0: i32, %arg1: memref<32x128xf32, #tpu.memory_space<vmem>>, %arg2: memref<1x128xf32, #tpu.memory_space<vmem>>, %arg3: memref<1x128xf32, #tpu.memory_space<vmem>>, %arg4: memref<32x128xf32, #tpu.memory_space<vmem>>) attributes {dimension_semantics = [#tpu.dimension_semantics<parallel>], iteration_bounds = array<i64: 1>, scalar_prefetch = 0 : i64, scratch_operands = 0 : i64, tpu.core_type = #tpu.core_type<tc>, window_params = [{transform_indices = @transform_0, window_bounds = array<i64: 32, 128>}, {pipeline_mode = #tpu.pipeline_mode<synchronous>, transform_indices = @transform_1, window_bounds = array<i64: 1, 128>}, {pipeline_mode = #tpu.pipeline_mode<synchronous>, transform_indices = @transform_2, window_bounds = array<i64: 1, 128>}, {transform_indices = @transform_3, window_bounds = array<i64: 32, 128>}]} {
    %c0 = arith.constant 0 : index
    %c0_0 = arith.constant 0 : index
    %0 = vector.load %arg1[%c0, %c0_0] : memref<32x128xf32, #tpu.memory_space<vmem>>, vector<32x128xf32>
    %c0_1 = arith.constant 0 : index
    %c0_2 = arith.constant 0 : index
    %1 = vector.load %arg2[%c0_1, %c0_2] : memref<1x128xf32, #tpu.memory_space<vmem>>, vector<1x128xf32>
    %2 = vector.broadcast %1 : vector<1x128xf32> to vector<32x128xf32>
    %3 = arith.mulf %0, %2 : vector<32x128xf32>
    %c0_3 = arith.constant 0 : index
    %c0_4 = arith.constant 0 : index
    %4 = vector.load %arg3[%c0_3, %c0_4] : memref<1x128xf32, #tpu.memory_space<vmem>>, vector<1x128xf32>
    %5 = vector.broadcast %4 : vector<1x128xf32> to vector<32x128xf32>
    %6 = arith.addf %3, %5 : vector<32x128xf32>
    %cst = arith.constant 0.000000e+00 : f32
    %7 = vector.broadcast %cst : f32 to vector<32x128xf32>
    %8 = arith.maximumf %6, %7 : vector<32x128xf32>
    %c0_5 = arith.constant 0 : index
    %c0_6 = arith.constant 0 : index
    %9 = vector.load %arg4[%c0_5, %c0_6] : memref<32x128xf32, #tpu.memory_space<vmem>>, vector<32x128xf32>
    tpu.vector_store %arg4[%c0_5, %c0_6], %8 {strides = array<i32>} : memref<32x128xf32, #tpu.memory_space<vmem>>, vector<32x128xf32>,
    return
  }
  func.func @transform_0(%arg0: i32) -> (i32, i32) {
    %c0_i32 = arith.constant 0 : i32
    %c0_i32_0 = arith.constant 0 : i32
    return %arg0, %c0_i32 : i32, i32
  }
  func.func @transform_1(%arg0: i32) -> (i32, i32) {
    %c0_i32 = arith.constant 0 : i32
    %c0_i32_0 = arith.constant 0 : i32
    %c0_i32_1 = arith.constant 0 : i32
    return %c0_i32, %c0_i32_0 : i32, i32
  }
  func.func @transform_2(%arg0: i32) -> (i32, i32) {
    %c0_i32 = arith.constant 0 : i32
    %c0_i32_0 = arith.constant 0 : i32
    %c0_i32_1 = arith.constant 0 : i32
    return %c0_i32, %c0_i32_0 : i32, i32
  }
  func.func @transform_3(%arg0: i32) -> (i32, i32) {
    %c0_i32 = arith.constant 0 : i32
    %c0_i32_0 = arith.constant 0 : i32
    return %arg0, %c0_i32 : i32, i32
  }
}

</mosaic_0001>

<llo_original>
// kernel: _lambda_.14
$region0: #{_lambda_.14}
  #allocation0 [shape = 'u32[]', space=smem, size = 0x4, offset = 0x4, fixed_abs, tag = 'smem constant byte address 0x4 - core index']
  #allocation1 [shape = 'u32[144,128]{1,0:T(1,128)}', space=vmem, size = 0x12000, scoped, tag = 'internal scratch']
  %s0 = inlined_call_operand.vmem [shape: bf16[512,32], index: 0, kind: input, shape index: {}]
  %s1 = inlined_call_operand.vmem [shape: bf16[32,16], index: 1, kind: input, shape index: {}]
  %s2 = inlined_call_operand.vmem [shape: f32[1,16], index: 2, kind: input, shape index: {}]
  %s3 = inlined_call_operand.vmem [shape: f32[1,16], index: 3, kind: input, shape index: {}]
  %s4 = inlined_call_operand.vmem [shape: f32[512,16], index: 4, kind: output, shape index: {}]
  %s5 = sld [smem:[#allocation0]]
  $region49: #{_lambda_.14} parent=0
    _
  %s7 = ssub.s32 1, %s5
  %s8 = scalar_select 0, %s7, %s5
  loop: start=0, step=1, limit=4
  $region2: #{_lambda_.14} parent=0 // loop_pre_header
    _
  $region3: #{_lambda_.14} parent=0 // loop_header
    %s10 = sphi 0, %s14
    %p11 = scmp.ge.s32.totalorder %s10, 4
    %s17 = sphi 0, %s29
    %s18 = sphi 0, %s25
    %s19 = sphi 0, %s17
    %s20 = sphi 0, %s18
    %s21 = sphi 0, %s19
    %s22 = sphi 0, %s20
    %s32 = sphi 0, %s34
    %s35 = sphi 0, %s32
    %s36 = sphi 0, %s35
    %s52 = sphi 0, %s36
    %s58 = sphi 0, %s60
    %s61 = sphi 0, %s58
    %s62 = sphi 0, %s61
    %s78 = sphi 0, %s62
    %s84 = sphi 0, %s86
    %s87 = sphi 0, %s84
    %s88 = sphi 0, %s87
    %s104 = sphi 0, %s88
    %s110 = sphi 0, %s112
    %s113 = sphi 0, %s110
    %s114 = sphi 0, %s113
    %s130 = sphi 0, %s114
    %s138 = sphi 0, %s140
    %s141 = sphi 0, %s138
    %s142 = sphi 0, %s141
    %s158 = sphi 0, %s142
  $region4: #{_lambda_.14} parent=0 // loop_header_branch
    %13 = sbr.rel (%p11) target = $region8
  $region5: #{_lambda_.14} parent=0 // loop_body
    %s15 = ssub.s32 %s10, 1
    %s16 = ssub.s32 %s10, 2
    %s23 = sadd.s32 1, %s18
    %p24 = scmp.ge.s32.totalorder %s23, 1
    %s25 = scalar_select %p24, 0, %s23
    %s26 = sadd.s32 1, %s17
    %s27 = scalar_select %p24, %s26, %s17
    %p28 = scmp.ge.s32.totalorder %s27, 2
    %s29 = scalar_select %p28, 0, %s27
    %s30 = ssub.s32 %s17, %s29
    %p31 = scmp.eq.s32.totalorder %s30, 0
    %s33 = sadd.s32 %s32, 1
    %s34 = scalar_select %p31, %s32, %s33
    %p37 = pneg %p31
    %p38 = scmp.eq.s32.totalorder %s10, 1
    %p39 = por %p37, %p38
    %p40 = scmp.ne.s32.totalorder %s32, %s35
    %p41 = scmp.eq.s32.totalorder %s10, 0
    %p42 = por %p40, %p41
    %p43 = scmp.ne.s32.totalorder %s32, %s35
    %p44 = scmp.eq.s32.totalorder %s15, 1
    %p45 = por %p43, %p44
    %p46 = scmp.ne.s32.totalorder %s35, %s36
    %p47 = scmp.eq.s32.totalorder %s15, 0
    %p48 = por %p46, %p47
    %p49 = scmp.ne.s32.totalorder %s35, %s36
    %p50 = scmp.eq.s32.totalorder %s16, 1
    %p51 = por %p49, %p50
    %p53 = scmp.ne.s32.totalorder %s36, %s52
    %p54 = scmp.eq.s32.totalorder %s16, 0
    %p55 = por %p53, %p54
    %s56 = ssub.s32 %s18, %s25
    %p57 = scmp.eq.s32.totalorder %s56, 0
    %s59 = sadd.s32 %s58, 1
    %s60 = scalar_select %p57, %s58, %s59
    %p63 = pneg %p57
    %p64 = scmp.eq.s32.totalorder %s10, 1
    %p65 = por %p63, %p64
    %p66 = scmp.ne.s32.totalorder %s58, %s61
    %p67 = scmp.eq.s32.totalorder %s10, 0
    %p68 = por %p66, %p67
    %p69 = scmp.ne.s32.totalorder %s58, %s61
    %p70 = scmp.eq.s32.totalorder %s15, 1
    %p71 = por %p69, %p70
    %p72 = scmp.ne.s32.totalorder %s61, %s62
    %p73 = scmp.eq.s32.totalorder %s15, 0
    %p74 = por %p72, %p73
    %p75 = scmp.ne.s32.totalorder %s61, %s62
    %p76 = scmp.eq.s32.totalorder %s16, 1
    %p77 = por %p75, %p76
    %p79 = scmp.ne.s32.totalorder %s62, %s78
    %p80 = scmp.eq.s32.totalorder %s16, 0
    %p81 = por %p79, %p80
    %s82 = ssub.s32 %s18, %s25
    %p83 = scmp.eq.s32.totalorder %s82, 0
    %s85 = sadd.s32 %s84, 1
    %s86 = scalar_select %p83, %s84, %s85
    %p89 = pneg %p83
    %p90 = scmp.eq.s32.totalorder %s10, 1
    %p91 = por %p89, %p90
    %p92 = scmp.ne.s32.totalorder %s84, %s87
    %p93 = scmp.eq.s32.totalorder %s10, 0
    %p94 = por %p92, %p93
    %p95 = scmp.ne.s32.totalorder %s84, %s87
    %p96 = scmp.eq.s32.totalorder %s15, 1
    %p97 = por %p95, %p96
    %p98 = scmp.ne.s32.totalorder %s87, %s88
    %p99 = scmp.eq.s32.totalorder %s15, 0
    %p100 = por %p98, %p99
    %p101 = scmp.ne.s32.totalorder %s87, %s88
    %p102 = scmp.eq.s32.totalorder %s16, 1
    %p103 = por %p101, %p102
    %p105 = scmp.ne.s32.totalorder %s88, %s104
    %p106 = scmp.eq.s32.totalorder %s16, 0
    %p107 = por %p105, %p106
    %s108 = ssub.s32 %s18, %s25
    %p109 = scmp.eq.s32.totalorder %s108, 0
    %s111 = sadd.s32 %s110, 1
    %s112 = scalar_select %p109, %s110, %s111
    %p115 = pneg %p109
    %p116 = scmp.eq.s32.totalorder %s10, 1
    %p117 = por %p115, %p116
    %p118 = scmp.ne.s32.totalorder %s110, %s113
    %p119 = scmp.eq.s32.totalorder %s10, 0
    %p120 = por %p118, %p119
    %p121 = scmp.ne.s32.totalorder %s110, %s113
    %p122 = scmp.eq.s32.totalorder %s15, 1
    %p123 = por %p121, %p122
    %p124 = scmp.ne.s32.totalorder %s113, %s114
    %p125 = scmp.eq.s32.totalorder %s15, 0
    %p126 = por %p124, %p125
    %p127 = scmp.ne.s32.totalorder %s113, %s114
    %p128 = scmp.eq.s32.totalorder %s16, 1
    %p129 = por %p127, %p128
    %p131 = scmp.ne.s32.totalorder %s114, %s130
    %p132 = scmp.eq.s32.totalorder %s16, 0
    %p133 = por %p131, %p132
    %s134 = ssub.s32 %s17, %s29
    %s135 = ssub.s32 %s18, %s25
    %s136 = sor.u32 %s134, %s135
    %p137 = scmp.eq.s32.totalorder %s136, 0
    %s139 = sadd.s32 %s138, 1
    %s140 = scalar_select %p137, %s138, %s139
    %p143 = pneg %p137
    %p144 = scmp.eq.s32.totalorder %s10, 1
    %p145 = por %p143, %p144
    %p146 = scmp.ne.s32.totalorder %s138, %s141
    %p147 = scmp.eq.s32.totalorder %s10, 0
    %p148 = por %p146, %p147
    %p149 = scmp.ne.s32.totalorder %s138, %s141
    %p150 = scmp.eq.s32.totalorder %s15, 1
    %p151 = por %p149, %p150
    %p152 = scmp.ne.s32.totalorder %s141, %s142
    %p153 = scmp.eq.s32.totalorder %s15, 0
    %p154 = por %p152, %p153
    %p155 = scmp.ne.s32.totalorder %s141, %s142
    %p156 = scmp.eq.s32.totalorder %s16, 1
    %p157 = por %p155, %p156
    %p159 = scmp.ne.s32.totalorder %s142, %s158
    %p160 = scmp.eq.s32.totalorder %s16, 0
    %p161 = por %p159, %p160
    %p162 = scmp.le.s32.totalorder 1, %s10
    %p163 = scmp.lt.s32.totalorder %s10, 3
    %p164 = pnand %p162, %p163
    %p165 = pneg %p164
    // Predicated region
    $region9: #{_lambda_.14} parent=5 // pred_check
      _
    $region10: #{_lambda_.14} parent=5 // pred_check_branch
      %167 = sbr.rel (%p164) target = $region12
    $region11: #{_lambda_.14} parent=5 // pred_region
      %s168 = ssub.s32 %s10, 1
      // Predicated region
      $region13: #{_lambda_.14} parent=11 // pred_check
        %p169 = pneg %p74
      $region14: #{_lambda_.14} parent=11 // pred_check_branch
        %171 = sbr.rel (%p169) target = $region16
      $region15: #{_lambda_.14} parent=11 // pred_region
        %p172 = scmp.lt.s32.totalorder %s20, 0
        %s173 = scalar_select %p172, %s20, 0
        %s174 = smul.addr %s173, 4
        %s175 = scalar_lea.vmem %s1, %s174
      $region16: #{_lambda_.14} parent=11 // pred_fallthru
        _
      // Predicated region
      $region17: #{_lambda_.14} parent=11 // pred_check
        %p176 = pneg %p100
      $region18: #{_lambda_.14} parent=11 // pred_check_branch
        %178 = sbr.rel (%p176) target = $region20
      $region19: #{_lambda_.14} parent=11 // pred_region
        %p179 = scmp.lt.s32.totalorder %s20, 0
        %s180 = scalar_select %p179, %s20, 0
        %s181 = scalar_lea.vmem %s2, %s180
      $region20: #{_lambda_.14} parent=11 // pred_fallthru
        _
      // Predicated region
      $region21: #{_lambda_.14} parent=11 // pred_check
        %p182 = pneg %p126
      $region22: #{_lambda_.14} parent=11 // pred_check_branch
        %184 = sbr.rel (%p182) target = $region24
      $region23: #{_lambda_.14} parent=11 // pred_region
        %p185 = scmp.lt.s32.totalorder %s20, 0
        %s186 = scalar_select %p185, %s20, 0
        %s187 = scalar_lea.vmem %s3, %s186
      $region24: #{_lambda_.14} parent=11 // pred_fallthru
        _
    $region12: #{_lambda_.14} parent=5 // pred_fallthru
      _
    %p188 = scmp.lt.s32.totalorder %s10, 2
    // Predicated region
    $region25: #{_lambda_.14} parent=5 // pred_check
      %p189 = pneg %p188
    $region26: #{_lambda_.14} parent=5 // pred_check_branch
      %191 = sbr.rel (%p189) target = $region28
    $region27: #{_lambda_.14} parent=5 // pred_region
      // Predicated region
      $region29: #{_lambda_.14} parent=27 // pred_check
        %p192 = pneg %p42
      $region30: #{_lambda_.14} parent=27 // pred_check_branch
        %194 = sbr.rel (%p192) target = $region32
      $region31: #{_lambda_.14} parent=27 // pred_region
        %s195 = smul.u32 32, %s17
        %p196 = scmp.lt.s32.totalorder %s195, 63
        %s197 = scalar_select %p196, %s195, 63
        %s198 = smul.addr %s197, 4
        %s199 = scalar_lea.vmem %s0, %s198
        %s200 = smul.u32 32, %s17
      $region32: #{_lambda_.14} parent=27 // pred_fallthru
        _
    $region28: #{_lambda_.14} parent=5 // pred_fallthru
      _
    %p201 = scmp.le.s32.totalorder 1, %s10
    %p202 = scmp.lt.s32.totalorder %s10, 3
    %p203 = pnand %p201, %p202
    %p204 = pneg %p203
    // Predicated region
    $region33: #{_lambda_.14} parent=5 // pred_check
      _
    $region34: #{_lambda_.14} parent=5 // pred_check_branch
      %206 = sbr.rel (%p203) target = $region36
    $region35: #{_lambda_.14} parent=5 // pred_region
      %s207 = ssub.s32 %s10, 1
      %s208 = smul.u32 32, %s19
      %p209 = scmp.lt.s32.totalorder %s208, 63
      %s210 = scalar_select %p209, %s208, 63
      %s211 = smul.addr %s210, 4
      %s212 = scalar_lea.vmem %s0, %s211
      %p213 = pneg %p48
      %p214 = pneg %p45
      %p215 = scmp.lt.s32.totalorder %s20, 0
      %s216 = scalar_select %p215, %s20, 0
      %s217 = smul.addr %s216, 4
      %s218 = scalar_lea.vmem %s1, %s217
      %p219 = pneg %p74
      %p220 = pneg %p71
      %p221 = scmp.lt.s32.totalorder %s20, 0
      %s222 = scalar_select %p221, %s20, 0
      %s223 = scalar_lea.vmem %s2, %s222
      %p224 = pneg %p100
      %p225 = pneg %p97
      %p226 = scmp.lt.s32.totalorder %s20, 0
      %s227 = scalar_select %p226, %s20, 0
      %s228 = scalar_lea.vmem %s3, %s227
      %p229 = pneg %p126
      %p230 = pneg %p123
      %p231 = pneg %p154
      %p232 = pneg %p151
      %s233 = smul.u32 32, %s19
      %p234 = scmp.lt.s32.totalorder %s233, 63
      %s235 = scalar_select %p234, %s233, 63
      %p236 = scmp.lt.s32.totalorder %s20, 0
      %s237 = scalar_select %p236, %s20, 0
      %s238 = sadd.s32 %s237, %s235
      %s239 = smul.addr %s238, 8
      %s240 = scalar_lea.vmem %s4, %s239
      %s241 = smul.u32 32, %s19
      %p242 = scmp.lt.s32.totalorder %s241, 63
      %s243 = scalar_select %p242, %s241, 63
      %s244 = smul.addr %s243, 4
      %s245 = scalar_lea.vmem %s0, %s244
      %s246 = smul.u32 32, %s19
      %p247 = scmp.lt.s32.totalorder %s20, 0
      %s248 = scalar_select %p247, %s20, 0
      %s249 = smul.addr %s248, 4
      %s250 = scalar_lea.vmem %s1, %s249
      %p251 = scmp.lt.s32.totalorder %s20, 0
      %s252 = scalar_select %p251, %s20, 0
      %s253 = scalar_lea.vmem %s2, %s252
      %p254 = scmp.lt.s32.totalorder %s20, 0
      %s255 = scalar_select %p254, %s20, 0
      %s256 = scalar_lea.vmem %s3, %s255
      %s257 = smul.u32 32, %s19
      %p258 = scmp.lt.s32.totalorder %s257, 63
      %s259 = scalar_select %p258, %s257, 63
      %p260 = scmp.lt.s32.totalorder %s20, 0
      %s261 = scalar_select %p260, %s20, 0
      %s262 = sadd.s32 %s261, %s259
      %s263 = smul.addr %s262, 8
      %s264 = scalar_lea.vmem %s4, %s263
      %s265 = smul.u32 32, %s19
      %v267 = vld [vmem:[%s245] sm:$0xf]
      %v268 = vld [vmem:[%s245 + $0x4] sm:$0xf]
      %v269 = vld [vmem:[%s245 + $0x8] sm:$0xf]
      %v270 = vld [vmem:[%s245 + $0xc] sm:$0xf]
      %v271 = vld [vmem:[%s245 + $0x10] sm:$0xf]
      %v272 = vld [vmem:[%s245 + $0x14] sm:$0xf]
      %v273 = vld [vmem:[%s245 + $0x18] sm:$0xf]
      %v274 = vld [vmem:[%s245 + $0x1c] sm:$0xf]
      %v275 = vld [vmem:[%s245 + $0x20] sm:$0xf]
      %v276 = vld [vmem:[%s245 + $0x24] sm:$0xf]
      %v277 = vld [vmem:[%s245 + $0x28] sm:$0xf]
      %v278 = vld [vmem:[%s245 + $0x2c] sm:$0xf]
      %v279 = vld [vmem:[%s245 + $0x30] sm:$0xf]
      %v280 = vld [vmem:[%s245 + $0x34] sm:$0xf]
      %v281 = vld [vmem:[%s245 + $0x38] sm:$0xf]
      %v282 = vld [vmem:[%s245 + $0x3c] sm:$0xf]
      %v283 = vld [vmem:[%s245 + $0x40] sm:$0xf]
      %v284 = vld [vmem:[%s245 + $0x44] sm:$0xf]
      %v285 = vld [vmem:[%s245 + $0x48] sm:$0xf]
      %v286 = vld [vmem:[%s245 + $0x4c] sm:$0xf]
      %v287 = vld [vmem:[%s245 + $0x50] sm:$0xf]
      %v288 = vld [vmem:[%s245 + $0x54] sm:$0xf]
      %v289 = vld [vmem:[%s245 + $0x58] sm:$0xf]
      %v290 = vld [vmem:[%s245 + $0x5c] sm:$0xf]
      %v291 = vld [vmem:[%s245 + $0x60] sm:$0xf]
      %v292 = vld [vmem:[%s245 + $0x64] sm:$0xf]
      %v293 = vld [vmem:[%s245 + $0x68] sm:$0xf]
      %v294 = vld [vmem:[%s245 + $0x6c] sm:$0xf]
      %v295 = vld [vmem:[%s245 + $0x70] sm:$0xf]
      %v296 = vld [vmem:[%s245 + $0x74] sm:$0xf]
      %v297 = vld [vmem:[%s245 + $0x78] sm:$0xf]
      %v298 = vld [vmem:[%s245 + $0x7c] sm:$0xf]
      %v299 = vld [vmem:[%s250] sm:$0xf]
      %v300 = vld [vmem:[%s250 + $0x4] sm:$0xf]
      %v301 = vld [vmem:[%s250 + $0x8] sm:$0xf]
      %v302 = vld [vmem:[%s250 + $0xc] sm:$0xf]
      %v335 = vunpack.c.l.b16 %v267
      %v336 = vunpack.c.l.b16 %v268
      %v337 = vunpack.c.l.b16 %v269
      %v338 = vunpack.c.l.b16 %v270
      %v339 = vunpack.c.l.b16 %v271
      %v340 = vunpack.c.l.b16 %v272
      %v341 = vunpack.c.l.b16 %v273
      %v342 = vunpack.c.l.b16 %v274
      %v343 = vunpack.c.l.b16 %v275
      %v344 = vunpack.c.l.b16 %v276
      %v345 = vunpack.c.l.b16 %v277
      %v346 = vunpack.c.l.b16 %v278
      %v347 = vunpack.c.l.b16 %v279
      %v348 = vunpack.c.l.b16 %v280
      %v349 = vunpack.c.l.b16 %v281
      %v350 = vunpack.c.l.b16 %v282
      %v351 = vunpack.c.l.b16 %v283
      %v352 = vunpack.c.l.b16 %v284
      %v353 = vunpack.c.l.b16 %v285
      %v354 = vunpack.c.l.b16 %v286
      %v355 = vunpack.c.l.b16 %v287
      %v356 = vunpack.c.l.b16 %v288
      %v357 = vunpack.c.l.b16 %v289
      %v358 = vunpack.c.l.b16 %v290
      %v359 = vunpack.c.l.b16 %v291
      %v360 = vunpack.c.l.b16 %v292
      %v361 = vunpack.c.l.b16 %v293
      %v362 = vunpack.c.l.b16 %v294
      %v363 = vunpack.c.l.b16 %v295
      %v364 = vunpack.c.l.b16 %v296
      %v365 = vunpack.c.l.b16 %v297
      %v366 = vunpack.c.l.b16 %v298
      %v367 = vpack.c.b16 %v336, %v335
      %v368 = vpack.c.b16 %v338, %v337
      %v369 = vpack.c.b16 %v340, %v339
      %v370 = vpack.c.b16 %v342, %v341
      %v371 = vpack.c.b16 %v344, %v343
      %v372 = vpack.c.b16 %v346, %v345
      %v373 = vpack.c.b16 %v348, %v347
      %v374 = vpack.c.b16 %v350, %v349
      %v375 = vpack.c.b16 %v352, %v351
      %v376 = vpack.c.b16 %v354, %v353
      %v377 = vpack.c.b16 %v356, %v355
      %v378 = vpack.c.b16 %v358, %v357
      %v379 = vpack.c.b16 %v360, %v359
      %v380 = vpack.c.b16 %v362, %v361
      %v381 = vpack.c.b16 %v364, %v363
      %v382 = vpack.c.b16 %v366, %v365
      %v387 = vunpack.c.l.b16 %v299
      %v388 = vunpack.c.l.b16 %v300
      %v389 = vunpack.c.l.b16 %v301
      %v390 = vunpack.c.l.b16 %v302
      %v391 = vpack.c.b16 %v388, %v387
      %v392 = vpack.c.b16 %v390, %v389
      %vm395 = vcmask 261120
      %v397 = vsel %vm395, %v367, 0
      %v400 = vsel %vm395, %v368, 0
      %v403 = vsel %vm395, %v369, 0
      %v406 = vsel %vm395, %v370, 0
      %v409 = vsel %vm395, %v371, 0
      %v412 = vsel %vm395, %v372, 0
      %v415 = vsel %vm395, %v373, 0
      %v418 = vsel %vm395, %v374, 0
      %v421 = vsel %vm395, %v375, 0
      %v424 = vsel %vm395, %v376, 0
      %v427 = vsel %vm395, %v377, 0
      %v430 = vsel %vm395, %v378, 0
      %v433 = vsel %vm395, %v379, 0
      %v436 = vsel %vm395, %v380, 0
      %v439 = vsel %vm395, %v381, 0
      %v442 = vsel %vm395, %v382, 0
      %444 = vmatprep.subr.bf16.mxu0 0
      %445 = vmatpush1.bf16.msra.mxu0 0
      %446 = vmatprep.subr.bf16.mxu0 0
      %447 = vmatpush1.bf16.msra.mxu0 0
      %448 = vmatprep.subr.bf16.mxu0 0
      %449 = vmatpush1.bf16.msra.mxu0 0
      %450 = vmatprep.subr.bf16.mxu0 0
      %451 = vmatpush1.bf16.msra.mxu0 0
      %452 = vmatprep.subr.bf16.mxu0 0
      %453 = vmatpush1.bf16.msra.mxu0 0
      %454 = vmatprep.subr.bf16.mxu0 0
      %455 = vmatpush1.bf16.msra.mxu0 0
      %456 = vmatprep.subr.bf16.mxu0 0
      %457 = vmatpush1.bf16.msra.mxu0 %v392
      %458 = vmatprep.subr.bf16.mxu0 0
      %459 = vmatpush1.bf16.msra.mxu0 %v391
      %460 = vmatprep.subr.bf16.mxu0 0
      %461 = vmatpush2.bf16.msra.mxu0 0
      %462 = vmatprep.subr.bf16.mxu0 0
      %463 = vmatpush2.bf16.msra.mxu0 0
      %464 = vmatprep.subr.bf16.mxu0 0
      %465 = vmatpush2.bf16.msra.mxu0 0
      %466 = vmatprep.subr.bf16.mxu0 0
      %467 = vmatpush2.bf16.msra.mxu0 0
      %468 = vmatprep.subr.bf16.mxu0 0
      %469 = vmatpush2.bf16.msra.mxu0 0
      %470 = vmatprep.subr.bf16.mxu0 0
      %471 = vmatpush2.bf16.msra.mxu0 0
      %472 = vmatprep.subr.bf16.mxu0 0
      %473 = vmatpush2.bf16.msra.mxu0 0
      %474 = vmatprep.subr.bf16.mxu0 0
      %475 = vmatpush2.bf16.msra.mxu0 0
      %476 = vmatprep.mubr.bf16.mxu0 0
      %477 = vmatmul.mubr.bf16.gmra.mxu0 %v397
      %v478 = vpop.f32.mrf.mxu0
      %v479 = vadd.f32 0.0, %v478
      %v480 = vpop.f32.mrf.mxu0
      %v481 = vpop.f32.mrf.mxu0
      %v482 = vadd.f32 0.0, %v481
      %v483 = vpop.f32.mrf.mxu0
      %484 = vmatprep.mubr.bf16.mxu0 0
      %485 = vmatmul.mubr.bf16.gmra.mxu0 %v400
      %v486 = vpop.f32.mrf.mxu0
      %v487 = vadd.f32 0.0, %v486
      %v488 = vpop.f32.mrf.mxu0
      %v489 = vpop.f32.mrf.mxu0
      %v490 = vadd.f32 0.0, %v489
      %v491 = vpop.f32.mrf.mxu0
      %492 = vmatprep.mubr.bf16.mxu0 0
      %493 = vmatmul.mubr.bf16.gmra.mxu0 %v403
      %v494 = vpop.f32.mrf.mxu0
      %v495 = vadd.f32 0.0, %v494
      %v496 = vpop.f32.mrf.mxu0
      %v497 = vpop.f32.mrf.mxu0
      %v498 = vadd.f32 0.0, %v497
      %v499 = vpop.f32.mrf.mxu0
      %500 = vmatprep.mubr.bf16.mxu0 0
      %501 = vmatmul.mubr.bf16.gmra.mxu0 %v406
      %v502 = vpop.f32.mrf.mxu0
      %v503 = vadd.f32 0.0, %v502
      %v504 = vpop.f32.mrf.mxu0
      %v505 = vpop.f32.mrf.mxu0
      %v506 = vadd.f32 0.0, %v505
      %v507 = vpop.f32.mrf.mxu0
      %508 = vmatprep.mubr.bf16.mxu0 0
      %509 = vmatmul.mubr.bf16.gmra.mxu0 %v409
      %v510 = vpop.f32.mrf.mxu0
      %v511 = vadd.f32 0.0, %v510
      %v512 = vpop.f32.mrf.mxu0
      %v513 = vpop.f32.mrf.mxu0
      %v514 = vadd.f32 0.0, %v513
      %v515 = vpop.f32.mrf.mxu0
      %516 = vmatprep.mubr.bf16.mxu0 0
      %517 = vmatmul.mubr.bf16.gmra.mxu0 %v412
      %v518 = vpop.f32.mrf.mxu0
      %v519 = vadd.f32 0.0, %v518
      %v520 = vpop.f32.mrf.mxu0
      %v521 = vpop.f32.mrf.mxu0
      %v522 = vadd.f32 0.0, %v521
      %v523 = vpop.f32.mrf.mxu0
      %524 = vmatprep.mubr.bf16.mxu0 0
      %525 = vmatmul.mubr.bf16.gmra.mxu0 %v415
      %v526 = vpop.f32.mrf.mxu0
      %v527 = vadd.f32 0.0, %v526
      %v528 = vpop.f32.mrf.mxu0
      %v529 = vpop.f32.mrf.mxu0
      %v530 = vadd.f32 0.0, %v529
      %v531 = vpop.f32.mrf.mxu0
      %532 = vmatprep.mubr.bf16.mxu0 0
      %533 = vmatmul.mubr.bf16.gmra.mxu0 %v418
      %v534 = vpop.f32.mrf.mxu0
      %v535 = vadd.f32 0.0, %v534
      %v536 = vpop.f32.mrf.mxu0
      %v537 = vpop.f32.mrf.mxu0
      %v538 = vadd.f32 0.0, %v537
      %v539 = vpop.f32.mrf.mxu0
      %540 = vmatprep.mubr.bf16.mxu0 0
      %541 = vmatmul.mubr.bf16.gmra.mxu0 %v421
      %v542 = vpop.f32.mrf.mxu0
      %v543 = vadd.f32 0.0, %v542
      %v544 = vpop.f32.mrf.mxu0
      %v545 = vpop.f32.mrf.mxu0
      %v546 = vadd.f32 0.0, %v545
      %v547 = vpop.f32.mrf.mxu0
      %548 = vmatprep.mubr.bf16.mxu0 0
      %549 = vmatmul.mubr.bf16.gmra.mxu0 %v424
      %v550 = vpop.f32.mrf.mxu0
      %v551 = vadd.f32 0.0, %v550
      %v552 = vpop.f32.mrf.mxu0
      %v553 = vpop.f32.mrf.mxu0
      %v554 = vadd.f32 0.0, %v553
      %v555 = vpop.f32.mrf.mxu0
      %556 = vmatprep.mubr.bf16.mxu0 0
      %557 = vmatmul.mubr.bf16.gmra.mxu0 %v427
      %v558 = vpop.f32.mrf.mxu0
      %v559 = vadd.f32 0.0, %v558
      %v560 = vpop.f32.mrf.mxu0
      %v561 = vpop.f32.mrf.mxu0
      %v562 = vadd.f32 0.0, %v561
      %v563 = vpop.f32.mrf.mxu0
      %564 = vmatprep.mubr.bf16.mxu0 0
      %565 = vmatmul.mubr.bf16.gmra.mxu0 %v430
      %v566 = vpop.f32.mrf.mxu0
      %v567 = vadd.f32 0.0, %v566
      %v568 = vpop.f32.mrf.mxu0
      %v569 = vpop.f32.mrf.mxu0
      %v570 = vadd.f32 0.0, %v569
      %v571 = vpop.f32.mrf.mxu0
      %572 = vmatprep.mubr.bf16.mxu0 0
      %573 = vmatmul.mubr.bf16.gmra.mxu0 %v433
      %v574 = vpop.f32.mrf.mxu0
      %v575 = vadd.f32 0.0, %v574
      %v576 = vpop.f32.mrf.mxu0
      %v577 = vpop.f32.mrf.mxu0
      %v578 = vadd.f32 0.0, %v577
      %v579 = vpop.f32.mrf.mxu0
      %580 = vmatprep.mubr.bf16.mxu0 0
      %581 = vmatmul.mubr.bf16.gmra.mxu0 %v436
      %v582 = vpop.f32.mrf.mxu0
      %v583 = vadd.f32 0.0, %v582
      %v584 = vpop.f32.mrf.mxu0
      %v585 = vpop.f32.mrf.mxu0
      %v586 = vadd.f32 0.0, %v585
      %v587 = vpop.f32.mrf.mxu0
      %588 = vmatprep.mubr.bf16.mxu0 0
      %589 = vmatmul.mubr.bf16.gmra.mxu0 %v439
      %v590 = vpop.f32.mrf.mxu0
      %v591 = vadd.f32 0.0, %v590
      %v592 = vpop.f32.mrf.mxu0
      %v593 = vpop.f32.mrf.mxu0
      %v594 = vadd.f32 0.0, %v593
      %v595 = vpop.f32.mrf.mxu0
      %596 = vmatprep.mubr.bf16.mxu0 0
      %597 = vmatmul.mubr.bf16.gmra.mxu0 %v442
      %v598 = vpop.f32.mrf.mxu0
      %v599 = vadd.f32 0.0, %v598
      %v600 = vpop.f32.mrf.mxu0
      %v601 = vpop.f32.mrf.mxu0
      %v602 = vadd.f32 0.0, %v601
      %v603 = vpop.f32.mrf.mxu0
      %604 = vdwg.mxu0
      %v605 = vld [vmem:[%s253] sm:$0x1]
      %v607 = vlaneseq
      %v608 = vshrl.u32 %v607, 7
      %v609 = vsub.s32 0, %v608
      %v610 = vrot.slane %v605, %v609
      %v612 = vmul.f32 %v479, %v610
      %v613 = vmul.f32 %v482, %v610
      %v614 = vmul.f32 %v487, %v610
      %v615 = vmul.f32 %v490, %v610
      %v616 = vmul.f32 %v495, %v610
      %v617 = vmul.f32 %v498, %v610
      %v618 = vmul.f32 %v503, %v610
      %v619 = vmul.f32 %v506, %v610
      %v620 = vmul.f32 %v511, %v610
      %v621 = vmul.f32 %v514, %v610
      %v622 = vmul.f32 %v519, %v610
      %v623 = vmul.f32 %v522, %v610
      %v624 = vmul.f32 %v527, %v610
      %v625 = vmul.f32 %v530, %v610
      %v626 = vmul.f32 %v535, %v610
      %v627 = vmul.f32 %v538, %v610
      %v628 = vmul.f32 %v543, %v610
      %v629 = vmul.f32 %v546, %v610
      %v630 = vmul.f32 %v551, %v610
      %v631 = vmul.f32 %v554, %v610
      %v632 = vmul.f32 %v559, %v610
      %v633 = vmul.f32 %v562, %v610
      %v634 = vmul.f32 %v567, %v610
      %v635 = vmul.f32 %v570, %v610
      %v636 = vmul.f32 %v575, %v610
      %v637 = vmul.f32 %v578, %v610
      %v638 = vmul.f32 %v583, %v610
      %v639 = vmul.f32 %v586, %v610
      %v640 = vmul.f32 %v591, %v610
      %v641 = vmul.f32 %v594, %v610
      %v642 = vmul.f32 %v599, %v610
      %v643 = vmul.f32 %v602, %v610
      %v644 = vld [vmem:[%s256] sm:$0x1]
      %v646 = vlaneseq
      %v647 = vshrl.u32 %v646, 7
      %v648 = vsub.s32 0, %v647
      %v649 = vrot.slane %v644, %v648
      %v651 = vadd.f32 %v612, %v649
      %v652 = vadd.f32 %v613, %v649
      %v653 = vadd.f32 %v614, %v649
      %v654 = vadd.f32 %v615, %v649
      %v655 = vadd.f32 %v616, %v649
      %v656 = vadd.f32 %v617, %v649
      %v657 = vadd.f32 %v618, %v649
      %v658 = vadd.f32 %v619, %v649
      %v659 = vadd.f32 %v620, %v649
      %v660 = vadd.f32 %v621, %v649
      %v661 = vadd.f32 %v622, %v649
      %v662 = vadd.f32 %v623, %v649
      %v663 = vadd.f32 %v624, %v649
      %v664 = vadd.f32 %v625, %v649
      %v665 = vadd.f32 %v626, %v649
      %v666 = vadd.f32 %v627, %v649
      %v667 = vadd.f32 %v628, %v649
      %v668 = vadd.f32 %v629, %v649
      %v669 = vadd.f32 %v630, %v649
      %v670 = vadd.f32 %v631, %v649
      %v671 = vadd.f32 %v632, %v649
      %v672 = vadd.f32 %v633, %v649
      %v673 = vadd.f32 %v634, %v649
      %v674 = vadd.f32 %v635, %v649
      %v675 = vadd.f32 %v636, %v649
      %v676 = vadd.f32 %v637, %v649
      %v677 = vadd.f32 %v638, %v649
      %v678 = vadd.f32 %v639, %v649
      %v679 = vadd.f32 %v640, %v649
      %v680 = vadd.f32 %v641, %v649
      %v681 = vadd.f32 %v642, %v649
      %v682 = vadd.f32 %v643, %v649
      %vm683 = vcmask 130048
      %684 = vst.msk [vmem:[%s264] sm:$0xff] %vm683, %v651
      %685 = vst.msk [vmem:[%s264 + $0x8] sm:$0xff] %vm683, %v652
      %686 = vst.msk [vmem:[%s264 + $0x10] sm:$0xff] %vm683, %v653
      %687 = vst.msk [vmem:[%s264 + $0x18] sm:$0xff] %vm683, %v654
      %688 = vst.msk [vmem:[%s264 + $0x20] sm:$0xff] %vm683, %v655
      %689 = vst.msk [vmem:[%s264 + $0x28] sm:$0xff] %vm683, %v656
      %690 = vst.msk [vmem:[%s264 + $0x30] sm:$0xff] %vm683, %v657
      %691 = vst.msk [vmem:[%s264 + $0x38] sm:$0xff] %vm683, %v658
      %692 = vst.msk [vmem:[%s264 + $0x40] sm:$0xff] %vm683, %v659
      %693 = vst.msk [vmem:[%s264 + $0x48] sm:$0xff] %vm683, %v660
      %694 = vst.msk [vmem:[%s264 + $0x50] sm:$0xff] %vm683, %v661
      %695 = vst.msk [vmem:[%s264 + $0x58] sm:$0xff] %vm683, %v662
      %696 = vst.msk [vmem:[%s264 + $0x60] sm:$0xff] %vm683, %v663
      %697 = vst.msk [vmem:[%s264 + $0x68] sm:$0xff] %vm683, %v664
      %698 = vst.msk [vmem:[%s264 + $0x70] sm:$0xff] %vm683, %v665
      %699 = vst.msk [vmem:[%s264 + $0x78] sm:$0xff] %vm683, %v666
      %700 = vst.msk [vmem:[%s264 + $0x80] sm:$0xff] %vm683, %v667
      %701 = vst.msk [vmem:[%s264 + $0x88] sm:$0xff] %vm683, %v668
      %702 = vst.msk [vmem:[%s264 + $0x90] sm:$0xff] %vm683, %v669
      %703 = vst.msk [vmem:[%s264 + $0x98] sm:$0xff] %vm683, %v670
      %704 = vst.msk [vmem:[%s264 + $0xa0] sm:$0xff] %vm683, %v671
      %705 = vst.msk [vmem:[%s264 + $0xa8] sm:$0xff] %vm683, %v672
      %706 = vst.msk [vmem:[%s264 + $0xb0] sm:$0xff] %vm683, %v673
      %707 = vst.msk [vmem:[%s264 + $0xb8] sm:$0xff] %vm683, %v674
      %708 = vst.msk [vmem:[%s264 + $0xc0] sm:$0xff] %vm683, %v675
      %709 = vst.msk [vmem:[%s264 + $0xc8] sm:$0xff] %vm683, %v676
      %710 = vst.msk [vmem:[%s264 + $0xd0] sm:$0xff] %vm683, %v677
      %711 = vst.msk [vmem:[%s264 + $0xd8] sm:$0xff] %vm683, %v678
      %712 = vst.msk [vmem:[%s264 + $0xe0] sm:$0xff] %vm683, %v679
      %713 = vst.msk [vmem:[%s264 + $0xe8] sm:$0xff] %vm683, %v680
      %714 = vst.msk [vmem:[%s264 + $0xf0] sm:$0xff] %vm683, %v681
      %715 = vst.msk [vmem:[%s264 + $0xf8] sm:$0xff] %vm683, %v682
      %s716 = smul.u32 32, %s19
      %p717 = scmp.lt.s32.totalorder %s716, 63
      %s718 = scalar_select %p717, %s716, 63
      %p719 = scmp.lt.s32.totalorder %s20, 0
      %s720 = scalar_select %p719, %s20, 0
      %s721 = sadd.s32 %s720, %s718
      %s722 = smul.addr %s721, 8
      %s723 = scalar_lea.vmem %s4, %s722
      // Predicated region
      $region37: #{_lambda_.14} parent=35 // pred_check
        %p724 = pneg %p151
      $region38: #{_lambda_.14} parent=35 // pred_check_branch
        %726 = sbr.rel (%p724) target = $region40
      $region39: #{_lambda_.14} parent=35 // pred_region
        %s727 = smul.u32 32, %s19
      $region40: #{_lambda_.14} parent=35 // pred_fallthru
        _
    $region36: #{_lambda_.14} parent=5 // pred_fallthru
      _
    %p728 = scmp.le.s32.totalorder 2, %s10
    // Predicated region
    $region41: #{_lambda_.14} parent=5 // pred_check
      %p729 = pneg %p728
    $region42: #{_lambda_.14} parent=5 // pred_check_branch
      %731 = sbr.rel (%p729) target = $region44
    $region43: #{_lambda_.14} parent=5 // pred_region
      %s732 = ssub.s32 %s10, 2
      // Predicated region
      $region45: #{_lambda_.14} parent=43 // pred_check
        %p733 = pneg %p157
      $region46: #{_lambda_.14} parent=43 // pred_check_branch
        %735 = sbr.rel (%p733) target = $region48
      $region47: #{_lambda_.14} parent=43 // pred_region
        %s736 = smul.u32 32, %s21
        %p737 = scmp.lt.s32.totalorder %s736, 63
        %s738 = scalar_select %p737, %s736, 63
        %p739 = scmp.lt.s32.totalorder %s22, 0
        %s740 = scalar_select %p739, %s22, 0
        %s741 = sadd.s32 %s740, %s738
        %s742 = smul.addr %s741, 8
        %s743 = scalar_lea.vmem %s4, %s742
      $region48: #{_lambda_.14} parent=43 // pred_fallthru
        _
    $region44: #{_lambda_.14} parent=5 // pred_fallthru
      _
  $region6: #{_lambda_.14} parent=0 // loop_footer
    %s14 = sadd.s32 1, %s10
  $region7: #{_lambda_.14} parent=0 // loop_footer_branch
    %9 = sbr.rel target = $region3
  $region8: #{_lambda_.14} parent=0 // loop_exit
    _

// kernel: _lambda_.15
$region0: #{_lambda_.15}
  #allocation0 [shape = 'u32[]', space=smem, size = 0x4, offset = 0x4, fixed_abs, tag = 'smem constant byte address 0x4 - core index']
  #allocation1 [shape = 'u32[144,128]{1,0:T(1,128)}', space=vmem, size = 0x12000, scoped, tag = 'internal scratch']
  %s0 = inlined_call_operand.vmem [shape: f32[512,16], index: 0, kind: input, shape index: {}]
  %s1 = inlined_call_operand.vmem [shape: f32[1,16], index: 1, kind: input, shape index: {}]
  %s2 = inlined_call_operand.vmem [shape: f32[1,16], index: 2, kind: input, shape index: {}]
  %s3 = inlined_call_operand.vmem [shape: bf16[512,16], index: 3, kind: output, shape index: {}]
  %s4 = sld [smem:[#allocation0]]
  $region22: #{_lambda_.15} parent=0
    _
  %s6 = ssub.s32 1, %s4
  %s7 = scalar_select 0, %s6, %s4
  // Predicated region
  $region2: #{_lambda_.15} parent=0 // pred_check
    _
  $region3: #{_lambda_.15} parent=0 // pred_check_branch
    %9 = sbr.rel (0) target = $region5
  $region4: #{_lambda_.15} parent=0 // pred_region
    _
  $region5: #{_lambda_.15} parent=0 // pred_fallthru
    _
  // Predicated region
  $region6: #{_lambda_.15} parent=0 // pred_check
    _
  $region7: #{_lambda_.15} parent=0 // pred_check_branch
    %11 = sbr.rel (0) target = $region9
  $region8: #{_lambda_.15} parent=0 // pred_region
    _
  $region9: #{_lambda_.15} parent=0 // pred_fallthru
    _
  // Predicated region
  $region10: #{_lambda_.15} parent=0 // pred_check
    _
  $region11: #{_lambda_.15} parent=0 // pred_check_branch
    %13 = sbr.rel (0) target = $region13
  $region12: #{_lambda_.15} parent=0 // pred_region
    _
  $region13: #{_lambda_.15} parent=0 // pred_fallthru
    _
  %v14 = vld [vmem:[%s0] sm:$0xff]
  %v15 = vld [vmem:[%s0 + $0x8] sm:$0xff]
  %v16 = vld [vmem:[%s0 + $0x10] sm:$0xff]
  %v17 = vld [vmem:[%s0 + $0x18] sm:$0xff]
  %v18 = vld [vmem:[%s0 + $0x20] sm:$0xff]
  %v19 = vld [vmem:[%s0 + $0x28] sm:$0xff]
  %v20 = vld [vmem:[%s0 + $0x30] sm:$0xff]
  %v21 = vld [vmem:[%s0 + $0x38] sm:$0xff]
  %v22 = vld [vmem:[%s0 + $0x40] sm:$0xff]
  %v23 = vld [vmem:[%s0 + $0x48] sm:$0xff]
  %v24 = vld [vmem:[%s0 + $0x50] sm:$0xff]
  %v25 = vld [vmem:[%s0 + $0x58] sm:$0xff]
  %v26 = vld [vmem:[%s0 + $0x60] sm:$0xff]
  %v27 = vld [vmem:[%s0 + $0x68] sm:$0xff]
  %v28 = vld [vmem:[%s0 + $0x70] sm:$0xff]
  %v29 = vld [vmem:[%s0 + $0x78] sm:$0xff]
  %v30 = vld [vmem:[%s0 + $0x80] sm:$0xff]
  %v31 = vld [vmem:[%s0 + $0x88] sm:$0xff]
  %v32 = vld [vmem:[%s0 + $0x90] sm:$0xff]
  %v33 = vld [vmem:[%s0 + $0x98] sm:$0xff]
  %v34 = vld [vmem:[%s0 + $0xa0] sm:$0xff]
  %v35 = vld [vmem:[%s0 + $0xa8] sm:$0xff]
  %v36 = vld [vmem:[%s0 + $0xb0] sm:$0xff]
  %v37 = vld [vmem:[%s0 + $0xb8] sm:$0xff]
  %v38 = vld [vmem:[%s0 + $0xc0] sm:$0xff]
  %v39 = vld [vmem:[%s0 + $0xc8] sm:$0xff]
  %v40 = vld [vmem:[%s0 + $0xd0] sm:$0xff]
  %v41 = vld [vmem:[%s0 + $0xd8] sm:$0xff]
  %v42 = vld [vmem:[%s0 + $0xe0] sm:$0xff]
  %v43 = vld [vmem:[%s0 + $0xe8] sm:$0xff]
  %v44 = vld [vmem:[%s0 + $0xf0] sm:$0xff]
  %v45 = vld [vmem:[%s0 + $0xf8] sm:$0xff]
  %v46 = vld [vmem:[%s0 + $0x100] sm:$0xff]
  %v47 = vld [vmem:[%s0 + $0x108] sm:$0xff]
  %v48 = vld [vmem:[%s0 + $0x110] sm:$0xff]
  %v49 = vld [vmem:[%s0 + $0x118] sm:$0xff]
  %v50 = vld [vmem:[%s0 + $0x120] sm:$0xff]
  %v51 = vld [vmem:[%s0 + $0x128] sm:$0xff]
  %v52 = vld [vmem:[%s0 + $0x130] sm:$0xff]
  %v53 = vld [vmem:[%s0 + $0x138] sm:$0xff]
  %v54 = vld [vmem:[%s0 + $0x140] sm:$0xff]
  %v55 = vld [vmem:[%s0 + $0x148] sm:$0xff]
  %v56 = vld [vmem:[%s0 + $0x150] sm:$0xff]
  %v57 = vld [vmem:[%s0 + $0x158] sm:$0xff]
  %v58 = vld [vmem:[%s0 + $0x160] sm:$0xff]
  %v59 = vld [vmem:[%s0 + $0x168] sm:$0xff]
  %v60 = vld [vmem:[%s0 + $0x170] sm:$0xff]
  %v61 = vld [vmem:[%s0 + $0x178] sm:$0xff]
  %v62 = vld [vmem:[%s0 + $0x180] sm:$0xff]
  %v63 = vld [vmem:[%s0 + $0x188] sm:$0xff]
  %v64 = vld [vmem:[%s0 + $0x190] sm:$0xff]
  %v65 = vld [vmem:[%s0 + $0x198] sm:$0xff]
  %v66 = vld [vmem:[%s0 + $0x1a0] sm:$0xff]
  %v67 = vld [vmem:[%s0 + $0x1a8] sm:$0xff]
  %v68 = vld [vmem:[%s0 + $0x1b0] sm:$0xff]
  %v69 = vld [vmem:[%s0 + $0x1b8] sm:$0xff]
  %v70 = vld [vmem:[%s0 + $0x1c0] sm:$0xff]
  %v71 = vld [vmem:[%s0 + $0x1c8] sm:$0xff]
  %v72 = vld [vmem:[%s0 + $0x1d0] sm:$0xff]
  %v73 = vld [vmem:[%s0 + $0x1d8] sm:$0xff]
  %v74 = vld [vmem:[%s0 + $0x1e0] sm:$0xff]
  %v75 = vld [vmem:[%s0 + $0x1e8] sm:$0xff]
  %v76 = vld [vmem:[%s0 + $0x1f0] sm:$0xff]
  %v77 = vld [vmem:[%s0 + $0x1f8] sm:$0xff]
  %v78 = vld [vmem:[%s1] sm:$0x1]
  %v80 = vlaneseq
  %v81 = vshrl.u32 %v80, 7
  %v82 = vsub.s32 0, %v81
  %v83 = vrot.slane %v78, %v82
  %v85 = vmul.f32 %v14, %v83
  %v86 = vmul.f32 %v15, %v83
  %v87 = vmul.f32 %v16, %v83
  %v88 = vmul.f32 %v17, %v83
  %v89 = vmul.f32 %v18, %v83
  %v90 = vmul.f32 %v19, %v83
  %v91 = vmul.f32 %v20, %v83
  %v92 = vmul.f32 %v21, %v83
  %v93 = vmul.f32 %v22, %v83
  %v94 = vmul.f32 %v23, %v83
  %v95 = vmul.f32 %v24, %v83
  %v96 = vmul.f32 %v25, %v83
  %v97 = vmul.f32 %v26, %v83
  %v98 = vmul.f32 %v27, %v83
  %v99 = vmul.f32 %v28, %v83
  %v100 = vmul.f32 %v29, %v83
  %v101 = vmul.f32 %v30, %v83
  %v102 = vmul.f32 %v31, %v83
  %v103 = vmul.f32 %v32, %v83
  %v104 = vmul.f32 %v33, %v83
  %v105 = vmul.f32 %v34, %v83
  %v106 = vmul.f32 %v35, %v83
  %v107 = vmul.f32 %v36, %v83
  %v108 = vmul.f32 %v37, %v83
  %v109 = vmul.f32 %v38, %v83
  %v110 = vmul.f32 %v39, %v83
  %v111 = vmul.f32 %v40, %v83
  %v112 = vmul.f32 %v41, %v83
  %v113 = vmul.f32 %v42, %v83
  %v114 = vmul.f32 %v43, %v83
  %v115 = vmul.f32 %v44, %v83
  %v116 = vmul.f32 %v45, %v83
  %v117 = vmul.f32 %v46, %v83
  %v118 = vmul.f32 %v47, %v83
  %v119 = vmul.f32 %v48, %v83
  %v120 = vmul.f32 %v49, %v83
  %v121 = vmul.f32 %v50, %v83
  %v122 = vmul.f32 %v51, %v83
  %v123 = vmul.f32 %v52, %v83
  %v124 = vmul.f32 %v53, %v83
  %v125 = vmul.f32 %v54, %v83
  %v126 = vmul.f32 %v55, %v83
  %v127 = vmul.f32 %v56, %v83
  %v128 = vmul.f32 %v57, %v83
  %v129 = vmul.f32 %v58, %v83
  %v130 = vmul.f32 %v59, %v83
  %v131 = vmul.f32 %v60, %v83
  %v132 = vmul.f32 %v61, %v83
  %v133 = vmul.f32 %v62, %v83
  %v134 = vmul.f32 %v63, %v83
  %v135 = vmul.f32 %v64, %v83
  %v136 = vmul.f32 %v65, %v83
  %v137 = vmul.f32 %v66, %v83
  %v138 = vmul.f32 %v67, %v83
  %v139 = vmul.f32 %v68, %v83
  %v140 = vmul.f32 %v69, %v83
  %v141 = vmul.f32 %v70, %v83
  %v142 = vmul.f32 %v71, %v83
  %v143 = vmul.f32 %v72, %v83
  %v144 = vmul.f32 %v73, %v83
  %v145 = vmul.f32 %v74, %v83
  %v146 = vmul.f32 %v75, %v83
  %v147 = vmul.f32 %v76, %v83
  %v148 = vmul.f32 %v77, %v83
  %v149 = vld [vmem:[%s2] sm:$0x1]
  %v151 = vlaneseq
  %v152 = vshrl.u32 %v151, 7
  %v153 = vsub.s32 0, %v152
  %v154 = vrot.slane %v149, %v153
  %v156 = vadd.f32 %v85, %v154
  %v157 = vadd.f32 %v86, %v154
  %v158 = vadd.f32 %v87, %v154
  %v159 = vadd.f32 %v88, %v154
  %v160 = vadd.f32 %v89, %v154
  %v161 = vadd.f32 %v90, %v154
  %v162 = vadd.f32 %v91, %v154
  %v163 = vadd.f32 %v92, %v154
  %v164 = vadd.f32 %v93, %v154
  %v165 = vadd.f32 %v94, %v154
  %v166 = vadd.f32 %v95, %v154
  %v167 = vadd.f32 %v96, %v154
  %v168 = vadd.f32 %v97, %v154
  %v169 = vadd.f32 %v98, %v154
  %v170 = vadd.f32 %v99, %v154
  %v171 = vadd.f32 %v100, %v154
  %v172 = vadd.f32 %v101, %v154
  %v173 = vadd.f32 %v102, %v154
  %v174 = vadd.f32 %v103, %v154
  %v175 = vadd.f32 %v104, %v154
  %v176 = vadd.f32 %v105, %v154
  %v177 = vadd.f32 %v106, %v154
  %v178 = vadd.f32 %v107, %v154
  %v179 = vadd.f32 %v108, %v154
  %v180 = vadd.f32 %v109, %v154
  %v181 = vadd.f32 %v110, %v154
  %v182 = vadd.f32 %v111, %v154
  %v183 = vadd.f32 %v112, %v154
  %v184 = vadd.f32 %v113, %v154
  %v185 = vadd.f32 %v114, %v154
  %v186 = vadd.f32 %v115, %v154
  %v187 = vadd.f32 %v116, %v154
  %v188 = vadd.f32 %v117, %v154
  %v189 = vadd.f32 %v118, %v154
  %v190 = vadd.f32 %v119, %v154
  %v191 = vadd.f32 %v120, %v154
  %v192 = vadd.f32 %v121, %v154
  %v193 = vadd.f32 %v122, %v154
  %v194 = vadd.f32 %v123, %v154
  %v195 = vadd.f32 %v124, %v154
  %v196 = vadd.f32 %v125, %v154
  %v197 = vadd.f32 %v126, %v154
  %v198 = vadd.f32 %v127, %v154
  %v199 = vadd.f32 %v128, %v154
  %v200 = vadd.f32 %v129, %v154
  %v201 = vadd.f32 %v130, %v154
  %v202 = vadd.f32 %v131, %v154
  %v203 = vadd.f32 %v132, %v154
  %v204 = vadd.f32 %v133, %v154
  %v205 = vadd.f32 %v134, %v154
  %v206 = vadd.f32 %v135, %v154
  %v207 = vadd.f32 %v136, %v154
  %v208 = vadd.f32 %v137, %v154
  %v209 = vadd.f32 %v138, %v154
  %v210 = vadd.f32 %v139, %v154
  %v211 = vadd.f32 %v140, %v154
  %v212 = vadd.f32 %v141, %v154
  %v213 = vadd.f32 %v142, %v154
  %v214 = vadd.f32 %v143, %v154
  %v215 = vadd.f32 %v144, %v154
  %v216 = vadd.f32 %v145, %v154
  %v217 = vadd.f32 %v146, %v154
  %v218 = vadd.f32 %v147, %v154
  %v219 = vadd.f32 %v148, %v154
  %v220 = vmax.f32 %v156, 0.0
  %v221 = vmax.f32 %v157, 0.0
  %v222 = vmax.f32 %v158, 0.0
  %v223 = vmax.f32 %v159, 0.0
  %v224 = vmax.f32 %v160, 0.0
  %v225 = vmax.f32 %v161, 0.0
  %v226 = vmax.f32 %v162, 0.0
  %v227 = vmax.f32 %v163, 0.0
  %v228 = vmax.f32 %v164, 0.0
  %v229 = vmax.f32 %v165, 0.0
  %v230 = vmax.f32 %v166, 0.0
  %v231 = vmax.f32 %v167, 0.0
  %v232 = vmax.f32 %v168, 0.0
  %v233 = vmax.f32 %v169, 0.0
  %v234 = vmax.f32 %v170, 0.0
  %v235 = vmax.f32 %v171, 0.0
  %v236 = vmax.f32 %v172, 0.0
  %v237 = vmax.f32 %v173, 0.0
  %v238 = vmax.f32 %v174, 0.0
  %v239 = vmax.f32 %v175, 0.0
  %v240 = vmax.f32 %v176, 0.0
  %v241 = vmax.f32 %v177, 0.0
  %v242 = vmax.f32 %v178, 0.0
  %v243 = vmax.f32 %v179, 0.0
  %v244 = vmax.f32 %v180, 0.0
  %v245 = vmax.f32 %v181, 0.0
  %v246 = vmax.f32 %v182, 0.0
  %v247 = vmax.f32 %v183, 0.0
  %v248 = vmax.f32 %v184, 0.0
  %v249 = vmax.f32 %v185, 0.0
  %v250 = vmax.f32 %v186, 0.0
  %v251 = vmax.f32 %v187, 0.0
  %v252 = vmax.f32 %v188, 0.0
  %v253 = vmax.f32 %v189, 0.0
  %v254 = vmax.f32 %v190, 0.0
  %v255 = vmax.f32 %v191, 0.0
  %v256 = vmax.f32 %v192, 0.0
  %v257 = vmax.f32 %v193, 0.0
  %v258 = vmax.f32 %v194, 0.0
  %v259 = vmax.f32 %v195, 0.0
  %v260 = vmax.f32 %v196, 0.0
  %v261 = vmax.f32 %v197, 0.0
  %v262 = vmax.f32 %v198, 0.0
  %v263 = vmax.f32 %v199, 0.0
  %v264 = vmax.f32 %v200, 0.0
  %v265 = vmax.f32 %v201, 0.0
  %v266 = vmax.f32 %v202, 0.0
  %v267 = vmax.f32 %v203, 0.0
  %v268 = vmax.f32 %v204, 0.0
  %v269 = vmax.f32 %v205, 0.0
  %v270 = vmax.f32 %v206, 0.0
  %v271 = vmax.f32 %v207, 0.0
  %v272 = vmax.f32 %v208, 0.0
  %v273 = vmax.f32 %v209, 0.0
  %v274 = vmax.f32 %v210, 0.0
  %v275 = vmax.f32 %v211, 0.0
  %v276 = vmax.f32 %v212, 0.0
  %v277 = vmax.f32 %v213, 0.0
  %v278 = vmax.f32 %v214, 0.0
  %v279 = vmax.f32 %v215, 0.0
  %v280 = vmax.f32 %v216, 0.0
  %v281 = vmax.f32 %v217, 0.0
  %v282 = vmax.f32 %v218, 0.0
  %v283 = vmax.f32 %v219, 0.0
  %v284 = vpack.c.bf16 %v221, %v220
  %v285 = vpack.c.bf16 %v223, %v222
  %v286 = vpack.c.bf16 %v225, %v224
  %v287 = vpack.c.bf16 %v227, %v226
  %v288 = vpack.c.bf16 %v229, %v228
  %v289 = vpack.c.bf16 %v231, %v230
  %v290 = vpack.c.bf16 %v233, %v232
  %v291 = vpack.c.bf16 %v235, %v234
  %v292 = vpack.c.bf16 %v237, %v236
  %v293 = vpack.c.bf16 %v239, %v238
  %v294 = vpack.c.bf16 %v241, %v240
  %v295 = vpack.c.bf16 %v243, %v242
  %v296 = vpack.c.bf16 %v245, %v244
  %v297 = vpack.c.bf16 %v247, %v246
  %v298 = vpack.c.bf16 %v249, %v248
  %v299 = vpack.c.bf16 %v251, %v250
  %v300 = vpack.c.bf16 %v253, %v252
  %v301 = vpack.c.bf16 %v255, %v254
  %v302 = vpack.c.bf16 %v257, %v256
  %v303 = vpack.c.bf16 %v259, %v258
  %v304 = vpack.c.bf16 %v261, %v260
  %v305 = vpack.c.bf16 %v263, %v262
  %v306 = vpack.c.bf16 %v265, %v264
  %v307 = vpack.c.bf16 %v267, %v266
  %v308 = vpack.c.bf16 %v269, %v268
  %v309 = vpack.c.bf16 %v271, %v270
  %v310 = vpack.c.bf16 %v273, %v272
  %v311 = vpack.c.bf16 %v275, %v274
  %v312 = vpack.c.bf16 %v277, %v276
  %v313 = vpack.c.bf16 %v279, %v278
  %v314 = vpack.c.bf16 %v281, %v280
  %v315 = vpack.c.bf16 %v283, %v282
  %v348 = vunpack.c.l.b16 %v284
  %v349 = vunpack.c.h.b16 %v284
  %v350 = vunpack.c.l.b16 %v285
  %v351 = vunpack.c.h.b16 %v285
  %v352 = vunpack.c.l.b16 %v286
  %v353 = vunpack.c.h.b16 %v286
  %v354 = vunpack.c.l.b16 %v287
  %v355 = vunpack.c.h.b16 %v287
  %v356 = vunpack.c.l.b16 %v288
  %v357 = vunpack.c.h.b16 %v288
  %v358 = vunpack.c.l.b16 %v289
  %v359 = vunpack.c.h.b16 %v289
  %v360 = vunpack.c.l.b16 %v290
  %v361 = vunpack.c.h.b16 %v290
  %v362 = vunpack.c.l.b16 %v291
  %v363 = vunpack.c.h.b16 %v291
  %v364 = vunpack.c.l.b16 %v292
  %v365 = vunpack.c.h.b16 %v292
  %v366 = vunpack.c.l.b16 %v293
  %v367 = vunpack.c.h.b16 %v293
  %v368 = vunpack.c.l.b16 %v294
  %v369 = vunpack.c.h.b16 %v294
  %v370 = vunpack.c.l.b16 %v295
  %v371 = vunpack.c.h.b16 %v295
  %v372 = vunpack.c.l.b16 %v296
  %v373 = vunpack.c.h.b16 %v296
  %v374 = vunpack.c.l.b16 %v297
  %v375 = vunpack.c.h.b16 %v297
  %v376 = vunpack.c.l.b16 %v298
  %v377 = vunpack.c.h.b16 %v298
  %v378 = vunpack.c.l.b16 %v299
  %v379 = vunpack.c.h.b16 %v299
  %v380 = vunpack.c.l.b16 %v300
  %v381 = vunpack.c.h.b16 %v300
  %v382 = vunpack.c.l.b16 %v301
  %v383 = vunpack.c.h.b16 %v301
  %v384 = vunpack.c.l.b16 %v302
  %v385 = vunpack.c.h.b16 %v302
  %v386 = vunpack.c.l.b16 %v303
  %v387 = vunpack.c.h.b16 %v303
  %v388 = vunpack.c.l.b16 %v304
  %v389 = vunpack.c.h.b16 %v304
  %v390 = vunpack.c.l.b16 %v305
  %v391 = vunpack.c.h.b16 %v305
  %v392 = vunpack.c.l.b16 %v306
  %v393 = vunpack.c.h.b16 %v306
  %v394 = vunpack.c.l.b16 %v307
  %v395 = vunpack.c.h.b16 %v307
  %v396 = vunpack.c.l.b16 %v308
  %v397 = vunpack.c.h.b16 %v308
  %v398 = vunpack.c.l.b16 %v309
  %v399 = vunpack.c.h.b16 %v309
  %v400 = vunpack.c.l.b16 %v310
  %v401 = vunpack.c.h.b16 %v310
  %v402 = vunpack.c.l.b16 %v311
  %v403 = vunpack.c.h.b16 %v311
  %v404 = vunpack.c.l.b16 %v312
  %v405 = vunpack.c.h.b16 %v312
  %v406 = vunpack.c.l.b16 %v313
  %v407 = vunpack.c.h.b16 %v313
  %v408 = vunpack.c.l.b16 %v314
  %v409 = vunpack.c.h.b16 %v314
  %v410 = vunpack.c.l.b16 %v315
  %v411 = vunpack.c.h.b16 %v315
  %v412 = vpack.c.b16 %v348, %v348
  %v413 = vpack.c.b16 %v349, %v349
  %v414 = vpack.c.b16 %v350, %v350
  %v415 = vpack.c.b16 %v351, %v351
  %v416 = vpack.c.b16 %v352, %v352
  %v417 = vpack.c.b16 %v353, %v353
  %v418 = vpack.c.b16 %v354, %v354
  %v419 = vpack.c.b16 %v355, %v355
  %v420 = vpack.c.b16 %v356, %v356
  %v421 = vpack.c.b16 %v357, %v357
  %v422 = vpack.c.b16 %v358, %v358
  %v423 = vpack.c.b16 %v359, %v359
  %v424 = vpack.c.b16 %v360, %v360
  %v425 = vpack.c.b16 %v361, %v361
  %v426 = vpack.c.b16 %v362, %v362
  %v427 = vpack.c.b16 %v363, %v363
  %v428 = vpack.c.b16 %v364, %v364
  %v429 = vpack.c.b16 %v365, %v365
  %v430 = vpack.c.b16 %v366, %v366
  %v431 = vpack.c.b16 %v367, %v367
  %v432 = vpack.c.b16 %v368, %v368
  %v433 = vpack.c.b16 %v369, %v369
  %v434 = vpack.c.b16 %v370, %v370
  %v435 = vpack.c.b16 %v371, %v371
  %v436 = vpack.c.b16 %v372, %v372
  %v437 = vpack.c.b16 %v373, %v373
  %v438 = vpack.c.b16 %v374, %v374
  %v439 = vpack.c.b16 %v375, %v375
  %v440 = vpack.c.b16 %v376, %v376
  %v441 = vpack.c.b16 %v377, %v377
  %v442 = vpack.c.b16 %v378, %v378
  %v443 = vpack.c.b16 %v379, %v379
  %v444 = vpack.c.b16 %v380, %v380
  %v445 = vpack.c.b16 %v381, %v381
  %v446 = vpack.c.b16 %v382, %v382
  %v447 = vpack.c.b16 %v383, %v383
  %v448 = vpack.c.b16 %v384, %v384
  %v449 = vpack.c.b16 %v385, %v385
  %v450 = vpack.c.b16 %v386, %v386
  %v451 = vpack.c.b16 %v387, %v387
  %v452 = vpack.c.b16 %v388, %v388
  %v453 = vpack.c.b16 %v389, %v389
  %v454 = vpack.c.b16 %v390, %v390
  %v455 = vpack.c.b16 %v391, %v391
  %v456 = vpack.c.b16 %v392, %v392
  %v457 = vpack.c.b16 %v393, %v393
  %v458 = vpack.c.b16 %v394, %v394
  %v459 = vpack.c.b16 %v395, %v395
  %v460 = vpack.c.b16 %v396, %v396
  %v461 = vpack.c.b16 %v397, %v397
  %v462 = vpack.c.b16 %v398, %v398
  %v463 = vpack.c.b16 %v399, %v399
  %v464 = vpack.c.b16 %v400, %v400
  %v465 = vpack.c.b16 %v401, %v401
  %v466 = vpack.c.b16 %v402, %v402
  %v467 = vpack.c.b16 %v403, %v403
  %v468 = vpack.c.b16 %v404, %v404
  %v469 = vpack.c.b16 %v405, %v405
  %v470 = vpack.c.b16 %v406, %v406
  %v471 = vpack.c.b16 %v407, %v407
  %v472 = vpack.c.b16 %v408, %v408
  %v473 = vpack.c.b16 %v409, %v409
  %v474 = vpack.c.b16 %v410, %v410
  %v475 = vpack.c.b16 %v411, %v411
  %vm540 = vcmask 125952
  %541 = vst.msk [vmem:[%s3] sm:$0xf] %vm540, %v412
  %542 = vst.msk [vmem:[%s3 + $0x4] sm:$0xf] %vm540, %v413
  %543 = vst.msk [vmem:[%s3 + $0x8] sm:$0xf] %vm540, %v414
  %544 = vst.msk [vmem:[%s3 + $0xc] sm:$0xf] %vm540, %v415
  %545 = vst.msk [vmem:[%s3 + $0x10] sm:$0xf] %vm540, %v416
  %546 = vst.msk [vmem:[%s3 + $0x14] sm:$0xf] %vm540, %v417
  %547 = vst.msk [vmem:[%s3 + $0x18] sm:$0xf] %vm540, %v418
  %548 = vst.msk [vmem:[%s3 + $0x1c] sm:$0xf] %vm540, %v419
  %549 = vst.msk [vmem:[%s3 + $0x20] sm:$0xf] %vm540, %v420
  %550 = vst.msk [vmem:[%s3 + $0x24] sm:$0xf] %vm540, %v421
  %551 = vst.msk [vmem:[%s3 + $0x28] sm:$0xf] %vm540, %v422
  %552 = vst.msk [vmem:[%s3 + $0x2c] sm:$0xf] %vm540, %v423
  %553 = vst.msk [vmem:[%s3 + $0x30] sm:$0xf] %vm540, %v424
  %554 = vst.msk [vmem:[%s3 + $0x34] sm:$0xf] %vm540, %v425
  %555 = vst.msk [vmem:[%s3 + $0x38] sm:$0xf] %vm540, %v426
  %556 = vst.msk [vmem:[%s3 + $0x3c] sm:$0xf] %vm540, %v427
  %557 = vst.msk [vmem:[%s3 + $0x40] sm:$0xf] %vm540, %v428
  %558 = vst.msk [vmem:[%s3 + $0x44] sm:$0xf] %vm540, %v429
  %559 = vst.msk [vmem:[%s3 + $0x48] sm:$0xf] %vm540, %v430
  %560 = vst.msk [vmem:[%s3 + $0x4c] sm:$0xf] %vm540, %v431
  %561 = vst.msk [vmem:[%s3 + $0x50] sm:$0xf] %vm540, %v432
  %562 = vst.msk [vmem:[%s3 + $0x54] sm:$0xf] %vm540, %v433
  %563 = vst.msk [vmem:[%s3 + $0x58] sm:$0xf] %vm540, %v434
  %564 = vst.msk [vmem:[%s3 + $0x5c] sm:$0xf] %vm540, %v435
  %565 = vst.msk [vmem:[%s3 + $0x60] sm:$0xf] %vm540, %v436
  %566 = vst.msk [vmem:[%s3 + $0x64] sm:$0xf] %vm540, %v437
  %567 = vst.msk [vmem:[%s3 + $0x68] sm:$0xf] %vm540, %v438
  %568 = vst.msk [vmem:[%s3 + $0x6c] sm:$0xf] %vm540, %v439
  %569 = vst.msk [vmem:[%s3 + $0x70] sm:$0xf] %vm540, %v440
  %570 = vst.msk [vmem:[%s3 + $0x74] sm:$0xf] %vm540, %v441
  %571 = vst.msk [vmem:[%s3 + $0x78] sm:$0xf] %vm540, %v442
  %572 = vst.msk [vmem:[%s3 + $0x7c] sm:$0xf] %vm540, %v443
  %573 = vst.msk [vmem:[%s3 + $0x80] sm:$0xf] %vm540, %v444
  %574 = vst.msk [vmem:[%s3 + $0x84] sm:$0xf] %vm540, %v445
  %575 = vst.msk [vmem:[%s3 + $0x88] sm:$0xf] %vm540, %v446
  %576 = vst.msk [vmem:[%s3 + $0x8c] sm:$0xf] %vm540, %v447
  %577 = vst.msk [vmem:[%s3 + $0x90] sm:$0xf] %vm540, %v448
  %578 = vst.msk [vmem:[%s3 + $0x94] sm:$0xf] %vm540, %v449
  %579 = vst.msk [vmem:[%s3 + $0x98] sm:$0xf] %vm540, %v450
  %580 = vst.msk [vmem:[%s3 + $0x9c] sm:$0xf] %vm540, %v451
  %581 = vst.msk [vmem:[%s3 + $0xa0] sm:$0xf] %vm540, %v452
  %582 = vst.msk [vmem:[%s3 + $0xa4] sm:$0xf] %vm540, %v453
  %583 = vst.msk [vmem:[%s3 + $0xa8] sm:$0xf] %vm540, %v454
  %584 = vst.msk [vmem:[%s3 + $0xac] sm:$0xf] %vm540, %v455
  %585 = vst.msk [vmem:[%s3 + $0xb0] sm:$0xf] %vm540, %v456
  %586 = vst.msk [vmem:[%s3 + $0xb4] sm:$0xf] %vm540, %v457
  %587 = vst.msk [vmem:[%s3 + $0xb8] sm:$0xf] %vm540, %v458
  %588 = vst.msk [vmem:[%s3 + $0xbc] sm:$0xf] %vm540, %v459
  %589 = vst.msk [vmem:[%s3 + $0xc0] sm:$0xf] %vm540, %v460
  %590 = vst.msk [vmem:[%s3 + $0xc4] sm:$0xf] %vm540, %v461
  %591 = vst.msk [vmem:[%s3 + $0xc8] sm:$0xf] %vm540, %v462
  %592 = vst.msk [vmem:[%s3 + $0xcc] sm:$0xf] %vm540, %v463
  %593 = vst.msk [vmem:[%s3 + $0xd0] sm:$0xf] %vm540, %v464
  %594 = vst.msk [vmem:[%s3 + $0xd4] sm:$0xf] %vm540, %v465
  %595 = vst.msk [vmem:[%s3 + $0xd8] sm:$0xf] %vm540, %v466
  %596 = vst.msk [vmem:[%s3 + $0xdc] sm:$0xf] %vm540, %v467
  %597 = vst.msk [vmem:[%s3 + $0xe0] sm:$0xf] %vm540, %v468
  %598 = vst.msk [vmem:[%s3 + $0xe4] sm:$0xf] %vm540, %v469
  %599 = vst.msk [vmem:[%s3 + $0xe8] sm:$0xf] %vm540, %v470
  %600 = vst.msk [vmem:[%s3 + $0xec] sm:$0xf] %vm540, %v471
  %601 = vst.msk [vmem:[%s3 + $0xf0] sm:$0xf] %vm540, %v472
  %602 = vst.msk [vmem:[%s3 + $0xf4] sm:$0xf] %vm540, %v473
  %603 = vst.msk [vmem:[%s3 + $0xf8] sm:$0xf] %vm540, %v474
  %604 = vst.msk [vmem:[%s3 + $0xfc] sm:$0xf] %vm540, %v475
  // Predicated region
  $region14: #{_lambda_.15} parent=0 // pred_check
    _
  $region15: #{_lambda_.15} parent=0 // pred_check_branch
    %606 = sbr.rel (0) target = $region17
  $region16: #{_lambda_.15} parent=0 // pred_region
    _
  $region17: #{_lambda_.15} parent=0 // pred_fallthru
    _
  // Predicated region
  $region18: #{_lambda_.15} parent=0 // pred_check
    _
  $region19: #{_lambda_.15} parent=0 // pred_check_branch
    %608 = sbr.rel (0) target = $region21
  $region20: #{_lambda_.15} parent=0 // pred_region
    _
  $region21: #{_lambda_.15} parent=0 // pred_fallthru
    _

// kernel: _lambda_.16
$region0: #{_lambda_.16}
  #allocation0 [shape = 'u32[]', space=smem, size = 0x4, offset = 0x4, fixed_abs, tag = 'smem constant byte address 0x4 - core index']
  #allocation1 [shape = 'u32[144,128]{1,0:T(1,128)}', space=vmem, size = 0x12000, scoped, tag = 'internal scratch']
  %s0 = inlined_call_operand.vmem [shape: bf16[512,144], index: 0, kind: input, shape index: {}]
  %s1 = inlined_call_operand.vmem [shape: bf16[144,32], index: 1, kind: input, shape index: {}]
  %s2 = inlined_call_operand.vmem [shape: f32[1,32], index: 2, kind: input, shape index: {}]
  %s3 = inlined_call_operand.vmem [shape: f32[1,32], index: 3, kind: input, shape index: {}]
  %s4 = inlined_call_operand.vmem [shape: bf16[512,32], index: 4, kind: output, shape index: {}]
  %s5 = sld [smem:[#allocation0]]
  $region49: #{_lambda_.16} parent=0
    _
  %s7 = ssub.s32 1, %s5
  %s8 = scalar_select 0, %s7, %s5
  loop: start=0, step=1, limit=4
  $region2: #{_lambda_.16} parent=0 // loop_pre_header
    _
  $region3: #{_lambda_.16} parent=0 // loop_header
    %s10 = sphi 0, %s14
    %p11 = scmp.ge.s32.totalorder %s10, 4
    %s17 = sphi 0, %s29
    %s18 = sphi 0, %s25
    %s19 = sphi 0, %s17
    %s20 = sphi 0, %s18
    %s21 = sphi 0, %s19
    %s22 = sphi 0, %s20
    %s32 = sphi 0, %s34
    %s35 = sphi 0, %s32
    %s36 = sphi 0, %s35
    %s52 = sphi 0, %s36
    %s58 = sphi 0, %s60
    %s61 = sphi 0, %s58
    %s62 = sphi 0, %s61
    %s78 = sphi 0, %s62
    %s84 = sphi 0, %s86
    %s87 = sphi 0, %s84
    %s88 = sphi 0, %s87
    %s104 = sphi 0, %s88
    %s110 = sphi 0, %s112
    %s113 = sphi 0, %s110
    %s114 = sphi 0, %s113
    %s130 = sphi 0, %s114
    %s138 = sphi 0, %s140
    %s141 = sphi 0, %s138
    %s142 = sphi 0, %s141
    %s158 = sphi 0, %s142
  $region4: #{_lambda_.16} parent=0 // loop_header_branch
    %13 = sbr.rel (%p11) target = $region8
  $region5: #{_lambda_.16} parent=0 // loop_body
    %s15 = ssub.s32 %s10, 1
    %s16 = ssub.s32 %s10, 2
    %s23 = sadd.s32 1, %s18
    %p24 = scmp.ge.s32.totalorder %s23, 1
    %s25 = scalar_select %p24, 0, %s23
    %s26 = sadd.s32 1, %s17
    %s27 = scalar_select %p24, %s26, %s17
    %p28 = scmp.ge.s32.totalorder %s27, 2
    %s29 = scalar_select %p28, 0, %s27
    %s30 = ssub.s32 %s17, %s29
    %p31 = scmp.eq.s32.totalorder %s30, 0
    %s33 = sadd.s32 %s32, 1
    %s34 = scalar_select %p31, %s32, %s33
    %p37 = pneg %p31
    %p38 = scmp.eq.s32.totalorder %s10, 1
    %p39 = por %p37, %p38
    %p40 = scmp.ne.s32.totalorder %s32, %s35
    %p41 = scmp.eq.s32.totalorder %s10, 0
    %p42 = por %p40, %p41
    %p43 = scmp.ne.s32.totalorder %s32, %s35
    %p44 = scmp.eq.s32.totalorder %s15, 1
    %p45 = por %p43, %p44
    %p46 = scmp.ne.s32.totalorder %s35, %s36
    %p47 = scmp.eq.s32.totalorder %s15, 0
    %p48 = por %p46, %p47
    %p49 = scmp.ne.s32.totalorder %s35, %s36
    %p50 = scmp.eq.s32.totalorder %s16, 1
    %p51 = por %p49, %p50
    %p53 = scmp.ne.s32.totalorder %s36, %s52
    %p54 = scmp.eq.s32.totalorder %s16, 0
    %p55 = por %p53, %p54
    %s56 = ssub.s32 %s18, %s25
    %p57 = scmp.eq.s32.totalorder %s56, 0
    %s59 = sadd.s32 %s58, 1
    %s60 = scalar_select %p57, %s58, %s59
    %p63 = pneg %p57
    %p64 = scmp.eq.s32.totalorder %s10, 1
    %p65 = por %p63, %p64
    %p66 = scmp.ne.s32.totalorder %s58, %s61
    %p67 = scmp.eq.s32.totalorder %s10, 0
    %p68 = por %p66, %p67
    %p69 = scmp.ne.s32.totalorder %s58, %s61
    %p70 = scmp.eq.s32.totalorder %s15, 1
    %p71 = por %p69, %p70
    %p72 = scmp.ne.s32.totalorder %s61, %s62
    %p73 = scmp.eq.s32.totalorder %s15, 0
    %p74 = por %p72, %p73
    %p75 = scmp.ne.s32.totalorder %s61, %s62
    %p76 = scmp.eq.s32.totalorder %s16, 1
    %p77 = por %p75, %p76
    %p79 = scmp.ne.s32.totalorder %s62, %s78
    %p80 = scmp.eq.s32.totalorder %s16, 0
    %p81 = por %p79, %p80
    %s82 = ssub.s32 %s18, %s25
    %p83 = scmp.eq.s32.totalorder %s82, 0
    %s85 = sadd.s32 %s84, 1
    %s86 = scalar_select %p83, %s84, %s85
    %p89 = pneg %p83
    %p90 = scmp.eq.s32.totalorder %s10, 1
    %p91 = por %p89, %p90
    %p92 = scmp.ne.s32.totalorder %s84, %s87
    %p93 = scmp.eq.s32.totalorder %s10, 0
    %p94 = por %p92, %p93
    %p95 = scmp.ne.s32.totalorder %s84, %s87
    %p96 = scmp.eq.s32.totalorder %s15, 1
    %p97 = por %p95, %p96
    %p98 = scmp.ne.s32.totalorder %s87, %s88
    %p99 = scmp.eq.s32.totalorder %s15, 0
    %p100 = por %p98, %p99
    %p101 = scmp.ne.s32.totalorder %s87, %s88
    %p102 = scmp.eq.s32.totalorder %s16, 1
    %p103 = por %p101, %p102
    %p105 = scmp.ne.s32.totalorder %s88, %s104
    %p106 = scmp.eq.s32.totalorder %s16, 0
    %p107 = por %p105, %p106
    %s108 = ssub.s32 %s18, %s25
    %p109 = scmp.eq.s32.totalorder %s108, 0
    %s111 = sadd.s32 %s110, 1
    %s112 = scalar_select %p109, %s110, %s111
    %p115 = pneg %p109
    %p116 = scmp.eq.s32.totalorder %s10, 1
    %p117 = por %p115, %p116
    %p118 = scmp.ne.s32.totalorder %s110, %s113
    %p119 = scmp.eq.s32.totalorder %s10, 0
    %p120 = por %p118, %p119
    %p121 = scmp.ne.s32.totalorder %s110, %s113
    %p122 = scmp.eq.s32.totalorder %s15, 1
    %p123 = por %p121, %p122
    %p124 = scmp.ne.s32.totalorder %s113, %s114
    %p125 = scmp.eq.s32.totalorder %s15, 0
    %p126 = por %p124, %p125
    %p127 = scmp.ne.s32.totalorder %s113, %s114
    %p128 = scmp.eq.s32.totalorder %s16, 1
    %p129 = por %p127, %p128
    %p131 = scmp.ne.s32.totalorder %s114, %s130
    %p132 = scmp.eq.s32.totalorder %s16, 0
    %p133 = por %p131, %p132
    %s134 = ssub.s32 %s17, %s29
    %s135 = ssub.s32 %s18, %s25
    %s136 = sor.u32 %s134, %s135
    %p137 = scmp.eq.s32.totalorder %s136, 0
    %s139 = sadd.s32 %s138, 1
    %s140 = scalar_select %p137, %s138, %s139
    %p143 = pneg %p137
    %p144 = scmp.eq.s32.totalorder %s10, 1
    %p145 = por %p143, %p144
    %p146 = scmp.ne.s32.totalorder %s138, %s141
    %p147 = scmp.eq.s32.totalorder %s10, 0
    %p148 = por %p146, %p147
    %p149 = scmp.ne.s32.totalorder %s138, %s141
    %p150 = scmp.eq.s32.totalorder %s15, 1
    %p151 = por %p149, %p150
    %p152 = scmp.ne.s32.totalorder %s141, %s142
    %p153 = scmp.eq.s32.totalorder %s15, 0
    %p154 = por %p152, %p153
    %p155 = scmp.ne.s32.totalorder %s141, %s142
    %p156 = scmp.eq.s32.totalorder %s16, 1
    %p157 = por %p155, %p156
    %p159 = scmp.ne.s32.totalorder %s142, %s158
    %p160 = scmp.eq.s32.totalorder %s16, 0
    %p161 = por %p159, %p160
    %p162 = scmp.le.s32.totalorder 1, %s10
    %p163 = scmp.lt.s32.totalorder %s10, 3
    %p164 = pnand %p162, %p163
    %p165 = pneg %p164
    // Predicated region
    $region9: #{_lambda_.16} parent=5 // pred_check
      _
    $region10: #{_lambda_.16} parent=5 // pred_check_branch
      %167 = sbr.rel (%p164) target = $region12
    $region11: #{_lambda_.16} parent=5 // pred_region
      %s168 = ssub.s32 %s10, 1
      // Predicated region
      $region13: #{_lambda_.16} parent=11 // pred_check
        %p169 = pneg %p74
      $region14: #{_lambda_.16} parent=11 // pred_check_branch
        %171 = sbr.rel (%p169) target = $region16
      $region15: #{_lambda_.16} parent=11 // pred_region
        %p172 = scmp.lt.s32.totalorder %s20, 0
        %s173 = scalar_select %p172, %s20, 0
        %s174 = smul.addr %s173, 4
        %s175 = scalar_lea.vmem %s1, %s174
      $region16: #{_lambda_.16} parent=11 // pred_fallthru
        _
      // Predicated region
      $region17: #{_lambda_.16} parent=11 // pred_check
        %p176 = pneg %p100
      $region18: #{_lambda_.16} parent=11 // pred_check_branch
        %178 = sbr.rel (%p176) target = $region20
      $region19: #{_lambda_.16} parent=11 // pred_region
        %p179 = scmp.lt.s32.totalorder %s20, 0
        %s180 = scalar_select %p179, %s20, 0
        %s181 = scalar_lea.vmem %s2, %s180
      $region20: #{_lambda_.16} parent=11 // pred_fallthru
        _
      // Predicated region
      $region21: #{_lambda_.16} parent=11 // pred_check
        %p182 = pneg %p126
      $region22: #{_lambda_.16} parent=11 // pred_check_branch
        %184 = sbr.rel (%p182) target = $region24
      $region23: #{_lambda_.16} parent=11 // pred_region
        %p185 = scmp.lt.s32.totalorder %s20, 0
        %s186 = scalar_select %p185, %s20, 0
        %s187 = scalar_lea.vmem %s3, %s186
      $region24: #{_lambda_.16} parent=11 // pred_fallthru
        _
    $region12: #{_lambda_.16} parent=5 // pred_fallthru
      _
    %p188 = scmp.lt.s32.totalorder %s10, 2
    // Predicated region
    $region25: #{_lambda_.16} parent=5 // pred_check
      %p189 = pneg %p188
    $region26: #{_lambda_.16} parent=5 // pred_check_branch
      %191 = sbr.rel (%p189) target = $region28
    $region27: #{_lambda_.16} parent=5 // pred_region
      // Predicated region
      $region29: #{_lambda_.16} parent=27 // pred_check
        %p192 = pneg %p42
      $region30: #{_lambda_.16} parent=27 // pred_check_branch
        %194 = sbr.rel (%p192) target = $region32
      $region31: #{_lambda_.16} parent=27 // pred_region
        %s195 = smul.u32 32, %s17
        %p196 = scmp.lt.s32.totalorder %s195, 63
        %s197 = scalar_select %p196, %s195, 63
        %s198 = smul.addr %s197, 2
        %s199 = smul.addr %s198, 4
        %s200 = scalar_lea.vmem %s0, %s199
        %s201 = smul.u32 32, %s17
      $region32: #{_lambda_.16} parent=27 // pred_fallthru
        _
    $region28: #{_lambda_.16} parent=5 // pred_fallthru
      _
    %p202 = scmp.le.s32.totalorder 1, %s10
    %p203 = scmp.lt.s32.totalorder %s10, 3
    %p204 = pnand %p202, %p203
    %p205 = pneg %p204
    // Predicated region
    $region33: #{_lambda_.16} parent=5 // pred_check
      _
    $region34: #{_lambda_.16} parent=5 // pred_check_branch
      %207 = sbr.rel (%p204) target = $region36
    $region35: #{_lambda_.16} parent=5 // pred_region
      %s208 = ssub.s32 %s10, 1
      %s209 = smul.u32 32, %s19
      %p210 = scmp.lt.s32.totalorder %s209, 63
      %s211 = scalar_select %p210, %s209, 63
      %s212 = smul.addr %s211, 2
      %s213 = smul.addr %s212, 4
      %s214 = scalar_lea.vmem %s0, %s213
      %p215 = pneg %p48
      %p216 = pneg %p45
      %p217 = scmp.lt.s32.totalorder %s20, 0
      %s218 = scalar_select %p217, %s20, 0
      %s219 = smul.addr %s218, 4
      %s220 = scalar_lea.vmem %s1, %s219
      %p221 = pneg %p74
      %p222 = pneg %p71
      %p223 = scmp.lt.s32.totalorder %s20, 0
      %s224 = scalar_select %p223, %s20, 0
      %s225 = scalar_lea.vmem %s2, %s224
      %p226 = pneg %p100
      %p227 = pneg %p97
      %p228 = scmp.lt.s32.totalorder %s20, 0
      %s229 = scalar_select %p228, %s20, 0
      %s230 = scalar_lea.vmem %s3, %s229
      %p231 = pneg %p126
      %p232 = pneg %p123
      %p233 = pneg %p154
      %p234 = pneg %p151
      %s235 = smul.u32 32, %s19
      %p236 = scmp.lt.s32.totalorder %s235, 63
      %s237 = scalar_select %p236, %s235, 63
      %p238 = scmp.lt.s32.totalorder %s20, 0
      %s239 = scalar_select %p238, %s20, 0
      %s240 = sadd.s32 %s239, %s237
      %s241 = smul.addr %s240, 4
      %s242 = scalar_lea.vmem %s4, %s241
      %s243 = smul.u32 32, %s19
      %p244 = scmp.lt.s32.totalorder %s243, 63
      %s245 = scalar_select %p244, %s243, 63
      %s246 = smul.addr %s245, 2
      %s247 = smul.addr %s246, 4
      %s248 = scalar_lea.vmem %s0, %s247
      %s249 = smul.u32 32, %s19
      %p250 = scmp.lt.s32.totalorder %s20, 0
      %s251 = scalar_select %p250, %s20, 0
      %s252 = smul.addr %s251, 4
      %s253 = scalar_lea.vmem %s1, %s252
      %p254 = scmp.lt.s32.totalorder %s20, 0
      %s255 = scalar_select %p254, %s20, 0
      %s256 = scalar_lea.vmem %s2, %s255
      %p257 = scmp.lt.s32.totalorder %s20, 0
      %s258 = scalar_select %p257, %s20, 0
      %s259 = scalar_lea.vmem %s3, %s258
      %s260 = smul.u32 32, %s19
      %p261 = scmp.lt.s32.totalorder %s260, 63
      %s262 = scalar_select %p261, %s260, 63
      %p263 = scmp.lt.s32.totalorder %s20, 0
      %s264 = scalar_select %p263, %s20, 0
      %s265 = sadd.s32 %s264, %s262
      %s266 = smul.addr %s265, 4
      %s267 = scalar_lea.vmem %s4, %s266
      %s268 = smul.u32 32, %s19
      %v270 = vld [vmem:[%s248] sm:$0xff]
      %v271 = vld [vmem:[%s248 + $0x8] sm:$0xff]
      %v272 = vld [vmem:[%s248 + $0x10] sm:$0xff]
      %v273 = vld [vmem:[%s248 + $0x18] sm:$0xff]
      %v274 = vld [vmem:[%s248 + $0x20] sm:$0xff]
      %v275 = vld [vmem:[%s248 + $0x28] sm:$0xff]
      %v276 = vld [vmem:[%s248 + $0x30] sm:$0xff]
      %v277 = vld [vmem:[%s248 + $0x38] sm:$0xff]
      %v278 = vld [vmem:[%s248 + $0x40] sm:$0xff]
      %v279 = vld [vmem:[%s248 + $0x48] sm:$0xff]
      %v280 = vld [vmem:[%s248 + $0x50] sm:$0xff]
      %v281 = vld [vmem:[%s248 + $0x58] sm:$0xff]
      %v282 = vld [vmem:[%s248 + $0x60] sm:$0xff]
      %v283 = vld [vmem:[%s248 + $0x68] sm:$0xff]
      %v284 = vld [vmem:[%s248 + $0x70] sm:$0xff]
      %v285 = vld [vmem:[%s248 + $0x78] sm:$0xff]
      %v286 = vld [vmem:[%s248 + $0x80] sm:$0xff]
      %v287 = vld [vmem:[%s248 + $0x88] sm:$0xff]
      %v288 = vld [vmem:[%s248 + $0x90] sm:$0xff]
      %v289 = vld [vmem:[%s248 + $0x98] sm:$0xff]
      %v290 = vld [vmem:[%s248 + $0xa0] sm:$0xff]
      %v291 = vld [vmem:[%s248 + $0xa8] sm:$0xff]
      %v292 = vld [vmem:[%s248 + $0xb0] sm:$0xff]
      %v293 = vld [vmem:[%s248 + $0xb8] sm:$0xff]
      %v294 = vld [vmem:[%s248 + $0xc0] sm:$0xff]
      %v295 = vld [vmem:[%s248 + $0xc8] sm:$0xff]
      %v296 = vld [vmem:[%s248 + $0xd0] sm:$0xff]
      %v297 = vld [vmem:[%s248 + $0xd8] sm:$0xff]
      %v298 = vld [vmem:[%s248 + $0xe0] sm:$0xff]
      %v299 = vld [vmem:[%s248 + $0xe8] sm:$0xff]
      %v300 = vld [vmem:[%s248 + $0xf0] sm:$0xff]
      %v301 = vld [vmem:[%s248 + $0xf8] sm:$0xff]
      %v302 = vld [vmem:[%s253] sm:$0xf]
      %v303 = vld [vmem:[%s253 + $0x4] sm:$0xf]
      %v304 = vld [vmem:[%s253 + $0x8] sm:$0xf]
      %v305 = vld [vmem:[%s253 + $0xc] sm:$0xf]
      %v306 = vld [vmem:[%s253 + $0x10] sm:$0xf]
      %v307 = vld [vmem:[%s253 + $0x14] sm:$0xf]
      %v308 = vld [vmem:[%s253 + $0x18] sm:$0xf]
      %v309 = vld [vmem:[%s253 + $0x1c] sm:$0xf]
      %v310 = vld [vmem:[%s253 + $0x20] sm:$0xf]
      %v311 = vld [vmem:[%s253 + $0x24] sm:$0xf]
      %v312 = vld [vmem:[%s253 + $0x28] sm:$0xf]
      %v313 = vld [vmem:[%s253 + $0x2c] sm:$0xf]
      %v314 = vld [vmem:[%s253 + $0x30] sm:$0xf]
      %v315 = vld [vmem:[%s253 + $0x34] sm:$0xf]
      %v316 = vld [vmem:[%s253 + $0x38] sm:$0xf]
      %v317 = vld [vmem:[%s253 + $0x3c] sm:$0xf]
      %v318 = vld [vmem:[%s253 + $0x40] sm:$0xf]
      %v319 = vld [vmem:[%s253 + $0x44] sm:$0xf]
      %v352 = vunpack.c.l.b16 %v270
      %v353 = vunpack.c.h.b16 %v270
      %v354 = vunpack.c.l.b16 %v271
      %v355 = vunpack.c.h.b16 %v271
      %v356 = vunpack.c.l.b16 %v272
      %v357 = vunpack.c.h.b16 %v272
      %v358 = vunpack.c.l.b16 %v273
      %v359 = vunpack.c.h.b16 %v273
      %v360 = vunpack.c.l.b16 %v274
      %v361 = vunpack.c.h.b16 %v274
      %v362 = vunpack.c.l.b16 %v275
      %v363 = vunpack.c.h.b16 %v275
      %v364 = vunpack.c.l.b16 %v276
      %v365 = vunpack.c.h.b16 %v276
      %v366 = vunpack.c.l.b16 %v277
      %v367 = vunpack.c.h.b16 %v277
      %v368 = vunpack.c.l.b16 %v278
      %v369 = vunpack.c.h.b16 %v278
      %v370 = vunpack.c.l.b16 %v279
      %v371 = vunpack.c.h.b16 %v279
      %v372 = vunpack.c.l.b16 %v280
      %v373 = vunpack.c.h.b16 %v280
      %v374 = vunpack.c.l.b16 %v281
      %v375 = vunpack.c.h.b16 %v281
      %v376 = vunpack.c.l.b16 %v282
      %v377 = vunpack.c.h.b16 %v282
      %v378 = vunpack.c.l.b16 %v283
      %v379 = vunpack.c.h.b16 %v283
      %v380 = vunpack.c.l.b16 %v284
      %v381 = vunpack.c.h.b16 %v284
      %v382 = vunpack.c.l.b16 %v285
      %v383 = vunpack.c.h.b16 %v285
      %v384 = vunpack.c.l.b16 %v286
      %v385 = vunpack.c.h.b16 %v286
      %v386 = vunpack.c.l.b16 %v287
      %v387 = vunpack.c.h.b16 %v287
      %v388 = vunpack.c.l.b16 %v288
      %v389 = vunpack.c.h.b16 %v288
      %v390 = vunpack.c.l.b16 %v289
      %v391 = vunpack.c.h.b16 %v289
      %v392 = vunpack.c.l.b16 %v290
      %v393 = vunpack.c.h.b16 %v290
      %v394 = vunpack.c.l.b16 %v291
      %v395 = vunpack.c.h.b16 %v291
      %v396 = vunpack.c.l.b16 %v292
      %v397 = vunpack.c.h.b16 %v292
      %v398 = vunpack.c.l.b16 %v293
      %v399 = vunpack.c.h.b16 %v293
      %v400 = vunpack.c.l.b16 %v294
      %v401 = vunpack.c.h.b16 %v294
      %v402 = vunpack.c.l.b16 %v295
      %v403 = vunpack.c.h.b16 %v295
      %v404 = vunpack.c.l.b16 %v296
      %v405 = vunpack.c.h.b16 %v296
      %v406 = vunpack.c.l.b16 %v297
      %v407 = vunpack.c.h.b16 %v297
      %v408 = vunpack.c.l.b16 %v298
      %v409 = vunpack.c.h.b16 %v298
      %v410 = vunpack.c.l.b16 %v299
      %v411 = vunpack.c.h.b16 %v299
      %v412 = vunpack.c.l.b16 %v300
      %v413 = vunpack.c.h.b16 %v300
      %v414 = vunpack.c.l.b16 %v301
      %v415 = vunpack.c.h.b16 %v301
      %v416 = vpack.c.b16 %v354, %v352
      %v417 = vpack.c.b16 %v355, %v353
      %v418 = vpack.c.b16 %v358, %v356
      %v419 = vpack.c.b16 %v359, %v357
      %v420 = vpack.c.b16 %v362, %v360
      %v421 = vpack.c.b16 %v363, %v361
      %v422 = vpack.c.b16 %v366, %v364
      %v423 = vpack.c.b16 %v367, %v365
      %v424 = vpack.c.b16 %v370, %v368
      %v425 = vpack.c.b16 %v371, %v369
      %v426 = vpack.c.b16 %v374, %v372
      %v427 = vpack.c.b16 %v375, %v373
      %v428 = vpack.c.b16 %v378, %v376
      %v429 = vpack.c.b16 %v379, %v377
      %v430 = vpack.c.b16 %v382, %v380
      %v431 = vpack.c.b16 %v383, %v381
      %v432 = vpack.c.b16 %v386, %v384
      %v433 = vpack.c.b16 %v387, %v385
      %v434 = vpack.c.b16 %v390, %v388
      %v435 = vpack.c.b16 %v391, %v389
      %v436 = vpack.c.b16 %v394, %v392
      %v437 = vpack.c.b16 %v395, %v393
      %v438 = vpack.c.b16 %v398, %v396
      %v439 = vpack.c.b16 %v399, %v397
      %v440 = vpack.c.b16 %v402, %v400
      %v441 = vpack.c.b16 %v403, %v401
      %v442 = vpack.c.b16 %v406, %v404
      %v443 = vpack.c.b16 %v407, %v405
      %v444 = vpack.c.b16 %v410, %v408
      %v445 = vpack.c.b16 %v411, %v409
      %v446 = vpack.c.b16 %v414, %v412
      %v447 = vpack.c.b16 %v415, %v413
      %v482 = vunpack.c.l.b16 %v302
      %v483 = vunpack.c.l.b16 %v303
      %v484 = vunpack.c.l.b16 %v304
      %v485 = vunpack.c.l.b16 %v305
      %v486 = vunpack.c.l.b16 %v306
      %v487 = vunpack.c.l.b16 %v307
      %v488 = vunpack.c.l.b16 %v308
      %v489 = vunpack.c.l.b16 %v309
      %v490 = vunpack.c.l.b16 %v310
      %v491 = vunpack.c.l.b16 %v311
      %v492 = vunpack.c.l.b16 %v312
      %v493 = vunpack.c.l.b16 %v313
      %v494 = vunpack.c.l.b16 %v314
      %v495 = vunpack.c.l.b16 %v315
      %v496 = vunpack.c.l.b16 %v316
      %v497 = vunpack.c.l.b16 %v317
      %v498 = vunpack.c.l.b16 %v318
      %v499 = vunpack.c.l.b16 %v319
      %v500 = vpack.c.b16 %v483, %v482
      %v501 = vpack.c.b16 %v485, %v484
      %v502 = vpack.c.b16 %v487, %v486
      %v503 = vpack.c.b16 %v489, %v488
      %v504 = vpack.c.b16 %v491, %v490
      %v505 = vpack.c.b16 %v493, %v492
      %v506 = vpack.c.b16 %v495, %v494
      %v507 = vpack.c.b16 %v497, %v496
      %v508 = vpack.c.b16 %v499, %v498
      %vm518 = vcmask 130048
      %v520 = vsel %vm518, %v417, 0
      %v523 = vsel %vm518, %v419, 0
      %v526 = vsel %vm518, %v421, 0
      %v529 = vsel %vm518, %v423, 0
      %v532 = vsel %vm518, %v425, 0
      %v535 = vsel %vm518, %v427, 0
      %v538 = vsel %vm518, %v429, 0
      %v541 = vsel %vm518, %v431, 0
      %v544 = vsel %vm518, %v433, 0
      %v547 = vsel %vm518, %v435, 0
      %v550 = vsel %vm518, %v437, 0
      %v553 = vsel %vm518, %v439, 0
      %v556 = vsel %vm518, %v441, 0
      %v559 = vsel %vm518, %v443, 0
      %v562 = vsel %vm518, %v445, 0
      %v565 = vsel %vm518, %v447, 0
      %567 = vmatprep.subr.bf16.mxu0 0
      %568 = vmatpush1.bf16.msra.mxu0 %v507
      %569 = vmatprep.subr.bf16.mxu0 0
      %570 = vmatpush1.bf16.msra.mxu0 %v506
      %571 = vmatprep.subr.bf16.mxu0 0
      %572 = vmatpush1.bf16.msra.mxu0 %v505
      %573 = vmatprep.subr.bf16.mxu0 0
      %574 = vmatpush1.bf16.msra.mxu0 %v504
      %575 = vmatprep.subr.bf16.mxu0 0
      %576 = vmatpush1.bf16.msra.mxu0 %v503
      %577 = vmatprep.subr.bf16.mxu0 0
      %578 = vmatpush1.bf16.msra.mxu0 %v502
      %579 = vmatprep.subr.bf16.mxu0 0
      %580 = vmatpush1.bf16.msra.mxu0 %v501
      %581 = vmatprep.subr.bf16.mxu0 0
      %582 = vmatpush1.bf16.msra.mxu0 %v500
      %583 = vmatprep.subr.bf16.mxu0 0
      %584 = vmatpush2.bf16.msra.mxu0 0
      %585 = vmatprep.subr.bf16.mxu0 0
      %586 = vmatpush2.bf16.msra.mxu0 0
      %587 = vmatprep.subr.bf16.mxu0 0
      %588 = vmatpush2.bf16.msra.mxu0 0
      %589 = vmatprep.subr.bf16.mxu0 0
      %590 = vmatpush2.bf16.msra.mxu0 0
      %591 = vmatprep.subr.bf16.mxu0 0
      %592 = vmatpush2.bf16.msra.mxu0 0
      %593 = vmatprep.subr.bf16.mxu0 0
      %594 = vmatpush2.bf16.msra.mxu0 0
      %595 = vmatprep.subr.bf16.mxu0 0
      %596 = vmatpush2.bf16.msra.mxu0 0
      %597 = vmatprep.subr.bf16.mxu0 0
      %598 = vmatpush2.bf16.msra.mxu0 %v508
      %599 = vmatprep.mubr.bf16.mxu0 %v520
      %600 = vmatmul.mubr.bf16.gmra.mxu0 %v416
      %v601 = vpop.f32.mrf.mxu0
      %v602 = vadd.f32 0.0, %v601
      %v603 = vpop.f32.mrf.mxu0
      %v604 = vpop.f32.mrf.mxu0
      %v605 = vadd.f32 0.0, %v604
      %v606 = vpop.f32.mrf.mxu0
      %607 = vmatprep.mubr.bf16.mxu0 %v523
      %608 = vmatmul.mubr.bf16.gmra.mxu0 %v418
      %v609 = vpop.f32.mrf.mxu0
      %v610 = vadd.f32 0.0, %v609
      %v611 = vpop.f32.mrf.mxu0
      %v612 = vpop.f32.mrf.mxu0
      %v613 = vadd.f32 0.0, %v612
      %v614 = vpop.f32.mrf.mxu0
      %615 = vmatprep.mubr.bf16.mxu0 %v526
      %616 = vmatmul.mubr.bf16.gmra.mxu0 %v420
      %v617 = vpop.f32.mrf.mxu0
      %v618 = vadd.f32 0.0, %v617
      %v619 = vpop.f32.mrf.mxu0
      %v620 = vpop.f32.mrf.mxu0
      %v621 = vadd.f32 0.0, %v620
      %v622 = vpop.f32.mrf.mxu0
      %623 = vmatprep.mubr.bf16.mxu0 %v529
      %624 = vmatmul.mubr.bf16.gmra.mxu0 %v422
      %v625 = vpop.f32.mrf.mxu0
      %v626 = vadd.f32 0.0, %v625
      %v627 = vpop.f32.mrf.mxu0
      %v628 = vpop.f32.mrf.mxu0
      %v629 = vadd.f32 0.0, %v628
      %v630 = vpop.f32.mrf.mxu0
      %631 = vmatprep.mubr.bf16.mxu0 %v532
      %632 = vmatmul.mubr.bf16.gmra.mxu0 %v424
      %v633 = vpop.f32.mrf.mxu0
      %v634 = vadd.f32 0.0, %v633
      %v635 = vpop.f32.mrf.mxu0
      %v636 = vpop.f32.mrf.mxu0
      %v637 = vadd.f32 0.0, %v636
      %v638 = vpop.f32.mrf.mxu0
      %639 = vmatprep.mubr.bf16.mxu0 %v535
      %640 = vmatmul.mubr.bf16.gmra.mxu0 %v426
      %v641 = vpop.f32.mrf.mxu0
      %v642 = vadd.f32 0.0, %v641
      %v643 = vpop.f32.mrf.mxu0
      %v644 = vpop.f32.mrf.mxu0
      %v645 = vadd.f32 0.0, %v644
      %v646 = vpop.f32.mrf.mxu0
      %647 = vmatprep.mubr.bf16.mxu0 %v538
      %648 = vmatmul.mubr.bf16.gmra.mxu0 %v428
      %v649 = vpop.f32.mrf.mxu0
      %v650 = vadd.f32 0.0, %v649
      %v651 = vpop.f32.mrf.mxu0
      %v652 = vpop.f32.mrf.mxu0
      %v653 = vadd.f32 0.0, %v652
      %v654 = vpop.f32.mrf.mxu0
      %655 = vmatprep.mubr.bf16.mxu0 %v541
      %656 = vmatmul.mubr.bf16.gmra.mxu0 %v430
      %v657 = vpop.f32.mrf.mxu0
      %v658 = vadd.f32 0.0, %v657
      %v659 = vpop.f32.mrf.mxu0
      %v660 = vpop.f32.mrf.mxu0
      %v661 = vadd.f32 0.0, %v660
      %v662 = vpop.f32.mrf.mxu0
      %663 = vmatprep.mubr.bf16.mxu0 %v544
      %664 = vmatmul.mubr.bf16.gmra.mxu0 %v432
      %v665 = vpop.f32.mrf.mxu0
      %v666 = vadd.f32 0.0, %v665
      %v667 = vpop.f32.mrf.mxu0
      %v668 = vpop.f32.mrf.mxu0
      %v669 = vadd.f32 0.0, %v668
      %v670 = vpop.f32.mrf.mxu0
      %671 = vmatprep.mubr.bf16.mxu0 %v547
      %672 = vmatmul.mubr.bf16.gmra.mxu0 %v434
      %v673 = vpop.f32.mrf.mxu0
      %v674 = vadd.f32 0.0, %v673
      %v675 = vpop.f32.mrf.mxu0
      %v676 = vpop.f32.mrf.mxu0
      %v677 = vadd.f32 0.0, %v676
      %v678 = vpop.f32.mrf.mxu0
      %679 = vmatprep.mubr.bf16.mxu0 %v550
      %680 = vmatmul.mubr.bf16.gmra.mxu0 %v436
      %v681 = vpop.f32.mrf.mxu0
      %v682 = vadd.f32 0.0, %v681
      %v683 = vpop.f32.mrf.mxu0
      %v684 = vpop.f32.mrf.mxu0
      %v685 = vadd.f32 0.0, %v684
      %v686 = vpop.f32.mrf.mxu0
      %687 = vmatprep.mubr.bf16.mxu0 %v553
      %688 = vmatmul.mubr.bf16.gmra.mxu0 %v438
      %v689 = vpop.f32.mrf.mxu0
      %v690 = vadd.f32 0.0, %v689
      %v691 = vpop.f32.mrf.mxu0
      %v692 = vpop.f32.mrf.mxu0
      %v693 = vadd.f32 0.0, %v692
      %v694 = vpop.f32.mrf.mxu0
      %695 = vmatprep.mubr.bf16.mxu0 %v556
      %696 = vmatmul.mubr.bf16.gmra.mxu0 %v440
      %v697 = vpop.f32.mrf.mxu0
      %v698 = vadd.f32 0.0, %v697
      %v699 = vpop.f32.mrf.mxu0
      %v700 = vpop.f32.mrf.mxu0
      %v701 = vadd.f32 0.0, %v700
      %v702 = vpop.f32.mrf.mxu0
      %703 = vmatprep.mubr.bf16.mxu0 %v559
      %704 = vmatmul.mubr.bf16.gmra.mxu0 %v442
      %v705 = vpop.f32.mrf.mxu0
      %v706 = vadd.f32 0.0, %v705
      %v707 = vpop.f32.mrf.mxu0
      %v708 = vpop.f32.mrf.mxu0
      %v709 = vadd.f32 0.0, %v708
      %v710 = vpop.f32.mrf.mxu0
      %711 = vmatprep.mubr.bf16.mxu0 %v562
      %712 = vmatmul.mubr.bf16.gmra.mxu0 %v444
      %v713 = vpop.f32.mrf.mxu0
      %v714 = vadd.f32 0.0, %v713
      %v715 = vpop.f32.mrf.mxu0
      %v716 = vpop.f32.mrf.mxu0
      %v717 = vadd.f32 0.0, %v716
      %v718 = vpop.f32.mrf.mxu0
      %719 = vmatprep.mubr.bf16.mxu0 %v565
      %720 = vmatmul.mubr.bf16.gmra.mxu0 %v446
      %v721 = vpop.f32.mrf.mxu0
      %v722 = vadd.f32 0.0, %v721
      %v723 = vpop.f32.mrf.mxu0
      %v724 = vpop.f32.mrf.mxu0
      %v725 = vadd.f32 0.0, %v724
      %v726 = vpop.f32.mrf.mxu0
      %727 = vdwg.mxu0
      %v728 = vld [vmem:[%s256] sm:$0x1]
      %v730 = vlaneseq
      %v731 = vshrl.u32 %v730, 7
      %v732 = vsub.s32 0, %v731
      %v733 = vrot.slane %v728, %v732
      %v735 = vmul.f32 %v602, %v733
      %v736 = vmul.f32 %v605, %v733
      %v737 = vmul.f32 %v610, %v733
      %v738 = vmul.f32 %v613, %v733
      %v739 = vmul.f32 %v618, %v733
      %v740 = vmul.f32 %v621, %v733
      %v741 = vmul.f32 %v626, %v733
      %v742 = vmul.f32 %v629, %v733
      %v743 = vmul.f32 %v634, %v733
      %v744 = vmul.f32 %v637, %v733
      %v745 = vmul.f32 %v642, %v733
      %v746 = vmul.f32 %v645, %v733
      %v747 = vmul.f32 %v650, %v733
      %v748 = vmul.f32 %v653, %v733
      %v749 = vmul.f32 %v658, %v733
      %v750 = vmul.f32 %v661, %v733
      %v751 = vmul.f32 %v666, %v733
      %v752 = vmul.f32 %v669, %v733
      %v753 = vmul.f32 %v674, %v733
      %v754 = vmul.f32 %v677, %v733
      %v755 = vmul.f32 %v682, %v733
      %v756 = vmul.f32 %v685, %v733
      %v757 = vmul.f32 %v690, %v733
      %v758 = vmul.f32 %v693, %v733
      %v759 = vmul.f32 %v698, %v733
      %v760 = vmul.f32 %v701, %v733
      %v761 = vmul.f32 %v706, %v733
      %v762 = vmul.f32 %v709, %v733
      %v763 = vmul.f32 %v714, %v733
      %v764 = vmul.f32 %v717, %v733
      %v765 = vmul.f32 %v722, %v733
      %v766 = vmul.f32 %v725, %v733
      %v767 = vld [vmem:[%s259] sm:$0x1]
      %v769 = vlaneseq
      %v770 = vshrl.u32 %v769, 7
      %v771 = vsub.s32 0, %v770
      %v772 = vrot.slane %v767, %v771
      %v774 = vadd.f32 %v735, %v772
      %v775 = vadd.f32 %v736, %v772
      %v776 = vadd.f32 %v737, %v772
      %v777 = vadd.f32 %v738, %v772
      %v778 = vadd.f32 %v739, %v772
      %v779 = vadd.f32 %v740, %v772
      %v780 = vadd.f32 %v741, %v772
      %v781 = vadd.f32 %v742, %v772
      %v782 = vadd.f32 %v743, %v772
      %v783 = vadd.f32 %v744, %v772
      %v784 = vadd.f32 %v745, %v772
      %v785 = vadd.f32 %v746, %v772
      %v786 = vadd.f32 %v747, %v772
      %v787 = vadd.f32 %v748, %v772
      %v788 = vadd.f32 %v749, %v772
      %v789 = vadd.f32 %v750, %v772
      %v790 = vadd.f32 %v751, %v772
      %v791 = vadd.f32 %v752, %v772
      %v792 = vadd.f32 %v753, %v772
      %v793 = vadd.f32 %v754, %v772
      %v794 = vadd.f32 %v755, %v772
      %v795 = vadd.f32 %v756, %v772
      %v796 = vadd.f32 %v757, %v772
      %v797 = vadd.f32 %v758, %v772
      %v798 = vadd.f32 %v759, %v772
      %v799 = vadd.f32 %v760, %v772
      %v800 = vadd.f32 %v761, %v772
      %v801 = vadd.f32 %v762, %v772
      %v802 = vadd.f32 %v763, %v772
      %v803 = vadd.f32 %v764, %v772
      %v804 = vadd.f32 %v765, %v772
      %v805 = vadd.f32 %v766, %v772
      %v806 = vmax.f32 %v774, 0.0
      %v807 = vmax.f32 %v775, 0.0
      %v808 = vmax.f32 %v776, 0.0
      %v809 = vmax.f32 %v777, 0.0
      %v810 = vmax.f32 %v778, 0.0
      %v811 = vmax.f32 %v779, 0.0
      %v812 = vmax.f32 %v780, 0.0
      %v813 = vmax.f32 %v781, 0.0
      %v814 = vmax.f32 %v782, 0.0
      %v815 = vmax.f32 %v783, 0.0
      %v816 = vmax.f32 %v784, 0.0
      %v817 = vmax.f32 %v785, 0.0
      %v818 = vmax.f32 %v786, 0.0
      %v819 = vmax.f32 %v787, 0.0
      %v820 = vmax.f32 %v788, 0.0
      %v821 = vmax.f32 %v789, 0.0
      %v822 = vmax.f32 %v790, 0.0
      %v823 = vmax.f32 %v791, 0.0
      %v824 = vmax.f32 %v792, 0.0
      %v825 = vmax.f32 %v793, 0.0
      %v826 = vmax.f32 %v794, 0.0
      %v827 = vmax.f32 %v795, 0.0
      %v828 = vmax.f32 %v796, 0.0
      %v829 = vmax.f32 %v797, 0.0
      %v830 = vmax.f32 %v798, 0.0
      %v831 = vmax.f32 %v799, 0.0
      %v832 = vmax.f32 %v800, 0.0
      %v833 = vmax.f32 %v801, 0.0
      %v834 = vmax.f32 %v802, 0.0
      %v835 = vmax.f32 %v803, 0.0
      %v836 = vmax.f32 %v804, 0.0
      %v837 = vmax.f32 %v805, 0.0
      %v838 = vpack.c.bf16 %v807, %v806
      %v839 = vpack.c.bf16 %v809, %v808
      %v840 = vpack.c.bf16 %v811, %v810
      %v841 = vpack.c.bf16 %v813, %v812
      %v842 = vpack.c.bf16 %v815, %v814
      %v843 = vpack.c.bf16 %v817, %v816
      %v844 = vpack.c.bf16 %v819, %v818
      %v845 = vpack.c.bf16 %v821, %v820
      %v846 = vpack.c.bf16 %v823, %v822
      %v847 = vpack.c.bf16 %v825, %v824
      %v848 = vpack.c.bf16 %v827, %v826
      %v849 = vpack.c.bf16 %v829, %v828
      %v850 = vpack.c.bf16 %v831, %v830
      %v851 = vpack.c.bf16 %v833, %v832
      %v852 = vpack.c.bf16 %v835, %v834
      %v853 = vpack.c.bf16 %v837, %v836
      %v870 = vunpack.c.l.b16 %v838
      %v871 = vunpack.c.h.b16 %v838
      %v872 = vunpack.c.l.b16 %v839
      %v873 = vunpack.c.h.b16 %v839
      %v874 = vunpack.c.l.b16 %v840
      %v875 = vunpack.c.h.b16 %v840
      %v876 = vunpack.c.l.b16 %v841
      %v877 = vunpack.c.h.b16 %v841
      %v878 = vunpack.c.l.b16 %v842
      %v879 = vunpack.c.h.b16 %v842
      %v880 = vunpack.c.l.b16 %v843
      %v881 = vunpack.c.h.b16 %v843
      %v882 = vunpack.c.l.b16 %v844
      %v883 = vunpack.c.h.b16 %v844
      %v884 = vunpack.c.l.b16 %v845
      %v885 = vunpack.c.h.b16 %v845
      %v886 = vunpack.c.l.b16 %v846
      %v887 = vunpack.c.h.b16 %v846
      %v888 = vunpack.c.l.b16 %v847
      %v889 = vunpack.c.h.b16 %v847
      %v890 = vunpack.c.l.b16 %v848
      %v891 = vunpack.c.h.b16 %v848
      %v892 = vunpack.c.l.b16 %v849
      %v893 = vunpack.c.h.b16 %v849
      %v894 = vunpack.c.l.b16 %v850
      %v895 = vunpack.c.h.b16 %v850
      %v896 = vunpack.c.l.b16 %v851
      %v897 = vunpack.c.h.b16 %v851
      %v898 = vunpack.c.l.b16 %v852
      %v899 = vunpack.c.h.b16 %v852
      %v900 = vunpack.c.l.b16 %v853
      %v901 = vunpack.c.h.b16 %v853
      %v902 = vpack.c.b16 %v870, %v870
      %v903 = vpack.c.b16 %v871, %v871
      %v904 = vpack.c.b16 %v872, %v872
      %v905 = vpack.c.b16 %v873, %v873
      %v906 = vpack.c.b16 %v874, %v874
      %v907 = vpack.c.b16 %v875, %v875
      %v908 = vpack.c.b16 %v876, %v876
      %v909 = vpack.c.b16 %v877, %v877
      %v910 = vpack.c.b16 %v878, %v878
      %v911 = vpack.c.b16 %v879, %v879
      %v912 = vpack.c.b16 %v880, %v880
      %v913 = vpack.c.b16 %v881, %v881
      %v914 = vpack.c.b16 %v882, %v882
      %v915 = vpack.c.b16 %v883, %v883
      %v916 = vpack.c.b16 %v884, %v884
      %v917 = vpack.c.b16 %v885, %v885
      %v918 = vpack.c.b16 %v886, %v886
      %v919 = vpack.c.b16 %v887, %v887
      %v920 = vpack.c.b16 %v888, %v888
      %v921 = vpack.c.b16 %v889, %v889
      %v922 = vpack.c.b16 %v890, %v890
      %v923 = vpack.c.b16 %v891, %v891
      %v924 = vpack.c.b16 %v892, %v892
      %v925 = vpack.c.b16 %v893, %v893
      %v926 = vpack.c.b16 %v894, %v894
      %v927 = vpack.c.b16 %v895, %v895
      %v928 = vpack.c.b16 %v896, %v896
      %v929 = vpack.c.b16 %v897, %v897
      %v930 = vpack.c.b16 %v898, %v898
      %v931 = vpack.c.b16 %v899, %v899
      %v932 = vpack.c.b16 %v900, %v900
      %v933 = vpack.c.b16 %v901, %v901
      %vm966 = vcmask 257024
      %967 = vst.msk [vmem:[%s267] sm:$0xf] %vm966, %v902
      %968 = vst.msk [vmem:[%s267 + $0x4] sm:$0xf] %vm966, %v903
      %969 = vst.msk [vmem:[%s267 + $0x8] sm:$0xf] %vm966, %v904
      %970 = vst.msk [vmem:[%s267 + $0xc] sm:$0xf] %vm966, %v905
      %971 = vst.msk [vmem:[%s267 + $0x10] sm:$0xf] %vm966, %v906
      %972 = vst.msk [vmem:[%s267 + $0x14] sm:$0xf] %vm966, %v907
      %973 = vst.msk [vmem:[%s267 + $0x18] sm:$0xf] %vm966, %v908
      %974 = vst.msk [vmem:[%s267 + $0x1c] sm:$0xf] %vm966, %v909
      %975 = vst.msk [vmem:[%s267 + $0x20] sm:$0xf] %vm966, %v910
      %976 = vst.msk [vmem:[%s267 + $0x24] sm:$0xf] %vm966, %v911
      %977 = vst.msk [vmem:[%s267 + $0x28] sm:$0xf] %vm966, %v912
      %978 = vst.msk [vmem:[%s267 + $0x2c] sm:$0xf] %vm966, %v913
      %979 = vst.msk [vmem:[%s267 + $0x30] sm:$0xf] %vm966, %v914
      %980 = vst.msk [vmem:[%s267 + $0x34] sm:$0xf] %vm966, %v915
      %981 = vst.msk [vmem:[%s267 + $0x38] sm:$0xf] %vm966, %v916
      %982 = vst.msk [vmem:[%s267 + $0x3c] sm:$0xf] %vm966, %v917
      %983 = vst.msk [vmem:[%s267 + $0x40] sm:$0xf] %vm966, %v918
      %984 = vst.msk [vmem:[%s267 + $0x44] sm:$0xf] %vm966, %v919
      %985 = vst.msk [vmem:[%s267 + $0x48] sm:$0xf] %vm966, %v920
      %986 = vst.msk [vmem:[%s267 + $0x4c] sm:$0xf] %vm966, %v921
      %987 = vst.msk [vmem:[%s267 + $0x50] sm:$0xf] %vm966, %v922
      %988 = vst.msk [vmem:[%s267 + $0x54] sm:$0xf] %vm966, %v923
      %989 = vst.msk [vmem:[%s267 + $0x58] sm:$0xf] %vm966, %v924
      %990 = vst.msk [vmem:[%s267 + $0x5c] sm:$0xf] %vm966, %v925
      %991 = vst.msk [vmem:[%s267 + $0x60] sm:$0xf] %vm966, %v926
      %992 = vst.msk [vmem:[%s267 + $0x64] sm:$0xf] %vm966, %v927
      %993 = vst.msk [vmem:[%s267 + $0x68] sm:$0xf] %vm966, %v928
      %994 = vst.msk [vmem:[%s267 + $0x6c] sm:$0xf] %vm966, %v929
      %995 = vst.msk [vmem:[%s267 + $0x70] sm:$0xf] %vm966, %v930
      %996 = vst.msk [vmem:[%s267 + $0x74] sm:$0xf] %vm966, %v931
      %997 = vst.msk [vmem:[%s267 + $0x78] sm:$0xf] %vm966, %v932
      %998 = vst.msk [vmem:[%s267 + $0x7c] sm:$0xf] %vm966, %v933
      %s999 = smul.u32 32, %s19
      %p1000 = scmp.lt.s32.totalorder %s999, 63
      %s1001 = scalar_select %p1000, %s999, 63
      %p1002 = scmp.lt.s32.totalorder %s20, 0
      %s1003 = scalar_select %p1002, %s20, 0
      %s1004 = sadd.s32 %s1003, %s1001
      %s1005 = smul.addr %s1004, 4
      %s1006 = scalar_lea.vmem %s4, %s1005
      // Predicated region
      $region37: #{_lambda_.16} parent=35 // pred_check
        %p1007 = pneg %p151
      $region38: #{_lambda_.16} parent=35 // pred_check_branch
        %1009 = sbr.rel (%p1007) target = $region40
      $region39: #{_lambda_.16} parent=35 // pred_region
        %s1010 = smul.u32 32, %s19
      $region40: #{_lambda_.16} parent=35 // pred_fallthru
        _
    $region36: #{_lambda_.16} parent=5 // pred_fallthru
      _
    %p1011 = scmp.le.s32.totalorder 2, %s10
    // Predicated region
    $region41: #{_lambda_.16} parent=5 // pred_check
      %p1012 = pneg %p1011
    $region42: #{_lambda_.16} parent=5 // pred_check_branch
      %1014 = sbr.rel (%p1012) target = $region44
    $region43: #{_lambda_.16} parent=5 // pred_region
      %s1015 = ssub.s32 %s10, 2
      // Predicated region
      $region45: #{_lambda_.16} parent=43 // pred_check
        %p1016 = pneg %p157
      $region46: #{_lambda_.16} parent=43 // pred_check_branch
        %1018 = sbr.rel (%p1016) target = $region48
      $region47: #{_lambda_.16} parent=43 // pred_region
        %s1019 = smul.u32 32, %s21
        %p1020 = scmp.lt.s32.totalorder %s1019, 63
        %s1021 = scalar_select %p1020, %s1019, 63
        %p1022 = scmp.lt.s32.totalorder %s22, 0
        %s1023 = scalar_select %p1022, %s22, 0
        %s1024 = sadd.s32 %s1023, %s1021
        %s1025 = smul.addr %s1024, 4
        %s1026 = scalar_lea.vmem %s4, %s1025
      $region48: #{_lambda_.16} parent=43 // pred_fallthru
        _
    $region44: #{_lambda_.16} parent=5 // pred_fallthru
      _
  $region6: #{_lambda_.16} parent=0 // loop_footer
    %s14 = sadd.s32 1, %s10
  $region7: #{_lambda_.16} parent=0 // loop_footer_branch
    %9 = sbr.rel target = $region3
  $region8: #{_lambda_.16} parent=0 // loop_exit
    _

// kernel: _lambda_.17
$region0: #{_lambda_.17}
  #allocation0 [shape = 'u32[]', space=smem, size = 0x4, offset = 0x4, fixed_abs, tag = 'smem constant byte address 0x4 - core index']
  #allocation1 [shape = 'u32[144,128]{1,0:T(1,128)}', space=vmem, size = 0x12000, scoped, tag = 'internal scratch']
  %s0 = inlined_call_operand.vmem [shape: bf16[512,16], index: 0, kind: input, shape index: {}]
  %s1 = inlined_call_operand.vmem [shape: bf16[16,32], index: 1, kind: input, shape index: {}]
  %s2 = inlined_call_operand.vmem [shape: f32[1,32], index: 2, kind: input, shape index: {}]
  %s3 = inlined_call_operand.vmem [shape: f32[1,32], index: 3, kind: input, shape index: {}]
  %s4 = inlined_call_operand.vmem [shape: f32[512,32], index: 4, kind: output, shape index: {}]
  %s5 = sld [smem:[#allocation0]]
  $region49: #{_lambda_.17} parent=0
    _
  %s7 = ssub.s32 1, %s5
  %s8 = scalar_select 0, %s7, %s5
  loop: start=0, step=1, limit=4
  $region2: #{_lambda_.17} parent=0 // loop_pre_header
    _
  $region3: #{_lambda_.17} parent=0 // loop_header
    %s10 = sphi 0, %s14
    %p11 = scmp.ge.s32.totalorder %s10, 4
    %s17 = sphi 0, %s29
    %s18 = sphi 0, %s25
    %s19 = sphi 0, %s17
    %s20 = sphi 0, %s18
    %s21 = sphi 0, %s19
    %s22 = sphi 0, %s20
    %s32 = sphi 0, %s34
    %s35 = sphi 0, %s32
    %s36 = sphi 0, %s35
    %s52 = sphi 0, %s36
    %s58 = sphi 0, %s60
    %s61 = sphi 0, %s58
    %s62 = sphi 0, %s61
    %s78 = sphi 0, %s62
    %s84 = sphi 0, %s86
    %s87 = sphi 0, %s84
    %s88 = sphi 0, %s87
    %s104 = sphi 0, %s88
    %s110 = sphi 0, %s112
    %s113 = sphi 0, %s110
    %s114 = sphi 0, %s113
    %s130 = sphi 0, %s114
    %s138 = sphi 0, %s140
    %s141 = sphi 0, %s138
    %s142 = sphi 0, %s141
    %s158 = sphi 0, %s142
  $region4: #{_lambda_.17} parent=0 // loop_header_branch
    %13 = sbr.rel (%p11) target = $region8
  $region5: #{_lambda_.17} parent=0 // loop_body
    %s15 = ssub.s32 %s10, 1
    %s16 = ssub.s32 %s10, 2
    %s23 = sadd.s32 1, %s18
    %p24 = scmp.ge.s32.totalorder %s23, 1
    %s25 = scalar_select %p24, 0, %s23
    %s26 = sadd.s32 1, %s17
    %s27 = scalar_select %p24, %s26, %s17
    %p28 = scmp.ge.s32.totalorder %s27, 2
    %s29 = scalar_select %p28, 0, %s27
    %s30 = ssub.s32 %s17, %s29
    %p31 = scmp.eq.s32.totalorder %s30, 0
    %s33 = sadd.s32 %s32, 1
    %s34 = scalar_select %p31, %s32, %s33
    %p37 = pneg %p31
    %p38 = scmp.eq.s32.totalorder %s10, 1
    %p39 = por %p37, %p38
    %p40 = scmp.ne.s32.totalorder %s32, %s35
    %p41 = scmp.eq.s32.totalorder %s10, 0
    %p42 = por %p40, %p41
    %p43 = scmp.ne.s32.totalorder %s32, %s35
    %p44 = scmp.eq.s32.totalorder %s15, 1
    %p45 = por %p43, %p44
    %p46 = scmp.ne.s32.totalorder %s35, %s36
    %p47 = scmp.eq.s32.totalorder %s15, 0
    %p48 = por %p46, %p47
    %p49 = scmp.ne.s32.totalorder %s35, %s36
    %p50 = scmp.eq.s32.totalorder %s16, 1
    %p51 = por %p49, %p50
    %p53 = scmp.ne.s32.totalorder %s36, %s52
    %p54 = scmp.eq.s32.totalorder %s16, 0
    %p55 = por %p53, %p54
    %s56 = ssub.s32 %s18, %s25
    %p57 = scmp.eq.s32.totalorder %s56, 0
    %s59 = sadd.s32 %s58, 1
    %s60 = scalar_select %p57, %s58, %s59
    %p63 = pneg %p57
    %p64 = scmp.eq.s32.totalorder %s10, 1
    %p65 = por %p63, %p64
    %p66 = scmp.ne.s32.totalorder %s58, %s61
    %p67 = scmp.eq.s32.totalorder %s10, 0
    %p68 = por %p66, %p67
    %p69 = scmp.ne.s32.totalorder %s58, %s61
    %p70 = scmp.eq.s32.totalorder %s15, 1
    %p71 = por %p69, %p70
    %p72 = scmp.ne.s32.totalorder %s61, %s62
    %p73 = scmp.eq.s32.totalorder %s15, 0
    %p74 = por %p72, %p73
    %p75 = scmp.ne.s32.totalorder %s61, %s62
    %p76 = scmp.eq.s32.totalorder %s16, 1
    %p77 = por %p75, %p76
    %p79 = scmp.ne.s32.totalorder %s62, %s78
    %p80 = scmp.eq.s32.totalorder %s16, 0
    %p81 = por %p79, %p80
    %s82 = ssub.s32 %s18, %s25
    %p83 = scmp.eq.s32.totalorder %s82, 0
    %s85 = sadd.s32 %s84, 1
    %s86 = scalar_select %p83, %s84, %s85
    %p89 = pneg %p83
    %p90 = scmp.eq.s32.totalorder %s10, 1
    %p91 = por %p89, %p90
    %p92 = scmp.ne.s32.totalorder %s84, %s87
    %p93 = scmp.eq.s32.totalorder %s10, 0
    %p94 = por %p92, %p93
    %p95 = scmp.ne.s32.totalorder %s84, %s87
    %p96 = scmp.eq.s32.totalorder %s15, 1
    %p97 = por %p95, %p96
    %p98 = scmp.ne.s32.totalorder %s87, %s88
    %p99 = scmp.eq.s32.totalorder %s15, 0
    %p100 = por %p98, %p99
    %p101 = scmp.ne.s32.totalorder %s87, %s88
    %p102 = scmp.eq.s32.totalorder %s16, 1
    %p103 = por %p101, %p102
    %p105 = scmp.ne.s32.totalorder %s88, %s104
    %p106 = scmp.eq.s32.totalorder %s16, 0
    %p107 = por %p105, %p106
    %s108 = ssub.s32 %s18, %s25
    %p109 = scmp.eq.s32.totalorder %s108, 0
    %s111 = sadd.s32 %s110, 1
    %s112 = scalar_select %p109, %s110, %s111
    %p115 = pneg %p109
    %p116 = scmp.eq.s32.totalorder %s10, 1
    %p117 = por %p115, %p116
    %p118 = scmp.ne.s32.totalorder %s110, %s113
    %p119 = scmp.eq.s32.totalorder %s10, 0
    %p120 = por %p118, %p119
    %p121 = scmp.ne.s32.totalorder %s110, %s113
    %p122 = scmp.eq.s32.totalorder %s15, 1
    %p123 = por %p121, %p122
    %p124 = scmp.ne.s32.totalorder %s113, %s114
    %p125 = scmp.eq.s32.totalorder %s15, 0
    %p126 = por %p124, %p125
    %p127 = scmp.ne.s32.totalorder %s113, %s114
    %p128 = scmp.eq.s32.totalorder %s16, 1
    %p129 = por %p127, %p128
    %p131 = scmp.ne.s32.totalorder %s114, %s130
    %p132 = scmp.eq.s32.totalorder %s16, 0
    %p133 = por %p131, %p132
    %s134 = ssub.s32 %s17, %s29
    %s135 = ssub.s32 %s18, %s25
    %s136 = sor.u32 %s134, %s135
    %p137 = scmp.eq.s32.totalorder %s136, 0
    %s139 = sadd.s32 %s138, 1
    %s140 = scalar_select %p137, %s138, %s139
    %p143 = pneg %p137
    %p144 = scmp.eq.s32.totalorder %s10, 1
    %p145 = por %p143, %p144
    %p146 = scmp.ne.s32.totalorder %s138, %s141
    %p147 = scmp.eq.s32.totalorder %s10, 0
    %p148 = por %p146, %p147
    %p149 = scmp.ne.s32.totalorder %s138, %s141
    %p150 = scmp.eq.s32.totalorder %s15, 1
    %p151 = por %p149, %p150
    %p152 = scmp.ne.s32.totalorder %s141, %s142
    %p153 = scmp.eq.s32.totalorder %s15, 0
    %p154 = por %p152, %p153
    %p155 = scmp.ne.s32.totalorder %s141, %s142
    %p156 = scmp.eq.s32.totalorder %s16, 1
    %p157 = por %p155, %p156
    %p159 = scmp.ne.s32.totalorder %s142, %s158
    %p160 = scmp.eq.s32.totalorder %s16, 0
    %p161 = por %p159, %p160
    %p162 = scmp.le.s32.totalorder 1, %s10
    %p163 = scmp.lt.s32.totalorder %s10, 3
    %p164 = pnand %p162, %p163
    %p165 = pneg %p164
    // Predicated region
    $region9: #{_lambda_.17} parent=5 // pred_check
      _
    $region10: #{_lambda_.17} parent=5 // pred_check_branch
      %167 = sbr.rel (%p164) target = $region12
    $region11: #{_lambda_.17} parent=5 // pred_region
      %s168 = ssub.s32 %s10, 1
      // Predicated region
      $region13: #{_lambda_.17} parent=11 // pred_check
        %p169 = pneg %p74
      $region14: #{_lambda_.17} parent=11 // pred_check_branch
        %171 = sbr.rel (%p169) target = $region16
      $region15: #{_lambda_.17} parent=11 // pred_region
        %p172 = scmp.lt.s32.totalorder %s20, 0
        %s173 = scalar_select %p172, %s20, 0
        %s174 = smul.addr %s173, 4
        %s175 = scalar_lea.vmem %s1, %s174
      $region16: #{_lambda_.17} parent=11 // pred_fallthru
        _
      // Predicated region
      $region17: #{_lambda_.17} parent=11 // pred_check
        %p176 = pneg %p100
      $region18: #{_lambda_.17} parent=11 // pred_check_branch
        %178 = sbr.rel (%p176) target = $region20
      $region19: #{_lambda_.17} parent=11 // pred_region
        %p179 = scmp.lt.s32.totalorder %s20, 0
        %s180 = scalar_select %p179, %s20, 0
        %s181 = scalar_lea.vmem %s2, %s180
      $region20: #{_lambda_.17} parent=11 // pred_fallthru
        _
      // Predicated region
      $region21: #{_lambda_.17} parent=11 // pred_check
        %p182 = pneg %p126
      $region22: #{_lambda_.17} parent=11 // pred_check_branch
        %184 = sbr.rel (%p182) target = $region24
      $region23: #{_lambda_.17} parent=11 // pred_region
        %p185 = scmp.lt.s32.totalorder %s20, 0
        %s186 = scalar_select %p185, %s20, 0
        %s187 = scalar_lea.vmem %s3, %s186
      $region24: #{_lambda_.17} parent=11 // pred_fallthru
        _
    $region12: #{_lambda_.17} parent=5 // pred_fallthru
      _
    %p188 = scmp.lt.s32.totalorder %s10, 2
    // Predicated region
    $region25: #{_lambda_.17} parent=5 // pred_check
      %p189 = pneg %p188
    $region26: #{_lambda_.17} parent=5 // pred_check_branch
      %191 = sbr.rel (%p189) target = $region28
    $region27: #{_lambda_.17} parent=5 // pred_region
      // Predicated region
      $region29: #{_lambda_.17} parent=27 // pred_check
        %p192 = pneg %p42
      $region30: #{_lambda_.17} parent=27 // pred_check_branch
        %194 = sbr.rel (%p192) target = $region32
      $region31: #{_lambda_.17} parent=27 // pred_region
        %s195 = smul.u32 32, %s17
        %p196 = scmp.lt.s32.totalorder %s195, 63
        %s197 = scalar_select %p196, %s195, 63
        %s198 = smul.addr %s197, 4
        %s199 = scalar_lea.vmem %s0, %s198
        %s200 = smul.u32 32, %s17
      $region32: #{_lambda_.17} parent=27 // pred_fallthru
        _
    $region28: #{_lambda_.17} parent=5 // pred_fallthru
      _
    %p201 = scmp.le.s32.totalorder 1, %s10
    %p202 = scmp.lt.s32.totalorder %s10, 3
    %p203 = pnand %p201, %p202
    %p204 = pneg %p203
    // Predicated region
    $region33: #{_lambda_.17} parent=5 // pred_check
      _
    $region34: #{_lambda_.17} parent=5 // pred_check_branch
      %206 = sbr.rel (%p203) target = $region36
    $region35: #{_lambda_.17} parent=5 // pred_region
      %s207 = ssub.s32 %s10, 1
      %s208 = smul.u32 32, %s19
      %p209 = scmp.lt.s32.totalorder %s208, 63
      %s210 = scalar_select %p209, %s208, 63
      %s211 = smul.addr %s210, 4
      %s212 = scalar_lea.vmem %s0, %s211
      %p213 = pneg %p48
      %p214 = pneg %p45
      %p215 = scmp.lt.s32.totalorder %s20, 0
      %s216 = scalar_select %p215, %s20, 0
      %s217 = smul.addr %s216, 4
      %s218 = scalar_lea.vmem %s1, %s217
      %p219 = pneg %p74
      %p220 = pneg %p71
      %p221 = scmp.lt.s32.totalorder %s20, 0
      %s222 = scalar_select %p221, %s20, 0
      %s223 = scalar_lea.vmem %s2, %s222
      %p224 = pneg %p100
      %p225 = pneg %p97
      %p226 = scmp.lt.s32.totalorder %s20, 0
      %s227 = scalar_select %p226, %s20, 0
      %s228 = scalar_lea.vmem %s3, %s227
      %p229 = pneg %p126
      %p230 = pneg %p123
      %p231 = pneg %p154
      %p232 = pneg %p151
      %s233 = smul.u32 32, %s19
      %p234 = scmp.lt.s32.totalorder %s233, 63
      %s235 = scalar_select %p234, %s233, 63
      %p236 = scmp.lt.s32.totalorder %s20, 0
      %s237 = scalar_select %p236, %s20, 0
      %s238 = sadd.s32 %s237, %s235
      %s239 = smul.addr %s238, 8
      %s240 = scalar_lea.vmem %s4, %s239
      %s241 = smul.u32 32, %s19
      %p242 = scmp.lt.s32.totalorder %s241, 63
      %s243 = scalar_select %p242, %s241, 63
      %s244 = smul.addr %s243, 4
      %s245 = scalar_lea.vmem %s0, %s244
      %s246 = smul.u32 32, %s19
      %p247 = scmp.lt.s32.totalorder %s20, 0
      %s248 = scalar_select %p247, %s20, 0
      %s249 = smul.addr %s248, 4
      %s250 = scalar_lea.vmem %s1, %s249
      %p251 = scmp.lt.s32.totalorder %s20, 0
      %s252 = scalar_select %p251, %s20, 0
      %s253 = scalar_lea.vmem %s2, %s252
      %p254 = scmp.lt.s32.totalorder %s20, 0
      %s255 = scalar_select %p254, %s20, 0
      %s256 = scalar_lea.vmem %s3, %s255
      %s257 = smul.u32 32, %s19
      %p258 = scmp.lt.s32.totalorder %s257, 63
      %s259 = scalar_select %p258, %s257, 63
      %p260 = scmp.lt.s32.totalorder %s20, 0
      %s261 = scalar_select %p260, %s20, 0
      %s262 = sadd.s32 %s261, %s259
      %s263 = smul.addr %s262, 8
      %s264 = scalar_lea.vmem %s4, %s263
      %s265 = smul.u32 32, %s19
      %v267 = vld [vmem:[%s245] sm:$0xf]
      %v268 = vld [vmem:[%s245 + $0x4] sm:$0xf]
      %v269 = vld [vmem:[%s245 + $0x8] sm:$0xf]
      %v270 = vld [vmem:[%s245 + $0xc] sm:$0xf]
      %v271 = vld [vmem:[%s245 + $0x10] sm:$0xf]
      %v272 = vld [vmem:[%s245 + $0x14] sm:$0xf]
      %v273 = vld [vmem:[%s245 + $0x18] sm:$0xf]
      %v274 = vld [vmem:[%s245 + $0x1c] sm:$0xf]
      %v275 = vld [vmem:[%s245 + $0x20] sm:$0xf]
      %v276 = vld [vmem:[%s245 + $0x24] sm:$0xf]
      %v277 = vld [vmem:[%s245 + $0x28] sm:$0xf]
      %v278 = vld [vmem:[%s245 + $0x2c] sm:$0xf]
      %v279 = vld [vmem:[%s245 + $0x30] sm:$0xf]
      %v280 = vld [vmem:[%s245 + $0x34] sm:$0xf]
      %v281 = vld [vmem:[%s245 + $0x38] sm:$0xf]
      %v282 = vld [vmem:[%s245 + $0x3c] sm:$0xf]
      %v283 = vld [vmem:[%s245 + $0x40] sm:$0xf]
      %v284 = vld [vmem:[%s245 + $0x44] sm:$0xf]
      %v285 = vld [vmem:[%s245 + $0x48] sm:$0xf]
      %v286 = vld [vmem:[%s245 + $0x4c] sm:$0xf]
      %v287 = vld [vmem:[%s245 + $0x50] sm:$0xf]
      %v288 = vld [vmem:[%s245 + $0x54] sm:$0xf]
      %v289 = vld [vmem:[%s245 + $0x58] sm:$0xf]
      %v290 = vld [vmem:[%s245 + $0x5c] sm:$0xf]
      %v291 = vld [vmem:[%s245 + $0x60] sm:$0xf]
      %v292 = vld [vmem:[%s245 + $0x64] sm:$0xf]
      %v293 = vld [vmem:[%s245 + $0x68] sm:$0xf]
      %v294 = vld [vmem:[%s245 + $0x6c] sm:$0xf]
      %v295 = vld [vmem:[%s245 + $0x70] sm:$0xf]
      %v296 = vld [vmem:[%s245 + $0x74] sm:$0xf]
      %v297 = vld [vmem:[%s245 + $0x78] sm:$0xf]
      %v298 = vld [vmem:[%s245 + $0x7c] sm:$0xf]
      %v299 = vld [vmem:[%s250] sm:$0xf]
      %v300 = vld [vmem:[%s250 + $0x4] sm:$0xf]
      %v333 = vunpack.c.l.b16 %v267
      %v334 = vunpack.c.l.b16 %v268
      %v335 = vunpack.c.l.b16 %v269
      %v336 = vunpack.c.l.b16 %v270
      %v337 = vunpack.c.l.b16 %v271
      %v338 = vunpack.c.l.b16 %v272
      %v339 = vunpack.c.l.b16 %v273
      %v340 = vunpack.c.l.b16 %v274
      %v341 = vunpack.c.l.b16 %v275
      %v342 = vunpack.c.l.b16 %v276
      %v343 = vunpack.c.l.b16 %v277
      %v344 = vunpack.c.l.b16 %v278
      %v345 = vunpack.c.l.b16 %v279
      %v346 = vunpack.c.l.b16 %v280
      %v347 = vunpack.c.l.b16 %v281
      %v348 = vunpack.c.l.b16 %v282
      %v349 = vunpack.c.l.b16 %v283
      %v350 = vunpack.c.l.b16 %v284
      %v351 = vunpack.c.l.b16 %v285
      %v352 = vunpack.c.l.b16 %v286
      %v353 = vunpack.c.l.b16 %v287
      %v354 = vunpack.c.l.b16 %v288
      %v355 = vunpack.c.l.b16 %v289
      %v356 = vunpack.c.l.b16 %v290
      %v357 = vunpack.c.l.b16 %v291
      %v358 = vunpack.c.l.b16 %v292
      %v359 = vunpack.c.l.b16 %v293
      %v360 = vunpack.c.l.b16 %v294
      %v361 = vunpack.c.l.b16 %v295
      %v362 = vunpack.c.l.b16 %v296
      %v363 = vunpack.c.l.b16 %v297
      %v364 = vunpack.c.l.b16 %v298
      %v365 = vpack.c.b16 %v334, %v333
      %v366 = vpack.c.b16 %v336, %v335
      %v367 = vpack.c.b16 %v338, %v337
      %v368 = vpack.c.b16 %v340, %v339
      %v369 = vpack.c.b16 %v342, %v341
      %v370 = vpack.c.b16 %v344, %v343
      %v371 = vpack.c.b16 %v346, %v345
      %v372 = vpack.c.b16 %v348, %v347
      %v373 = vpack.c.b16 %v350, %v349
      %v374 = vpack.c.b16 %v352, %v351
      %v375 = vpack.c.b16 %v354, %v353
      %v376 = vpack.c.b16 %v356, %v355
      %v377 = vpack.c.b16 %v358, %v357
      %v378 = vpack.c.b16 %v360, %v359
      %v379 = vpack.c.b16 %v362, %v361
      %v380 = vpack.c.b16 %v364, %v363
      %v383 = vunpack.c.l.b16 %v299
      %v384 = vunpack.c.l.b16 %v300
      %v385 = vpack.c.b16 %v384, %v383
      %vm387 = vcmask 130048
      %v389 = vsel %vm387, %v365, 0
      %v392 = vsel %vm387, %v366, 0
      %v395 = vsel %vm387, %v367, 0
      %v398 = vsel %vm387, %v368, 0
      %v401 = vsel %vm387, %v369, 0
      %v404 = vsel %vm387, %v370, 0
      %v407 = vsel %vm387, %v371, 0
      %v410 = vsel %vm387, %v372, 0
      %v413 = vsel %vm387, %v373, 0
      %v416 = vsel %vm387, %v374, 0
      %v419 = vsel %vm387, %v375, 0
      %v422 = vsel %vm387, %v376, 0
      %v425 = vsel %vm387, %v377, 0
      %v428 = vsel %vm387, %v378, 0
      %v431 = vsel %vm387, %v379, 0
      %v434 = vsel %vm387, %v380, 0
      %436 = vmatprep.subr.bf16.mxu0 0
      %437 = vmatpush1.bf16.msra.mxu0 0
      %438 = vmatprep.subr.bf16.mxu0 0
      %439 = vmatpush1.bf16.msra.mxu0 0
      %440 = vmatprep.subr.bf16.mxu0 0
      %441 = vmatpush1.bf16.msra.mxu0 0
      %442 = vmatprep.subr.bf16.mxu0 0
      %443 = vmatpush1.bf16.msra.mxu0 0
      %444 = vmatprep.subr.bf16.mxu0 0
      %445 = vmatpush1.bf16.msra.mxu0 0
      %446 = vmatprep.subr.bf16.mxu0 0
      %447 = vmatpush1.bf16.msra.mxu0 0
      %448 = vmatprep.subr.bf16.mxu0 0
      %449 = vmatpush1.bf16.msra.mxu0 0
      %450 = vmatprep.subr.bf16.mxu0 0
      %451 = vmatpush1.bf16.msra.mxu0 %v385
      %452 = vmatprep.subr.bf16.mxu0 0
      %453 = vmatpush2.bf16.msra.mxu0 0
      %454 = vmatprep.subr.bf16.mxu0 0
      %455 = vmatpush2.bf16.msra.mxu0 0
      %456 = vmatprep.subr.bf16.mxu0 0
      %457 = vmatpush2.bf16.msra.mxu0 0
      %458 = vmatprep.subr.bf16.mxu0 0
      %459 = vmatpush2.bf16.msra.mxu0 0
      %460 = vmatprep.subr.bf16.mxu0 0
      %461 = vmatpush2.bf16.msra.mxu0 0
      %462 = vmatprep.subr.bf16.mxu0 0
      %463 = vmatpush2.bf16.msra.mxu0 0
      %464 = vmatprep.subr.bf16.mxu0 0
      %465 = vmatpush2.bf16.msra.mxu0 0
      %466 = vmatprep.subr.bf16.mxu0 0
      %467 = vmatpush2.bf16.msra.mxu0 0
      %468 = vmatprep.mubr.bf16.mxu0 0
      %469 = vmatmul.mubr.bf16.gmra.mxu0 %v389
      %v470 = vpop.f32.mrf.mxu0
      %v471 = vadd.f32 0.0, %v470
      %v472 = vpop.f32.mrf.mxu0
      %v473 = vpop.f32.mrf.mxu0
      %v474 = vadd.f32 0.0, %v473
      %v475 = vpop.f32.mrf.mxu0
      %476 = vmatprep.mubr.bf16.mxu0 0
      %477 = vmatmul.mubr.bf16.gmra.mxu0 %v392
      %v478 = vpop.f32.mrf.mxu0
      %v479 = vadd.f32 0.0, %v478
      %v480 = vpop.f32.mrf.mxu0
      %v481 = vpop.f32.mrf.mxu0
      %v482 = vadd.f32 0.0, %v481
      %v483 = vpop.f32.mrf.mxu0
      %484 = vmatprep.mubr.bf16.mxu0 0
      %485 = vmatmul.mubr.bf16.gmra.mxu0 %v395
      %v486 = vpop.f32.mrf.mxu0
      %v487 = vadd.f32 0.0, %v486
      %v488 = vpop.f32.mrf.mxu0
      %v489 = vpop.f32.mrf.mxu0
      %v490 = vadd.f32 0.0, %v489
      %v491 = vpop.f32.mrf.mxu0
      %492 = vmatprep.mubr.bf16.mxu0 0
      %493 = vmatmul.mubr.bf16.gmra.mxu0 %v398
      %v494 = vpop.f32.mrf.mxu0
      %v495 = vadd.f32 0.0, %v494
      %v496 = vpop.f32.mrf.mxu0
      %v497 = vpop.f32.mrf.mxu0
      %v498 = vadd.f32 0.0, %v497
      %v499 = vpop.f32.mrf.mxu0
      %500 = vmatprep.mubr.bf16.mxu0 0
      %501 = vmatmul.mubr.bf16.gmra.mxu0 %v401
      %v502 = vpop.f32.mrf.mxu0
      %v503 = vadd.f32 0.0, %v502
      %v504 = vpop.f32.mrf.mxu0
      %v505 = vpop.f32.mrf.mxu0
      %v506 = vadd.f32 0.0, %v505
      %v507 = vpop.f32.mrf.mxu0
      %508 = vmatprep.mubr.bf16.mxu0 0
      %509 = vmatmul.mubr.bf16.gmra.mxu0 %v404
      %v510 = vpop.f32.mrf.mxu0
      %v511 = vadd.f32 0.0, %v510
      %v512 = vpop.f32.mrf.mxu0
      %v513 = vpop.f32.mrf.mxu0
      %v514 = vadd.f32 0.0, %v513
      %v515 = vpop.f32.mrf.mxu0
      %516 = vmatprep.mubr.bf16.mxu0 0
      %517 = vmatmul.mubr.bf16.gmra.mxu0 %v407
      %v518 = vpop.f32.mrf.mxu0
      %v519 = vadd.f32 0.0, %v518
      %v520 = vpop.f32.mrf.mxu0
      %v521 = vpop.f32.mrf.mxu0
      %v522 = vadd.f32 0.0, %v521
      %v523 = vpop.f32.mrf.mxu0
      %524 = vmatprep.mubr.bf16.mxu0 0
      %525 = vmatmul.mubr.bf16.gmra.mxu0 %v410
      %v526 = vpop.f32.mrf.mxu0
      %v527 = vadd.f32 0.0, %v526
      %v528 = vpop.f32.mrf.mxu0
      %v529 = vpop.f32.mrf.mxu0
      %v530 = vadd.f32 0.0, %v529
      %v531 = vpop.f32.mrf.mxu0
      %532 = vmatprep.mubr.bf16.mxu0 0
      %533 = vmatmul.mubr.bf16.gmra.mxu0 %v413
      %v534 = vpop.f32.mrf.mxu0
      %v535 = vadd.f32 0.0, %v534
      %v536 = vpop.f32.mrf.mxu0
      %v537 = vpop.f32.mrf.mxu0
      %v538 = vadd.f32 0.0, %v537
      %v539 = vpop.f32.mrf.mxu0
      %540 = vmatprep.mubr.bf16.mxu0 0
      %541 = vmatmul.mubr.bf16.gmra.mxu0 %v416
      %v542 = vpop.f32.mrf.mxu0
      %v543 = vadd.f32 0.0, %v542
      %v544 = vpop.f32.mrf.mxu0
      %v545 = vpop.f32.mrf.mxu0
      %v546 = vadd.f32 0.0, %v545
      %v547 = vpop.f32.mrf.mxu0
      %548 = vmatprep.mubr.bf16.mxu0 0
      %549 = vmatmul.mubr.bf16.gmra.mxu0 %v419
      %v550 = vpop.f32.mrf.mxu0
      %v551 = vadd.f32 0.0, %v550
      %v552 = vpop.f32.mrf.mxu0
      %v553 = vpop.f32.mrf.mxu0
      %v554 = vadd.f32 0.0, %v553
      %v555 = vpop.f32.mrf.mxu0
      %556 = vmatprep.mubr.bf16.mxu0 0
      %557 = vmatmul.mubr.bf16.gmra.mxu0 %v422
      %v558 = vpop.f32.mrf.mxu0
      %v559 = vadd.f32 0.0, %v558
      %v560 = vpop.f32.mrf.mxu0
      %v561 = vpop.f32.mrf.mxu0
      %v562 = vadd.f32 0.0, %v561
      %v563 = vpop.f32.mrf.mxu0
      %564 = vmatprep.mubr.bf16.mxu0 0
      %565 = vmatmul.mubr.bf16.gmra.mxu0 %v425
      %v566 = vpop.f32.mrf.mxu0
      %v567 = vadd.f32 0.0, %v566
      %v568 = vpop.f32.mrf.mxu0
      %v569 = vpop.f32.mrf.mxu0
      %v570 = vadd.f32 0.0, %v569
      %v571 = vpop.f32.mrf.mxu0
      %572 = vmatprep.mubr.bf16.mxu0 0
      %573 = vmatmul.mubr.bf16.gmra.mxu0 %v428
      %v574 = vpop.f32.mrf.mxu0
      %v575 = vadd.f32 0.0, %v574
      %v576 = vpop.f32.mrf.mxu0
      %v577 = vpop.f32.mrf.mxu0
      %v578 = vadd.f32 0.0, %v577
      %v579 = vpop.f32.mrf.mxu0
      %580 = vmatprep.mubr.bf16.mxu0 0
      %581 = vmatmul.mubr.bf16.gmra.mxu0 %v431
      %v582 = vpop.f32.mrf.mxu0
      %v583 = vadd.f32 0.0, %v582
      %v584 = vpop.f32.mrf.mxu0
      %v585 = vpop.f32.mrf.mxu0
      %v586 = vadd.f32 0.0, %v585
      %v587 = vpop.f32.mrf.mxu0
      %588 = vmatprep.mubr.bf16.mxu0 0
      %589 = vmatmul.mubr.bf16.gmra.mxu0 %v434
      %v590 = vpop.f32.mrf.mxu0
      %v591 = vadd.f32 0.0, %v590
      %v592 = vpop.f32.mrf.mxu0
      %v593 = vpop.f32.mrf.mxu0
      %v594 = vadd.f32 0.0, %v593
      %v595 = vpop.f32.mrf.mxu0
      %596 = vdwg.mxu0
      %v597 = vld [vmem:[%s253] sm:$0x1]
      %v599 = vlaneseq
      %v600 = vshrl.u32 %v599, 7
      %v601 = vsub.s32 0, %v600
      %v602 = vrot.slane %v597, %v601
      %v604 = vmul.f32 %v471, %v602
      %v605 = vmul.f32 %v474, %v602
      %v606 = vmul.f32 %v479, %v602
      %v607 = vmul.f32 %v482, %v602
      %v608 = vmul.f32 %v487, %v602
      %v609 = vmul.f32 %v490, %v602
      %v610 = vmul.f32 %v495, %v602
      %v611 = vmul.f32 %v498, %v602
      %v612 = vmul.f32 %v503, %v602
      %v613 = vmul.f32 %v506, %v602
      %v614 = vmul.f32 %v511, %v602
      %v615 = vmul.f32 %v514, %v602
      %v616 = vmul.f32 %v519, %v602
      %v617 = vmul.f32 %v522, %v602
      %v618 = vmul.f32 %v527, %v602
      %v619 = vmul.f32 %v530, %v602
      %v620 = vmul.f32 %v535, %v602
      %v621 = vmul.f32 %v538, %v602
      %v622 = vmul.f32 %v543, %v602
      %v623 = vmul.f32 %v546, %v602
      %v624 = vmul.f32 %v551, %v602
      %v625 = vmul.f32 %v554, %v602
      %v626 = vmul.f32 %v559, %v602
      %v627 = vmul.f32 %v562, %v602
      %v628 = vmul.f32 %v567, %v602
      %v629 = vmul.f32 %v570, %v602
      %v630 = vmul.f32 %v575, %v602
      %v631 = vmul.f32 %v578, %v602
      %v632 = vmul.f32 %v583, %v602
      %v633 = vmul.f32 %v586, %v602
      %v634 = vmul.f32 %v591, %v602
      %v635 = vmul.f32 %v594, %v602
      %v636 = vld [vmem:[%s256] sm:$0x1]
      %v638 = vlaneseq
      %v639 = vshrl.u32 %v638, 7
      %v640 = vsub.s32 0, %v639
      %v641 = vrot.slane %v636, %v640
      %v643 = vadd.f32 %v604, %v641
      %v644 = vadd.f32 %v605, %v641
      %v645 = vadd.f32 %v606, %v641
      %v646 = vadd.f32 %v607, %v641
      %v647 = vadd.f32 %v608, %v641
      %v648 = vadd.f32 %v609, %v641
      %v649 = vadd.f32 %v610, %v641
      %v650 = vadd.f32 %v611, %v641
      %v651 = vadd.f32 %v612, %v641
      %v652 = vadd.f32 %v613, %v641
      %v653 = vadd.f32 %v614, %v641
      %v654 = vadd.f32 %v615, %v641
      %v655 = vadd.f32 %v616, %v641
      %v656 = vadd.f32 %v617, %v641
      %v657 = vadd.f32 %v618, %v641
      %v658 = vadd.f32 %v619, %v641
      %v659 = vadd.f32 %v620, %v641
      %v660 = vadd.f32 %v621, %v641
      %v661 = vadd.f32 %v622, %v641
      %v662 = vadd.f32 %v623, %v641
      %v663 = vadd.f32 %v624, %v641
      %v664 = vadd.f32 %v625, %v641
      %v665 = vadd.f32 %v626, %v641
      %v666 = vadd.f32 %v627, %v641
      %v667 = vadd.f32 %v628, %v641
      %v668 = vadd.f32 %v629, %v641
      %v669 = vadd.f32 %v630, %v641
      %v670 = vadd.f32 %v631, %v641
      %v671 = vadd.f32 %v632, %v641
      %v672 = vadd.f32 %v633, %v641
      %v673 = vadd.f32 %v634, %v641
      %v674 = vadd.f32 %v635, %v641
      %vm675 = vcmask 261120
      %676 = vst.msk [vmem:[%s264] sm:$0xff] %vm675, %v643
      %677 = vst.msk [vmem:[%s264 + $0x8] sm:$0xff] %vm675, %v644
      %678 = vst.msk [vmem:[%s264 + $0x10] sm:$0xff] %vm675, %v645
      %679 = vst.msk [vmem:[%s264 + $0x18] sm:$0xff] %vm675, %v646
      %680 = vst.msk [vmem:[%s264 + $0x20] sm:$0xff] %vm675, %v647
      %681 = vst.msk [vmem:[%s264 + $0x28] sm:$0xff] %vm675, %v648
      %682 = vst.msk [vmem:[%s264 + $0x30] sm:$0xff] %vm675, %v649
      %683 = vst.msk [vmem:[%s264 + $0x38] sm:$0xff] %vm675, %v650
      %684 = vst.msk [vmem:[%s264 + $0x40] sm:$0xff] %vm675, %v651
      %685 = vst.msk [vmem:[%s264 + $0x48] sm:$0xff] %vm675, %v652
      %686 = vst.msk [vmem:[%s264 + $0x50] sm:$0xff] %vm675, %v653
      %687 = vst.msk [vmem:[%s264 + $0x58] sm:$0xff] %vm675, %v654
      %688 = vst.msk [vmem:[%s264 + $0x60] sm:$0xff] %vm675, %v655
      %689 = vst.msk [vmem:[%s264 + $0x68] sm:$0xff] %vm675, %v656
      %690 = vst.msk [vmem:[%s264 + $0x70] sm:$0xff] %vm675, %v657
      %691 = vst.msk [vmem:[%s264 + $0x78] sm:$0xff] %vm675, %v658
      %692 = vst.msk [vmem:[%s264 + $0x80] sm:$0xff] %vm675, %v659
      %693 = vst.msk [vmem:[%s264 + $0x88] sm:$0xff] %vm675, %v660
      %694 = vst.msk [vmem:[%s264 + $0x90] sm:$0xff] %vm675, %v661
      %695 = vst.msk [vmem:[%s264 + $0x98] sm:$0xff] %vm675, %v662
      %696 = vst.msk [vmem:[%s264 + $0xa0] sm:$0xff] %vm675, %v663
      %697 = vst.msk [vmem:[%s264 + $0xa8] sm:$0xff] %vm675, %v664
      %698 = vst.msk [vmem:[%s264 + $0xb0] sm:$0xff] %vm675, %v665
      %699 = vst.msk [vmem:[%s264 + $0xb8] sm:$0xff] %vm675, %v666
      %700 = vst.msk [vmem:[%s264 + $0xc0] sm:$0xff] %vm675, %v667
      %701 = vst.msk [vmem:[%s264 + $0xc8] sm:$0xff] %vm675, %v668
      %702 = vst.msk [vmem:[%s264 + $0xd0] sm:$0xff] %vm675, %v669
      %703 = vst.msk [vmem:[%s264 + $0xd8] sm:$0xff] %vm675, %v670
      %704 = vst.msk [vmem:[%s264 + $0xe0] sm:$0xff] %vm675, %v671
      %705 = vst.msk [vmem:[%s264 + $0xe8] sm:$0xff] %vm675, %v672
      %706 = vst.msk [vmem:[%s264 + $0xf0] sm:$0xff] %vm675, %v673
      %707 = vst.msk [vmem:[%s264 + $0xf8] sm:$0xff] %vm675, %v674
      %s708 = smul.u32 32, %s19
      %p709 = scmp.lt.s32.totalorder %s708, 63
      %s710 = scalar_select %p709, %s708, 63
      %p711 = scmp.lt.s32.totalorder %s20, 0
      %s712 = scalar_select %p711, %s20, 0
      %s713 = sadd.s32 %s712, %s710
      %s714 = smul.addr %s713, 8
      %s715 = scalar_lea.vmem %s4, %s714
      // Predicated region
      $region37: #{_lambda_.17} parent=35 // pred_check
        %p716 = pneg %p151
      $region38: #{_lambda_.17} parent=35 // pred_check_branch
        %718 = sbr.rel (%p716) target = $region40
      $region39: #{_lambda_.17} parent=35 // pred_region
        %s719 = smul.u32 32, %s19
      $region40: #{_lambda_.17} parent=35 // pred_fallthru
        _
    $region36: #{_lambda_.17} parent=5 // pred_fallthru
      _
    %p720 = scmp.le.s32.totalorder 2, %s10
    // Predicated region
    $region41: #{_lambda_.17} parent=5 // pred_check
      %p721 = pneg %p720
    $region42: #{_lambda_.17} parent=5 // pred_check_branch
      %723 = sbr.rel (%p721) target = $region44
    $region43: #{_lambda_.17} parent=5 // pred_region
      %s724 = ssub.s32 %s10, 2
      // Predicated region
      $region45: #{_lambda_.17} parent=43 // pred_check
        %p725 = pneg %p157
      $region46: #{_lambda_.17} parent=43 // pred_check_branch
        %727 = sbr.rel (%p725) target = $region48
      $region47: #{_lambda_.17} parent=43 // pred_region
        %s728 = smul.u32 32, %s21
        %p729 = scmp.lt.s32.totalorder %s728, 63
        %s730 = scalar_select %p729, %s728, 63
        %p731 = scmp.lt.s32.totalorder %s22, 0
        %s732 = scalar_select %p731, %s22, 0
        %s733 = sadd.s32 %s732, %s730
        %s734 = smul.addr %s733, 8
        %s735 = scalar_lea.vmem %s4, %s734
      $region48: #{_lambda_.17} parent=43 // pred_fallthru
        _
    $region44: #{_lambda_.17} parent=5 // pred_fallthru
      _
  $region6: #{_lambda_.17} parent=0 // loop_footer
    %s14 = sadd.s32 1, %s10
  $region7: #{_lambda_.17} parent=0 // loop_footer_branch
    %9 = sbr.rel target = $region3
  $region8: #{_lambda_.17} parent=0 // loop_exit
    _

// kernel: _lambda_.18
$region0: #{_lambda_.18}
  #allocation0 [shape = 'u32[]', space=smem, size = 0x4, offset = 0x4, fixed_abs, tag = 'smem constant byte address 0x4 - core index']
  #allocation1 [shape = 'u32[144,128]{1,0:T(1,128)}', space=vmem, size = 0x12000, scoped, tag = 'internal scratch']
  %s0 = inlined_call_operand.vmem [shape: bf16[512,288], index: 0, kind: input, shape index: {}]
  %s1 = inlined_call_operand.vmem [shape: bf16[288,32], index: 1, kind: input, shape index: {}]
  %s2 = inlined_call_operand.vmem [shape: f32[1,32], index: 2, kind: input, shape index: {}]
  %s3 = inlined_call_operand.vmem [shape: f32[1,32], index: 3, kind: input, shape index: {}]
  %s4 = inlined_call_operand.vmem [shape: f32[512,32], index: 4, kind: input, shape index: {}]
  %s5 = inlined_call_operand.vmem [shape: f32[512,32], index: 5, kind: output, shape index: {}]
  %s6 = sld [smem:[#allocation0]]
  $region53: #{_lambda_.18} parent=0
    _
  %s8 = ssub.s32 1, %s6
  %s9 = scalar_select 0, %s8, %s6
  loop: start=0, step=1, limit=4
  $region2: #{_lambda_.18} parent=0 // loop_pre_header
    _
  $region3: #{_lambda_.18} parent=0 // loop_header
    %s11 = sphi 0, %s15
    %p12 = scmp.ge.s32.totalorder %s11, 4
    %s18 = sphi 0, %s30
    %s19 = sphi 0, %s26
    %s20 = sphi 0, %s18
    %s21 = sphi 0, %s19
    %s22 = sphi 0, %s20
    %s23 = sphi 0, %s21
    %s33 = sphi 0, %s35
    %s36 = sphi 0, %s33
    %s37 = sphi 0, %s36
    %s53 = sphi 0, %s37
    %s59 = sphi 0, %s61
    %s62 = sphi 0, %s59
    %s63 = sphi 0, %s62
    %s79 = sphi 0, %s63
    %s85 = sphi 0, %s87
    %s88 = sphi 0, %s85
    %s89 = sphi 0, %s88
    %s105 = sphi 0, %s89
    %s111 = sphi 0, %s113
    %s114 = sphi 0, %s111
    %s115 = sphi 0, %s114
    %s131 = sphi 0, %s115
    %s139 = sphi 0, %s141
    %s142 = sphi 0, %s139
    %s143 = sphi 0, %s142
    %s159 = sphi 0, %s143
    %s167 = sphi 0, %s169
    %s170 = sphi 0, %s167
    %s171 = sphi 0, %s170
    %s187 = sphi 0, %s171
  $region4: #{_lambda_.18} parent=0 // loop_header_branch
    %14 = sbr.rel (%p12) target = $region8
  $region5: #{_lambda_.18} parent=0 // loop_body
    %s16 = ssub.s32 %s11, 1
    %s17 = ssub.s32 %s11, 2
    %s24 = sadd.s32 1, %s19
    %p25 = scmp.ge.s32.totalorder %s24, 1
    %s26 = scalar_select %p25, 0, %s24
    %s27 = sadd.s32 1, %s18
    %s28 = scalar_select %p25, %s27, %s18
    %p29 = scmp.ge.s32.totalorder %s28, 2
    %s30 = scalar_select %p29, 0, %s28
    %s31 = ssub.s32 %s18, %s30
    %p32 = scmp.eq.s32.totalorder %s31, 0
    %s34 = sadd.s32 %s33, 1
    %s35 = scalar_select %p32, %s33, %s34
    %p38 = pneg %p32
    %p39 = scmp.eq.s32.totalorder %s11, 1
    %p40 = por %p38, %p39
    %p41 = scmp.ne.s32.totalorder %s33, %s36
    %p42 = scmp.eq.s32.totalorder %s11, 0
    %p43 = por %p41, %p42
    %p44 = scmp.ne.s32.totalorder %s33, %s36
    %p45 = scmp.eq.s32.totalorder %s16, 1
    %p46 = por %p44, %p45
    %p47 = scmp.ne.s32.totalorder %s36, %s37
    %p48 = scmp.eq.s32.totalorder %s16, 0
    %p49 = por %p47, %p48
    %p50 = scmp.ne.s32.totalorder %s36, %s37
    %p51 = scmp.eq.s32.totalorder %s17, 1
    %p52 = por %p50, %p51
    %p54 = scmp.ne.s32.totalorder %s37, %s53
    %p55 = scmp.eq.s32.totalorder %s17, 0
    %p56 = por %p54, %p55
    %s57 = ssub.s32 %s19, %s26
    %p58 = scmp.eq.s32.totalorder %s57, 0
    %s60 = sadd.s32 %s59, 1
    %s61 = scalar_select %p58, %s59, %s60
    %p64 = pneg %p58
    %p65 = scmp.eq.s32.totalorder %s11, 1
    %p66 = por %p64, %p65
    %p67 = scmp.ne.s32.totalorder %s59, %s62
    %p68 = scmp.eq.s32.totalorder %s11, 0
    %p69 = por %p67, %p68
    %p70 = scmp.ne.s32.totalorder %s59, %s62
    %p71 = scmp.eq.s32.totalorder %s16, 1
    %p72 = por %p70, %p71
    %p73 = scmp.ne.s32.totalorder %s62, %s63
    %p74 = scmp.eq.s32.totalorder %s16, 0
    %p75 = por %p73, %p74
    %p76 = scmp.ne.s32.totalorder %s62, %s63
    %p77 = scmp.eq.s32.totalorder %s17, 1
    %p78 = por %p76, %p77
    %p80 = scmp.ne.s32.totalorder %s63, %s79
    %p81 = scmp.eq.s32.totalorder %s17, 0
    %p82 = por %p80, %p81
    %s83 = ssub.s32 %s19, %s26
    %p84 = scmp.eq.s32.totalorder %s83, 0
    %s86 = sadd.s32 %s85, 1
    %s87 = scalar_select %p84, %s85, %s86
    %p90 = pneg %p84
    %p91 = scmp.eq.s32.totalorder %s11, 1
    %p92 = por %p90, %p91
    %p93 = scmp.ne.s32.totalorder %s85, %s88
    %p94 = scmp.eq.s32.totalorder %s11, 0
    %p95 = por %p93, %p94
    %p96 = scmp.ne.s32.totalorder %s85, %s88
    %p97 = scmp.eq.s32.totalorder %s16, 1
    %p98 = por %p96, %p97
    %p99 = scmp.ne.s32.totalorder %s88, %s89
    %p100 = scmp.eq.s32.totalorder %s16, 0
    %p101 = por %p99, %p100
    %p102 = scmp.ne.s32.totalorder %s88, %s89
    %p103 = scmp.eq.s32.totalorder %s17, 1
    %p104 = por %p102, %p103
    %p106 = scmp.ne.s32.totalorder %s89, %s105
    %p107 = scmp.eq.s32.totalorder %s17, 0
    %p108 = por %p106, %p107
    %s109 = ssub.s32 %s19, %s26
    %p110 = scmp.eq.s32.totalorder %s109, 0
    %s112 = sadd.s32 %s111, 1
    %s113 = scalar_select %p110, %s111, %s112
    %p116 = pneg %p110
    %p117 = scmp.eq.s32.totalorder %s11, 1
    %p118 = por %p116, %p117
    %p119 = scmp.ne.s32.totalorder %s111, %s114
    %p120 = scmp.eq.s32.totalorder %s11, 0
    %p121 = por %p119, %p120
    %p122 = scmp.ne.s32.totalorder %s111, %s114
    %p123 = scmp.eq.s32.totalorder %s16, 1
    %p124 = por %p122, %p123
    %p125 = scmp.ne.s32.totalorder %s114, %s115
    %p126 = scmp.eq.s32.totalorder %s16, 0
    %p127 = por %p125, %p126
    %p128 = scmp.ne.s32.totalorder %s114, %s115
    %p129 = scmp.eq.s32.totalorder %s17, 1
    %p130 = por %p128, %p129
    %p132 = scmp.ne.s32.totalorder %s115, %s131
    %p133 = scmp.eq.s32.totalorder %s17, 0
    %p134 = por %p132, %p133
    %s135 = ssub.s32 %s18, %s30
    %s136 = ssub.s32 %s19, %s26
    %s137 = sor.u32 %s135, %s136
    %p138 = scmp.eq.s32.totalorder %s137, 0
    %s140 = sadd.s32 %s139, 1
    %s141 = scalar_select %p138, %s139, %s140
    %p144 = pneg %p138
    %p145 = scmp.eq.s32.totalorder %s11, 1
    %p146 = por %p144, %p145
    %p147 = scmp.ne.s32.totalorder %s139, %s142
    %p148 = scmp.eq.s32.totalorder %s11, 0
    %p149 = por %p147, %p148
    %p150 = scmp.ne.s32.totalorder %s139, %s142
    %p151 = scmp.eq.s32.totalorder %s16, 1
    %p152 = por %p150, %p151
    %p153 = scmp.ne.s32.totalorder %s142, %s143
    %p154 = scmp.eq.s32.totalorder %s16, 0
    %p155 = por %p153, %p154
    %p156 = scmp.ne.s32.totalorder %s142, %s143
    %p157 = scmp.eq.s32.totalorder %s17, 1
    %p158 = por %p156, %p157
    %p160 = scmp.ne.s32.totalorder %s143, %s159
    %p161 = scmp.eq.s32.totalorder %s17, 0
    %p162 = por %p160, %p161
    %s163 = ssub.s32 %s18, %s30
    %s164 = ssub.s32 %s19, %s26
    %s165 = sor.u32 %s163, %s164
    %p166 = scmp.eq.s32.totalorder %s165, 0
    %s168 = sadd.s32 %s167, 1
    %s169 = scalar_select %p166, %s167, %s168
    %p172 = pneg %p166
    %p173 = scmp.eq.s32.totalorder %s11, 1
    %p174 = por %p172, %p173
    %p175 = scmp.ne.s32.totalorder %s167, %s170
    %p176 = scmp.eq.s32.totalorder %s11, 0
    %p177 = por %p175, %p176
    %p178 = scmp.ne.s32.totalorder %s167, %s170
    %p179 = scmp.eq.s32.totalorder %s16, 1
    %p180 = por %p178, %p179
    %p181 = scmp.ne.s32.totalorder %s170, %s171
    %p182 = scmp.eq.s32.totalorder %s16, 0
    %p183 = por %p181, %p182
    %p184 = scmp.ne.s32.totalorder %s170, %s171
    %p185 = scmp.eq.s32.totalorder %s17, 1
    %p186 = por %p184, %p185
    %p188 = scmp.ne.s32.totalorder %s171, %s187
    %p189 = scmp.eq.s32.totalorder %s17, 0
    %p190 = por %p188, %p189
    %p191 = scmp.le.s32.totalorder 1, %s11
    %p192 = scmp.lt.s32.totalorder %s11, 3
    %p193 = pnand %p191, %p192
    %p194 = pneg %p193
    // Predicated region
    $region9: #{_lambda_.18} parent=5 // pred_check
      _
    $region10: #{_lambda_.18} parent=5 // pred_check_branch
      %196 = sbr.rel (%p193) target = $region12
    $region11: #{_lambda_.18} parent=5 // pred_region
      %s197 = ssub.s32 %s11, 1
      // Predicated region
      $region13: #{_lambda_.18} parent=11 // pred_check
        %p198 = pneg %p75
      $region14: #{_lambda_.18} parent=11 // pred_check_branch
        %200 = sbr.rel (%p198) target = $region16
      $region15: #{_lambda_.18} parent=11 // pred_region
        %p201 = scmp.lt.s32.totalorder %s21, 0
        %s202 = scalar_select %p201, %s21, 0
        %s203 = smul.addr %s202, 4
        %s204 = scalar_lea.vmem %s1, %s203
      $region16: #{_lambda_.18} parent=11 // pred_fallthru
        _
      // Predicated region
      $region17: #{_lambda_.18} parent=11 // pred_check
        %p205 = pneg %p101
      $region18: #{_lambda_.18} parent=11 // pred_check_branch
        %207 = sbr.rel (%p205) target = $region20
      $region19: #{_lambda_.18} parent=11 // pred_region
        %p208 = scmp.lt.s32.totalorder %s21, 0
        %s209 = scalar_select %p208, %s21, 0
        %s210 = scalar_lea.vmem %s2, %s209
      $region20: #{_lambda_.18} parent=11 // pred_fallthru
        _
      // Predicated region
      $region21: #{_lambda_.18} parent=11 // pred_check
        %p211 = pneg %p127
      $region22: #{_lambda_.18} parent=11 // pred_check_branch
        %213 = sbr.rel (%p211) target = $region24
      $region23: #{_lambda_.18} parent=11 // pred_region
        %p214 = scmp.lt.s32.totalorder %s21, 0
        %s215 = scalar_select %p214, %s21, 0
        %s216 = scalar_lea.vmem %s3, %s215
      $region24: #{_lambda_.18} parent=11 // pred_fallthru
        _
    $region12: #{_lambda_.18} parent=5 // pred_fallthru
      _
    %p217 = scmp.lt.s32.totalorder %s11, 2
    // Predicated region
    $region25: #{_lambda_.18} parent=5 // pred_check
      %p218 = pneg %p217
    $region26: #{_lambda_.18} parent=5 // pred_check_branch
      %220 = sbr.rel (%p218) target = $region28
    $region27: #{_lambda_.18} parent=5 // pred_region
      // Predicated region
      $region29: #{_lambda_.18} parent=27 // pred_check
        %p221 = pneg %p43
      $region30: #{_lambda_.18} parent=27 // pred_check_branch
        %223 = sbr.rel (%p221) target = $region32
      $region31: #{_lambda_.18} parent=27 // pred_region
        %s224 = smul.u32 32, %s18
        %p225 = scmp.lt.s32.totalorder %s224, 63
        %s226 = scalar_select %p225, %s224, 63
        %s227 = smul.addr %s226, 3
        %s228 = smul.addr %s227, 4
        %s229 = scalar_lea.vmem %s0, %s228
        %s230 = smul.u32 32, %s18
      $region32: #{_lambda_.18} parent=27 // pred_fallthru
        _
      // Predicated region
      $region33: #{_lambda_.18} parent=27 // pred_check
        %p231 = pneg %p149
      $region34: #{_lambda_.18} parent=27 // pred_check_branch
        %233 = sbr.rel (%p231) target = $region36
      $region35: #{_lambda_.18} parent=27 // pred_region
        %s234 = smul.u32 32, %s18
        %p235 = scmp.lt.s32.totalorder %s234, 63
        %s236 = scalar_select %p235, %s234, 63
        %p237 = scmp.lt.s32.totalorder %s19, 0
        %s238 = scalar_select %p237, %s19, 0
        %s239 = sadd.s32 %s238, %s236
        %s240 = smul.addr %s239, 8
        %s241 = scalar_lea.vmem %s4, %s240
        %s242 = smul.u32 32, %s18
      $region36: #{_lambda_.18} parent=27 // pred_fallthru
        _
    $region28: #{_lambda_.18} parent=5 // pred_fallthru
      _
    %p243 = scmp.le.s32.totalorder 1, %s11
    %p244 = scmp.lt.s32.totalorder %s11, 3
    %p245 = pnand %p243, %p244
    %p246 = pneg %p245
    // Predicated region
    $region37: #{_lambda_.18} parent=5 // pred_check
      _
    $region38: #{_lambda_.18} parent=5 // pred_check_branch
      %248 = sbr.rel (%p245) target = $region40
    $region39: #{_lambda_.18} parent=5 // pred_region
      %s249 = ssub.s32 %s11, 1
      %s250 = smul.u32 32, %s20
      %p251 = scmp.lt.s32.totalorder %s250, 63
      %s252 = scalar_select %p251, %s250, 63
      %s253 = smul.addr %s252, 3
      %s254 = smul.addr %s253, 4
      %s255 = scalar_lea.vmem %s0, %s254
      %p256 = pneg %p49
      %p257 = pneg %p46
      %p258 = scmp.lt.s32.totalorder %s21, 0
      %s259 = scalar_select %p258, %s21, 0
      %s260 = smul.addr %s259, 4
      %s261 = scalar_lea.vmem %s1, %s260
      %p262 = pneg %p75
      %p263 = pneg %p72
      %p264 = scmp.lt.s32.totalorder %s21, 0
      %s265 = scalar_select %p264, %s21, 0
      %s266 = scalar_lea.vmem %s2, %s265
      %p267 = pneg %p101
      %p268 = pneg %p98
      %p269 = scmp.lt.s32.totalorder %s21, 0
      %s270 = scalar_select %p269, %s21, 0
      %s271 = scalar_lea.vmem %s3, %s270
      %p272 = pneg %p127
      %p273 = pneg %p124
      %s274 = smul.u32 32, %s20
      %p275 = scmp.lt.s32.totalorder %s274, 63
      %s276 = scalar_select %p275, %s274, 63
      %p277 = scmp.lt.s32.totalorder %s21, 0
      %s278 = scalar_select %p277, %s21, 0
      %s279 = sadd.s32 %s278, %s276
      %s280 = smul.addr %s279, 8
      %s281 = scalar_lea.vmem %s4, %s280
      %p282 = pneg %p155
      %p283 = pneg %p152
      %p284 = pneg %p183
      %p285 = pneg %p180
      %s286 = smul.u32 32, %s20
      %p287 = scmp.lt.s32.totalorder %s286, 63
      %s288 = scalar_select %p287, %s286, 63
      %p289 = scmp.lt.s32.totalorder %s21, 0
      %s290 = scalar_select %p289, %s21, 0
      %s291 = sadd.s32 %s290, %s288
      %s292 = smul.addr %s291, 8
      %s293 = scalar_lea.vmem %s5, %s292
      %s294 = smul.u32 32, %s20
      %p295 = scmp.lt.s32.totalorder %s294, 63
      %s296 = scalar_select %p295, %s294, 63
      %s297 = smul.addr %s296, 3
      %s298 = smul.addr %s297, 4
      %s299 = scalar_lea.vmem %s0, %s298
      %s300 = smul.u32 32, %s20
      %p301 = scmp.lt.s32.totalorder %s21, 0
      %s302 = scalar_select %p301, %s21, 0
      %s303 = smul.addr %s302, 4
      %s304 = scalar_lea.vmem %s1, %s303
      %p305 = scmp.lt.s32.totalorder %s21, 0
      %s306 = scalar_select %p305, %s21, 0
      %s307 = scalar_lea.vmem %s2, %s306
      %p308 = scmp.lt.s32.totalorder %s21, 0
      %s309 = scalar_select %p308, %s21, 0
      %s310 = scalar_lea.vmem %s3, %s309
      %s311 = smul.u32 32, %s20
      %p312 = scmp.lt.s32.totalorder %s311, 63
      %s313 = scalar_select %p312, %s311, 63
      %p314 = scmp.lt.s32.totalorder %s21, 0
      %s315 = scalar_select %p314, %s21, 0
      %s316 = sadd.s32 %s315, %s313
      %s317 = smul.addr %s316, 8
      %s318 = scalar_lea.vmem %s4, %s317
      %s319 = smul.u32 32, %s20
      %s320 = smul.u32 32, %s20
      %p321 = scmp.lt.s32.totalorder %s320, 63
      %s322 = scalar_select %p321, %s320, 63
      %p323 = scmp.lt.s32.totalorder %s21, 0
      %s324 = scalar_select %p323, %s21, 0
      %s325 = sadd.s32 %s324, %s322
      %s326 = smul.addr %s325, 8
      %s327 = scalar_lea.vmem %s5, %s326
      %s328 = smul.u32 32, %s20
      %v330 = vld [vmem:[%s299] sm:$0xff]
      %v331 = vld [vmem:[%s299 + $0x8] sm:$0xf]
      %v332 = vld [vmem:[%s299 + $0xc] sm:$0xff]
      %v333 = vld [vmem:[%s299 + $0x14] sm:$0xf]
      %v334 = vld [vmem:[%s299 + $0x18] sm:$0xff]
      %v335 = vld [vmem:[%s299 + $0x20] sm:$0xf]
      %v336 = vld [vmem:[%s299 + $0x24] sm:$0xff]
      %v337 = vld [vmem:[%s299 + $0x2c] sm:$0xf]
      %v338 = vld [vmem:[%s299 + $0x30] sm:$0xff]
      %v339 = vld [vmem:[%s299 + $0x38] sm:$0xf]
      %v340 = vld [vmem:[%s299 + $0x3c] sm:$0xff]
      %v341 = vld [vmem:[%s299 + $0x44] sm:$0xf]
      %v342 = vld [vmem:[%s299 + $0x48] sm:$0xff]
      %v343 = vld [vmem:[%s299 + $0x50] sm:$0xf]
      %v344 = vld [vmem:[%s299 + $0x54] sm:$0xff]
      %v345 = vld [vmem:[%s299 + $0x5c] sm:$0xf]
      %v346 = vld [vmem:[%s299 + $0x60] sm:$0xff]
      %v347 = vld [vmem:[%s299 + $0x68] sm:$0xf]
      %v348 = vld [vmem:[%s299 + $0x6c] sm:$0xff]
      %v349 = vld [vmem:[%s299 + $0x74] sm:$0xf]
      %v350 = vld [vmem:[%s299 + $0x78] sm:$0xff]
      %v351 = vld [vmem:[%s299 + $0x80] sm:$0xf]
      %v352 = vld [vmem:[%s299 + $0x84] sm:$0xff]
      %v353 = vld [vmem:[%s299 + $0x8c] sm:$0xf]
      %v354 = vld [vmem:[%s299 + $0x90] sm:$0xff]
      %v355 = vld [vmem:[%s299 + $0x98] sm:$0xf]
      %v356 = vld [vmem:[%s299 + $0x9c] sm:$0xff]
      %v357 = vld [vmem:[%s299 + $0xa4] sm:$0xf]
      %v358 = vld [vmem:[%s299 + $0xa8] sm:$0xff]
      %v359 = vld [vmem:[%s299 + $0xb0] sm:$0xf]
      %v360 = vld [vmem:[%s299 + $0xb4] sm:$0xff]
      %v361 = vld [vmem:[%s299 + $0xbc] sm:$0xf]
      %v362 = vld [vmem:[%s299 + $0xc0] sm:$0xff]
      %v363 = vld [vmem:[%s299 + $0xc8] sm:$0xf]
      %v364 = vld [vmem:[%s299 + $0xcc] sm:$0xff]
      %v365 = vld [vmem:[%s299 + $0xd4] sm:$0xf]
      %v366 = vld [vmem:[%s299 + $0xd8] sm:$0xff]
      %v367 = vld [vmem:[%s299 + $0xe0] sm:$0xf]
      %v368 = vld [vmem:[%s299 + $0xe4] sm:$0xff]
      %v369 = vld [vmem:[%s299 + $0xec] sm:$0xf]
      %v370 = vld [vmem:[%s299 + $0xf0] sm:$0xff]
      %v371 = vld [vmem:[%s299 + $0xf8] sm:$0xf]
      %v372 = vld [vmem:[%s299 + $0xfc] sm:$0xff]
      %v373 = vld [vmem:[%s299 + $0x104] sm:$0xf]
      %v374 = vld [vmem:[%s299 + $0x108] sm:$0xff]
      %v375 = vld [vmem:[%s299 + $0x110] sm:$0xf]
      %v376 = vld [vmem:[%s299 + $0x114] sm:$0xff]
      %v377 = vld [vmem:[%s299 + $0x11c] sm:$0xf]
      %v378 = vld [vmem:[%s299 + $0x120] sm:$0xff]
      %v379 = vld [vmem:[%s299 + $0x128] sm:$0xf]
      %v380 = vld [vmem:[%s299 + $0x12c] sm:$0xff]
      %v381 = vld [vmem:[%s299 + $0x134] sm:$0xf]
      %v382 = vld [vmem:[%s299 + $0x138] sm:$0xff]
      %v383 = vld [vmem:[%s299 + $0x140] sm:$0xf]
      %v384 = vld [vmem:[%s299 + $0x144] sm:$0xff]
      %v385 = vld [vmem:[%s299 + $0x14c] sm:$0xf]
      %v386 = vld [vmem:[%s299 + $0x150] sm:$0xff]
      %v387 = vld [vmem:[%s299 + $0x158] sm:$0xf]
      %v388 = vld [vmem:[%s299 + $0x15c] sm:$0xff]
      %v389 = vld [vmem:[%s299 + $0x164] sm:$0xf]
      %v390 = vld [vmem:[%s299 + $0x168] sm:$0xff]
      %v391 = vld [vmem:[%s299 + $0x170] sm:$0xf]
      %v392 = vld [vmem:[%s299 + $0x174] sm:$0xff]
      %v393 = vld [vmem:[%s299 + $0x17c] sm:$0xf]
      %v394 = vld [vmem:[%s304] sm:$0xf]
      %v395 = vld [vmem:[%s304 + $0x4] sm:$0xf]
      %v396 = vld [vmem:[%s304 + $0x8] sm:$0xf]
      %v397 = vld [vmem:[%s304 + $0xc] sm:$0xf]
      %v398 = vld [vmem:[%s304 + $0x10] sm:$0xf]
      %v399 = vld [vmem:[%s304 + $0x14] sm:$0xf]
      %v400 = vld [vmem:[%s304 + $0x18] sm:$0xf]
      %v401 = vld [vmem:[%s304 + $0x1c] sm:$0xf]
      %v402 = vld [vmem:[%s304 + $0x20] sm:$0xf]
      %v403 = vld [vmem:[%s304 + $0x24] sm:$0xf]
      %v404 = vld [vmem:[%s304 + $0x28] sm:$0xf]
      %v405 = vld [vmem:[%s304 + $0x2c] sm:$0xf]
      %v406 = vld [vmem:[%s304 + $0x30] sm:$0xf]
      %v407 = vld [vmem:[%s304 + $0x34] sm:$0xf]
      %v408 = vld [vmem:[%s304 + $0x38] sm:$0xf]
      %v409 = vld [vmem:[%s304 + $0x3c] sm:$0xf]
      %v410 = vld [vmem:[%s304 + $0x40] sm:$0xf]
      %v411 = vld [vmem:[%s304 + $0x44] sm:$0xf]
      %v412 = vld [vmem:[%s304 + $0x48] sm:$0xf]
      %v413 = vld [vmem:[%s304 + $0x4c] sm:$0xf]
      %v414 = vld [vmem:[%s304 + $0x50] sm:$0xf]
      %v415 = vld [vmem:[%s304 + $0x54] sm:$0xf]
      %v416 = vld [vmem:[%s304 + $0x58] sm:$0xf]
      %v417 = vld [vmem:[%s304 + $0x5c] sm:$0xf]
      %v418 = vld [vmem:[%s304 + $0x60] sm:$0xf]
      %v419 = vld [vmem:[%s304 + $0x64] sm:$0xf]
      %v420 = vld [vmem:[%s304 + $0x68] sm:$0xf]
      %v421 = vld [vmem:[%s304 + $0x6c] sm:$0xf]
      %v422 = vld [vmem:[%s304 + $0x70] sm:$0xf]
      %v423 = vld [vmem:[%s304 + $0x74] sm:$0xf]
      %v424 = vld [vmem:[%s304 + $0x78] sm:$0xf]
      %v425 = vld [vmem:[%s304 + $0x7c] sm:$0xf]
      %v426 = vld [vmem:[%s304 + $0x80] sm:$0xf]
      %v427 = vld [vmem:[%s304 + $0x84] sm:$0xf]
      %v428 = vld [vmem:[%s304 + $0x88] sm:$0xf]
      %v429 = vld [vmem:[%s304 + $0x8c] sm:$0xf]
      %v494 = vunpack.c.l.b16 %v330
      %v495 = vunpack.c.h.b16 %v330
      %v496 = vunpack.c.l.b16 %v331
      %v497 = vunpack.c.l.b16 %v332
      %v498 = vunpack.c.h.b16 %v332
      %v499 = vunpack.c.l.b16 %v333
      %v500 = vunpack.c.l.b16 %v334
      %v501 = vunpack.c.h.b16 %v334
      %v502 = vunpack.c.l.b16 %v335
      %v503 = vunpack.c.l.b16 %v336
      %v504 = vunpack.c.h.b16 %v336
      %v505 = vunpack.c.l.b16 %v337
      %v506 = vunpack.c.l.b16 %v338
      %v507 = vunpack.c.h.b16 %v338
      %v508 = vunpack.c.l.b16 %v339
      %v509 = vunpack.c.l.b16 %v340
      %v510 = vunpack.c.h.b16 %v340
      %v511 = vunpack.c.l.b16 %v341
      %v512 = vunpack.c.l.b16 %v342
      %v513 = vunpack.c.h.b16 %v342
      %v514 = vunpack.c.l.b16 %v343
      %v515 = vunpack.c.l.b16 %v344
      %v516 = vunpack.c.h.b16 %v344
      %v517 = vunpack.c.l.b16 %v345
      %v518 = vunpack.c.l.b16 %v346
      %v519 = vunpack.c.h.b16 %v346
      %v520 = vunpack.c.l.b16 %v347
      %v521 = vunpack.c.l.b16 %v348
      %v522 = vunpack.c.h.b16 %v348
      %v523 = vunpack.c.l.b16 %v349
      %v524 = vunpack.c.l.b16 %v350
      %v525 = vunpack.c.h.b16 %v350
      %v526 = vunpack.c.l.b16 %v351
      %v527 = vunpack.c.l.b16 %v352
      %v528 = vunpack.c.h.b16 %v352
      %v529 = vunpack.c.l.b16 %v353
      %v530 = vunpack.c.l.b16 %v354
      %v531 = vunpack.c.h.b16 %v354
      %v532 = vunpack.c.l.b16 %v355
      %v533 = vunpack.c.l.b16 %v356
      %v534 = vunpack.c.h.b16 %v356
      %v535 = vunpack.c.l.b16 %v357
      %v536 = vunpack.c.l.b16 %v358
      %v537 = vunpack.c.h.b16 %v358
      %v538 = vunpack.c.l.b16 %v359
      %v539 = vunpack.c.l.b16 %v360
      %v540 = vunpack.c.h.b16 %v360
      %v541 = vunpack.c.l.b16 %v361
      %v542 = vunpack.c.l.b16 %v362
      %v543 = vunpack.c.h.b16 %v362
      %v544 = vunpack.c.l.b16 %v363
      %v545 = vunpack.c.l.b16 %v364
      %v546 = vunpack.c.h.b16 %v364
      %v547 = vunpack.c.l.b16 %v365
      %v548 = vunpack.c.l.b16 %v366
      %v549 = vunpack.c.h.b16 %v366
      %v550 = vunpack.c.l.b16 %v367
      %v551 = vunpack.c.l.b16 %v368
      %v552 = vunpack.c.h.b16 %v368
      %v553 = vunpack.c.l.b16 %v369
      %v554 = vunpack.c.l.b16 %v370
      %v555 = vunpack.c.h.b16 %v370
      %v556 = vunpack.c.l.b16 %v371
      %v557 = vunpack.c.l.b16 %v372
      %v558 = vunpack.c.h.b16 %v372
      %v559 = vunpack.c.l.b16 %v373
      %v560 = vunpack.c.l.b16 %v374
      %v561 = vunpack.c.h.b16 %v374
      %v562 = vunpack.c.l.b16 %v375
      %v563 = vunpack.c.l.b16 %v376
      %v564 = vunpack.c.h.b16 %v376
      %v565 = vunpack.c.l.b16 %v377
      %v566 = vunpack.c.l.b16 %v378
      %v567 = vunpack.c.h.b16 %v378
      %v568 = vunpack.c.l.b16 %v379
      %v569 = vunpack.c.l.b16 %v380
      %v570 = vunpack.c.h.b16 %v380
      %v571 = vunpack.c.l.b16 %v381
      %v572 = vunpack.c.l.b16 %v382
      %v573 = vunpack.c.h.b16 %v382
      %v574 = vunpack.c.l.b16 %v383
      %v575 = vunpack.c.l.b16 %v384
      %v576 = vunpack.c.h.b16 %v384
      %v577 = vunpack.c.l.b16 %v385
      %v578 = vunpack.c.l.b16 %v386
      %v579 = vunpack.c.h.b16 %v386
      %v580 = vunpack.c.l.b16 %v387
      %v581 = vunpack.c.l.b16 %v388
      %v582 = vunpack.c.h.b16 %v388
      %v583 = vunpack.c.l.b16 %v389
      %v584 = vunpack.c.l.b16 %v390
      %v585 = vunpack.c.h.b16 %v390
      %v586 = vunpack.c.l.b16 %v391
      %v587 = vunpack.c.l.b16 %v392
      %v588 = vunpack.c.h.b16 %v392
      %v589 = vunpack.c.l.b16 %v393
      %v590 = vpack.c.b16 %v497, %v494
      %v591 = vpack.c.b16 %v498, %v495
      %v592 = vpack.c.b16 %v499, %v496
      %v593 = vpack.c.b16 %v503, %v500
      %v594 = vpack.c.b16 %v504, %v501
      %v595 = vpack.c.b16 %v505, %v502
      %v596 = vpack.c.b16 %v509, %v506
      %v597 = vpack.c.b16 %v510, %v507
      %v598 = vpack.c.b16 %v511, %v508
      %v599 = vpack.c.b16 %v515, %v512
      %v600 = vpack.c.b16 %v516, %v513
      %v601 = vpack.c.b16 %v517, %v514
      %v602 = vpack.c.b16 %v521, %v518
      %v603 = vpack.c.b16 %v522, %v519
      %v604 = vpack.c.b16 %v523, %v520
      %v605 = vpack.c.b16 %v527, %v524
      %v606 = vpack.c.b16 %v528, %v525
      %v607 = vpack.c.b16 %v529, %v526
      %v608 = vpack.c.b16 %v533, %v530
      %v609 = vpack.c.b16 %v534, %v531
      %v610 = vpack.c.b16 %v535, %v532
      %v611 = vpack.c.b16 %v539, %v536
      %v612 = vpack.c.b16 %v540, %v537
      %v613 = vpack.c.b16 %v541, %v538
      %v614 = vpack.c.b16 %v545, %v542
      %v615 = vpack.c.b16 %v546, %v543
      %v616 = vpack.c.b16 %v547, %v544
      %v617 = vpack.c.b16 %v551, %v548
      %v618 = vpack.c.b16 %v552, %v549
      %v619 = vpack.c.b16 %v553, %v550
      %v620 = vpack.c.b16 %v557, %v554
      %v621 = vpack.c.b16 %v558, %v555
      %v622 = vpack.c.b16 %v559, %v556
      %v623 = vpack.c.b16 %v563, %v560
      %v624 = vpack.c.b16 %v564, %v561
      %v625 = vpack.c.b16 %v565, %v562
      %v626 = vpack.c.b16 %v569, %v566
      %v627 = vpack.c.b16 %v570, %v567
      %v628 = vpack.c.b16 %v571, %v568
      %v629 = vpack.c.b16 %v575, %v572
      %v630 = vpack.c.b16 %v576, %v573
      %v631 = vpack.c.b16 %v577, %v574
      %v632 = vpack.c.b16 %v581, %v578
      %v633 = vpack.c.b16 %v582, %v579
      %v634 = vpack.c.b16 %v583, %v580
      %v635 = vpack.c.b16 %v587, %v584
      %v636 = vpack.c.b16 %v588, %v585
      %v637 = vpack.c.b16 %v589, %v586
      %v706 = vunpack.c.l.b16 %v394
      %v707 = vunpack.c.l.b16 %v395
      %v708 = vunpack.c.l.b16 %v396
      %v709 = vunpack.c.l.b16 %v397
      %v710 = vunpack.c.l.b16 %v398
      %v711 = vunpack.c.l.b16 %v399
      %v712 = vunpack.c.l.b16 %v400
      %v713 = vunpack.c.l.b16 %v401
      %v714 = vunpack.c.l.b16 %v402
      %v715 = vunpack.c.l.b16 %v403
      %v716 = vunpack.c.l.b16 %v404
      %v717 = vunpack.c.l.b16 %v405
      %v718 = vunpack.c.l.b16 %v406
      %v719 = vunpack.c.l.b16 %v407
      %v720 = vunpack.c.l.b16 %v408
      %v721 = vunpack.c.l.b16 %v409
      %v722 = vunpack.c.l.b16 %v410
      %v723 = vunpack.c.l.b16 %v411
      %v724 = vunpack.c.l.b16 %v412
      %v725 = vunpack.c.l.b16 %v413
      %v726 = vunpack.c.l.b16 %v414
      %v727 = vunpack.c.l.b16 %v415
      %v728 = vunpack.c.l.b16 %v416
      %v729 = vunpack.c.l.b16 %v417
      %v730 = vunpack.c.l.b16 %v418
      %v731 = vunpack.c.l.b16 %v419
      %v732 = vunpack.c.l.b16 %v420
      %v733 = vunpack.c.l.b16 %v421
      %v734 = vunpack.c.l.b16 %v422
      %v735 = vunpack.c.l.b16 %v423
      %v736 = vunpack.c.l.b16 %v424
      %v737 = vunpack.c.l.b16 %v425
      %v738 = vunpack.c.l.b16 %v426
      %v739 = vunpack.c.l.b16 %v427
      %v740 = vunpack.c.l.b16 %v428
      %v741 = vunpack.c.l.b16 %v429
      %v742 = vpack.c.b16 %v707, %v706
      %v743 = vpack.c.b16 %v709, %v708
      %v744 = vpack.c.b16 %v711, %v710
      %v745 = vpack.c.b16 %v713, %v712
      %v746 = vpack.c.b16 %v715, %v714
      %v747 = vpack.c.b16 %v717, %v716
      %v748 = vpack.c.b16 %v719, %v718
      %v749 = vpack.c.b16 %v721, %v720
      %v750 = vpack.c.b16 %v723, %v722
      %v751 = vpack.c.b16 %v725, %v724
      %v752 = vpack.c.b16 %v727, %v726
      %v753 = vpack.c.b16 %v729, %v728
      %v754 = vpack.c.b16 %v731, %v730
      %v755 = vpack.c.b16 %v733, %v732
      %v756 = vpack.c.b16 %v735, %v734
      %v757 = vpack.c.b16 %v737, %v736
      %v758 = vpack.c.b16 %v739, %v738
      %v759 = vpack.c.b16 %v741, %v740
      %vm778 = vcmask 261120
      %v780 = vsel %vm778, %v592, 0
      %v783 = vsel %vm778, %v595, 0
      %v786 = vsel %vm778, %v598, 0
      %v789 = vsel %vm778, %v601, 0
      %v792 = vsel %vm778, %v604, 0
      %v795 = vsel %vm778, %v607, 0
      %v798 = vsel %vm778, %v610, 0
      %v801 = vsel %vm778, %v613, 0
      %v804 = vsel %vm778, %v616, 0
      %v807 = vsel %vm778, %v619, 0
      %v810 = vsel %vm778, %v622, 0
      %v813 = vsel %vm778, %v625, 0
      %v816 = vsel %vm778, %v628, 0
      %v819 = vsel %vm778, %v631, 0
      %v822 = vsel %vm778, %v634, 0
      %v825 = vsel %vm778, %v637, 0
      %827 = vmatprep.subr.bf16.mxu0 0
      %828 = vmatpush1.bf16.msra.mxu0 %v749
      %829 = vmatprep.subr.bf16.mxu0 0
      %830 = vmatpush1.bf16.msra.mxu0 %v748
      %831 = vmatprep.subr.bf16.mxu0 0
      %832 = vmatpush1.bf16.msra.mxu0 %v747
      %833 = vmatprep.subr.bf16.mxu0 0
      %834 = vmatpush1.bf16.msra.mxu0 %v746
      %835 = vmatprep.subr.bf16.mxu0 0
      %836 = vmatpush1.bf16.msra.mxu0 %v745
      %837 = vmatprep.subr.bf16.mxu0 0
      %838 = vmatpush1.bf16.msra.mxu0 %v744
      %839 = vmatprep.subr.bf16.mxu0 0
      %840 = vmatpush1.bf16.msra.mxu0 %v743
      %841 = vmatprep.subr.bf16.mxu0 0
      %842 = vmatpush1.bf16.msra.mxu0 %v742
      %843 = vmatprep.subr.bf16.mxu0 0
      %844 = vmatpush2.bf16.msra.mxu0 %v757
      %845 = vmatprep.subr.bf16.mxu0 0
      %846 = vmatpush2.bf16.msra.mxu0 %v756
      %847 = vmatprep.subr.bf16.mxu0 0
      %848 = vmatpush2.bf16.msra.mxu0 %v755
      %849 = vmatprep.subr.bf16.mxu0 0
      %850 = vmatpush2.bf16.msra.mxu0 %v754
      %851 = vmatprep.subr.bf16.mxu0 0
      %852 = vmatpush2.bf16.msra.mxu0 %v753
      %853 = vmatprep.subr.bf16.mxu0 0
      %854 = vmatpush2.bf16.msra.mxu0 %v752
      %855 = vmatprep.subr.bf16.mxu0 0
      %856 = vmatpush2.bf16.msra.mxu0 %v751
      %857 = vmatprep.subr.bf16.mxu0 0
      %858 = vmatpush2.bf16.msra.mxu0 %v750
      %859 = vmatprep.mubr.bf16.mxu0 %v591
      %860 = vmatmul.mubr.bf16.gmra.mxu0 %v590
      %v861 = vpop.f32.mrf.mxu0
      %v862 = vadd.f32 0.0, %v861
      %v863 = vpop.f32.mrf.mxu0
      %v864 = vpop.f32.mrf.mxu0
      %v865 = vadd.f32 0.0, %v864
      %v866 = vpop.f32.mrf.mxu0
      %867 = vmatprep.mubr.bf16.mxu0 %v594
      %868 = vmatmul.mubr.bf16.gmra.mxu0 %v593
      %v869 = vpop.f32.mrf.mxu0
      %v870 = vadd.f32 0.0, %v869
      %v871 = vpop.f32.mrf.mxu0
      %v872 = vpop.f32.mrf.mxu0
      %v873 = vadd.f32 0.0, %v872
      %v874 = vpop.f32.mrf.mxu0
      %875 = vmatprep.mubr.bf16.mxu0 %v597
      %876 = vmatmul.mubr.bf16.gmra.mxu0 %v596
      %v877 = vpop.f32.mrf.mxu0
      %v878 = vadd.f32 0.0, %v877
      %v879 = vpop.f32.mrf.mxu0
      %v880 = vpop.f32.mrf.mxu0
      %v881 = vadd.f32 0.0, %v880
      %v882 = vpop.f32.mrf.mxu0
      %883 = vmatprep.mubr.bf16.mxu0 %v600
      %884 = vmatmul.mubr.bf16.gmra.mxu0 %v599
      %v885 = vpop.f32.mrf.mxu0
      %v886 = vadd.f32 0.0, %v885
      %v887 = vpop.f32.mrf.mxu0
      %v888 = vpop.f32.mrf.mxu0
      %v889 = vadd.f32 0.0, %v888
      %v890 = vpop.f32.mrf.mxu0
      %891 = vmatprep.mubr.bf16.mxu0 %v603
      %892 = vmatmul.mubr.bf16.gmra.mxu0 %v602
      %v893 = vpop.f32.mrf.mxu0
      %v894 = vadd.f32 0.0, %v893
      %v895 = vpop.f32.mrf.mxu0
      %v896 = vpop.f32.mrf.mxu0
      %v897 = vadd.f32 0.0, %v896
      %v898 = vpop.f32.mrf.mxu0
      %899 = vmatprep.mubr.bf16.mxu0 %v606
      %900 = vmatmul.mubr.bf16.gmra.mxu0 %v605
      %v901 = vpop.f32.mrf.mxu0
      %v902 = vadd.f32 0.0, %v901
      %v903 = vpop.f32.mrf.mxu0
      %v904 = vpop.f32.mrf.mxu0
      %v905 = vadd.f32 0.0, %v904
      %v906 = vpop.f32.mrf.mxu0
      %907 = vmatprep.mubr.bf16.mxu0 %v609
      %908 = vmatmul.mubr.bf16.gmra.mxu0 %v608
      %v909 = vpop.f32.mrf.mxu0
      %v910 = vadd.f32 0.0, %v909
      %v911 = vpop.f32.mrf.mxu0
      %v912 = vpop.f32.mrf.mxu0
      %v913 = vadd.f32 0.0, %v912
      %v914 = vpop.f32.mrf.mxu0
      %915 = vmatprep.mubr.bf16.mxu0 %v612
      %916 = vmatmul.mubr.bf16.gmra.mxu0 %v611
      %v917 = vpop.f32.mrf.mxu0
      %v918 = vadd.f32 0.0, %v917
      %v919 = vpop.f32.mrf.mxu0
      %v920 = vpop.f32.mrf.mxu0
      %v921 = vadd.f32 0.0, %v920
      %v922 = vpop.f32.mrf.mxu0
      %923 = vmatprep.mubr.bf16.mxu0 %v615
      %924 = vmatmul.mubr.bf16.gmra.mxu0 %v614
      %v925 = vpop.f32.mrf.mxu0
      %v926 = vadd.f32 0.0, %v925
      %v927 = vpop.f32.mrf.mxu0
      %v928 = vpop.f32.mrf.mxu0
      %v929 = vadd.f32 0.0, %v928
      %v930 = vpop.f32.mrf.mxu0
      %931 = vmatprep.mubr.bf16.mxu0 %v618
      %932 = vmatmul.mubr.bf16.gmra.mxu0 %v617
      %v933 = vpop.f32.mrf.mxu0
      %v934 = vadd.f32 0.0, %v933
      %v935 = vpop.f32.mrf.mxu0
      %v936 = vpop.f32.mrf.mxu0
      %v937 = vadd.f32 0.0, %v936
      %v938 = vpop.f32.mrf.mxu0
      %939 = vmatprep.mubr.bf16.mxu0 %v621
      %940 = vmatmul.mubr.bf16.gmra.mxu0 %v620
      %v941 = vpop.f32.mrf.mxu0
      %v942 = vadd.f32 0.0, %v941
      %v943 = vpop.f32.mrf.mxu0
      %v944 = vpop.f32.mrf.mxu0
      %v945 = vadd.f32 0.0, %v944
      %v946 = vpop.f32.mrf.mxu0
      %947 = vmatprep.mubr.bf16.mxu0 %v624
      %948 = vmatmul.mubr.bf16.gmra.mxu0 %v623
      %v949 = vpop.f32.mrf.mxu0
      %v950 = vadd.f32 0.0, %v949
      %v951 = vpop.f32.mrf.mxu0
      %v952 = vpop.f32.mrf.mxu0
      %v953 = vadd.f32 0.0, %v952
      %v954 = vpop.f32.mrf.mxu0
      %955 = vmatprep.mubr.bf16.mxu0 %v627
      %956 = vmatmul.mubr.bf16.gmra.mxu0 %v626
      %v957 = vpop.f32.mrf.mxu0
      %v958 = vadd.f32 0.0, %v957
      %v959 = vpop.f32.mrf.mxu0
      %v960 = vpop.f32.mrf.mxu0
      %v961 = vadd.f32 0.0, %v960
      %v962 = vpop.f32.mrf.mxu0
      %963 = vmatprep.mubr.bf16.mxu0 %v630
      %964 = vmatmul.mubr.bf16.gmra.mxu0 %v629
      %v965 = vpop.f32.mrf.mxu0
      %v966 = vadd.f32 0.0, %v965
      %v967 = vpop.f32.mrf.mxu0
      %v968 = vpop.f32.mrf.mxu0
      %v969 = vadd.f32 0.0, %v968
      %v970 = vpop.f32.mrf.mxu0
      %971 = vmatprep.mubr.bf16.mxu0 %v633
      %972 = vmatmul.mubr.bf16.gmra.mxu0 %v632
      %v973 = vpop.f32.mrf.mxu0
      %v974 = vadd.f32 0.0, %v973
      %v975 = vpop.f32.mrf.mxu0
      %v976 = vpop.f32.mrf.mxu0
      %v977 = vadd.f32 0.0, %v976
      %v978 = vpop.f32.mrf.mxu0
      %979 = vmatprep.mubr.bf16.mxu0 %v636
      %980 = vmatmul.mubr.bf16.gmra.mxu0 %v635
      %v981 = vpop.f32.mrf.mxu0
      %v982 = vadd.f32 0.0, %v981
      %v983 = vpop.f32.mrf.mxu0
      %v984 = vpop.f32.mrf.mxu0
      %v985 = vadd.f32 0.0, %v984
      %v986 = vpop.f32.mrf.mxu0
      %987 = vdwg.mxu0
      %988 = vmatprep.subr.bf16.mxu0 0
      %989 = vmatpush1.bf16.msra.mxu0 0
      %990 = vmatprep.subr.bf16.mxu0 0
      %991 = vmatpush1.bf16.msra.mxu0 0
      %992 = vmatprep.subr.bf16.mxu0 0
      %993 = vmatpush1.bf16.msra.mxu0 0
      %994 = vmatprep.subr.bf16.mxu0 0
      %995 = vmatpush1.bf16.msra.mxu0 0
      %996 = vmatprep.subr.bf16.mxu0 0
      %997 = vmatpush1.bf16.msra.mxu0 0
      %998 = vmatprep.subr.bf16.mxu0 0
      %999 = vmatpush1.bf16.msra.mxu0 0
      %1000 = vmatprep.subr.bf16.mxu0 0
      %1001 = vmatpush1.bf16.msra.mxu0 %v759
      %1002 = vmatprep.subr.bf16.mxu0 0
      %1003 = vmatpush1.bf16.msra.mxu0 %v758
      %1004 = vmatprep.subr.bf16.mxu0 0
      %1005 = vmatpush2.bf16.msra.mxu0 0
      %1006 = vmatprep.subr.bf16.mxu0 0
      %1007 = vmatpush2.bf16.msra.mxu0 0
      %1008 = vmatprep.subr.bf16.mxu0 0
      %1009 = vmatpush2.bf16.msra.mxu0 0
      %1010 = vmatprep.subr.bf16.mxu0 0
      %1011 = vmatpush2.bf16.msra.mxu0 0
      %1012 = vmatprep.subr.bf16.mxu0 0
      %1013 = vmatpush2.bf16.msra.mxu0 0
      %1014 = vmatprep.subr.bf16.mxu0 0
      %1015 = vmatpush2.bf16.msra.mxu0 0
      %1016 = vmatprep.subr.bf16.mxu0 0
      %1017 = vmatpush2.bf16.msra.mxu0 0
      %1018 = vmatprep.subr.bf16.mxu0 0
      %1019 = vmatpush2.bf16.msra.mxu0 0
      %1020 = vmatprep.mubr.bf16.mxu0 0
      %1021 = vmatmul.mubr.bf16.gmra.mxu0 %v780
      %v1022 = vpop.f32.mrf.mxu0
      %v1023 = vadd.f32 %v862, %v1022
      %v1024 = vpop.f32.mrf.mxu0
      %v1025 = vpop.f32.mrf.mxu0
      %v1026 = vadd.f32 %v865, %v1025
      %v1027 = vpop.f32.mrf.mxu0
      %1028 = vmatprep.mubr.bf16.mxu0 0
      %1029 = vmatmul.mubr.bf16.gmra.mxu0 %v783
      %v1030 = vpop.f32.mrf.mxu0
      %v1031 = vadd.f32 %v870, %v1030
      %v1032 = vpop.f32.mrf.mxu0
      %v1033 = vpop.f32.mrf.mxu0
      %v1034 = vadd.f32 %v873, %v1033
      %v1035 = vpop.f32.mrf.mxu0
      %1036 = vmatprep.mubr.bf16.mxu0 0
      %1037 = vmatmul.mubr.bf16.gmra.mxu0 %v786
      %v1038 = vpop.f32.mrf.mxu0
      %v1039 = vadd.f32 %v878, %v1038
      %v1040 = vpop.f32.mrf.mxu0
      %v1041 = vpop.f32.mrf.mxu0
      %v1042 = vadd.f32 %v881, %v1041
      %v1043 = vpop.f32.mrf.mxu0
      %1044 = vmatprep.mubr.bf16.mxu0 0
      %1045 = vmatmul.mubr.bf16.gmra.mxu0 %v789
      %v1046 = vpop.f32.mrf.mxu0
      %v1047 = vadd.f32 %v886, %v1046
      %v1048 = vpop.f32.mrf.mxu0
      %v1049 = vpop.f32.mrf.mxu0
      %v1050 = vadd.f32 %v889, %v1049
      %v1051 = vpop.f32.mrf.mxu0
      %1052 = vmatprep.mubr.bf16.mxu0 0
      %1053 = vmatmul.mubr.bf16.gmra.mxu0 %v792
      %v1054 = vpop.f32.mrf.mxu0
      %v1055 = vadd.f32 %v894, %v1054
      %v1056 = vpop.f32.mrf.mxu0
      %v1057 = vpop.f32.mrf.mxu0
      %v1058 = vadd.f32 %v897, %v1057
      %v1059 = vpop.f32.mrf.mxu0
      %1060 = vmatprep.mubr.bf16.mxu0 0
      %1061 = vmatmul.mubr.bf16.gmra.mxu0 %v795
      %v1062 = vpop.f32.mrf.mxu0
      %v1063 = vadd.f32 %v902, %v1062
      %v1064 = vpop.f32.mrf.mxu0
      %v1065 = vpop.f32.mrf.mxu0
      %v1066 = vadd.f32 %v905, %v1065
      %v1067 = vpop.f32.mrf.mxu0
      %1068 = vmatprep.mubr.bf16.mxu0 0
      %1069 = vmatmul.mubr.bf16.gmra.mxu0 %v798
      %v1070 = vpop.f32.mrf.mxu0
      %v1071 = vadd.f32 %v910, %v1070
      %v1072 = vpop.f32.mrf.mxu0
      %v1073 = vpop.f32.mrf.mxu0
      %v1074 = vadd.f32 %v913, %v1073
      %v1075 = vpop.f32.mrf.mxu0
      %1076 = vmatprep.mubr.bf16.mxu0 0
      %1077 = vmatmul.mubr.bf16.gmra.mxu0 %v801
      %v1078 = vpop.f32.mrf.mxu0
      %v1079 = vadd.f32 %v918, %v1078
      %v1080 = vpop.f32.mrf.mxu0
      %v1081 = vpop.f32.mrf.mxu0
      %v1082 = vadd.f32 %v921, %v1081
      %v1083 = vpop.f32.mrf.mxu0
      %1084 = vmatprep.mubr.bf16.mxu0 0
      %1085 = vmatmul.mubr.bf16.gmra.mxu0 %v804
      %v1086 = vpop.f32.mrf.mxu0
      %v1087 = vadd.f32 %v926, %v1086
      %v1088 = vpop.f32.mrf.mxu0
      %v1089 = vpop.f32.mrf.mxu0
      %v1090 = vadd.f32 %v929, %v1089
      %v1091 = vpop.f32.mrf.mxu0
      %1092 = vmatprep.mubr.bf16.mxu0 0
      %1093 = vmatmul.mubr.bf16.gmra.mxu0 %v807
      %v1094 = vpop.f32.mrf.mxu0
      %v1095 = vadd.f32 %v934, %v1094
      %v1096 = vpop.f32.mrf.mxu0
      %v1097 = vpop.f32.mrf.mxu0
      %v1098 = vadd.f32 %v937, %v1097
      %v1099 = vpop.f32.mrf.mxu0
      %1100 = vmatprep.mubr.bf16.mxu0 0
      %1101 = vmatmul.mubr.bf16.gmra.mxu0 %v810
      %v1102 = vpop.f32.mrf.mxu0
      %v1103 = vadd.f32 %v942, %v1102
      %v1104 = vpop.f32.mrf.mxu0
      %v1105 = vpop.f32.mrf.mxu0
      %v1106 = vadd.f32 %v945, %v1105
      %v1107 = vpop.f32.mrf.mxu0
      %1108 = vmatprep.mubr.bf16.mxu0 0
      %1109 = vmatmul.mubr.bf16.gmra.mxu0 %v813
      %v1110 = vpop.f32.mrf.mxu0
      %v1111 = vadd.f32 %v950, %v1110
      %v1112 = vpop.f32.mrf.mxu0
      %v1113 = vpop.f32.mrf.mxu0
      %v1114 = vadd.f32 %v953, %v1113
      %v1115 = vpop.f32.mrf.mxu0
      %1116 = vmatprep.mubr.bf16.mxu0 0
      %1117 = vmatmul.mubr.bf16.gmra.mxu0 %v816
      %v1118 = vpop.f32.mrf.mxu0
      %v1119 = vadd.f32 %v958, %v1118
      %v1120 = vpop.f32.mrf.mxu0
      %v1121 = vpop.f32.mrf.mxu0
      %v1122 = vadd.f32 %v961, %v1121
      %v1123 = vpop.f32.mrf.mxu0
      %1124 = vmatprep.mubr.bf16.mxu0 0
      %1125 = vmatmul.mubr.bf16.gmra.mxu0 %v819
      %v1126 = vpop.f32.mrf.mxu0
      %v1127 = vadd.f32 %v966, %v1126
      %v1128 = vpop.f32.mrf.mxu0
      %v1129 = vpop.f32.mrf.mxu0
      %v1130 = vadd.f32 %v969, %v1129
      %v1131 = vpop.f32.mrf.mxu0
      %1132 = vmatprep.mubr.bf16.mxu0 0
      %1133 = vmatmul.mubr.bf16.gmra.mxu0 %v822
      %v1134 = vpop.f32.mrf.mxu0
      %v1135 = vadd.f32 %v974, %v1134
      %v1136 = vpop.f32.mrf.mxu0
      %v1137 = vpop.f32.mrf.mxu0
      %v1138 = vadd.f32 %v977, %v1137
      %v1139 = vpop.f32.mrf.mxu0
      %1140 = vmatprep.mubr.bf16.mxu0 0
      %1141 = vmatmul.mubr.bf16.gmra.mxu0 %v825
      %v1142 = vpop.f32.mrf.mxu0
      %v1143 = vadd.f32 %v982, %v1142
      %v1144 = vpop.f32.mrf.mxu0
      %v1145 = vpop.f32.mrf.mxu0
      %v1146 = vadd.f32 %v985, %v1145
      %v1147 = vpop.f32.mrf.mxu0
      %1148 = vdwg.mxu0
      %v1149 = vld [vmem:[%s307] sm:$0x1]
      %v1151 = vlaneseq
      %v1152 = vshrl.u32 %v1151, 7
      %v1153 = vsub.s32 0, %v1152
      %v1154 = vrot.slane %v1149, %v1153
      %v1156 = vmul.f32 %v1023, %v1154
      %v1157 = vmul.f32 %v1026, %v1154
      %v1158 = vmul.f32 %v1031, %v1154
      %v1159 = vmul.f32 %v1034, %v1154
      %v1160 = vmul.f32 %v1039, %v1154
      %v1161 = vmul.f32 %v1042, %v1154
      %v1162 = vmul.f32 %v1047, %v1154
      %v1163 = vmul.f32 %v1050, %v1154
      %v1164 = vmul.f32 %v1055, %v1154
      %v1165 = vmul.f32 %v1058, %v1154
      %v1166 = vmul.f32 %v1063, %v1154
      %v1167 = vmul.f32 %v1066, %v1154
      %v1168 = vmul.f32 %v1071, %v1154
      %v1169 = vmul.f32 %v1074, %v1154
      %v1170 = vmul.f32 %v1079, %v1154
      %v1171 = vmul.f32 %v1082, %v1154
      %v1172 = vmul.f32 %v1087, %v1154
      %v1173 = vmul.f32 %v1090, %v1154
      %v1174 = vmul.f32 %v1095, %v1154
      %v1175 = vmul.f32 %v1098, %v1154
      %v1176 = vmul.f32 %v1103, %v1154
      %v1177 = vmul.f32 %v1106, %v1154
      %v1178 = vmul.f32 %v1111, %v1154
      %v1179 = vmul.f32 %v1114, %v1154
      %v1180 = vmul.f32 %v1119, %v1154
      %v1181 = vmul.f32 %v1122, %v1154
      %v1182 = vmul.f32 %v1127, %v1154
      %v1183 = vmul.f32 %v1130, %v1154
      %v1184 = vmul.f32 %v1135, %v1154
      %v1185 = vmul.f32 %v1138, %v1154
      %v1186 = vmul.f32 %v1143, %v1154
      %v1187 = vmul.f32 %v1146, %v1154
      %v1188 = vld [vmem:[%s310] sm:$0x1]
      %v1190 = vlaneseq
      %v1191 = vshrl.u32 %v1190, 7
      %v1192 = vsub.s32 0, %v1191
      %v1193 = vrot.slane %v1188, %v1192
      %v1195 = vadd.f32 %v1156, %v1193
      %v1196 = vadd.f32 %v1157, %v1193
      %v1197 = vadd.f32 %v1158, %v1193
      %v1198 = vadd.f32 %v1159, %v1193
      %v1199 = vadd.f32 %v1160, %v1193
      %v1200 = vadd.f32 %v1161, %v1193
      %v1201 = vadd.f32 %v1162, %v1193
      %v1202 = vadd.f32 %v1163, %v1193
      %v1203 = vadd.f32 %v1164, %v1193
      %v1204 = vadd.f32 %v1165, %v1193
      %v1205 = vadd.f32 %v1166, %v1193
      %v1206 = vadd.f32 %v1167, %v1193
      %v1207 = vadd.f32 %v1168, %v1193
      %v1208 = vadd.f32 %v1169, %v1193
      %v1209 = vadd.f32 %v1170, %v1193
      %v1210 = vadd.f32 %v1171, %v1193
      %v1211 = vadd.f32 %v1172, %v1193
      %v1212 = vadd.f32 %v1173, %v1193
      %v1213 = vadd.f32 %v1174, %v1193
      %v1214 = vadd.f32 %v1175, %v1193
      %v1215 = vadd.f32 %v1176, %v1193
      %v1216 = vadd.f32 %v1177, %v1193
      %v1217 = vadd.f32 %v1178, %v1193
      %v1218 = vadd.f32 %v1179, %v1193
      %v1219 = vadd.f32 %v1180, %v1193
      %v1220 = vadd.f32 %v1181, %v1193
      %v1221 = vadd.f32 %v1182, %v1193
      %v1222 = vadd.f32 %v1183, %v1193
      %v1223 = vadd.f32 %v1184, %v1193
      %v1224 = vadd.f32 %v1185, %v1193
      %v1225 = vadd.f32 %v1186, %v1193
      %v1226 = vadd.f32 %v1187, %v1193
      %v1227 = vld [vmem:[%s318] sm:$0xff]
      %v1228 = vld [vmem:[%s318 + $0x8] sm:$0xff]
      %v1229 = vld [vmem:[%s318 + $0x10] sm:$0xff]
      %v1230 = vld [vmem:[%s318 + $0x18] sm:$0xff]
      %v1231 = vld [vmem:[%s318 + $0x20] sm:$0xff]
      %v1232 = vld [vmem:[%s318 + $0x28] sm:$0xff]
      %v1233 = vld [vmem:[%s318 + $0x30] sm:$0xff]
      %v1234 = vld [vmem:[%s318 + $0x38] sm:$0xff]
      %v1235 = vld [vmem:[%s318 + $0x40] sm:$0xff]
      %v1236 = vld [vmem:[%s318 + $0x48] sm:$0xff]
      %v1237 = vld [vmem:[%s318 + $0x50] sm:$0xff]
      %v1238 = vld [vmem:[%s318 + $0x58] sm:$0xff]
      %v1239 = vld [vmem:[%s318 + $0x60] sm:$0xff]
      %v1240 = vld [vmem:[%s318 + $0x68] sm:$0xff]
      %v1241 = vld [vmem:[%s318 + $0x70] sm:$0xff]
      %v1242 = vld [vmem:[%s318 + $0x78] sm:$0xff]
      %v1243 = vld [vmem:[%s318 + $0x80] sm:$0xff]
      %v1244 = vld [vmem:[%s318 + $0x88] sm:$0xff]
      %v1245 = vld [vmem:[%s318 + $0x90] sm:$0xff]
      %v1246 = vld [vmem:[%s318 + $0x98] sm:$0xff]
      %v1247 = vld [vmem:[%s318 + $0xa0] sm:$0xff]
      %v1248 = vld [vmem:[%s318 + $0xa8] sm:$0xff]
      %v1249 = vld [vmem:[%s318 + $0xb0] sm:$0xff]
      %v1250 = vld [vmem:[%s318 + $0xb8] sm:$0xff]
      %v1251 = vld [vmem:[%s318 + $0xc0] sm:$0xff]
      %v1252 = vld [vmem:[%s318 + $0xc8] sm:$0xff]
      %v1253 = vld [vmem:[%s318 + $0xd0] sm:$0xff]
      %v1254 = vld [vmem:[%s318 + $0xd8] sm:$0xff]
      %v1255 = vld [vmem:[%s318 + $0xe0] sm:$0xff]
      %v1256 = vld [vmem:[%s318 + $0xe8] sm:$0xff]
      %v1257 = vld [vmem:[%s318 + $0xf0] sm:$0xff]
      %v1258 = vld [vmem:[%s318 + $0xf8] sm:$0xff]
      %v1259 = vadd.f32 %v1195, %v1227
      %v1260 = vadd.f32 %v1196, %v1228
      %v1261 = vadd.f32 %v1197, %v1229
      %v1262 = vadd.f32 %v1198, %v1230
      %v1263 = vadd.f32 %v1199, %v1231
      %v1264 = vadd.f32 %v1200, %v1232
      %v1265 = vadd.f32 %v1201, %v1233
      %v1266 = vadd.f32 %v1202, %v1234
      %v1267 = vadd.f32 %v1203, %v1235
      %v1268 = vadd.f32 %v1204, %v1236
      %v1269 = vadd.f32 %v1205, %v1237
      %v1270 = vadd.f32 %v1206, %v1238
      %v1271 = vadd.f32 %v1207, %v1239
      %v1272 = vadd.f32 %v1208, %v1240
      %v1273 = vadd.f32 %v1209, %v1241
      %v1274 = vadd.f32 %v1210, %v1242
      %v1275 = vadd.f32 %v1211, %v1243
      %v1276 = vadd.f32 %v1212, %v1244
      %v1277 = vadd.f32 %v1213, %v1245
      %v1278 = vadd.f32 %v1214, %v1246
      %v1279 = vadd.f32 %v1215, %v1247
      %v1280 = vadd.f32 %v1216, %v1248
      %v1281 = vadd.f32 %v1217, %v1249
      %v1282 = vadd.f32 %v1218, %v1250
      %v1283 = vadd.f32 %v1219, %v1251
      %v1284 = vadd.f32 %v1220, %v1252
      %v1285 = vadd.f32 %v1221, %v1253
      %v1286 = vadd.f32 %v1222, %v1254
      %v1287 = vadd.f32 %v1223, %v1255
      %v1288 = vadd.f32 %v1224, %v1256
      %v1289 = vadd.f32 %v1225, %v1257
      %v1290 = vadd.f32 %v1226, %v1258
      %1291 = vst.msk [vmem:[%s327] sm:$0xff] %vm778, %v1259
      %1292 = vst.msk [vmem:[%s327 + $0x8] sm:$0xff] %vm778, %v1260
      %1293 = vst.msk [vmem:[%s327 + $0x10] sm:$0xff] %vm778, %v1261
      %1294 = vst.msk [vmem:[%s327 + $0x18] sm:$0xff] %vm778, %v1262
      %1295 = vst.msk [vmem:[%s327 + $0x20] sm:$0xff] %vm778, %v1263
      %1296 = vst.msk [vmem:[%s327 + $0x28] sm:$0xff] %vm778, %v1264
      %1297 = vst.msk [vmem:[%s327 + $0x30] sm:$0xff] %vm778, %v1265
      %1298 = vst.msk [vmem:[%s327 + $0x38] sm:$0xff] %vm778, %v1266
      %1299 = vst.msk [vmem:[%s327 + $0x40] sm:$0xff] %vm778, %v1267
      %1300 = vst.msk [vmem:[%s327 + $0x48] sm:$0xff] %vm778, %v1268
      %1301 = vst.msk [vmem:[%s327 + $0x50] sm:$0xff] %vm778, %v1269
      %1302 = vst.msk [vmem:[%s327 + $0x58] sm:$0xff] %vm778, %v1270
      %1303 = vst.msk [vmem:[%s327 + $0x60] sm:$0xff] %vm778, %v1271
      %1304 = vst.msk [vmem:[%s327 + $0x68] sm:$0xff] %vm778, %v1272
      %1305 = vst.msk [vmem:[%s327 + $0x70] sm:$0xff] %vm778, %v1273
      %1306 = vst.msk [vmem:[%s327 + $0x78] sm:$0xff] %vm778, %v1274
      %1307 = vst.msk [vmem:[%s327 + $0x80] sm:$0xff] %vm778, %v1275
      %1308 = vst.msk [vmem:[%s327 + $0x88] sm:$0xff] %vm778, %v1276
      %1309 = vst.msk [vmem:[%s327 + $0x90] sm:$0xff] %vm778, %v1277
      %1310 = vst.msk [vmem:[%s327 + $0x98] sm:$0xff] %vm778, %v1278
      %1311 = vst.msk [vmem:[%s327 + $0xa0] sm:$0xff] %vm778, %v1279
      %1312 = vst.msk [vmem:[%s327 + $0xa8] sm:$0xff] %vm778, %v1280
      %1313 = vst.msk [vmem:[%s327 + $0xb0] sm:$0xff] %vm778, %v1281
      %1314 = vst.msk [vmem:[%s327 + $0xb8] sm:$0xff] %vm778, %v1282
      %1315 = vst.msk [vmem:[%s327 + $0xc0] sm:$0xff] %vm778, %v1283
      %1316 = vst.msk [vmem:[%s327 + $0xc8] sm:$0xff] %vm778, %v1284
      %1317 = vst.msk [vmem:[%s327 + $0xd0] sm:$0xff] %vm778, %v1285
      %1318 = vst.msk [vmem:[%s327 + $0xd8] sm:$0xff] %vm778, %v1286
      %1319 = vst.msk [vmem:[%s327 + $0xe0] sm:$0xff] %vm778, %v1287
      %1320 = vst.msk [vmem:[%s327 + $0xe8] sm:$0xff] %vm778, %v1288
      %1321 = vst.msk [vmem:[%s327 + $0xf0] sm:$0xff] %vm778, %v1289
      %1322 = vst.msk [vmem:[%s327 + $0xf8] sm:$0xff] %vm778, %v1290
      %s1323 = smul.u32 32, %s20
      %p1324 = scmp.lt.s32.totalorder %s1323, 63
      %s1325 = scalar_select %p1324, %s1323, 63
      %p1326 = scmp.lt.s32.totalorder %s21, 0
      %s1327 = scalar_select %p1326, %s21, 0
      %s1328 = sadd.s32 %s1327, %s1325
      %s1329 = smul.addr %s1328, 8
      %s1330 = scalar_lea.vmem %s5, %s1329
      // Predicated region
      $region41: #{_lambda_.18} parent=39 // pred_check
        %p1331 = pneg %p180
      $region42: #{_lambda_.18} parent=39 // pred_check_branch
        %1333 = sbr.rel (%p1331) target = $region44
      $region43: #{_lambda_.18} parent=39 // pred_region
        %s1334 = smul.u32 32, %s20
      $region44: #{_lambda_.18} parent=39 // pred_fallthru
        _
    $region40: #{_lambda_.18} parent=5 // pred_fallthru
      _
    %p1335 = scmp.le.s32.totalorder 2, %s11
    // Predicated region
    $region45: #{_lambda_.18} parent=5 // pred_check
      %p1336 = pneg %p1335
    $region46: #{_lambda_.18} parent=5 // pred_check_branch
      %1338 = sbr.rel (%p1336) target = $region48
    $region47: #{_lambda_.18} parent=5 // pred_region
      %s1339 = ssub.s32 %s11, 2
      // Predicated region
      $region49: #{_lambda_.18} parent=47 // pred_check
        %p1340 = pneg %p186
      $region50: #{_lambda_.18} parent=47 // pred_check_branch
        %1342 = sbr.rel (%p1340) target = $region52
      $region51: #{_lambda_.18} parent=47 // pred_region
        %s1343 = smul.u32 32, %s22
        %p1344 = scmp.lt.s32.totalorder %s1343, 63
        %s1345 = scalar_select %p1344, %s1343, 63
        %p1346 = scmp.lt.s32.totalorder %s23, 0
        %s1347 = scalar_select %p1346, %s23, 0
        %s1348 = sadd.s32 %s1347, %s1345
        %s1349 = smul.addr %s1348, 8
        %s1350 = scalar_lea.vmem %s5, %s1349
      $region52: #{_lambda_.18} parent=47 // pred_fallthru
        _
    $region48: #{_lambda_.18} parent=5 // pred_fallthru
      _
  $region6: #{_lambda_.18} parent=0 // loop_footer
    %s15 = sadd.s32 1, %s11
  $region7: #{_lambda_.18} parent=0 // loop_footer_branch
    %10 = sbr.rel target = $region3
  $region8: #{_lambda_.18} parent=0 // loop_exit
    _

// kernel: _lambda_.19
$region0: #{_lambda_.19}
  #allocation0 [shape = 'u32[]', space=smem, size = 0x4, offset = 0x4, fixed_abs, tag = 'smem constant byte address 0x4 - core index']
  #allocation1 [shape = 'u32[144,128]{1,0:T(1,128)}', space=vmem, size = 0x12000, scoped, tag = 'internal scratch']
  %s0 = inlined_call_operand.vmem [shape: f32[512,32], index: 0, kind: input, shape index: {}]
  %s1 = inlined_call_operand.vmem [shape: f32[1,32], index: 1, kind: input, shape index: {}]
  %s2 = inlined_call_operand.vmem [shape: f32[1,32], index: 2, kind: input, shape index: {}]
  %s3 = inlined_call_operand.vmem [shape: bf16[512,32], index: 3, kind: output, shape index: {}]
  %s4 = sld [smem:[#allocation0]]
  $region22: #{_lambda_.19} parent=0
    _
  %s6 = ssub.s32 1, %s4
  %s7 = scalar_select 0, %s6, %s4
  // Predicated region
  $region2: #{_lambda_.19} parent=0 // pred_check
    _
  $region3: #{_lambda_.19} parent=0 // pred_check_branch
    %9 = sbr.rel (0) target = $region5
  $region4: #{_lambda_.19} parent=0 // pred_region
    _
  $region5: #{_lambda_.19} parent=0 // pred_fallthru
    _
  // Predicated region
  $region6: #{_lambda_.19} parent=0 // pred_check
    _
  $region7: #{_lambda_.19} parent=0 // pred_check_branch
    %11 = sbr.rel (0) target = $region9
  $region8: #{_lambda_.19} parent=0 // pred_region
    _
  $region9: #{_lambda_.19} parent=0 // pred_fallthru
    _
  // Predicated region
  $region10: #{_lambda_.19} parent=0 // pred_check
    _
  $region11: #{_lambda_.19} parent=0 // pred_check_branch
    %13 = sbr.rel (0) target = $region13
  $region12: #{_lambda_.19} parent=0 // pred_region
    _
  $region13: #{_lambda_.19} parent=0 // pred_fallthru
    _
  %v14 = vld [vmem:[%s0] sm:$0xff]
  %v15 = vld [vmem:[%s0 + $0x8] sm:$0xff]
  %v16 = vld [vmem:[%s0 + $0x10] sm:$0xff]
  %v17 = vld [vmem:[%s0 + $0x18] sm:$0xff]
  %v18 = vld [vmem:[%s0 + $0x20] sm:$0xff]
  %v19 = vld [vmem:[%s0 + $0x28] sm:$0xff]
  %v20 = vld [vmem:[%s0 + $0x30] sm:$0xff]
  %v21 = vld [vmem:[%s0 + $0x38] sm:$0xff]
  %v22 = vld [vmem:[%s0 + $0x40] sm:$0xff]
  %v23 = vld [vmem:[%s0 + $0x48] sm:$0xff]
  %v24 = vld [vmem:[%s0 + $0x50] sm:$0xff]
  %v25 = vld [vmem:[%s0 + $0x58] sm:$0xff]
  %v26 = vld [vmem:[%s0 + $0x60] sm:$0xff]
  %v27 = vld [vmem:[%s0 + $0x68] sm:$0xff]
  %v28 = vld [vmem:[%s0 + $0x70] sm:$0xff]
  %v29 = vld [vmem:[%s0 + $0x78] sm:$0xff]
  %v30 = vld [vmem:[%s0 + $0x80] sm:$0xff]
  %v31 = vld [vmem:[%s0 + $0x88] sm:$0xff]
  %v32 = vld [vmem:[%s0 + $0x90] sm:$0xff]
  %v33 = vld [vmem:[%s0 + $0x98] sm:$0xff]
  %v34 = vld [vmem:[%s0 + $0xa0] sm:$0xff]
  %v35 = vld [vmem:[%s0 + $0xa8] sm:$0xff]
  %v36 = vld [vmem:[%s0 + $0xb0] sm:$0xff]
  %v37 = vld [vmem:[%s0 + $0xb8] sm:$0xff]
  %v38 = vld [vmem:[%s0 + $0xc0] sm:$0xff]
  %v39 = vld [vmem:[%s0 + $0xc8] sm:$0xff]
  %v40 = vld [vmem:[%s0 + $0xd0] sm:$0xff]
  %v41 = vld [vmem:[%s0 + $0xd8] sm:$0xff]
  %v42 = vld [vmem:[%s0 + $0xe0] sm:$0xff]
  %v43 = vld [vmem:[%s0 + $0xe8] sm:$0xff]
  %v44 = vld [vmem:[%s0 + $0xf0] sm:$0xff]
  %v45 = vld [vmem:[%s0 + $0xf8] sm:$0xff]
  %v46 = vld [vmem:[%s0 + $0x100] sm:$0xff]
  %v47 = vld [vmem:[%s0 + $0x108] sm:$0xff]
  %v48 = vld [vmem:[%s0 + $0x110] sm:$0xff]
  %v49 = vld [vmem:[%s0 + $0x118] sm:$0xff]
  %v50 = vld [vmem:[%s0 + $0x120] sm:$0xff]
  %v51 = vld [vmem:[%s0 + $0x128] sm:$0xff]
  %v52 = vld [vmem:[%s0 + $0x130] sm:$0xff]
  %v53 = vld [vmem:[%s0 + $0x138] sm:$0xff]
  %v54 = vld [vmem:[%s0 + $0x140] sm:$0xff]
  %v55 = vld [vmem:[%s0 + $0x148] sm:$0xff]
  %v56 = vld [vmem:[%s0 + $0x150] sm:$0xff]
  %v57 = vld [vmem:[%s0 + $0x158] sm:$0xff]
  %v58 = vld [vmem:[%s0 + $0x160] sm:$0xff]
  %v59 = vld [vmem:[%s0 + $0x168] sm:$0xff]
  %v60 = vld [vmem:[%s0 + $0x170] sm:$0xff]
  %v61 = vld [vmem:[%s0 + $0x178] sm:$0xff]
  %v62 = vld [vmem:[%s0 + $0x180] sm:$0xff]
  %v63 = vld [vmem:[%s0 + $0x188] sm:$0xff]
  %v64 = vld [vmem:[%s0 + $0x190] sm:$0xff]
  %v65 = vld [vmem:[%s0 + $0x198] sm:$0xff]
  %v66 = vld [vmem:[%s0 + $0x1a0] sm:$0xff]
  %v67 = vld [vmem:[%s0 + $0x1a8] sm:$0xff]
  %v68 = vld [vmem:[%s0 + $0x1b0] sm:$0xff]
  %v69 = vld [vmem:[%s0 + $0x1b8] sm:$0xff]
  %v70 = vld [vmem:[%s0 + $0x1c0] sm:$0xff]
  %v71 = vld [vmem:[%s0 + $0x1c8] sm:$0xff]
  %v72 = vld [vmem:[%s0 + $0x1d0] sm:$0xff]
  %v73 = vld [vmem:[%s0 + $0x1d8] sm:$0xff]
  %v74 = vld [vmem:[%s0 + $0x1e0] sm:$0xff]
  %v75 = vld [vmem:[%s0 + $0x1e8] sm:$0xff]
  %v76 = vld [vmem:[%s0 + $0x1f0] sm:$0xff]
  %v77 = vld [vmem:[%s0 + $0x1f8] sm:$0xff]
  %v78 = vld [vmem:[%s1] sm:$0x1]
  %v80 = vlaneseq
  %v81 = vshrl.u32 %v80, 7
  %v82 = vsub.s32 0, %v81
  %v83 = vrot.slane %v78, %v82
  %v85 = vmul.f32 %v14, %v83
  %v86 = vmul.f32 %v15, %v83
  %v87 = vmul.f32 %v16, %v83
  %v88 = vmul.f32 %v17, %v83
  %v89 = vmul.f32 %v18, %v83
  %v90 = vmul.f32 %v19, %v83
  %v91 = vmul.f32 %v20, %v83
  %v92 = vmul.f32 %v21, %v83
  %v93 = vmul.f32 %v22, %v83
  %v94 = vmul.f32 %v23, %v83
  %v95 = vmul.f32 %v24, %v83
  %v96 = vmul.f32 %v25, %v83
  %v97 = vmul.f32 %v26, %v83
  %v98 = vmul.f32 %v27, %v83
  %v99 = vmul.f32 %v28, %v83
  %v100 = vmul.f32 %v29, %v83
  %v101 = vmul.f32 %v30, %v83
  %v102 = vmul.f32 %v31, %v83
  %v103 = vmul.f32 %v32, %v83
  %v104 = vmul.f32 %v33, %v83
  %v105 = vmul.f32 %v34, %v83
  %v106 = vmul.f32 %v35, %v83
  %v107 = vmul.f32 %v36, %v83
  %v108 = vmul.f32 %v37, %v83
  %v109 = vmul.f32 %v38, %v83
  %v110 = vmul.f32 %v39, %v83
  %v111 = vmul.f32 %v40, %v83
  %v112 = vmul.f32 %v41, %v83
  %v113 = vmul.f32 %v42, %v83
  %v114 = vmul.f32 %v43, %v83
  %v115 = vmul.f32 %v44, %v83
  %v116 = vmul.f32 %v45, %v83
  %v117 = vmul.f32 %v46, %v83
  %v118 = vmul.f32 %v47, %v83
  %v119 = vmul.f32 %v48, %v83
  %v120 = vmul.f32 %v49, %v83
  %v121 = vmul.f32 %v50, %v83
  %v122 = vmul.f32 %v51, %v83
  %v123 = vmul.f32 %v52, %v83
  %v124 = vmul.f32 %v53, %v83
  %v125 = vmul.f32 %v54, %v83
  %v126 = vmul.f32 %v55, %v83
  %v127 = vmul.f32 %v56, %v83
  %v128 = vmul.f32 %v57, %v83
  %v129 = vmul.f32 %v58, %v83
  %v130 = vmul.f32 %v59, %v83
  %v131 = vmul.f32 %v60, %v83
  %v132 = vmul.f32 %v61, %v83
  %v133 = vmul.f32 %v62, %v83
  %v134 = vmul.f32 %v63, %v83
  %v135 = vmul.f32 %v64, %v83
  %v136 = vmul.f32 %v65, %v83
  %v137 = vmul.f32 %v66, %v83
  %v138 = vmul.f32 %v67, %v83
  %v139 = vmul.f32 %v68, %v83
  %v140 = vmul.f32 %v69, %v83
  %v141 = vmul.f32 %v70, %v83
  %v142 = vmul.f32 %v71, %v83
  %v143 = vmul.f32 %v72, %v83
  %v144 = vmul.f32 %v73, %v83
  %v145 = vmul.f32 %v74, %v83
  %v146 = vmul.f32 %v75, %v83
  %v147 = vmul.f32 %v76, %v83
  %v148 = vmul.f32 %v77, %v83
  %v149 = vld [vmem:[%s2] sm:$0x1]
  %v151 = vlaneseq
  %v152 = vshrl.u32 %v151, 7
  %v153 = vsub.s32 0, %v152
  %v154 = vrot.slane %v149, %v153
  %v156 = vadd.f32 %v85, %v154
  %v157 = vadd.f32 %v86, %v154
  %v158 = vadd.f32 %v87, %v154
  %v159 = vadd.f32 %v88, %v154
  %v160 = vadd.f32 %v89, %v154
  %v161 = vadd.f32 %v90, %v154
  %v162 = vadd.f32 %v91, %v154
  %v163 = vadd.f32 %v92, %v154
  %v164 = vadd.f32 %v93, %v154
  %v165 = vadd.f32 %v94, %v154
  %v166 = vadd.f32 %v95, %v154
  %v167 = vadd.f32 %v96, %v154
  %v168 = vadd.f32 %v97, %v154
  %v169 = vadd.f32 %v98, %v154
  %v170 = vadd.f32 %v99, %v154
  %v171 = vadd.f32 %v100, %v154
  %v172 = vadd.f32 %v101, %v154
  %v173 = vadd.f32 %v102, %v154
  %v174 = vadd.f32 %v103, %v154
  %v175 = vadd.f32 %v104, %v154
  %v176 = vadd.f32 %v105, %v154
  %v177 = vadd.f32 %v106, %v154
  %v178 = vadd.f32 %v107, %v154
  %v179 = vadd.f32 %v108, %v154
  %v180 = vadd.f32 %v109, %v154
  %v181 = vadd.f32 %v110, %v154
  %v182 = vadd.f32 %v111, %v154
  %v183 = vadd.f32 %v112, %v154
  %v184 = vadd.f32 %v113, %v154
  %v185 = vadd.f32 %v114, %v154
  %v186 = vadd.f32 %v115, %v154
  %v187 = vadd.f32 %v116, %v154
  %v188 = vadd.f32 %v117, %v154
  %v189 = vadd.f32 %v118, %v154
  %v190 = vadd.f32 %v119, %v154
  %v191 = vadd.f32 %v120, %v154
  %v192 = vadd.f32 %v121, %v154
  %v193 = vadd.f32 %v122, %v154
  %v194 = vadd.f32 %v123, %v154
  %v195 = vadd.f32 %v124, %v154
  %v196 = vadd.f32 %v125, %v154
  %v197 = vadd.f32 %v126, %v154
  %v198 = vadd.f32 %v127, %v154
  %v199 = vadd.f32 %v128, %v154
  %v200 = vadd.f32 %v129, %v154
  %v201 = vadd.f32 %v130, %v154
  %v202 = vadd.f32 %v131, %v154
  %v203 = vadd.f32 %v132, %v154
  %v204 = vadd.f32 %v133, %v154
  %v205 = vadd.f32 %v134, %v154
  %v206 = vadd.f32 %v135, %v154
  %v207 = vadd.f32 %v136, %v154
  %v208 = vadd.f32 %v137, %v154
  %v209 = vadd.f32 %v138, %v154
  %v210 = vadd.f32 %v139, %v154
  %v211 = vadd.f32 %v140, %v154
  %v212 = vadd.f32 %v141, %v154
  %v213 = vadd.f32 %v142, %v154
  %v214 = vadd.f32 %v143, %v154
  %v215 = vadd.f32 %v144, %v154
  %v216 = vadd.f32 %v145, %v154
  %v217 = vadd.f32 %v146, %v154
  %v218 = vadd.f32 %v147, %v154
  %v219 = vadd.f32 %v148, %v154
  %v220 = vmax.f32 %v156, 0.0
  %v221 = vmax.f32 %v157, 0.0
  %v222 = vmax.f32 %v158, 0.0
  %v223 = vmax.f32 %v159, 0.0
  %v224 = vmax.f32 %v160, 0.0
  %v225 = vmax.f32 %v161, 0.0
  %v226 = vmax.f32 %v162, 0.0
  %v227 = vmax.f32 %v163, 0.0
  %v228 = vmax.f32 %v164, 0.0
  %v229 = vmax.f32 %v165, 0.0
  %v230 = vmax.f32 %v166, 0.0
  %v231 = vmax.f32 %v167, 0.0
  %v232 = vmax.f32 %v168, 0.0
  %v233 = vmax.f32 %v169, 0.0
  %v234 = vmax.f32 %v170, 0.0
  %v235 = vmax.f32 %v171, 0.0
  %v236 = vmax.f32 %v172, 0.0
  %v237 = vmax.f32 %v173, 0.0
  %v238 = vmax.f32 %v174, 0.0
  %v239 = vmax.f32 %v175, 0.0
  %v240 = vmax.f32 %v176, 0.0
  %v241 = vmax.f32 %v177, 0.0
  %v242 = vmax.f32 %v178, 0.0
  %v243 = vmax.f32 %v179, 0.0
  %v244 = vmax.f32 %v180, 0.0
  %v245 = vmax.f32 %v181, 0.0
  %v246 = vmax.f32 %v182, 0.0
  %v247 = vmax.f32 %v183, 0.0
  %v248 = vmax.f32 %v184, 0.0
  %v249 = vmax.f32 %v185, 0.0
  %v250 = vmax.f32 %v186, 0.0
  %v251 = vmax.f32 %v187, 0.0
  %v252 = vmax.f32 %v188, 0.0
  %v253 = vmax.f32 %v189, 0.0
  %v254 = vmax.f32 %v190, 0.0
  %v255 = vmax.f32 %v191, 0.0
  %v256 = vmax.f32 %v192, 0.0
  %v257 = vmax.f32 %v193, 0.0
  %v258 = vmax.f32 %v194, 0.0
  %v259 = vmax.f32 %v195, 0.0
  %v260 = vmax.f32 %v196, 0.0
  %v261 = vmax.f32 %v197, 0.0
  %v262 = vmax.f32 %v198, 0.0
  %v263 = vmax.f32 %v199, 0.0
  %v264 = vmax.f32 %v200, 0.0
  %v265 = vmax.f32 %v201, 0.0
  %v266 = vmax.f32 %v202, 0.0
  %v267 = vmax.f32 %v203, 0.0
  %v268 = vmax.f32 %v204, 0.0
  %v269 = vmax.f32 %v205, 0.0
  %v270 = vmax.f32 %v206, 0.0
  %v271 = vmax.f32 %v207, 0.0
  %v272 = vmax.f32 %v208, 0.0
  %v273 = vmax.f32 %v209, 0.0
  %v274 = vmax.f32 %v210, 0.0
  %v275 = vmax.f32 %v211, 0.0
  %v276 = vmax.f32 %v212, 0.0
  %v277 = vmax.f32 %v213, 0.0
  %v278 = vmax.f32 %v214, 0.0
  %v279 = vmax.f32 %v215, 0.0
  %v280 = vmax.f32 %v216, 0.0
  %v281 = vmax.f32 %v217, 0.0
  %v282 = vmax.f32 %v218, 0.0
  %v283 = vmax.f32 %v219, 0.0
  %v284 = vpack.c.bf16 %v221, %v220
  %v285 = vpack.c.bf16 %v223, %v222
  %v286 = vpack.c.bf16 %v225, %v224
  %v287 = vpack.c.bf16 %v227, %v226
  %v288 = vpack.c.bf16 %v229, %v228
  %v289 = vpack.c.bf16 %v231, %v230
  %v290 = vpack.c.bf16 %v233, %v232
  %v291 = vpack.c.bf16 %v235, %v234
  %v292 = vpack.c.bf16 %v237, %v236
  %v293 = vpack.c.bf16 %v239, %v238
  %v294 = vpack.c.bf16 %v241, %v240
  %v295 = vpack.c.bf16 %v243, %v242
  %v296 = vpack.c.bf16 %v245, %v244
  %v297 = vpack.c.bf16 %v247, %v246
  %v298 = vpack.c.bf16 %v249, %v248
  %v299 = vpack.c.bf16 %v251, %v250
  %v300 = vpack.c.bf16 %v253, %v252
  %v301 = vpack.c.bf16 %v255, %v254
  %v302 = vpack.c.bf16 %v257, %v256
  %v303 = vpack.c.bf16 %v259, %v258
  %v304 = vpack.c.bf16 %v261, %v260
  %v305 = vpack.c.bf16 %v263, %v262
  %v306 = vpack.c.bf16 %v265, %v264
  %v307 = vpack.c.bf16 %v267, %v266
  %v308 = vpack.c.bf16 %v269, %v268
  %v309 = vpack.c.bf16 %v271, %v270
  %v310 = vpack.c.bf16 %v273, %v272
  %v311 = vpack.c.bf16 %v275, %v274
  %v312 = vpack.c.bf16 %v277, %v276
  %v313 = vpack.c.bf16 %v279, %v278
  %v314 = vpack.c.bf16 %v281, %v280
  %v315 = vpack.c.bf16 %v283, %v282
  %v348 = vunpack.c.l.b16 %v284
  %v349 = vunpack.c.h.b16 %v284
  %v350 = vunpack.c.l.b16 %v285
  %v351 = vunpack.c.h.b16 %v285
  %v352 = vunpack.c.l.b16 %v286
  %v353 = vunpack.c.h.b16 %v286
  %v354 = vunpack.c.l.b16 %v287
  %v355 = vunpack.c.h.b16 %v287
  %v356 = vunpack.c.l.b16 %v288
  %v357 = vunpack.c.h.b16 %v288
  %v358 = vunpack.c.l.b16 %v289
  %v359 = vunpack.c.h.b16 %v289
  %v360 = vunpack.c.l.b16 %v290
  %v361 = vunpack.c.h.b16 %v290
  %v362 = vunpack.c.l.b16 %v291
  %v363 = vunpack.c.h.b16 %v291
  %v364 = vunpack.c.l.b16 %v292
  %v365 = vunpack.c.h.b16 %v292
  %v366 = vunpack.c.l.b16 %v293
  %v367 = vunpack.c.h.b16 %v293
  %v368 = vunpack.c.l.b16 %v294
  %v369 = vunpack.c.h.b16 %v294
  %v370 = vunpack.c.l.b16 %v295
  %v371 = vunpack.c.h.b16 %v295
  %v372 = vunpack.c.l.b16 %v296
  %v373 = vunpack.c.h.b16 %v296
  %v374 = vunpack.c.l.b16 %v297
  %v375 = vunpack.c.h.b16 %v297
  %v376 = vunpack.c.l.b16 %v298
  %v377 = vunpack.c.h.b16 %v298
  %v378 = vunpack.c.l.b16 %v299
  %v379 = vunpack.c.h.b16 %v299
  %v380 = vunpack.c.l.b16 %v300
  %v381 = vunpack.c.h.b16 %v300
  %v382 = vunpack.c.l.b16 %v301
  %v383 = vunpack.c.h.b16 %v301
  %v384 = vunpack.c.l.b16 %v302
  %v385 = vunpack.c.h.b16 %v302
  %v386 = vunpack.c.l.b16 %v303
  %v387 = vunpack.c.h.b16 %v303
  %v388 = vunpack.c.l.b16 %v304
  %v389 = vunpack.c.h.b16 %v304
  %v390 = vunpack.c.l.b16 %v305
  %v391 = vunpack.c.h.b16 %v305
  %v392 = vunpack.c.l.b16 %v306
  %v393 = vunpack.c.h.b16 %v306
  %v394 = vunpack.c.l.b16 %v307
  %v395 = vunpack.c.h.b16 %v307
  %v396 = vunpack.c.l.b16 %v308
  %v397 = vunpack.c.h.b16 %v308
  %v398 = vunpack.c.l.b16 %v309
  %v399 = vunpack.c.h.b16 %v309
  %v400 = vunpack.c.l.b16 %v310
  %v401 = vunpack.c.h.b16 %v310
  %v402 = vunpack.c.l.b16 %v311
  %v403 = vunpack.c.h.b16 %v311
  %v404 = vunpack.c.l.b16 %v312
  %v405 = vunpack.c.h.b16 %v312
  %v406 = vunpack.c.l.b16 %v313
  %v407 = vunpack.c.h.b16 %v313
  %v408 = vunpack.c.l.b16 %v314
  %v409 = vunpack.c.h.b16 %v314
  %v410 = vunpack.c.l.b16 %v315
  %v411 = vunpack.c.h.b16 %v315
  %v412 = vpack.c.b16 %v348, %v348
  %v413 = vpack.c.b16 %v349, %v349
  %v414 = vpack.c.b16 %v350, %v350
  %v415 = vpack.c.b16 %v351, %v351
  %v416 = vpack.c.b16 %v352, %v352
  %v417 = vpack.c.b16 %v353, %v353
  %v418 = vpack.c.b16 %v354, %v354
  %v419 = vpack.c.b16 %v355, %v355
  %v420 = vpack.c.b16 %v356, %v356
  %v421 = vpack.c.b16 %v357, %v357
  %v422 = vpack.c.b16 %v358, %v358
  %v423 = vpack.c.b16 %v359, %v359
  %v424 = vpack.c.b16 %v360, %v360
  %v425 = vpack.c.b16 %v361, %v361
  %v426 = vpack.c.b16 %v362, %v362
  %v427 = vpack.c.b16 %v363, %v363
  %v428 = vpack.c.b16 %v364, %v364
  %v429 = vpack.c.b16 %v365, %v365
  %v430 = vpack.c.b16 %v366, %v366
  %v431 = vpack.c.b16 %v367, %v367
  %v432 = vpack.c.b16 %v368, %v368
  %v433 = vpack.c.b16 %v369, %v369
  %v434 = vpack.c.b16 %v370, %v370
  %v435 = vpack.c.b16 %v371, %v371
  %v436 = vpack.c.b16 %v372, %v372
  %v437 = vpack.c.b16 %v373, %v373
  %v438 = vpack.c.b16 %v374, %v374
  %v439 = vpack.c.b16 %v375, %v375
  %v440 = vpack.c.b16 %v376, %v376
  %v441 = vpack.c.b16 %v377, %v377
  %v442 = vpack.c.b16 %v378, %v378
  %v443 = vpack.c.b16 %v379, %v379
  %v444 = vpack.c.b16 %v380, %v380
  %v445 = vpack.c.b16 %v381, %v381
  %v446 = vpack.c.b16 %v382, %v382
  %v447 = vpack.c.b16 %v383, %v383
  %v448 = vpack.c.b16 %v384, %v384
  %v449 = vpack.c.b16 %v385, %v385
  %v450 = vpack.c.b16 %v386, %v386
  %v451 = vpack.c.b16 %v387, %v387
  %v452 = vpack.c.b16 %v388, %v388
  %v453 = vpack.c.b16 %v389, %v389
  %v454 = vpack.c.b16 %v390, %v390
  %v455 = vpack.c.b16 %v391, %v391
  %v456 = vpack.c.b16 %v392, %v392
  %v457 = vpack.c.b16 %v393, %v393
  %v458 = vpack.c.b16 %v394, %v394
  %v459 = vpack.c.b16 %v395, %v395
  %v460 = vpack.c.b16 %v396, %v396
  %v461 = vpack.c.b16 %v397, %v397
  %v462 = vpack.c.b16 %v398, %v398
  %v463 = vpack.c.b16 %v399, %v399
  %v464 = vpack.c.b16 %v400, %v400
  %v465 = vpack.c.b16 %v401, %v401
  %v466 = vpack.c.b16 %v402, %v402
  %v467 = vpack.c.b16 %v403, %v403
  %v468 = vpack.c.b16 %v404, %v404
  %v469 = vpack.c.b16 %v405, %v405
  %v470 = vpack.c.b16 %v406, %v406
  %v471 = vpack.c.b16 %v407, %v407
  %v472 = vpack.c.b16 %v408, %v408
  %v473 = vpack.c.b16 %v409, %v409
  %v474 = vpack.c.b16 %v410, %v410
  %v475 = vpack.c.b16 %v411, %v411
  %vm540 = vcmask 257024
  %541 = vst.msk [vmem:[%s3] sm:$0xf] %vm540, %v412
  %542 = vst.msk [vmem:[%s3 + $0x4] sm:$0xf] %vm540, %v413
  %543 = vst.msk [vmem:[%s3 + $0x8] sm:$0xf] %vm540, %v414
  %544 = vst.msk [vmem:[%s3 + $0xc] sm:$0xf] %vm540, %v415
  %545 = vst.msk [vmem:[%s3 + $0x10] sm:$0xf] %vm540, %v416
  %546 = vst.msk [vmem:[%s3 + $0x14] sm:$0xf] %vm540, %v417
  %547 = vst.msk [vmem:[%s3 + $0x18] sm:$0xf] %vm540, %v418
  %548 = vst.msk [vmem:[%s3 + $0x1c] sm:$0xf] %vm540, %v419
  %549 = vst.msk [vmem:[%s3 + $0x20] sm:$0xf] %vm540, %v420
  %550 = vst.msk [vmem:[%s3 + $0x24] sm:$0xf] %vm540, %v421
  %551 = vst.msk [vmem:[%s3 + $0x28] sm:$0xf] %vm540, %v422
  %552 = vst.msk [vmem:[%s3 + $0x2c] sm:$0xf] %vm540, %v423
  %553 = vst.msk [vmem:[%s3 + $0x30] sm:$0xf] %vm540, %v424
  %554 = vst.msk [vmem:[%s3 + $0x34] sm:$0xf] %vm540, %v425
  %555 = vst.msk [vmem:[%s3 + $0x38] sm:$0xf] %vm540, %v426
  %556 = vst.msk [vmem:[%s3 + $0x3c] sm:$0xf] %vm540, %v427
  %557 = vst.msk [vmem:[%s3 + $0x40] sm:$0xf] %vm540, %v428
  %558 = vst.msk [vmem:[%s3 + $0x44] sm:$0xf] %vm540, %v429
  %559 = vst.msk [vmem:[%s3 + $0x48] sm:$0xf] %vm540, %v430
  %560 = vst.msk [vmem:[%s3 + $0x4c] sm:$0xf] %vm540, %v431
  %561 = vst.msk [vmem:[%s3 + $0x50] sm:$0xf] %vm540, %v432
  %562 = vst.msk [vmem:[%s3 + $0x54] sm:$0xf] %vm540, %v433
  %563 = vst.msk [vmem:[%s3 + $0x58] sm:$0xf] %vm540, %v434
  %564 = vst.msk [vmem:[%s3 + $0x5c] sm:$0xf] %vm540, %v435
  %565 = vst.msk [vmem:[%s3 + $0x60] sm:$0xf] %vm540, %v436
  %566 = vst.msk [vmem:[%s3 + $0x64] sm:$0xf] %vm540, %v437
  %567 = vst.msk [vmem:[%s3 + $0x68] sm:$0xf] %vm540, %v438
  %568 = vst.msk [vmem:[%s3 + $0x6c] sm:$0xf] %vm540, %v439
  %569 = vst.msk [vmem:[%s3 + $0x70] sm:$0xf] %vm540, %v440
  %570 = vst.msk [vmem:[%s3 + $0x74] sm:$0xf] %vm540, %v441
  %571 = vst.msk [vmem:[%s3 + $0x78] sm:$0xf] %vm540, %v442
  %572 = vst.msk [vmem:[%s3 + $0x7c] sm:$0xf] %vm540, %v443
  %573 = vst.msk [vmem:[%s3 + $0x80] sm:$0xf] %vm540, %v444
  %574 = vst.msk [vmem:[%s3 + $0x84] sm:$0xf] %vm540, %v445
  %575 = vst.msk [vmem:[%s3 + $0x88] sm:$0xf] %vm540, %v446
  %576 = vst.msk [vmem:[%s3 + $0x8c] sm:$0xf] %vm540, %v447
  %577 = vst.msk [vmem:[%s3 + $0x90] sm:$0xf] %vm540, %v448
  %578 = vst.msk [vmem:[%s3 + $0x94] sm:$0xf] %vm540, %v449
  %579 = vst.msk [vmem:[%s3 + $0x98] sm:$0xf] %vm540, %v450
  %580 = vst.msk [vmem:[%s3 + $0x9c] sm:$0xf] %vm540, %v451
  %581 = vst.msk [vmem:[%s3 + $0xa0] sm:$0xf] %vm540, %v452
  %582 = vst.msk [vmem:[%s3 + $0xa4] sm:$0xf] %vm540, %v453
  %583 = vst.msk [vmem:[%s3 + $0xa8] sm:$0xf] %vm540, %v454
  %584 = vst.msk [vmem:[%s3 + $0xac] sm:$0xf] %vm540, %v455
  %585 = vst.msk [vmem:[%s3 + $0xb0] sm:$0xf] %vm540, %v456
  %586 = vst.msk [vmem:[%s3 + $0xb4] sm:$0xf] %vm540, %v457
  %587 = vst.msk [vmem:[%s3 + $0xb8] sm:$0xf] %vm540, %v458
  %588 = vst.msk [vmem:[%s3 + $0xbc] sm:$0xf] %vm540, %v459
  %589 = vst.msk [vmem:[%s3 + $0xc0] sm:$0xf] %vm540, %v460
  %590 = vst.msk [vmem:[%s3 + $0xc4] sm:$0xf] %vm540, %v461
  %591 = vst.msk [vmem:[%s3 + $0xc8] sm:$0xf] %vm540, %v462
  %592 = vst.msk [vmem:[%s3 + $0xcc] sm:$0xf] %vm540, %v463
  %593 = vst.msk [vmem:[%s3 + $0xd0] sm:$0xf] %vm540, %v464
  %594 = vst.msk [vmem:[%s3 + $0xd4] sm:$0xf] %vm540, %v465
  %595 = vst.msk [vmem:[%s3 + $0xd8] sm:$0xf] %vm540, %v466
  %596 = vst.msk [vmem:[%s3 + $0xdc] sm:$0xf] %vm540, %v467
  %597 = vst.msk [vmem:[%s3 + $0xe0] sm:$0xf] %vm540, %v468
  %598 = vst.msk [vmem:[%s3 + $0xe4] sm:$0xf] %vm540, %v469
  %599 = vst.msk [vmem:[%s3 + $0xe8] sm:$0xf] %vm540, %v470
  %600 = vst.msk [vmem:[%s3 + $0xec] sm:$0xf] %vm540, %v471
  %601 = vst.msk [vmem:[%s3 + $0xf0] sm:$0xf] %vm540, %v472
  %602 = vst.msk [vmem:[%s3 + $0xf4] sm:$0xf] %vm540, %v473
  %603 = vst.msk [vmem:[%s3 + $0xf8] sm:$0xf] %vm540, %v474
  %604 = vst.msk [vmem:[%s3 + $0xfc] sm:$0xf] %vm540, %v475
  // Predicated region
  $region14: #{_lambda_.19} parent=0 // pred_check
    _
  $region15: #{_lambda_.19} parent=0 // pred_check_branch
    %606 = sbr.rel (0) target = $region17
  $region16: #{_lambda_.19} parent=0 // pred_region
    _
  $region17: #{_lambda_.19} parent=0 // pred_fallthru
    _
  // Predicated region
  $region18: #{_lambda_.19} parent=0 // pred_check
    _
  $region19: #{_lambda_.19} parent=0 // pred_check_branch
    %608 = sbr.rel (0) target = $region21
  $region20: #{_lambda_.19} parent=0 // pred_region
    _
  $region21: #{_lambda_.19} parent=0 // pred_fallthru
    _

// kernel: _lambda_.20
$region0: #{_lambda_.20}
  #allocation0 [shape = 'u32[]', space=smem, size = 0x4, offset = 0x4, fixed_abs, tag = 'smem constant byte address 0x4 - core index']
  #allocation1 [shape = 'u32[144,128]{1,0:T(1,128)}', space=vmem, size = 0x12000, scoped, tag = 'internal scratch']
  %s0 = inlined_call_operand.vmem [shape: bf16[128,288], index: 0, kind: input, shape index: {}]
  %s1 = inlined_call_operand.vmem [shape: bf16[288,64], index: 1, kind: input, shape index: {}]
  %s2 = inlined_call_operand.vmem [shape: f32[1,64], index: 2, kind: input, shape index: {}]
  %s3 = inlined_call_operand.vmem [shape: f32[1,64], index: 3, kind: input, shape index: {}]
  %s4 = inlined_call_operand.vmem [shape: bf16[128,64], index: 4, kind: output, shape index: {}]
  %s5 = sld [smem:[#allocation0]]
  $region26: #{_lambda_.20} parent=0
    _
  %s7 = ssub.s32 1, %s5
  %s8 = scalar_select 0, %s7, %s5
  // Predicated region
  $region2: #{_lambda_.20} parent=0 // pred_check
    _
  $region3: #{_lambda_.20} parent=0 // pred_check_branch
    %10 = sbr.rel (0) target = $region5
  $region4: #{_lambda_.20} parent=0 // pred_region
    _
  $region5: #{_lambda_.20} parent=0 // pred_fallthru
    _
  // Predicated region
  $region6: #{_lambda_.20} parent=0 // pred_check
    _
  $region7: #{_lambda_.20} parent=0 // pred_check_branch
    %12 = sbr.rel (0) target = $region9
  $region8: #{_lambda_.20} parent=0 // pred_region
    _
  $region9: #{_lambda_.20} parent=0 // pred_fallthru
    _
  // Predicated region
  $region10: #{_lambda_.20} parent=0 // pred_check
    _
  $region11: #{_lambda_.20} parent=0 // pred_check_branch
    %14 = sbr.rel (0) target = $region13
  $region12: #{_lambda_.20} parent=0 // pred_region
    _
  $region13: #{_lambda_.20} parent=0 // pred_fallthru
    _
  // Predicated region
  $region14: #{_lambda_.20} parent=0 // pred_check
    _
  $region15: #{_lambda_.20} parent=0 // pred_check_branch
    %16 = sbr.rel (0) target = $region17
  $region16: #{_lambda_.20} parent=0 // pred_region
    _
  $region17: #{_lambda_.20} parent=0 // pred_fallthru
    _
  %v18 = vld [vmem:[%s0] sm:$0xff]
  %v19 = vld [vmem:[%s0 + $0x8] sm:$0xf]
  %v20 = vld [vmem:[%s0 + $0xc] sm:$0xff]
  %v21 = vld [vmem:[%s0 + $0x14] sm:$0xf]
  %v22 = vld [vmem:[%s0 + $0x18] sm:$0xff]
  %v23 = vld [vmem:[%s0 + $0x20] sm:$0xf]
  %v24 = vld [vmem:[%s0 + $0x24] sm:$0xff]
  %v25 = vld [vmem:[%s0 + $0x2c] sm:$0xf]
  %v26 = vld [vmem:[%s0 + $0x30] sm:$0xff]
  %v27 = vld [vmem:[%s0 + $0x38] sm:$0xf]
  %v28 = vld [vmem:[%s0 + $0x3c] sm:$0xff]
  %v29 = vld [vmem:[%s0 + $0x44] sm:$0xf]
  %v30 = vld [vmem:[%s0 + $0x48] sm:$0xff]
  %v31 = vld [vmem:[%s0 + $0x50] sm:$0xf]
  %v32 = vld [vmem:[%s0 + $0x54] sm:$0xff]
  %v33 = vld [vmem:[%s0 + $0x5c] sm:$0xf]
  %v34 = vld [vmem:[%s0 + $0x60] sm:$0xff]
  %v35 = vld [vmem:[%s0 + $0x68] sm:$0xf]
  %v36 = vld [vmem:[%s0 + $0x6c] sm:$0xff]
  %v37 = vld [vmem:[%s0 + $0x74] sm:$0xf]
  %v38 = vld [vmem:[%s0 + $0x78] sm:$0xff]
  %v39 = vld [vmem:[%s0 + $0x80] sm:$0xf]
  %v40 = vld [vmem:[%s0 + $0x84] sm:$0xff]
  %v41 = vld [vmem:[%s0 + $0x8c] sm:$0xf]
  %v42 = vld [vmem:[%s0 + $0x90] sm:$0xff]
  %v43 = vld [vmem:[%s0 + $0x98] sm:$0xf]
  %v44 = vld [vmem:[%s0 + $0x9c] sm:$0xff]
  %v45 = vld [vmem:[%s0 + $0xa4] sm:$0xf]
  %v46 = vld [vmem:[%s0 + $0xa8] sm:$0xff]
  %v47 = vld [vmem:[%s0 + $0xb0] sm:$0xf]
  %v48 = vld [vmem:[%s0 + $0xb4] sm:$0xff]
  %v49 = vld [vmem:[%s0 + $0xbc] sm:$0xf]
  %v50 = vld [vmem:[%s1] sm:$0xf]
  %v51 = vld [vmem:[%s1 + $0x4] sm:$0xf]
  %v52 = vld [vmem:[%s1 + $0x8] sm:$0xf]
  %v53 = vld [vmem:[%s1 + $0xc] sm:$0xf]
  %v54 = vld [vmem:[%s1 + $0x10] sm:$0xf]
  %v55 = vld [vmem:[%s1 + $0x14] sm:$0xf]
  %v56 = vld [vmem:[%s1 + $0x18] sm:$0xf]
  %v57 = vld [vmem:[%s1 + $0x1c] sm:$0xf]
  %v58 = vld [vmem:[%s1 + $0x20] sm:$0xf]
  %v59 = vld [vmem:[%s1 + $0x24] sm:$0xf]
  %v60 = vld [vmem:[%s1 + $0x28] sm:$0xf]
  %v61 = vld [vmem:[%s1 + $0x2c] sm:$0xf]
  %v62 = vld [vmem:[%s1 + $0x30] sm:$0xf]
  %v63 = vld [vmem:[%s1 + $0x34] sm:$0xf]
  %v64 = vld [vmem:[%s1 + $0x38] sm:$0xf]
  %v65 = vld [vmem:[%s1 + $0x3c] sm:$0xf]
  %v66 = vld [vmem:[%s1 + $0x40] sm:$0xf]
  %v67 = vld [vmem:[%s1 + $0x44] sm:$0xf]
  %v68 = vld [vmem:[%s1 + $0x48] sm:$0xf]
  %v69 = vld [vmem:[%s1 + $0x4c] sm:$0xf]
  %v70 = vld [vmem:[%s1 + $0x50] sm:$0xf]
  %v71 = vld [vmem:[%s1 + $0x54] sm:$0xf]
  %v72 = vld [vmem:[%s1 + $0x58] sm:$0xf]
  %v73 = vld [vmem:[%s1 + $0x5c] sm:$0xf]
  %v74 = vld [vmem:[%s1 + $0x60] sm:$0xf]
  %v75 = vld [vmem:[%s1 + $0x64] sm:$0xf]
  %v76 = vld [vmem:[%s1 + $0x68] sm:$0xf]
  %v77 = vld [vmem:[%s1 + $0x6c] sm:$0xf]
  %v78 = vld [vmem:[%s1 + $0x70] sm:$0xf]
  %v79 = vld [vmem:[%s1 + $0x74] sm:$0xf]
  %v80 = vld [vmem:[%s1 + $0x78] sm:$0xf]
  %v81 = vld [vmem:[%s1 + $0x7c] sm:$0xf]
  %v82 = vld [vmem:[%s1 + $0x80] sm:$0xf]
  %v83 = vld [vmem:[%s1 + $0x84] sm:$0xf]
  %v84 = vld [vmem:[%s1 + $0x88] sm:$0xf]
  %v85 = vld [vmem:[%s1 + $0x8c] sm:$0xf]
  %v118 = vunpack.c.l.b16 %v18
  %v119 = vunpack.c.h.b16 %v18
  %v120 = vunpack.c.l.b16 %v19
  %v121 = vunpack.c.l.b16 %v20
  %v122 = vunpack.c.h.b16 %v20
  %v123 = vunpack.c.l.b16 %v21
  %v124 = vunpack.c.l.b16 %v22
  %v125 = vunpack.c.h.b16 %v22
  %v126 = vunpack.c.l.b16 %v23
  %v127 = vunpack.c.l.b16 %v24
  %v128 = vunpack.c.h.b16 %v24
  %v129 = vunpack.c.l.b16 %v25
  %v130 = vunpack.c.l.b16 %v26
  %v131 = vunpack.c.h.b16 %v26
  %v132 = vunpack.c.l.b16 %v27
  %v133 = vunpack.c.l.b16 %v28
  %v134 = vunpack.c.h.b16 %v28
  %v135 = vunpack.c.l.b16 %v29
  %v136 = vunpack.c.l.b16 %v30
  %v137 = vunpack.c.h.b16 %v30
  %v138 = vunpack.c.l.b16 %v31
  %v139 = vunpack.c.l.b16 %v32
  %v140 = vunpack.c.h.b16 %v32
  %v141 = vunpack.c.l.b16 %v33
  %v142 = vunpack.c.l.b16 %v34
  %v143 = vunpack.c.h.b16 %v34
  %v144 = vunpack.c.l.b16 %v35
  %v145 = vunpack.c.l.b16 %v36
  %v146 = vunpack.c.h.b16 %v36
  %v147 = vunpack.c.l.b16 %v37
  %v148 = vunpack.c.l.b16 %v38
  %v149 = vunpack.c.h.b16 %v38
  %v150 = vunpack.c.l.b16 %v39
  %v151 = vunpack.c.l.b16 %v40
  %v152 = vunpack.c.h.b16 %v40
  %v153 = vunpack.c.l.b16 %v41
  %v154 = vunpack.c.l.b16 %v42
  %v155 = vunpack.c.h.b16 %v42
  %v156 = vunpack.c.l.b16 %v43
  %v157 = vunpack.c.l.b16 %v44
  %v158 = vunpack.c.h.b16 %v44
  %v159 = vunpack.c.l.b16 %v45
  %v160 = vunpack.c.l.b16 %v46
  %v161 = vunpack.c.h.b16 %v46
  %v162 = vunpack.c.l.b16 %v47
  %v163 = vunpack.c.l.b16 %v48
  %v164 = vunpack.c.h.b16 %v48
  %v165 = vunpack.c.l.b16 %v49
  %v166 = vpack.c.b16 %v121, %v118
  %v167 = vpack.c.b16 %v122, %v119
  %v168 = vpack.c.b16 %v123, %v120
  %v169 = vpack.c.b16 %v127, %v124
  %v170 = vpack.c.b16 %v128, %v125
  %v171 = vpack.c.b16 %v129, %v126
  %v172 = vpack.c.b16 %v133, %v130
  %v173 = vpack.c.b16 %v134, %v131
  %v174 = vpack.c.b16 %v135, %v132
  %v175 = vpack.c.b16 %v139, %v136
  %v176 = vpack.c.b16 %v140, %v137
  %v177 = vpack.c.b16 %v141, %v138
  %v178 = vpack.c.b16 %v145, %v142
  %v179 = vpack.c.b16 %v146, %v143
  %v180 = vpack.c.b16 %v147, %v144
  %v181 = vpack.c.b16 %v151, %v148
  %v182 = vpack.c.b16 %v152, %v149
  %v183 = vpack.c.b16 %v153, %v150
  %v184 = vpack.c.b16 %v157, %v154
  %v185 = vpack.c.b16 %v158, %v155
  %v186 = vpack.c.b16 %v159, %v156
  %v187 = vpack.c.b16 %v163, %v160
  %v188 = vpack.c.b16 %v164, %v161
  %v189 = vpack.c.b16 %v165, %v162
  %v242 = vunpack.c.l.b16 %v50
  %v243 = vunpack.c.l.b16 %v51
  %v244 = vunpack.c.l.b16 %v52
  %v245 = vunpack.c.l.b16 %v53
  %v246 = vunpack.c.l.b16 %v54
  %v247 = vunpack.c.l.b16 %v55
  %v248 = vunpack.c.l.b16 %v56
  %v249 = vunpack.c.l.b16 %v57
  %v250 = vunpack.c.l.b16 %v58
  %v251 = vunpack.c.l.b16 %v59
  %v252 = vunpack.c.l.b16 %v60
  %v253 = vunpack.c.l.b16 %v61
  %v254 = vunpack.c.l.b16 %v62
  %v255 = vunpack.c.l.b16 %v63
  %v256 = vunpack.c.l.b16 %v64
  %v257 = vunpack.c.l.b16 %v65
  %v258 = vunpack.c.l.b16 %v66
  %v259 = vunpack.c.l.b16 %v67
  %v260 = vunpack.c.l.b16 %v68
  %v261 = vunpack.c.l.b16 %v69
  %v262 = vunpack.c.l.b16 %v70
  %v263 = vunpack.c.l.b16 %v71
  %v264 = vunpack.c.l.b16 %v72
  %v265 = vunpack.c.l.b16 %v73
  %v266 = vunpack.c.l.b16 %v74
  %v267 = vunpack.c.l.b16 %v75
  %v268 = vunpack.c.l.b16 %v76
  %v269 = vunpack.c.l.b16 %v77
  %v270 = vunpack.c.l.b16 %v78
  %v271 = vunpack.c.l.b16 %v79
  %v272 = vunpack.c.l.b16 %v80
  %v273 = vunpack.c.l.b16 %v81
  %v274 = vunpack.c.l.b16 %v82
  %v275 = vunpack.c.l.b16 %v83
  %v276 = vunpack.c.l.b16 %v84
  %v277 = vunpack.c.l.b16 %v85
  %v278 = vpack.c.b16 %v243, %v242
  %v279 = vpack.c.b16 %v245, %v244
  %v280 = vpack.c.b16 %v247, %v246
  %v281 = vpack.c.b16 %v249, %v248
  %v282 = vpack.c.b16 %v251, %v250
  %v283 = vpack.c.b16 %v253, %v252
  %v284 = vpack.c.b16 %v255, %v254
  %v285 = vpack.c.b16 %v257, %v256
  %v286 = vpack.c.b16 %v259, %v258
  %v287 = vpack.c.b16 %v261, %v260
  %v288 = vpack.c.b16 %v263, %v262
  %v289 = vpack.c.b16 %v265, %v264
  %v290 = vpack.c.b16 %v267, %v266
  %v291 = vpack.c.b16 %v269, %v268
  %v292 = vpack.c.b16 %v271, %v270
  %v293 = vpack.c.b16 %v273, %v272
  %v294 = vpack.c.b16 %v275, %v274
  %v295 = vpack.c.b16 %v277, %v276
  %vm314 = vcmask 261120
  %v316 = vsel %vm314, %v168, 0
  %v319 = vsel %vm314, %v171, 0
  %v322 = vsel %vm314, %v174, 0
  %v325 = vsel %vm314, %v177, 0
  %v328 = vsel %vm314, %v180, 0
  %v331 = vsel %vm314, %v183, 0
  %v334 = vsel %vm314, %v186, 0
  %v337 = vsel %vm314, %v189, 0
  %339 = vmatprep.subr.bf16.mxu0 0
  %340 = vmatpush1.bf16.msra.mxu0 %v285
  %341 = vmatprep.subr.bf16.mxu0 0
  %342 = vmatpush1.bf16.msra.mxu0 %v284
  %343 = vmatprep.subr.bf16.mxu0 0
  %344 = vmatpush1.bf16.msra.mxu0 %v283
  %345 = vmatprep.subr.bf16.mxu0 0
  %346 = vmatpush1.bf16.msra.mxu0 %v282
  %347 = vmatprep.subr.bf16.mxu0 0
  %348 = vmatpush1.bf16.msra.mxu0 %v281
  %349 = vmatprep.subr.bf16.mxu0 0
  %350 = vmatpush1.bf16.msra.mxu0 %v280
  %351 = vmatprep.subr.bf16.mxu0 0
  %352 = vmatpush1.bf16.msra.mxu0 %v279
  %353 = vmatprep.subr.bf16.mxu0 0
  %354 = vmatpush1.bf16.msra.mxu0 %v278
  %355 = vmatprep.subr.bf16.mxu0 0
  %356 = vmatpush2.bf16.msra.mxu0 %v293
  %357 = vmatprep.subr.bf16.mxu0 0
  %358 = vmatpush2.bf16.msra.mxu0 %v292
  %359 = vmatprep.subr.bf16.mxu0 0
  %360 = vmatpush2.bf16.msra.mxu0 %v291
  %361 = vmatprep.subr.bf16.mxu0 0
  %362 = vmatpush2.bf16.msra.mxu0 %v290
  %363 = vmatprep.subr.bf16.mxu0 0
  %364 = vmatpush2.bf16.msra.mxu0 %v289
  %365 = vmatprep.subr.bf16.mxu0 0
  %366 = vmatpush2.bf16.msra.mxu0 %v288
  %367 = vmatprep.subr.bf16.mxu0 0
  %368 = vmatpush2.bf16.msra.mxu0 %v287
  %369 = vmatprep.subr.bf16.mxu0 0
  %370 = vmatpush2.bf16.msra.mxu0 %v286
  %371 = vmatprep.mubr.bf16.mxu0 %v167
  %372 = vmatmul.mubr.bf16.gmra.mxu0 %v166
  %v373 = vpop.f32.mrf.mxu0
  %v374 = vadd.f32 0.0, %v373
  %v375 = vpop.f32.mrf.mxu0
  %v376 = vpop.f32.mrf.mxu0
  %v377 = vadd.f32 0.0, %v376
  %v378 = vpop.f32.mrf.mxu0
  %379 = vmatprep.mubr.bf16.mxu0 %v170
  %380 = vmatmul.mubr.bf16.gmra.mxu0 %v169
  %v381 = vpop.f32.mrf.mxu0
  %v382 = vadd.f32 0.0, %v381
  %v383 = vpop.f32.mrf.mxu0
  %v384 = vpop.f32.mrf.mxu0
  %v385 = vadd.f32 0.0, %v384
  %v386 = vpop.f32.mrf.mxu0
  %387 = vmatprep.mubr.bf16.mxu0 %v173
  %388 = vmatmul.mubr.bf16.gmra.mxu0 %v172
  %v389 = vpop.f32.mrf.mxu0
  %v390 = vadd.f32 0.0, %v389
  %v391 = vpop.f32.mrf.mxu0
  %v392 = vpop.f32.mrf.mxu0
  %v393 = vadd.f32 0.0, %v392
  %v394 = vpop.f32.mrf.mxu0
  %395 = vmatprep.mubr.bf16.mxu0 %v176
  %396 = vmatmul.mubr.bf16.gmra.mxu0 %v175
  %v397 = vpop.f32.mrf.mxu0
  %v398 = vadd.f32 0.0, %v397
  %v399 = vpop.f32.mrf.mxu0
  %v400 = vpop.f32.mrf.mxu0
  %v401 = vadd.f32 0.0, %v400
  %v402 = vpop.f32.mrf.mxu0
  %403 = vmatprep.mubr.bf16.mxu0 %v179
  %404 = vmatmul.mubr.bf16.gmra.mxu0 %v178
  %v405 = vpop.f32.mrf.mxu0
  %v406 = vadd.f32 0.0, %v405
  %v407 = vpop.f32.mrf.mxu0
  %v408 = vpop.f32.mrf.mxu0
  %v409 = vadd.f32 0.0, %v408
  %v410 = vpop.f32.mrf.mxu0
  %411 = vmatprep.mubr.bf16.mxu0 %v182
  %412 = vmatmul.mubr.bf16.gmra.mxu0 %v181
  %v413 = vpop.f32.mrf.mxu0
  %v414 = vadd.f32 0.0, %v413
  %v415 = vpop.f32.mrf.mxu0
  %v416 = vpop.f32.mrf.mxu0
  %v417 = vadd.f32 0.0, %v416
  %v418 = vpop.f32.mrf.mxu0
  %419 = vmatprep.mubr.bf16.mxu0 %v185
  %420 = vmatmul.mubr.bf16.gmra.mxu0 %v184
  %v421 = vpop.f32.mrf.mxu0
  %v422 = vadd.f32 0.0, %v421
  %v423 = vpop.f32.mrf.mxu0
  %v424 = vpop.f32.mrf.mxu0
  %v425 = vadd.f32 0.0, %v424
  %v426 = vpop.f32.mrf.mxu0
  %427 = vmatprep.mubr.bf16.mxu0 %v188
  %428 = vmatmul.mubr.bf16.gmra.mxu0 %v187
  %v429 = vpop.f32.mrf.mxu0
  %v430 = vadd.f32 0.0, %v429
  %v431 = vpop.f32.mrf.mxu0
  %v432 = vpop.f32.mrf.mxu0
  %v433 = vadd.f32 0.0, %v432
  %v434 = vpop.f32.mrf.mxu0
  %435 = vdwg.mxu0
  %436 = vmatprep.subr.bf16.mxu0 0
  %437 = vmatpush1.bf16.msra.mxu0 0
  %438 = vmatprep.subr.bf16.mxu0 0
  %439 = vmatpush1.bf16.msra.mxu0 0
  %440 = vmatprep.subr.bf16.mxu0 0
  %441 = vmatpush1.bf16.msra.mxu0 0
  %442 = vmatprep.subr.bf16.mxu0 0
  %443 = vmatpush1.bf16.msra.mxu0 0
  %444 = vmatprep.subr.bf16.mxu0 0
  %445 = vmatpush1.bf16.msra.mxu0 0
  %446 = vmatprep.subr.bf16.mxu0 0
  %447 = vmatpush1.bf16.msra.mxu0 0
  %448 = vmatprep.subr.bf16.mxu0 0
  %449 = vmatpush1.bf16.msra.mxu0 %v295
  %450 = vmatprep.subr.bf16.mxu0 0
  %451 = vmatpush1.bf16.msra.mxu0 %v294
  %452 = vmatprep.subr.bf16.mxu0 0
  %453 = vmatpush2.bf16.msra.mxu0 0
  %454 = vmatprep.subr.bf16.mxu0 0
  %455 = vmatpush2.bf16.msra.mxu0 0
  %456 = vmatprep.subr.bf16.mxu0 0
  %457 = vmatpush2.bf16.msra.mxu0 0
  %458 = vmatprep.subr.bf16.mxu0 0
  %459 = vmatpush2.bf16.msra.mxu0 0
  %460 = vmatprep.subr.bf16.mxu0 0
  %461 = vmatpush2.bf16.msra.mxu0 0
  %462 = vmatprep.subr.bf16.mxu0 0
  %463 = vmatpush2.bf16.msra.mxu0 0
  %464 = vmatprep.subr.bf16.mxu0 0
  %465 = vmatpush2.bf16.msra.mxu0 0
  %466 = vmatprep.subr.bf16.mxu0 0
  %467 = vmatpush2.bf16.msra.mxu0 0
  %468 = vmatprep.mubr.bf16.mxu0 0
  %469 = vmatmul.mubr.bf16.gmra.mxu0 %v316
  %v470 = vpop.f32.mrf.mxu0
  %v471 = vadd.f32 %v374, %v470
  %v472 = vpop.f32.mrf.mxu0
  %v473 = vpop.f32.mrf.mxu0
  %v474 = vadd.f32 %v377, %v473
  %v475 = vpop.f32.mrf.mxu0
  %476 = vmatprep.mubr.bf16.mxu0 0
  %477 = vmatmul.mubr.bf16.gmra.mxu0 %v319
  %v478 = vpop.f32.mrf.mxu0
  %v479 = vadd.f32 %v382, %v478
  %v480 = vpop.f32.mrf.mxu0
  %v481 = vpop.f32.mrf.mxu0
  %v482 = vadd.f32 %v385, %v481
  %v483 = vpop.f32.mrf.mxu0
  %484 = vmatprep.mubr.bf16.mxu0 0
  %485 = vmatmul.mubr.bf16.gmra.mxu0 %v322
  %v486 = vpop.f32.mrf.mxu0
  %v487 = vadd.f32 %v390, %v486
  %v488 = vpop.f32.mrf.mxu0
  %v489 = vpop.f32.mrf.mxu0
  %v490 = vadd.f32 %v393, %v489
  %v491 = vpop.f32.mrf.mxu0
  %492 = vmatprep.mubr.bf16.mxu0 0
  %493 = vmatmul.mubr.bf16.gmra.mxu0 %v325
  %v494 = vpop.f32.mrf.mxu0
  %v495 = vadd.f32 %v398, %v494
  %v496 = vpop.f32.mrf.mxu0
  %v497 = vpop.f32.mrf.mxu0
  %v498 = vadd.f32 %v401, %v497
  %v499 = vpop.f32.mrf.mxu0
  %500 = vmatprep.mubr.bf16.mxu0 0
  %501 = vmatmul.mubr.bf16.gmra.mxu0 %v328
  %v502 = vpop.f32.mrf.mxu0
  %v503 = vadd.f32 %v406, %v502
  %v504 = vpop.f32.mrf.mxu0
  %v505 = vpop.f32.mrf.mxu0
  %v506 = vadd.f32 %v409, %v505
  %v507 = vpop.f32.mrf.mxu0
  %508 = vmatprep.mubr.bf16.mxu0 0
  %509 = vmatmul.mubr.bf16.gmra.mxu0 %v331
  %v510 = vpop.f32.mrf.mxu0
  %v511 = vadd.f32 %v414, %v510
  %v512 = vpop.f32.mrf.mxu0
  %v513 = vpop.f32.mrf.mxu0
  %v514 = vadd.f32 %v417, %v513
  %v515 = vpop.f32.mrf.mxu0
  %516 = vmatprep.mubr.bf16.mxu0 0
  %517 = vmatmul.mubr.bf16.gmra.mxu0 %v334
  %v518 = vpop.f32.mrf.mxu0
  %v519 = vadd.f32 %v422, %v518
  %v520 = vpop.f32.mrf.mxu0
  %v521 = vpop.f32.mrf.mxu0
  %v522 = vadd.f32 %v425, %v521
  %v523 = vpop.f32.mrf.mxu0
  %524 = vmatprep.mubr.bf16.mxu0 0
  %525 = vmatmul.mubr.bf16.gmra.mxu0 %v337
  %v526 = vpop.f32.mrf.mxu0
  %v527 = vadd.f32 %v430, %v526
  %v528 = vpop.f32.mrf.mxu0
  %v529 = vpop.f32.mrf.mxu0
  %v530 = vadd.f32 %v433, %v529
  %v531 = vpop.f32.mrf.mxu0
  %532 = vdwg.mxu0
  %v533 = vld [vmem:[%s2] sm:$0x1]
  %v535 = vlaneseq
  %v536 = vshrl.u32 %v535, 7
  %v537 = vsub.s32 0, %v536
  %v538 = vrot.slane %v533, %v537
  %v540 = vmul.f32 %v471, %v538
  %v541 = vmul.f32 %v474, %v538
  %v542 = vmul.f32 %v479, %v538
  %v543 = vmul.f32 %v482, %v538
  %v544 = vmul.f32 %v487, %v538
  %v545 = vmul.f32 %v490, %v538
  %v546 = vmul.f32 %v495, %v538
  %v547 = vmul.f32 %v498, %v538
  %v548 = vmul.f32 %v503, %v538
  %v549 = vmul.f32 %v506, %v538
  %v550 = vmul.f32 %v511, %v538
  %v551 = vmul.f32 %v514, %v538
  %v552 = vmul.f32 %v519, %v538
  %v553 = vmul.f32 %v522, %v538
  %v554 = vmul.f32 %v527, %v538
  %v555 = vmul.f32 %v530, %v538
  %v556 = vld [vmem:[%s3] sm:$0x1]
  %v558 = vlaneseq
  %v559 = vshrl.u32 %v558, 7
  %v560 = vsub.s32 0, %v559
  %v561 = vrot.slane %v556, %v560
  %v563 = vadd.f32 %v540, %v561
  %v564 = vadd.f32 %v541, %v561
  %v565 = vadd.f32 %v542, %v561
  %v566 = vadd.f32 %v543, %v561
  %v567 = vadd.f32 %v544, %v561
  %v568 = vadd.f32 %v545, %v561
  %v569 = vadd.f32 %v546, %v561
  %v570 = vadd.f32 %v547, %v561
  %v571 = vadd.f32 %v548, %v561
  %v572 = vadd.f32 %v549, %v561
  %v573 = vadd.f32 %v550, %v561
  %v574 = vadd.f32 %v551, %v561
  %v575 = vadd.f32 %v552, %v561
  %v576 = vadd.f32 %v553, %v561
  %v577 = vadd.f32 %v554, %v561
  %v578 = vadd.f32 %v555, %v561
  %v579 = vmax.f32 %v563, 0.0
  %v580 = vmax.f32 %v564, 0.0
  %v581 = vmax.f32 %v565, 0.0
  %v582 = vmax.f32 %v566, 0.0
  %v583 = vmax.f32 %v567, 0.0
  %v584 = vmax.f32 %v568, 0.0
  %v585 = vmax.f32 %v569, 0.0
  %v586 = vmax.f32 %v570, 0.0
  %v587 = vmax.f32 %v571, 0.0
  %v588 = vmax.f32 %v572, 0.0
  %v589 = vmax.f32 %v573, 0.0
  %v590 = vmax.f32 %v574, 0.0
  %v591 = vmax.f32 %v575, 0.0
  %v592 = vmax.f32 %v576, 0.0
  %v593 = vmax.f32 %v577, 0.0
  %v594 = vmax.f32 %v578, 0.0
  %v595 = vpack.c.bf16 %v580, %v579
  %v596 = vpack.c.bf16 %v582, %v581
  %v597 = vpack.c.bf16 %v584, %v583
  %v598 = vpack.c.bf16 %v586, %v585
  %v599 = vpack.c.bf16 %v588, %v587
  %v600 = vpack.c.bf16 %v590, %v589
  %v601 = vpack.c.bf16 %v592, %v591
  %v602 = vpack.c.bf16 %v594, %v593
  %v611 = vunpack.c.l.b16 %v595
  %v612 = vunpack.c.h.b16 %v595
  %v613 = vunpack.c.l.b16 %v596
  %v614 = vunpack.c.h.b16 %v596
  %v615 = vunpack.c.l.b16 %v597
  %v616 = vunpack.c.h.b16 %v597
  %v617 = vunpack.c.l.b16 %v598
  %v618 = vunpack.c.h.b16 %v598
  %v619 = vunpack.c.l.b16 %v599
  %v620 = vunpack.c.h.b16 %v599
  %v621 = vunpack.c.l.b16 %v600
  %v622 = vunpack.c.h.b16 %v600
  %v623 = vunpack.c.l.b16 %v601
  %v624 = vunpack.c.h.b16 %v601
  %v625 = vunpack.c.l.b16 %v602
  %v626 = vunpack.c.h.b16 %v602
  %v627 = vpack.c.b16 %v611, %v611
  %v628 = vpack.c.b16 %v612, %v612
  %v629 = vpack.c.b16 %v613, %v613
  %v630 = vpack.c.b16 %v614, %v614
  %v631 = vpack.c.b16 %v615, %v615
  %v632 = vpack.c.b16 %v616, %v616
  %v633 = vpack.c.b16 %v617, %v617
  %v634 = vpack.c.b16 %v618, %v618
  %v635 = vpack.c.b16 %v619, %v619
  %v636 = vpack.c.b16 %v620, %v620
  %v637 = vpack.c.b16 %v621, %v621
  %v638 = vpack.c.b16 %v622, %v622
  %v639 = vpack.c.b16 %v623, %v623
  %v640 = vpack.c.b16 %v624, %v624
  %v641 = vpack.c.b16 %v625, %v625
  %v642 = vpack.c.b16 %v626, %v626
  %vm659 = vcmask 519168
  %660 = vst.msk [vmem:[%s4] sm:$0xf] %vm659, %v627
  %661 = vst.msk [vmem:[%s4 + $0x4] sm:$0xf] %vm659, %v628
  %662 = vst.msk [vmem:[%s4 + $0x8] sm:$0xf] %vm659, %v629
  %663 = vst.msk [vmem:[%s4 + $0xc] sm:$0xf] %vm659, %v630
  %664 = vst.msk [vmem:[%s4 + $0x10] sm:$0xf] %vm659, %v631
  %665 = vst.msk [vmem:[%s4 + $0x14] sm:$0xf] %vm659, %v632
  %666 = vst.msk [vmem:[%s4 + $0x18] sm:$0xf] %vm659, %v633
  %667 = vst.msk [vmem:[%s4 + $0x1c] sm:$0xf] %vm659, %v634
  %668 = vst.msk [vmem:[%s4 + $0x20] sm:$0xf] %vm659, %v635
  %669 = vst.msk [vmem:[%s4 + $0x24] sm:$0xf] %vm659, %v636
  %670 = vst.msk [vmem:[%s4 + $0x28] sm:$0xf] %vm659, %v637
  %671 = vst.msk [vmem:[%s4 + $0x2c] sm:$0xf] %vm659, %v638
  %672 = vst.msk [vmem:[%s4 + $0x30] sm:$0xf] %vm659, %v639
  %673 = vst.msk [vmem:[%s4 + $0x34] sm:$0xf] %vm659, %v640
  %674 = vst.msk [vmem:[%s4 + $0x38] sm:$0xf] %vm659, %v641
  %675 = vst.msk [vmem:[%s4 + $0x3c] sm:$0xf] %vm659, %v642
  // Predicated region
  $region18: #{_lambda_.20} parent=0 // pred_check
    _
  $region19: #{_lambda_.20} parent=0 // pred_check_branch
    %677 = sbr.rel (0) target = $region21
  $region20: #{_lambda_.20} parent=0 // pred_region
    _
  $region21: #{_lambda_.20} parent=0 // pred_fallthru
    _
  // Predicated region
  $region22: #{_lambda_.20} parent=0 // pred_check
    _
  $region23: #{_lambda_.20} parent=0 // pred_check_branch
    %679 = sbr.rel (0) target = $region25
  $region24: #{_lambda_.20} parent=0 // pred_region
    _
  $region25: #{_lambda_.20} parent=0 // pred_fallthru
    _

// kernel: _lambda_.23
$region0: #{_lambda_.23}
  #allocation0 [shape = 'u32[]', space=smem, size = 0x4, offset = 0x4, fixed_abs, tag = 'smem constant byte address 0x4 - core index']
  #allocation1 [shape = 'u32[144,128]{1,0:T(1,128)}', space=vmem, size = 0x12000, scoped, tag = 'internal scratch']
  %s0 = inlined_call_operand.vmem [shape: f32[128,64], index: 0, kind: input, shape index: {}]
  %s1 = inlined_call_operand.vmem [shape: f32[1,64], index: 1, kind: input, shape index: {}]
  %s2 = inlined_call_operand.vmem [shape: f32[1,64], index: 2, kind: input, shape index: {}]
  %s3 = inlined_call_operand.vmem [shape: bf16[128,64], index: 3, kind: output, shape index: {}]
  %s4 = sld [smem:[#allocation0]]
  $region22: #{_lambda_.23} parent=0
    _
  %s6 = ssub.s32 1, %s4
  %s7 = scalar_select 0, %s6, %s4
  // Predicated region
  $region2: #{_lambda_.23} parent=0 // pred_check
    _
  $region3: #{_lambda_.23} parent=0 // pred_check_branch
    %9 = sbr.rel (0) target = $region5
  $region4: #{_lambda_.23} parent=0 // pred_region
    _
  $region5: #{_lambda_.23} parent=0 // pred_fallthru
    _
  // Predicated region
  $region6: #{_lambda_.23} parent=0 // pred_check
    _
  $region7: #{_lambda_.23} parent=0 // pred_check_branch
    %11 = sbr.rel (0) target = $region9
  $region8: #{_lambda_.23} parent=0 // pred_region
    _
  $region9: #{_lambda_.23} parent=0 // pred_fallthru
    _
  // Predicated region
  $region10: #{_lambda_.23} parent=0 // pred_check
    _
  $region11: #{_lambda_.23} parent=0 // pred_check_branch
    %13 = sbr.rel (0) target = $region13
  $region12: #{_lambda_.23} parent=0 // pred_region
    _
  $region13: #{_lambda_.23} parent=0 // pred_fallthru
    _
  %v14 = vld [vmem:[%s0] sm:$0xff]
  %v15 = vld [vmem:[%s0 + $0x8] sm:$0xff]
  %v16 = vld [vmem:[%s0 + $0x10] sm:$0xff]
  %v17 = vld [vmem:[%s0 + $0x18] sm:$0xff]
  %v18 = vld [vmem:[%s0 + $0x20] sm:$0xff]
  %v19 = vld [vmem:[%s0 + $0x28] sm:$0xff]
  %v20 = vld [vmem:[%s0 + $0x30] sm:$0xff]
  %v21 = vld [vmem:[%s0 + $0x38] sm:$0xff]
  %v22 = vld [vmem:[%s0 + $0x40] sm:$0xff]
  %v23 = vld [vmem:[%s0 + $0x48] sm:$0xff]
  %v24 = vld [vmem:[%s0 + $0x50] sm:$0xff]
  %v25 = vld [vmem:[%s0 + $0x58] sm:$0xff]
  %v26 = vld [vmem:[%s0 + $0x60] sm:$0xff]
  %v27 = vld [vmem:[%s0 + $0x68] sm:$0xff]
  %v28 = vld [vmem:[%s0 + $0x70] sm:$0xff]
  %v29 = vld [vmem:[%s0 + $0x78] sm:$0xff]
  %v30 = vld [vmem:[%s1] sm:$0x1]
  %v32 = vlaneseq
  %v33 = vshrl.u32 %v32, 7
  %v34 = vsub.s32 0, %v33
  %v35 = vrot.slane %v30, %v34
  %v37 = vmul.f32 %v14, %v35
  %v38 = vmul.f32 %v15, %v35
  %v39 = vmul.f32 %v16, %v35
  %v40 = vmul.f32 %v17, %v35
  %v41 = vmul.f32 %v18, %v35
  %v42 = vmul.f32 %v19, %v35
  %v43 = vmul.f32 %v20, %v35
  %v44 = vmul.f32 %v21, %v35
  %v45 = vmul.f32 %v22, %v35
  %v46 = vmul.f32 %v23, %v35
  %v47 = vmul.f32 %v24, %v35
  %v48 = vmul.f32 %v25, %v35
  %v49 = vmul.f32 %v26, %v35
  %v50 = vmul.f32 %v27, %v35
  %v51 = vmul.f32 %v28, %v35
  %v52 = vmul.f32 %v29, %v35
  %v53 = vld [vmem:[%s2] sm:$0x1]
  %v55 = vlaneseq
  %v56 = vshrl.u32 %v55, 7
  %v57 = vsub.s32 0, %v56
  %v58 = vrot.slane %v53, %v57
  %v60 = vadd.f32 %v37, %v58
  %v61 = vadd.f32 %v38, %v58
  %v62 = vadd.f32 %v39, %v58
  %v63 = vadd.f32 %v40, %v58
  %v64 = vadd.f32 %v41, %v58
  %v65 = vadd.f32 %v42, %v58
  %v66 = vadd.f32 %v43, %v58
  %v67 = vadd.f32 %v44, %v58
  %v68 = vadd.f32 %v45, %v58
  %v69 = vadd.f32 %v46, %v58
  %v70 = vadd.f32 %v47, %v58
  %v71 = vadd.f32 %v48, %v58
  %v72 = vadd.f32 %v49, %v58
  %v73 = vadd.f32 %v50, %v58
  %v74 = vadd.f32 %v51, %v58
  %v75 = vadd.f32 %v52, %v58
  %v76 = vmax.f32 %v60, 0.0
  %v77 = vmax.f32 %v61, 0.0
  %v78 = vmax.f32 %v62, 0.0
  %v79 = vmax.f32 %v63, 0.0
  %v80 = vmax.f32 %v64, 0.0
  %v81 = vmax.f32 %v65, 0.0
  %v82 = vmax.f32 %v66, 0.0
  %v83 = vmax.f32 %v67, 0.0
  %v84 = vmax.f32 %v68, 0.0
  %v85 = vmax.f32 %v69, 0.0
  %v86 = vmax.f32 %v70, 0.0
  %v87 = vmax.f32 %v71, 0.0
  %v88 = vmax.f32 %v72, 0.0
  %v89 = vmax.f32 %v73, 0.0
  %v90 = vmax.f32 %v74, 0.0
  %v91 = vmax.f32 %v75, 0.0
  %v92 = vpack.c.bf16 %v77, %v76
  %v93 = vpack.c.bf16 %v79, %v78
  %v94 = vpack.c.bf16 %v81, %v80
  %v95 = vpack.c.bf16 %v83, %v82
  %v96 = vpack.c.bf16 %v85, %v84
  %v97 = vpack.c.bf16 %v87, %v86
  %v98 = vpack.c.bf16 %v89, %v88
  %v99 = vpack.c.bf16 %v91, %v90
  %v108 = vunpack.c.l.b16 %v92
  %v109 = vunpack.c.h.b16 %v92
  %v110 = vunpack.c.l.b16 %v93
  %v111 = vunpack.c.h.b16 %v93
  %v112 = vunpack.c.l.b16 %v94
  %v113 = vunpack.c.h.b16 %v94
  %v114 = vunpack.c.l.b16 %v95
  %v115 = vunpack.c.h.b16 %v95
  %v116 = vunpack.c.l.b16 %v96
  %v117 = vunpack.c.h.b16 %v96
  %v118 = vunpack.c.l.b16 %v97
  %v119 = vunpack.c.h.b16 %v97
  %v120 = vunpack.c.l.b16 %v98
  %v121 = vunpack.c.h.b16 %v98
  %v122 = vunpack.c.l.b16 %v99
  %v123 = vunpack.c.h.b16 %v99
  %v124 = vpack.c.b16 %v108, %v108
  %v125 = vpack.c.b16 %v109, %v109
  %v126 = vpack.c.b16 %v110, %v110
  %v127 = vpack.c.b16 %v111, %v111
  %v128 = vpack.c.b16 %v112, %v112
  %v129 = vpack.c.b16 %v113, %v113
  %v130 = vpack.c.b16 %v114, %v114
  %v131 = vpack.c.b16 %v115, %v115
  %v132 = vpack.c.b16 %v116, %v116
  %v133 = vpack.c.b16 %v117, %v117
  %v134 = vpack.c.b16 %v118, %v118
  %v135 = vpack.c.b16 %v119, %v119
  %v136 = vpack.c.b16 %v120, %v120
  %v137 = vpack.c.b16 %v121, %v121
  %v138 = vpack.c.b16 %v122, %v122
  %v139 = vpack.c.b16 %v123, %v123
  %vm156 = vcmask 519168
  %157 = vst.msk [vmem:[%s3] sm:$0xf] %vm156, %v124
  %158 = vst.msk [vmem:[%s3 + $0x4] sm:$0xf] %vm156, %v125
  %159 = vst.msk [vmem:[%s3 + $0x8] sm:$0xf] %vm156, %v126
  %160 = vst.msk [vmem:[%s3 + $0xc] sm:$0xf] %vm156, %v127
  %161 = vst.msk [vmem:[%s3 + $0x10] sm:$0xf] %vm156, %v128
  %162 = vst.msk [vmem:[%s3 + $0x14] sm:$0xf] %vm156, %v129
  %163 = vst.msk [vmem:[%s3 + $0x18] sm:$0xf] %vm156, %v130
  %164 = vst.msk [vmem:[%s3 + $0x1c] sm:$0xf] %vm156, %v131
  %165 = vst.msk [vmem:[%s3 + $0x20] sm:$0xf] %vm156, %v132
  %166 = vst.msk [vmem:[%s3 + $0x24] sm:$0xf] %vm156, %v133
  %167 = vst.msk [vmem:[%s3 + $0x28] sm:$0xf] %vm156, %v134
  %168 = vst.msk [vmem:[%s3 + $0x2c] sm:$0xf] %vm156, %v135
  %169 = vst.msk [vmem:[%s3 + $0x30] sm:$0xf] %vm156, %v136
  %170 = vst.msk [vmem:[%s3 + $0x34] sm:$0xf] %vm156, %v137
  %171 = vst.msk [vmem:[%s3 + $0x38] sm:$0xf] %vm156, %v138
  %172 = vst.msk [vmem:[%s3 + $0x3c] sm:$0xf] %vm156, %v139
  // Predicated region
  $region14: #{_lambda_.23} parent=0 // pred_check
    _
  $region15: #{_lambda_.23} parent=0 // pred_check_branch
    %174 = sbr.rel (0) target = $region17
  $region16: #{_lambda_.23} parent=0 // pred_region
    _
  $region17: #{_lambda_.23} parent=0 // pred_fallthru
    _
  // Predicated region
  $region18: #{_lambda_.23} parent=0 // pred_check
    _
  $region19: #{_lambda_.23} parent=0 // pred_check_branch
    %176 = sbr.rel (0) target = $region21
  $region20: #{_lambda_.23} parent=0 // pred_region
    _
  $region21: #{_lambda_.23} parent=0 // pred_fallthru
    _

// kernel: _lambda_.21
$region0: #{_lambda_.21}
  #allocation0 [shape = 'u32[]', space=smem, size = 0x4, offset = 0x4, fixed_abs, tag = 'smem constant byte address 0x4 - core index']
  #allocation1 [shape = 'u32[144,128]{1,0:T(1,128)}', space=vmem, size = 0x12000, scoped, tag = 'internal scratch']
  %s0 = inlined_call_operand.vmem [shape: bf16[128,32], index: 0, kind: input, shape index: {}]
  %s1 = inlined_call_operand.vmem [shape: bf16[32,64], index: 1, kind: input, shape index: {}]
  %s2 = inlined_call_operand.vmem [shape: f32[1,64], index: 2, kind: input, shape index: {}]
  %s3 = inlined_call_operand.vmem [shape: f32[1,64], index: 3, kind: input, shape index: {}]
  %s4 = inlined_call_operand.vmem [shape: f32[128,64], index: 4, kind: output, shape index: {}]
  %s5 = sld [smem:[#allocation0]]
  $region26: #{_lambda_.21} parent=0
    _
  %s7 = ssub.s32 1, %s5
  %s8 = scalar_select 0, %s7, %s5
  // Predicated region
  $region2: #{_lambda_.21} parent=0 // pred_check
    _
  $region3: #{_lambda_.21} parent=0 // pred_check_branch
    %10 = sbr.rel (0) target = $region5
  $region4: #{_lambda_.21} parent=0 // pred_region
    _
  $region5: #{_lambda_.21} parent=0 // pred_fallthru
    _
  // Predicated region
  $region6: #{_lambda_.21} parent=0 // pred_check
    _
  $region7: #{_lambda_.21} parent=0 // pred_check_branch
    %12 = sbr.rel (0) target = $region9
  $region8: #{_lambda_.21} parent=0 // pred_region
    _
  $region9: #{_lambda_.21} parent=0 // pred_fallthru
    _
  // Predicated region
  $region10: #{_lambda_.21} parent=0 // pred_check
    _
  $region11: #{_lambda_.21} parent=0 // pred_check_branch
    %14 = sbr.rel (0) target = $region13
  $region12: #{_lambda_.21} parent=0 // pred_region
    _
  $region13: #{_lambda_.21} parent=0 // pred_fallthru
    _
  // Predicated region
  $region14: #{_lambda_.21} parent=0 // pred_check
    _
  $region15: #{_lambda_.21} parent=0 // pred_check_branch
    %16 = sbr.rel (0) target = $region17
  $region16: #{_lambda_.21} parent=0 // pred_region
    _
  $region17: #{_lambda_.21} parent=0 // pred_fallthru
    _
  %v18 = vld [vmem:[%s0] sm:$0xf]
  %v19 = vld [vmem:[%s0 + $0x4] sm:$0xf]
  %v20 = vld [vmem:[%s0 + $0x8] sm:$0xf]
  %v21 = vld [vmem:[%s0 + $0xc] sm:$0xf]
  %v22 = vld [vmem:[%s0 + $0x10] sm:$0xf]
  %v23 = vld [vmem:[%s0 + $0x14] sm:$0xf]
  %v24 = vld [vmem:[%s0 + $0x18] sm:$0xf]
  %v25 = vld [vmem:[%s0 + $0x1c] sm:$0xf]
  %v26 = vld [vmem:[%s0 + $0x20] sm:$0xf]
  %v27 = vld [vmem:[%s0 + $0x24] sm:$0xf]
  %v28 = vld [vmem:[%s0 + $0x28] sm:$0xf]
  %v29 = vld [vmem:[%s0 + $0x2c] sm:$0xf]
  %v30 = vld [vmem:[%s0 + $0x30] sm:$0xf]
  %v31 = vld [vmem:[%s0 + $0x34] sm:$0xf]
  %v32 = vld [vmem:[%s0 + $0x38] sm:$0xf]
  %v33 = vld [vmem:[%s0 + $0x3c] sm:$0xf]
  %v34 = vld [vmem:[%s1] sm:$0xf]
  %v35 = vld [vmem:[%s1 + $0x4] sm:$0xf]
  %v36 = vld [vmem:[%s1 + $0x8] sm:$0xf]
  %v37 = vld [vmem:[%s1 + $0xc] sm:$0xf]
  %v54 = vunpack.c.l.b16 %v18
  %v55 = vunpack.c.l.b16 %v19
  %v56 = vunpack.c.l.b16 %v20
  %v57 = vunpack.c.l.b16 %v21
  %v58 = vunpack.c.l.b16 %v22
  %v59 = vunpack.c.l.b16 %v23
  %v60 = vunpack.c.l.b16 %v24
  %v61 = vunpack.c.l.b16 %v25
  %v62 = vunpack.c.l.b16 %v26
  %v63 = vunpack.c.l.b16 %v27
  %v64 = vunpack.c.l.b16 %v28
  %v65 = vunpack.c.l.b16 %v29
  %v66 = vunpack.c.l.b16 %v30
  %v67 = vunpack.c.l.b16 %v31
  %v68 = vunpack.c.l.b16 %v32
  %v69 = vunpack.c.l.b16 %v33
  %v70 = vpack.c.b16 %v55, %v54
  %v71 = vpack.c.b16 %v57, %v56
  %v72 = vpack.c.b16 %v59, %v58
  %v73 = vpack.c.b16 %v61, %v60
  %v74 = vpack.c.b16 %v63, %v62
  %v75 = vpack.c.b16 %v65, %v64
  %v76 = vpack.c.b16 %v67, %v66
  %v77 = vpack.c.b16 %v69, %v68
  %v82 = vunpack.c.l.b16 %v34
  %v83 = vunpack.c.l.b16 %v35
  %v84 = vunpack.c.l.b16 %v36
  %v85 = vunpack.c.l.b16 %v37
  %v86 = vpack.c.b16 %v83, %v82
  %v87 = vpack.c.b16 %v85, %v84
  %vm90 = vcmask 261120
  %v92 = vsel %vm90, %v70, 0
  %v95 = vsel %vm90, %v71, 0
  %v98 = vsel %vm90, %v72, 0
  %v101 = vsel %vm90, %v73, 0
  %v104 = vsel %vm90, %v74, 0
  %v107 = vsel %vm90, %v75, 0
  %v110 = vsel %vm90, %v76, 0
  %v113 = vsel %vm90, %v77, 0
  %115 = vmatprep.subr.bf16.mxu0 0
  %116 = vmatpush1.bf16.msra.mxu0 0
  %117 = vmatprep.subr.bf16.mxu0 0
  %118 = vmatpush1.bf16.msra.mxu0 0
  %119 = vmatprep.subr.bf16.mxu0 0
  %120 = vmatpush1.bf16.msra.mxu0 0
  %121 = vmatprep.subr.bf16.mxu0 0
  %122 = vmatpush1.bf16.msra.mxu0 0
  %123 = vmatprep.subr.bf16.mxu0 0
  %124 = vmatpush1.bf16.msra.mxu0 0
  %125 = vmatprep.subr.bf16.mxu0 0
  %126 = vmatpush1.bf16.msra.mxu0 0
  %127 = vmatprep.subr.bf16.mxu0 0
  %128 = vmatpush1.bf16.msra.mxu0 %v87
  %129 = vmatprep.subr.bf16.mxu0 0
  %130 = vmatpush1.bf16.msra.mxu0 %v86
  %131 = vmatprep.subr.bf16.mxu0 0
  %132 = vmatpush2.bf16.msra.mxu0 0
  %133 = vmatprep.subr.bf16.mxu0 0
  %134 = vmatpush2.bf16.msra.mxu0 0
  %135 = vmatprep.subr.bf16.mxu0 0
  %136 = vmatpush2.bf16.msra.mxu0 0
  %137 = vmatprep.subr.bf16.mxu0 0
  %138 = vmatpush2.bf16.msra.mxu0 0
  %139 = vmatprep.subr.bf16.mxu0 0
  %140 = vmatpush2.bf16.msra.mxu0 0
  %141 = vmatprep.subr.bf16.mxu0 0
  %142 = vmatpush2.bf16.msra.mxu0 0
  %143 = vmatprep.subr.bf16.mxu0 0
  %144 = vmatpush2.bf16.msra.mxu0 0
  %145 = vmatprep.subr.bf16.mxu0 0
  %146 = vmatpush2.bf16.msra.mxu0 0
  %147 = vmatprep.mubr.bf16.mxu0 0
  %148 = vmatmul.mubr.bf16.gmra.mxu0 %v92
  %v149 = vpop.f32.mrf.mxu0
  %v150 = vadd.f32 0.0, %v149
  %v151 = vpop.f32.mrf.mxu0
  %v152 = vpop.f32.mrf.mxu0
  %v153 = vadd.f32 0.0, %v152
  %v154 = vpop.f32.mrf.mxu0
  %155 = vmatprep.mubr.bf16.mxu0 0
  %156 = vmatmul.mubr.bf16.gmra.mxu0 %v95
  %v157 = vpop.f32.mrf.mxu0
  %v158 = vadd.f32 0.0, %v157
  %v159 = vpop.f32.mrf.mxu0
  %v160 = vpop.f32.mrf.mxu0
  %v161 = vadd.f32 0.0, %v160
  %v162 = vpop.f32.mrf.mxu0
  %163 = vmatprep.mubr.bf16.mxu0 0
  %164 = vmatmul.mubr.bf16.gmra.mxu0 %v98
  %v165 = vpop.f32.mrf.mxu0
  %v166 = vadd.f32 0.0, %v165
  %v167 = vpop.f32.mrf.mxu0
  %v168 = vpop.f32.mrf.mxu0
  %v169 = vadd.f32 0.0, %v168
  %v170 = vpop.f32.mrf.mxu0
  %171 = vmatprep.mubr.bf16.mxu0 0
  %172 = vmatmul.mubr.bf16.gmra.mxu0 %v101
  %v173 = vpop.f32.mrf.mxu0
  %v174 = vadd.f32 0.0, %v173
  %v175 = vpop.f32.mrf.mxu0
  %v176 = vpop.f32.mrf.mxu0
  %v177 = vadd.f32 0.0, %v176
  %v178 = vpop.f32.mrf.mxu0
  %179 = vmatprep.mubr.bf16.mxu0 0
  %180 = vmatmul.mubr.bf16.gmra.mxu0 %v104
  %v181 = vpop.f32.mrf.mxu0
  %v182 = vadd.f32 0.0, %v181
  %v183 = vpop.f32.mrf.mxu0
  %v184 = vpop.f32.mrf.mxu0
  %v185 = vadd.f32 0.0, %v184
  %v186 = vpop.f32.mrf.mxu0
  %187 = vmatprep.mubr.bf16.mxu0 0
  %188 = vmatmul.mubr.bf16.gmra.mxu0 %v107
  %v189 = vpop.f32.mrf.mxu0
  %v190 = vadd.f32 0.0, %v189
  %v191 = vpop.f32.mrf.mxu0
  %v192 = vpop.f32.mrf.mxu0
  %v193 = vadd.f32 0.0, %v192
  %v194 = vpop.f32.mrf.mxu0
  %195 = vmatprep.mubr.bf16.mxu0 0
  %196 = vmatmul.mubr.bf16.gmra.mxu0 %v110
  %v197 = vpop.f32.mrf.mxu0
  %v198 = vadd.f32 0.0, %v197
  %v199 = vpop.f32.mrf.mxu0
  %v200 = vpop.f32.mrf.mxu0
  %v201 = vadd.f32 0.0, %v200
  %v202 = vpop.f32.mrf.mxu0
  %203 = vmatprep.mubr.bf16.mxu0 0
  %204 = vmatmul.mubr.bf16.gmra.mxu0 %v113
  %v205 = vpop.f32.mrf.mxu0
  %v206 = vadd.f32 0.0, %v205
  %v207 = vpop.f32.mrf.mxu0
  %v208 = vpop.f32.mrf.mxu0
  %v209 = vadd.f32 0.0, %v208
  %v210 = vpop.f32.mrf.mxu0
  %211 = vdwg.mxu0
  %v212 = vld [vmem:[%s2] sm:$0x1]
  %v214 = vlaneseq
  %v215 = vshrl.u32 %v214, 7
  %v216 = vsub.s32 0, %v215
  %v217 = vrot.slane %v212, %v216
  %v219 = vmul.f32 %v150, %v217
  %v220 = vmul.f32 %v153, %v217
  %v221 = vmul.f32 %v158, %v217
  %v222 = vmul.f32 %v161, %v217
  %v223 = vmul.f32 %v166, %v217
  %v224 = vmul.f32 %v169, %v217
  %v225 = vmul.f32 %v174, %v217
  %v226 = vmul.f32 %v177, %v217
  %v227 = vmul.f32 %v182, %v217
  %v228 = vmul.f32 %v185, %v217
  %v229 = vmul.f32 %v190, %v217
  %v230 = vmul.f32 %v193, %v217
  %v231 = vmul.f32 %v198, %v217
  %v232 = vmul.f32 %v201, %v217
  %v233 = vmul.f32 %v206, %v217
  %v234 = vmul.f32 %v209, %v217
  %v235 = vld [vmem:[%s3] sm:$0x1]
  %v237 = vlaneseq
  %v238 = vshrl.u32 %v237, 7
  %v239 = vsub.s32 0, %v238
  %v240 = vrot.slane %v235, %v239
  %v242 = vadd.f32 %v219, %v240
  %v243 = vadd.f32 %v220, %v240
  %v244 = vadd.f32 %v221, %v240
  %v245 = vadd.f32 %v222, %v240
  %v246 = vadd.f32 %v223, %v240
  %v247 = vadd.f32 %v224, %v240
  %v248 = vadd.f32 %v225, %v240
  %v249 = vadd.f32 %v226, %v240
  %v250 = vadd.f32 %v227, %v240
  %v251 = vadd.f32 %v228, %v240
  %v252 = vadd.f32 %v229, %v240
  %v253 = vadd.f32 %v230, %v240
  %v254 = vadd.f32 %v231, %v240
  %v255 = vadd.f32 %v232, %v240
  %v256 = vadd.f32 %v233, %v240
  %v257 = vadd.f32 %v234, %v240
  %vm258 = vcmask 523264
  %259 = vst.msk [vmem:[%s4] sm:$0xff] %vm258, %v242
  %260 = vst.msk [vmem:[%s4 + $0x8] sm:$0xff] %vm258, %v243
  %261 = vst.msk [vmem:[%s4 + $0x10] sm:$0xff] %vm258, %v244
  %262 = vst.msk [vmem:[%s4 + $0x18] sm:$0xff] %vm258, %v245
  %263 = vst.msk [vmem:[%s4 + $0x20] sm:$0xff] %vm258, %v246
  %264 = vst.msk [vmem:[%s4 + $0x28] sm:$0xff] %vm258, %v247
  %265 = vst.msk [vmem:[%s4 + $0x30] sm:$0xff] %vm258, %v248
  %266 = vst.msk [vmem:[%s4 + $0x38] sm:$0xff] %vm258, %v249
  %267 = vst.msk [vmem:[%s4 + $0x40] sm:$0xff] %vm258, %v250
  %268 = vst.msk [vmem:[%s4 + $0x48] sm:$0xff] %vm258, %v251
  %269 = vst.msk [vmem:[%s4 + $0x50] sm:$0xff] %vm258, %v252
  %270 = vst.msk [vmem:[%s4 + $0x58] sm:$0xff] %vm258, %v253
  %271 = vst.msk [vmem:[%s4 + $0x60] sm:$0xff] %vm258, %v254
  %272 = vst.msk [vmem:[%s4 + $0x68] sm:$0xff] %vm258, %v255
  %273 = vst.msk [vmem:[%s4 + $0x70] sm:$0xff] %vm258, %v256
  %274 = vst.msk [vmem:[%s4 + $0x78] sm:$0xff] %vm258, %v257
  // Predicated region
  $region18: #{_lambda_.21} parent=0 // pred_check
    _
  $region19: #{_lambda_.21} parent=0 // pred_check_branch
    %276 = sbr.rel (0) target = $region21
  $region20: #{_lambda_.21} parent=0 // pred_region
    _
  $region21: #{_lambda_.21} parent=0 // pred_fallthru
    _
  // Predicated region
  $region22: #{_lambda_.21} parent=0 // pred_check
    _
  $region23: #{_lambda_.21} parent=0 // pred_check_branch
    %278 = sbr.rel (0) target = $region25
  $region24: #{_lambda_.21} parent=0 // pred_region
    _
  $region25: #{_lambda_.21} parent=0 // pred_fallthru
    _

// kernel: _lambda_.22
$region0: #{_lambda_.22}
  #allocation0 [shape = 'u32[]', space=smem, size = 0x4, offset = 0x4, fixed_abs, tag = 'smem constant byte address 0x4 - core index']
  #allocation1 [shape = 'u32[144,128]{1,0:T(1,128)}', space=vmem, size = 0x12000, scoped, tag = 'internal scratch']
  %s0 = inlined_call_operand.vmem [shape: bf16[128,576], index: 0, kind: input, shape index: {}]
  %s1 = inlined_call_operand.vmem [shape: bf16[576,64], index: 1, kind: input, shape index: {}]
  %s2 = inlined_call_operand.vmem [shape: f32[1,64], index: 2, kind: input, shape index: {}]
  %s3 = inlined_call_operand.vmem [shape: f32[1,64], index: 3, kind: input, shape index: {}]
  %s4 = inlined_call_operand.vmem [shape: f32[128,64], index: 4, kind: input, shape index: {}]
  %s5 = inlined_call_operand.vmem [shape: f32[128,64], index: 5, kind: output, shape index: {}]
  %s6 = sld [smem:[#allocation0]]
  $region30: #{_lambda_.22} parent=0
    _
  %s8 = ssub.s32 1, %s6
  %s9 = scalar_select 0, %s8, %s6
  // Predicated region
  $region2: #{_lambda_.22} parent=0 // pred_check
    _
  $region3: #{_lambda_.22} parent=0 // pred_check_branch
    %11 = sbr.rel (0) target = $region5
  $region4: #{_lambda_.22} parent=0 // pred_region
    _
  $region5: #{_lambda_.22} parent=0 // pred_fallthru
    _
  // Predicated region
  $region6: #{_lambda_.22} parent=0 // pred_check
    _
  $region7: #{_lambda_.22} parent=0 // pred_check_branch
    %13 = sbr.rel (0) target = $region9
  $region8: #{_lambda_.22} parent=0 // pred_region
    _
  $region9: #{_lambda_.22} parent=0 // pred_fallthru
    _
  // Predicated region
  $region10: #{_lambda_.22} parent=0 // pred_check
    _
  $region11: #{_lambda_.22} parent=0 // pred_check_branch
    %15 = sbr.rel (0) target = $region13
  $region12: #{_lambda_.22} parent=0 // pred_region
    _
  $region13: #{_lambda_.22} parent=0 // pred_fallthru
    _
  // Predicated region
  $region14: #{_lambda_.22} parent=0 // pred_check
    _
  $region15: #{_lambda_.22} parent=0 // pred_check_branch
    %17 = sbr.rel (0) target = $region17
  $region16: #{_lambda_.22} parent=0 // pred_region
    _
  $region17: #{_lambda_.22} parent=0 // pred_fallthru
    _
  // Predicated region
  $region18: #{_lambda_.22} parent=0 // pred_check
    _
  $region19: #{_lambda_.22} parent=0 // pred_check_branch
    %19 = sbr.rel (0) target = $region21
  $region20: #{_lambda_.22} parent=0 // pred_region
    _
  $region21: #{_lambda_.22} parent=0 // pred_fallthru
    _
  %v21 = vld [vmem:[%s0] sm:$0xff]
  %v22 = vld [vmem:[%s0 + $0x8] sm:$0xff]
  %v23 = vld [vmem:[%s0 + $0x10] sm:$0xf]
  %v24 = vld [vmem:[%s0 + $0x14] sm:$0xff]
  %v25 = vld [vmem:[%s0 + $0x1c] sm:$0xff]
  %v26 = vld [vmem:[%s0 + $0x24] sm:$0xf]
  %v27 = vld [vmem:[%s0 + $0x28] sm:$0xff]
  %v28 = vld [vmem:[%s0 + $0x30] sm:$0xff]
  %v29 = vld [vmem:[%s0 + $0x38] sm:$0xf]
  %v30 = vld [vmem:[%s0 + $0x3c] sm:$0xff]
  %v31 = vld [vmem:[%s0 + $0x44] sm:$0xff]
  %v32 = vld [vmem:[%s0 + $0x4c] sm:$0xf]
  %v33 = vld [vmem:[%s0 + $0x50] sm:$0xff]
  %v34 = vld [vmem:[%s0 + $0x58] sm:$0xff]
  %v35 = vld [vmem:[%s0 + $0x60] sm:$0xf]
  %v36 = vld [vmem:[%s0 + $0x64] sm:$0xff]
  %v37 = vld [vmem:[%s0 + $0x6c] sm:$0xff]
  %v38 = vld [vmem:[%s0 + $0x74] sm:$0xf]
  %v39 = vld [vmem:[%s0 + $0x78] sm:$0xff]
  %v40 = vld [vmem:[%s0 + $0x80] sm:$0xff]
  %v41 = vld [vmem:[%s0 + $0x88] sm:$0xf]
  %v42 = vld [vmem:[%s0 + $0x8c] sm:$0xff]
  %v43 = vld [vmem:[%s0 + $0x94] sm:$0xff]
  %v44 = vld [vmem:[%s0 + $0x9c] sm:$0xf]
  %v45 = vld [vmem:[%s0 + $0xa0] sm:$0xff]
  %v46 = vld [vmem:[%s0 + $0xa8] sm:$0xff]
  %v47 = vld [vmem:[%s0 + $0xb0] sm:$0xf]
  %v48 = vld [vmem:[%s0 + $0xb4] sm:$0xff]
  %v49 = vld [vmem:[%s0 + $0xbc] sm:$0xff]
  %v50 = vld [vmem:[%s0 + $0xc4] sm:$0xf]
  %v51 = vld [vmem:[%s0 + $0xc8] sm:$0xff]
  %v52 = vld [vmem:[%s0 + $0xd0] sm:$0xff]
  %v53 = vld [vmem:[%s0 + $0xd8] sm:$0xf]
  %v54 = vld [vmem:[%s0 + $0xdc] sm:$0xff]
  %v55 = vld [vmem:[%s0 + $0xe4] sm:$0xff]
  %v56 = vld [vmem:[%s0 + $0xec] sm:$0xf]
  %v57 = vld [vmem:[%s0 + $0xf0] sm:$0xff]
  %v58 = vld [vmem:[%s0 + $0xf8] sm:$0xff]
  %v59 = vld [vmem:[%s0 + $0x100] sm:$0xf]
  %v60 = vld [vmem:[%s0 + $0x104] sm:$0xff]
  %v61 = vld [vmem:[%s0 + $0x10c] sm:$0xff]
  %v62 = vld [vmem:[%s0 + $0x114] sm:$0xf]
  %v63 = vld [vmem:[%s0 + $0x118] sm:$0xff]
  %v64 = vld [vmem:[%s0 + $0x120] sm:$0xff]
  %v65 = vld [vmem:[%s0 + $0x128] sm:$0xf]
  %v66 = vld [vmem:[%s0 + $0x12c] sm:$0xff]
  %v67 = vld [vmem:[%s0 + $0x134] sm:$0xff]
  %v68 = vld [vmem:[%s0 + $0x13c] sm:$0xf]
  %v69 = vld [vmem:[%s1] sm:$0xf]
  %v70 = vld [vmem:[%s1 + $0x4] sm:$0xf]
  %v71 = vld [vmem:[%s1 + $0x8] sm:$0xf]
  %v72 = vld [vmem:[%s1 + $0xc] sm:$0xf]
  %v73 = vld [vmem:[%s1 + $0x10] sm:$0xf]
  %v74 = vld [vmem:[%s1 + $0x14] sm:$0xf]
  %v75 = vld [vmem:[%s1 + $0x18] sm:$0xf]
  %v76 = vld [vmem:[%s1 + $0x1c] sm:$0xf]
  %v77 = vld [vmem:[%s1 + $0x20] sm:$0xf]
  %v78 = vld [vmem:[%s1 + $0x24] sm:$0xf]
  %v79 = vld [vmem:[%s1 + $0x28] sm:$0xf]
  %v80 = vld [vmem:[%s1 + $0x2c] sm:$0xf]
  %v81 = vld [vmem:[%s1 + $0x30] sm:$0xf]
  %v82 = vld [vmem:[%s1 + $0x34] sm:$0xf]
  %v83 = vld [vmem:[%s1 + $0x38] sm:$0xf]
  %v84 = vld [vmem:[%s1 + $0x3c] sm:$0xf]
  %v85 = vld [vmem:[%s1 + $0x40] sm:$0xf]
  %v86 = vld [vmem:[%s1 + $0x44] sm:$0xf]
  %v87 = vld [vmem:[%s1 + $0x48] sm:$0xf]
  %v88 = vld [vmem:[%s1 + $0x4c] sm:$0xf]
  %v89 = vld [vmem:[%s1 + $0x50] sm:$0xf]
  %v90 = vld [vmem:[%s1 + $0x54] sm:$0xf]
  %v91 = vld [vmem:[%s1 + $0x58] sm:$0xf]
  %v92 = vld [vmem:[%s1 + $0x5c] sm:$0xf]
  %v93 = vld [vmem:[%s1 + $0x60] sm:$0xf]
  %v94 = vld [vmem:[%s1 + $0x64] sm:$0xf]
  %v95 = vld [vmem:[%s1 + $0x68] sm:$0xf]
  %v96 = vld [vmem:[%s1 + $0x6c] sm:$0xf]
  %v97 = vld [vmem:[%s1 + $0x70] sm:$0xf]
  %v98 = vld [vmem:[%s1 + $0x74] sm:$0xf]
  %v99 = vld [vmem:[%s1 + $0x78] sm:$0xf]
  %v100 = vld [vmem:[%s1 + $0x7c] sm:$0xf]
  %v101 = vld [vmem:[%s1 + $0x80] sm:$0xf]
  %v102 = vld [vmem:[%s1 + $0x84] sm:$0xf]
  %v103 = vld [vmem:[%s1 + $0x88] sm:$0xf]
  %v104 = vld [vmem:[%s1 + $0x8c] sm:$0xf]
  %v105 = vld [vmem:[%s1 + $0x90] sm:$0xf]
  %v106 = vld [vmem:[%s1 + $0x94] sm:$0xf]
  %v107 = vld [vmem:[%s1 + $0x98] sm:$0xf]
  %v108 = vld [vmem:[%s1 + $0x9c] sm:$0xf]
  %v109 = vld [vmem:[%s1 + $0xa0] sm:$0xf]
  %v110 = vld [vmem:[%s1 + $0xa4] sm:$0xf]
  %v111 = vld [vmem:[%s1 + $0xa8] sm:$0xf]
  %v112 = vld [vmem:[%s1 + $0xac] sm:$0xf]
  %v113 = vld [vmem:[%s1 + $0xb0] sm:$0xf]
  %v114 = vld [vmem:[%s1 + $0xb4] sm:$0xf]
  %v115 = vld [vmem:[%s1 + $0xb8] sm:$0xf]
  %v116 = vld [vmem:[%s1 + $0xbc] sm:$0xf]
  %v117 = vld [vmem:[%s1 + $0xc0] sm:$0xf]
  %v118 = vld [vmem:[%s1 + $0xc4] sm:$0xf]
  %v119 = vld [vmem:[%s1 + $0xc8] sm:$0xf]
  %v120 = vld [vmem:[%s1 + $0xcc] sm:$0xf]
  %v121 = vld [vmem:[%s1 + $0xd0] sm:$0xf]
  %v122 = vld [vmem:[%s1 + $0xd4] sm:$0xf]
  %v123 = vld [vmem:[%s1 + $0xd8] sm:$0xf]
  %v124 = vld [vmem:[%s1 + $0xdc] sm:$0xf]
  %v125 = vld [vmem:[%s1 + $0xe0] sm:$0xf]
  %v126 = vld [vmem:[%s1 + $0xe4] sm:$0xf]
  %v127 = vld [vmem:[%s1 + $0xe8] sm:$0xf]
  %v128 = vld [vmem:[%s1 + $0xec] sm:$0xf]
  %v129 = vld [vmem:[%s1 + $0xf0] sm:$0xf]
  %v130 = vld [vmem:[%s1 + $0xf4] sm:$0xf]
  %v131 = vld [vmem:[%s1 + $0xf8] sm:$0xf]
  %v132 = vld [vmem:[%s1 + $0xfc] sm:$0xf]
  %v133 = vld [vmem:[%s1 + $0x100] sm:$0xf]
  %v134 = vld [vmem:[%s1 + $0x104] sm:$0xf]
  %v135 = vld [vmem:[%s1 + $0x108] sm:$0xf]
  %v136 = vld [vmem:[%s1 + $0x10c] sm:$0xf]
  %v137 = vld [vmem:[%s1 + $0x110] sm:$0xf]
  %v138 = vld [vmem:[%s1 + $0x114] sm:$0xf]
  %v139 = vld [vmem:[%s1 + $0x118] sm:$0xf]
  %v140 = vld [vmem:[%s1 + $0x11c] sm:$0xf]
  %v189 = vunpack.c.l.b16 %v21
  %v190 = vunpack.c.h.b16 %v21
  %v191 = vunpack.c.l.b16 %v22
  %v192 = vunpack.c.h.b16 %v22
  %v193 = vunpack.c.l.b16 %v23
  %v194 = vunpack.c.l.b16 %v24
  %v195 = vunpack.c.h.b16 %v24
  %v196 = vunpack.c.l.b16 %v25
  %v197 = vunpack.c.h.b16 %v25
  %v198 = vunpack.c.l.b16 %v26
  %v199 = vunpack.c.l.b16 %v27
  %v200 = vunpack.c.h.b16 %v27
  %v201 = vunpack.c.l.b16 %v28
  %v202 = vunpack.c.h.b16 %v28
  %v203 = vunpack.c.l.b16 %v29
  %v204 = vunpack.c.l.b16 %v30
  %v205 = vunpack.c.h.b16 %v30
  %v206 = vunpack.c.l.b16 %v31
  %v207 = vunpack.c.h.b16 %v31
  %v208 = vunpack.c.l.b16 %v32
  %v209 = vunpack.c.l.b16 %v33
  %v210 = vunpack.c.h.b16 %v33
  %v211 = vunpack.c.l.b16 %v34
  %v212 = vunpack.c.h.b16 %v34
  %v213 = vunpack.c.l.b16 %v35
  %v214 = vunpack.c.l.b16 %v36
  %v215 = vunpack.c.h.b16 %v36
  %v216 = vunpack.c.l.b16 %v37
  %v217 = vunpack.c.h.b16 %v37
  %v218 = vunpack.c.l.b16 %v38
  %v219 = vunpack.c.l.b16 %v39
  %v220 = vunpack.c.h.b16 %v39
  %v221 = vunpack.c.l.b16 %v40
  %v222 = vunpack.c.h.b16 %v40
  %v223 = vunpack.c.l.b16 %v41
  %v224 = vunpack.c.l.b16 %v42
  %v225 = vunpack.c.h.b16 %v42
  %v226 = vunpack.c.l.b16 %v43
  %v227 = vunpack.c.h.b16 %v43
  %v228 = vunpack.c.l.b16 %v44
  %v229 = vunpack.c.l.b16 %v45
  %v230 = vunpack.c.h.b16 %v45
  %v231 = vunpack.c.l.b16 %v46
  %v232 = vunpack.c.h.b16 %v46
  %v233 = vunpack.c.l.b16 %v47
  %v234 = vunpack.c.l.b16 %v48
  %v235 = vunpack.c.h.b16 %v48
  %v236 = vunpack.c.l.b16 %v49
  %v237 = vunpack.c.h.b16 %v49
  %v238 = vunpack.c.l.b16 %v50
  %v239 = vunpack.c.l.b16 %v51
  %v240 = vunpack.c.h.b16 %v51
  %v241 = vunpack.c.l.b16 %v52
  %v242 = vunpack.c.h.b16 %v52
  %v243 = vunpack.c.l.b16 %v53
  %v244 = vunpack.c.l.b16 %v54
  %v245 = vunpack.c.h.b16 %v54
  %v246 = vunpack.c.l.b16 %v55
  %v247 = vunpack.c.h.b16 %v55
  %v248 = vunpack.c.l.b16 %v56
  %v249 = vunpack.c.l.b16 %v57
  %v250 = vunpack.c.h.b16 %v57
  %v251 = vunpack.c.l.b16 %v58
  %v252 = vunpack.c.h.b16 %v58
  %v253 = vunpack.c.l.b16 %v59
  %v254 = vunpack.c.l.b16 %v60
  %v255 = vunpack.c.h.b16 %v60
  %v256 = vunpack.c.l.b16 %v61
  %v257 = vunpack.c.h.b16 %v61
  %v258 = vunpack.c.l.b16 %v62
  %v259 = vunpack.c.l.b16 %v63
  %v260 = vunpack.c.h.b16 %v63
  %v261 = vunpack.c.l.b16 %v64
  %v262 = vunpack.c.h.b16 %v64
  %v263 = vunpack.c.l.b16 %v65
  %v264 = vunpack.c.l.b16 %v66
  %v265 = vunpack.c.h.b16 %v66
  %v266 = vunpack.c.l.b16 %v67
  %v267 = vunpack.c.h.b16 %v67
  %v268 = vunpack.c.l.b16 %v68
  %v269 = vpack.c.b16 %v194, %v189
  %v270 = vpack.c.b16 %v195, %v190
  %v271 = vpack.c.b16 %v196, %v191
  %v272 = vpack.c.b16 %v197, %v192
  %v273 = vpack.c.b16 %v198, %v193
  %v274 = vpack.c.b16 %v204, %v199
  %v275 = vpack.c.b16 %v205, %v200
  %v276 = vpack.c.b16 %v206, %v201
  %v277 = vpack.c.b16 %v207, %v202
  %v278 = vpack.c.b16 %v208, %v203
  %v279 = vpack.c.b16 %v214, %v209
  %v280 = vpack.c.b16 %v215, %v210
  %v281 = vpack.c.b16 %v216, %v211
  %v282 = vpack.c.b16 %v217, %v212
  %v283 = vpack.c.b16 %v218, %v213
  %v284 = vpack.c.b16 %v224, %v219
  %v285 = vpack.c.b16 %v225, %v220
  %v286 = vpack.c.b16 %v226, %v221
  %v287 = vpack.c.b16 %v227, %v222
  %v288 = vpack.c.b16 %v228, %v223
  %v289 = vpack.c.b16 %v234, %v229
  %v290 = vpack.c.b16 %v235, %v230
  %v291 = vpack.c.b16 %v236, %v231
  %v292 = vpack.c.b16 %v237, %v232
  %v293 = vpack.c.b16 %v238, %v233
  %v294 = vpack.c.b16 %v244, %v239
  %v295 = vpack.c.b16 %v245, %v240
  %v296 = vpack.c.b16 %v246, %v241
  %v297 = vpack.c.b16 %v247, %v242
  %v298 = vpack.c.b16 %v248, %v243
  %v299 = vpack.c.b16 %v254, %v249
  %v300 = vpack.c.b16 %v255, %v250
  %v301 = vpack.c.b16 %v256, %v251
  %v302 = vpack.c.b16 %v257, %v252
  %v303 = vpack.c.b16 %v258, %v253
  %v304 = vpack.c.b16 %v264, %v259
  %v305 = vpack.c.b16 %v265, %v260
  %v306 = vpack.c.b16 %v266, %v261
  %v307 = vpack.c.b16 %v267, %v262
  %v308 = vpack.c.b16 %v268, %v263
  %v413 = vunpack.c.l.b16 %v69
  %v414 = vunpack.c.l.b16 %v70
  %v415 = vunpack.c.l.b16 %v71
  %v416 = vunpack.c.l.b16 %v72
  %v417 = vunpack.c.l.b16 %v73
  %v418 = vunpack.c.l.b16 %v74
  %v419 = vunpack.c.l.b16 %v75
  %v420 = vunpack.c.l.b16 %v76
  %v421 = vunpack.c.l.b16 %v77
  %v422 = vunpack.c.l.b16 %v78
  %v423 = vunpack.c.l.b16 %v79
  %v424 = vunpack.c.l.b16 %v80
  %v425 = vunpack.c.l.b16 %v81
  %v426 = vunpack.c.l.b16 %v82
  %v427 = vunpack.c.l.b16 %v83
  %v428 = vunpack.c.l.b16 %v84
  %v429 = vunpack.c.l.b16 %v85
  %v430 = vunpack.c.l.b16 %v86
  %v431 = vunpack.c.l.b16 %v87
  %v432 = vunpack.c.l.b16 %v88
  %v433 = vunpack.c.l.b16 %v89
  %v434 = vunpack.c.l.b16 %v90
  %v435 = vunpack.c.l.b16 %v91
  %v436 = vunpack.c.l.b16 %v92
  %v437 = vunpack.c.l.b16 %v93
  %v438 = vunpack.c.l.b16 %v94
  %v439 = vunpack.c.l.b16 %v95
  %v440 = vunpack.c.l.b16 %v96
  %v441 = vunpack.c.l.b16 %v97
  %v442 = vunpack.c.l.b16 %v98
  %v443 = vunpack.c.l.b16 %v99
  %v444 = vunpack.c.l.b16 %v100
  %v445 = vunpack.c.l.b16 %v101
  %v446 = vunpack.c.l.b16 %v102
  %v447 = vunpack.c.l.b16 %v103
  %v448 = vunpack.c.l.b16 %v104
  %v449 = vunpack.c.l.b16 %v105
  %v450 = vunpack.c.l.b16 %v106
  %v451 = vunpack.c.l.b16 %v107
  %v452 = vunpack.c.l.b16 %v108
  %v453 = vunpack.c.l.b16 %v109
  %v454 = vunpack.c.l.b16 %v110
  %v455 = vunpack.c.l.b16 %v111
  %v456 = vunpack.c.l.b16 %v112
  %v457 = vunpack.c.l.b16 %v113
  %v458 = vunpack.c.l.b16 %v114
  %v459 = vunpack.c.l.b16 %v115
  %v460 = vunpack.c.l.b16 %v116
  %v461 = vunpack.c.l.b16 %v117
  %v462 = vunpack.c.l.b16 %v118
  %v463 = vunpack.c.l.b16 %v119
  %v464 = vunpack.c.l.b16 %v120
  %v465 = vunpack.c.l.b16 %v121
  %v466 = vunpack.c.l.b16 %v122
  %v467 = vunpack.c.l.b16 %v123
  %v468 = vunpack.c.l.b16 %v124
  %v469 = vunpack.c.l.b16 %v125
  %v470 = vunpack.c.l.b16 %v126
  %v471 = vunpack.c.l.b16 %v127
  %v472 = vunpack.c.l.b16 %v128
  %v473 = vunpack.c.l.b16 %v129
  %v474 = vunpack.c.l.b16 %v130
  %v475 = vunpack.c.l.b16 %v131
  %v476 = vunpack.c.l.b16 %v132
  %v477 = vunpack.c.l.b16 %v133
  %v478 = vunpack.c.l.b16 %v134
  %v479 = vunpack.c.l.b16 %v135
  %v480 = vunpack.c.l.b16 %v136
  %v481 = vunpack.c.l.b16 %v137
  %v482 = vunpack.c.l.b16 %v138
  %v483 = vunpack.c.l.b16 %v139
  %v484 = vunpack.c.l.b16 %v140
  %v485 = vpack.c.b16 %v414, %v413
  %v486 = vpack.c.b16 %v416, %v415
  %v487 = vpack.c.b16 %v418, %v417
  %v488 = vpack.c.b16 %v420, %v419
  %v489 = vpack.c.b16 %v422, %v421
  %v490 = vpack.c.b16 %v424, %v423
  %v491 = vpack.c.b16 %v426, %v425
  %v492 = vpack.c.b16 %v428, %v427
  %v493 = vpack.c.b16 %v430, %v429
  %v494 = vpack.c.b16 %v432, %v431
  %v495 = vpack.c.b16 %v434, %v433
  %v496 = vpack.c.b16 %v436, %v435
  %v497 = vpack.c.b16 %v438, %v437
  %v498 = vpack.c.b16 %v440, %v439
  %v499 = vpack.c.b16 %v442, %v441
  %v500 = vpack.c.b16 %v444, %v443
  %v501 = vpack.c.b16 %v446, %v445
  %v502 = vpack.c.b16 %v448, %v447
  %v503 = vpack.c.b16 %v450, %v449
  %v504 = vpack.c.b16 %v452, %v451
  %v505 = vpack.c.b16 %v454, %v453
  %v506 = vpack.c.b16 %v456, %v455
  %v507 = vpack.c.b16 %v458, %v457
  %v508 = vpack.c.b16 %v460, %v459
  %v509 = vpack.c.b16 %v462, %v461
  %v510 = vpack.c.b16 %v464, %v463
  %v511 = vpack.c.b16 %v466, %v465
  %v512 = vpack.c.b16 %v468, %v467
  %v513 = vpack.c.b16 %v470, %v469
  %v514 = vpack.c.b16 %v472, %v471
  %v515 = vpack.c.b16 %v474, %v473
  %v516 = vpack.c.b16 %v476, %v475
  %v517 = vpack.c.b16 %v478, %v477
  %v518 = vpack.c.b16 %v480, %v479
  %v519 = vpack.c.b16 %v482, %v481
  %v520 = vpack.c.b16 %v484, %v483
  %vm557 = vcmask 523264
  %v559 = vsel %vm557, %v273, 0
  %v562 = vsel %vm557, %v278, 0
  %v565 = vsel %vm557, %v283, 0
  %v568 = vsel %vm557, %v288, 0
  %v571 = vsel %vm557, %v293, 0
  %v574 = vsel %vm557, %v298, 0
  %v577 = vsel %vm557, %v303, 0
  %v580 = vsel %vm557, %v308, 0
  %582 = vmatprep.subr.bf16.mxu0 0
  %583 = vmatpush1.bf16.msra.mxu0 %v492
  %584 = vmatprep.subr.bf16.mxu0 0
  %585 = vmatpush1.bf16.msra.mxu0 %v491
  %586 = vmatprep.subr.bf16.mxu0 0
  %587 = vmatpush1.bf16.msra.mxu0 %v490
  %588 = vmatprep.subr.bf16.mxu0 0
  %589 = vmatpush1.bf16.msra.mxu0 %v489
  %590 = vmatprep.subr.bf16.mxu0 0
  %591 = vmatpush1.bf16.msra.mxu0 %v488
  %592 = vmatprep.subr.bf16.mxu0 0
  %593 = vmatpush1.bf16.msra.mxu0 %v487
  %594 = vmatprep.subr.bf16.mxu0 0
  %595 = vmatpush1.bf16.msra.mxu0 %v486
  %596 = vmatprep.subr.bf16.mxu0 0
  %597 = vmatpush1.bf16.msra.mxu0 %v485
  %598 = vmatprep.subr.bf16.mxu0 0
  %599 = vmatpush2.bf16.msra.mxu0 %v500
  %600 = vmatprep.subr.bf16.mxu0 0
  %601 = vmatpush2.bf16.msra.mxu0 %v499
  %602 = vmatprep.subr.bf16.mxu0 0
  %603 = vmatpush2.bf16.msra.mxu0 %v498
  %604 = vmatprep.subr.bf16.mxu0 0
  %605 = vmatpush2.bf16.msra.mxu0 %v497
  %606 = vmatprep.subr.bf16.mxu0 0
  %607 = vmatpush2.bf16.msra.mxu0 %v496
  %608 = vmatprep.subr.bf16.mxu0 0
  %609 = vmatpush2.bf16.msra.mxu0 %v495
  %610 = vmatprep.subr.bf16.mxu0 0
  %611 = vmatpush2.bf16.msra.mxu0 %v494
  %612 = vmatprep.subr.bf16.mxu0 0
  %613 = vmatpush2.bf16.msra.mxu0 %v493
  %614 = vmatprep.mubr.bf16.mxu0 %v270
  %615 = vmatmul.mubr.bf16.gmra.mxu0 %v269
  %v616 = vpop.f32.mrf.mxu0
  %v617 = vadd.f32 0.0, %v616
  %v618 = vpop.f32.mrf.mxu0
  %v619 = vpop.f32.mrf.mxu0
  %v620 = vadd.f32 0.0, %v619
  %v621 = vpop.f32.mrf.mxu0
  %622 = vmatprep.mubr.bf16.mxu0 %v275
  %623 = vmatmul.mubr.bf16.gmra.mxu0 %v274
  %v624 = vpop.f32.mrf.mxu0
  %v625 = vadd.f32 0.0, %v624
  %v626 = vpop.f32.mrf.mxu0
  %v627 = vpop.f32.mrf.mxu0
  %v628 = vadd.f32 0.0, %v627
  %v629 = vpop.f32.mrf.mxu0
  %630 = vmatprep.mubr.bf16.mxu0 %v280
  %631 = vmatmul.mubr.bf16.gmra.mxu0 %v279
  %v632 = vpop.f32.mrf.mxu0
  %v633 = vadd.f32 0.0, %v632
  %v634 = vpop.f32.mrf.mxu0
  %v635 = vpop.f32.mrf.mxu0
  %v636 = vadd.f32 0.0, %v635
  %v637 = vpop.f32.mrf.mxu0
  %638 = vmatprep.mubr.bf16.mxu0 %v285
  %639 = vmatmul.mubr.bf16.gmra.mxu0 %v284
  %v640 = vpop.f32.mrf.mxu0
  %v641 = vadd.f32 0.0, %v640
  %v642 = vpop.f32.mrf.mxu0
  %v643 = vpop.f32.mrf.mxu0
  %v644 = vadd.f32 0.0, %v643
  %v645 = vpop.f32.mrf.mxu0
  %646 = vmatprep.mubr.bf16.mxu0 %v290
  %647 = vmatmul.mubr.bf16.gmra.mxu0 %v289
  %v648 = vpop.f32.mrf.mxu0
  %v649 = vadd.f32 0.0, %v648
  %v650 = vpop.f32.mrf.mxu0
  %v651 = vpop.f32.mrf.mxu0
  %v652 = vadd.f32 0.0, %v651
  %v653 = vpop.f32.mrf.mxu0
  %654 = vmatprep.mubr.bf16.mxu0 %v295
  %655 = vmatmul.mubr.bf16.gmra.mxu0 %v294
  %v656 = vpop.f32.mrf.mxu0
  %v657 = vadd.f32 0.0, %v656
  %v658 = vpop.f32.mrf.mxu0
  %v659 = vpop.f32.mrf.mxu0
  %v660 = vadd.f32 0.0, %v659
  %v661 = vpop.f32.mrf.mxu0
  %662 = vmatprep.mubr.bf16.mxu0 %v300
  %663 = vmatmul.mubr.bf16.gmra.mxu0 %v299
  %v664 = vpop.f32.mrf.mxu0
  %v665 = vadd.f32 0.0, %v664
  %v666 = vpop.f32.mrf.mxu0
  %v667 = vpop.f32.mrf.mxu0
  %v668 = vadd.f32 0.0, %v667
  %v669 = vpop.f32.mrf.mxu0
  %670 = vmatprep.mubr.bf16.mxu0 %v305
  %671 = vmatmul.mubr.bf16.gmra.mxu0 %v304
  %v672 = vpop.f32.mrf.mxu0
  %v673 = vadd.f32 0.0, %v672
  %v674 = vpop.f32.mrf.mxu0
  %v675 = vpop.f32.mrf.mxu0
  %v676 = vadd.f32 0.0, %v675
  %v677 = vpop.f32.mrf.mxu0
  %678 = vdwg.mxu0
  %679 = vmatprep.subr.bf16.mxu0 0
  %680 = vmatpush1.bf16.msra.mxu0 %v508
  %681 = vmatprep.subr.bf16.mxu0 0
  %682 = vmatpush1.bf16.msra.mxu0 %v507
  %683 = vmatprep.subr.bf16.mxu0 0
  %684 = vmatpush1.bf16.msra.mxu0 %v506
  %685 = vmatprep.subr.bf16.mxu0 0
  %686 = vmatpush1.bf16.msra.mxu0 %v505
  %687 = vmatprep.subr.bf16.mxu0 0
  %688 = vmatpush1.bf16.msra.mxu0 %v504
  %689 = vmatprep.subr.bf16.mxu0 0
  %690 = vmatpush1.bf16.msra.mxu0 %v503
  %691 = vmatprep.subr.bf16.mxu0 0
  %692 = vmatpush1.bf16.msra.mxu0 %v502
  %693 = vmatprep.subr.bf16.mxu0 0
  %694 = vmatpush1.bf16.msra.mxu0 %v501
  %695 = vmatprep.subr.bf16.mxu0 0
  %696 = vmatpush2.bf16.msra.mxu0 %v516
  %697 = vmatprep.subr.bf16.mxu0 0
  %698 = vmatpush2.bf16.msra.mxu0 %v515
  %699 = vmatprep.subr.bf16.mxu0 0
  %700 = vmatpush2.bf16.msra.mxu0 %v514
  %701 = vmatprep.subr.bf16.mxu0 0
  %702 = vmatpush2.bf16.msra.mxu0 %v513
  %703 = vmatprep.subr.bf16.mxu0 0
  %704 = vmatpush2.bf16.msra.mxu0 %v512
  %705 = vmatprep.subr.bf16.mxu0 0
  %706 = vmatpush2.bf16.msra.mxu0 %v511
  %707 = vmatprep.subr.bf16.mxu0 0
  %708 = vmatpush2.bf16.msra.mxu0 %v510
  %709 = vmatprep.subr.bf16.mxu0 0
  %710 = vmatpush2.bf16.msra.mxu0 %v509
  %711 = vmatprep.mubr.bf16.mxu0 %v272
  %712 = vmatmul.mubr.bf16.gmra.mxu0 %v271
  %v713 = vpop.f32.mrf.mxu0
  %v714 = vadd.f32 %v617, %v713
  %v715 = vpop.f32.mrf.mxu0
  %v716 = vpop.f32.mrf.mxu0
  %v717 = vadd.f32 %v620, %v716
  %v718 = vpop.f32.mrf.mxu0
  %719 = vmatprep.mubr.bf16.mxu0 %v277
  %720 = vmatmul.mubr.bf16.gmra.mxu0 %v276
  %v721 = vpop.f32.mrf.mxu0
  %v722 = vadd.f32 %v625, %v721
  %v723 = vpop.f32.mrf.mxu0
  %v724 = vpop.f32.mrf.mxu0
  %v725 = vadd.f32 %v628, %v724
  %v726 = vpop.f32.mrf.mxu0
  %727 = vmatprep.mubr.bf16.mxu0 %v282
  %728 = vmatmul.mubr.bf16.gmra.mxu0 %v281
  %v729 = vpop.f32.mrf.mxu0
  %v730 = vadd.f32 %v633, %v729
  %v731 = vpop.f32.mrf.mxu0
  %v732 = vpop.f32.mrf.mxu0
  %v733 = vadd.f32 %v636, %v732
  %v734 = vpop.f32.mrf.mxu0
  %735 = vmatprep.mubr.bf16.mxu0 %v287
  %736 = vmatmul.mubr.bf16.gmra.mxu0 %v286
  %v737 = vpop.f32.mrf.mxu0
  %v738 = vadd.f32 %v641, %v737
  %v739 = vpop.f32.mrf.mxu0
  %v740 = vpop.f32.mrf.mxu0
  %v741 = vadd.f32 %v644, %v740
  %v742 = vpop.f32.mrf.mxu0
  %743 = vmatprep.mubr.bf16.mxu0 %v292
  %744 = vmatmul.mubr.bf16.gmra.mxu0 %v291
  %v745 = vpop.f32.mrf.mxu0
  %v746 = vadd.f32 %v649, %v745
  %v747 = vpop.f32.mrf.mxu0
  %v748 = vpop.f32.mrf.mxu0
  %v749 = vadd.f32 %v652, %v748
  %v750 = vpop.f32.mrf.mxu0
  %751 = vmatprep.mubr.bf16.mxu0 %v297
  %752 = vmatmul.mubr.bf16.gmra.mxu0 %v296
  %v753 = vpop.f32.mrf.mxu0
  %v754 = vadd.f32 %v657, %v753
  %v755 = vpop.f32.mrf.mxu0
  %v756 = vpop.f32.mrf.mxu0
  %v757 = vadd.f32 %v660, %v756
  %v758 = vpop.f32.mrf.mxu0
  %759 = vmatprep.mubr.bf16.mxu0 %v302
  %760 = vmatmul.mubr.bf16.gmra.mxu0 %v301
  %v761 = vpop.f32.mrf.mxu0
  %v762 = vadd.f32 %v665, %v761
  %v763 = vpop.f32.mrf.mxu0
  %v764 = vpop.f32.mrf.mxu0
  %v765 = vadd.f32 %v668, %v764
  %v766 = vpop.f32.mrf.mxu0
  %767 = vmatprep.mubr.bf16.mxu0 %v307
  %768 = vmatmul.mubr.bf16.gmra.mxu0 %v306
  %v769 = vpop.f32.mrf.mxu0
  %v770 = vadd.f32 %v673, %v769
  %v771 = vpop.f32.mrf.mxu0
  %v772 = vpop.f32.mrf.mxu0
  %v773 = vadd.f32 %v676, %v772
  %v774 = vpop.f32.mrf.mxu0
  %775 = vdwg.mxu0
  %776 = vmatprep.subr.bf16.mxu0 0
  %777 = vmatpush1.bf16.msra.mxu0 0
  %778 = vmatprep.subr.bf16.mxu0 0
  %779 = vmatpush1.bf16.msra.mxu0 0
  %780 = vmatprep.subr.bf16.mxu0 0
  %781 = vmatpush1.bf16.msra.mxu0 0
  %782 = vmatprep.subr.bf16.mxu0 0
  %783 = vmatpush1.bf16.msra.mxu0 0
  %784 = vmatprep.subr.bf16.mxu0 0
  %785 = vmatpush1.bf16.msra.mxu0 %v520
  %786 = vmatprep.subr.bf16.mxu0 0
  %787 = vmatpush1.bf16.msra.mxu0 %v519
  %788 = vmatprep.subr.bf16.mxu0 0
  %789 = vmatpush1.bf16.msra.mxu0 %v518
  %790 = vmatprep.subr.bf16.mxu0 0
  %791 = vmatpush1.bf16.msra.mxu0 %v517
  %792 = vmatprep.subr.bf16.mxu0 0
  %793 = vmatpush2.bf16.msra.mxu0 0
  %794 = vmatprep.subr.bf16.mxu0 0
  %795 = vmatpush2.bf16.msra.mxu0 0
  %796 = vmatprep.subr.bf16.mxu0 0
  %797 = vmatpush2.bf16.msra.mxu0 0
  %798 = vmatprep.subr.bf16.mxu0 0
  %799 = vmatpush2.bf16.msra.mxu0 0
  %800 = vmatprep.subr.bf16.mxu0 0
  %801 = vmatpush2.bf16.msra.mxu0 0
  %802 = vmatprep.subr.bf16.mxu0 0
  %803 = vmatpush2.bf16.msra.mxu0 0
  %804 = vmatprep.subr.bf16.mxu0 0
  %805 = vmatpush2.bf16.msra.mxu0 0
  %806 = vmatprep.subr.bf16.mxu0 0
  %807 = vmatpush2.bf16.msra.mxu0 0
  %808 = vmatprep.mubr.bf16.mxu0 0
  %809 = vmatmul.mubr.bf16.gmra.mxu0 %v559
  %v810 = vpop.f32.mrf.mxu0
  %v811 = vadd.f32 %v714, %v810
  %v812 = vpop.f32.mrf.mxu0
  %v813 = vpop.f32.mrf.mxu0
  %v814 = vadd.f32 %v717, %v813
  %v815 = vpop.f32.mrf.mxu0
  %816 = vmatprep.mubr.bf16.mxu0 0
  %817 = vmatmul.mubr.bf16.gmra.mxu0 %v562
  %v818 = vpop.f32.mrf.mxu0
  %v819 = vadd.f32 %v722, %v818
  %v820 = vpop.f32.mrf.mxu0
  %v821 = vpop.f32.mrf.mxu0
  %v822 = vadd.f32 %v725, %v821
  %v823 = vpop.f32.mrf.mxu0
  %824 = vmatprep.mubr.bf16.mxu0 0
  %825 = vmatmul.mubr.bf16.gmra.mxu0 %v565
  %v826 = vpop.f32.mrf.mxu0
  %v827 = vadd.f32 %v730, %v826
  %v828 = vpop.f32.mrf.mxu0
  %v829 = vpop.f32.mrf.mxu0
  %v830 = vadd.f32 %v733, %v829
  %v831 = vpop.f32.mrf.mxu0
  %832 = vmatprep.mubr.bf16.mxu0 0
  %833 = vmatmul.mubr.bf16.gmra.mxu0 %v568
  %v834 = vpop.f32.mrf.mxu0
  %v835 = vadd.f32 %v738, %v834
  %v836 = vpop.f32.mrf.mxu0
  %v837 = vpop.f32.mrf.mxu0
  %v838 = vadd.f32 %v741, %v837
  %v839 = vpop.f32.mrf.mxu0
  %840 = vmatprep.mubr.bf16.mxu0 0
  %841 = vmatmul.mubr.bf16.gmra.mxu0 %v571
  %v842 = vpop.f32.mrf.mxu0
  %v843 = vadd.f32 %v746, %v842
  %v844 = vpop.f32.mrf.mxu0
  %v845 = vpop.f32.mrf.mxu0
  %v846 = vadd.f32 %v749, %v845
  %v847 = vpop.f32.mrf.mxu0
  %848 = vmatprep.mubr.bf16.mxu0 0
  %849 = vmatmul.mubr.bf16.gmra.mxu0 %v574
  %v850 = vpop.f32.mrf.mxu0
  %v851 = vadd.f32 %v754, %v850
  %v852 = vpop.f32.mrf.mxu0
  %v853 = vpop.f32.mrf.mxu0
  %v854 = vadd.f32 %v757, %v853
  %v855 = vpop.f32.mrf.mxu0
  %856 = vmatprep.mubr.bf16.mxu0 0
  %857 = vmatmul.mubr.bf16.gmra.mxu0 %v577
  %v858 = vpop.f32.mrf.mxu0
  %v859 = vadd.f32 %v762, %v858
  %v860 = vpop.f32.mrf.mxu0
  %v861 = vpop.f32.mrf.mxu0
  %v862 = vadd.f32 %v765, %v861
  %v863 = vpop.f32.mrf.mxu0
  %864 = vmatprep.mubr.bf16.mxu0 0
  %865 = vmatmul.mubr.bf16.gmra.mxu0 %v580
  %v866 = vpop.f32.mrf.mxu0
  %v867 = vadd.f32 %v770, %v866
  %v868 = vpop.f32.mrf.mxu0
  %v869 = vpop.f32.mrf.mxu0
  %v870 = vadd.f32 %v773, %v869
  %v871 = vpop.f32.mrf.mxu0
  %872 = vdwg.mxu0
  %v873 = vld [vmem:[%s2] sm:$0x1]
  %v875 = vlaneseq
  %v876 = vshrl.u32 %v875, 7
  %v877 = vsub.s32 0, %v876
  %v878 = vrot.slane %v873, %v877
  %v880 = vmul.f32 %v811, %v878
  %v881 = vmul.f32 %v814, %v878
  %v882 = vmul.f32 %v819, %v878
  %v883 = vmul.f32 %v822, %v878
  %v884 = vmul.f32 %v827, %v878
  %v885 = vmul.f32 %v830, %v878
  %v886 = vmul.f32 %v835, %v878
  %v887 = vmul.f32 %v838, %v878
  %v888 = vmul.f32 %v843, %v878
  %v889 = vmul.f32 %v846, %v878
  %v890 = vmul.f32 %v851, %v878
  %v891 = vmul.f32 %v854, %v878
  %v892 = vmul.f32 %v859, %v878
  %v893 = vmul.f32 %v862, %v878
  %v894 = vmul.f32 %v867, %v878
  %v895 = vmul.f32 %v870, %v878
  %v896 = vld [vmem:[%s3] sm:$0x1]
  %v898 = vlaneseq
  %v899 = vshrl.u32 %v898, 7
  %v900 = vsub.s32 0, %v899
  %v901 = vrot.slane %v896, %v900
  %v903 = vadd.f32 %v880, %v901
  %v904 = vadd.f32 %v881, %v901
  %v905 = vadd.f32 %v882, %v901
  %v906 = vadd.f32 %v883, %v901
  %v907 = vadd.f32 %v884, %v901
  %v908 = vadd.f32 %v885, %v901
  %v909 = vadd.f32 %v886, %v901
  %v910 = vadd.f32 %v887, %v901
  %v911 = vadd.f32 %v888, %v901
  %v912 = vadd.f32 %v889, %v901
  %v913 = vadd.f32 %v890, %v901
  %v914 = vadd.f32 %v891, %v901
  %v915 = vadd.f32 %v892, %v901
  %v916 = vadd.f32 %v893, %v901
  %v917 = vadd.f32 %v894, %v901
  %v918 = vadd.f32 %v895, %v901
  %v919 = vld [vmem:[%s4] sm:$0xff]
  %v920 = vld [vmem:[%s4 + $0x8] sm:$0xff]
  %v921 = vld [vmem:[%s4 + $0x10] sm:$0xff]
  %v922 = vld [vmem:[%s4 + $0x18] sm:$0xff]
  %v923 = vld [vmem:[%s4 + $0x20] sm:$0xff]
  %v924 = vld [vmem:[%s4 + $0x28] sm:$0xff]
  %v925 = vld [vmem:[%s4 + $0x30] sm:$0xff]
  %v926 = vld [vmem:[%s4 + $0x38] sm:$0xff]
  %v927 = vld [vmem:[%s4 + $0x40] sm:$0xff]
  %v928 = vld [vmem:[%s4 + $0x48] sm:$0xff]
  %v929 = vld [vmem:[%s4 + $0x50] sm:$0xff]
  %v930 = vld [vmem:[%s4 + $0x58] sm:$0xff]
  %v931 = vld [vmem:[%s4 + $0x60] sm:$0xff]
  %v932 = vld [vmem:[%s4 + $0x68] sm:$0xff]
  %v933 = vld [vmem:[%s4 + $0x70] sm:$0xff]
  %v934 = vld [vmem:[%s4 + $0x78] sm:$0xff]
  %v935 = vadd.f32 %v903, %v919
  %v936 = vadd.f32 %v904, %v920
  %v937 = vadd.f32 %v905, %v921
  %v938 = vadd.f32 %v906, %v922
  %v939 = vadd.f32 %v907, %v923
  %v940 = vadd.f32 %v908, %v924
  %v941 = vadd.f32 %v909, %v925
  %v942 = vadd.f32 %v910, %v926
  %v943 = vadd.f32 %v911, %v927
  %v944 = vadd.f32 %v912, %v928
  %v945 = vadd.f32 %v913, %v929
  %v946 = vadd.f32 %v914, %v930
  %v947 = vadd.f32 %v915, %v931
  %v948 = vadd.f32 %v916, %v932
  %v949 = vadd.f32 %v917, %v933
  %v950 = vadd.f32 %v918, %v934
  %951 = vst.msk [vmem:[%s5] sm:$0xff] %vm557, %v935
  %952 = vst.msk [vmem:[%s5 + $0x8] sm:$0xff] %vm557, %v936
  %953 = vst.msk [vmem:[%s5 + $0x10] sm:$0xff] %vm557, %v937
  %954 = vst.msk [vmem:[%s5 + $0x18] sm:$0xff] %vm557, %v938
  %955 = vst.msk [vmem:[%s5 + $0x20] sm:$0xff] %vm557, %v939
  %956 = vst.msk [vmem:[%s5 + $0x28] sm:$0xff] %vm557, %v940
  %957 = vst.msk [vmem:[%s5 + $0x30] sm:$0xff] %vm557, %v941
  %958 = vst.msk [vmem:[%s5 + $0x38] sm:$0xff] %vm557, %v942
  %959 = vst.msk [vmem:[%s5 + $0x40] sm:$0xff] %vm557, %v943
  %960 = vst.msk [vmem:[%s5 + $0x48] sm:$0xff] %vm557, %v944
  %961 = vst.msk [vmem:[%s5 + $0x50] sm:$0xff] %vm557, %v945
  %962 = vst.msk [vmem:[%s5 + $0x58] sm:$0xff] %vm557, %v946
  %963 = vst.msk [vmem:[%s5 + $0x60] sm:$0xff] %vm557, %v947
  %964 = vst.msk [vmem:[%s5 + $0x68] sm:$0xff] %vm557, %v948
  %965 = vst.msk [vmem:[%s5 + $0x70] sm:$0xff] %vm557, %v949
  %966 = vst.msk [vmem:[%s5 + $0x78] sm:$0xff] %vm557, %v950
  // Predicated region
  $region22: #{_lambda_.22} parent=0 // pred_check
    _
  $region23: #{_lambda_.22} parent=0 // pred_check_branch
    %968 = sbr.rel (0) target = $region25
  $region24: #{_lambda_.22} parent=0 // pred_region
    _
  $region25: #{_lambda_.22} parent=0 // pred_fallthru
    _
  // Predicated region
  $region26: #{_lambda_.22} parent=0 // pred_check
    _
  $region27: #{_lambda_.22} parent=0 // pred_check_branch
    %970 = sbr.rel (0) target = $region29
  $region28: #{_lambda_.22} parent=0 // pred_region
    _
  $region29: #{_lambda_.22} parent=0 // pred_fallthru
    _

// kernel: _lambda_.24
$region0: #{_lambda_.24}
  #allocation0 [shape = 'u32[]', space=smem, size = 0x4, offset = 0x4, fixed_abs, tag = 'smem constant byte address 0x4 - core index']
  #allocation1 [shape = 'u32[144,128]{1,0:T(1,128)}', space=vmem, size = 0x12000, scoped, tag = 'internal scratch']
  %s0 = inlined_call_operand.vmem [shape: bf16[32,576], index: 0, kind: input, shape index: {}]
  %s1 = inlined_call_operand.vmem [shape: bf16[576,128], index: 1, kind: input, shape index: {}]
  %s2 = inlined_call_operand.vmem [shape: f32[1,128], index: 2, kind: input, shape index: {}]
  %s3 = inlined_call_operand.vmem [shape: f32[1,128], index: 3, kind: input, shape index: {}]
  %s4 = inlined_call_operand.vmem [shape: bf16[32,128], index: 4, kind: output, shape index: {}]
  %s5 = sld [smem:[#allocation0]]
  $region26: #{_lambda_.24} parent=0
    _
  %s7 = ssub.s32 1, %s5
  %s8 = scalar_select 0, %s7, %s5
  // Predicated region
  $region2: #{_lambda_.24} parent=0 // pred_check
    _
  $region3: #{_lambda_.24} parent=0 // pred_check_branch
    %10 = sbr.rel (0) target = $region5
  $region4: #{_lambda_.24} parent=0 // pred_region
    _
  $region5: #{_lambda_.24} parent=0 // pred_fallthru
    _
  // Predicated region
  $region6: #{_lambda_.24} parent=0 // pred_check
    _
  $region7: #{_lambda_.24} parent=0 // pred_check_branch
    %12 = sbr.rel (0) target = $region9
  $region8: #{_lambda_.24} parent=0 // pred_region
    _
  $region9: #{_lambda_.24} parent=0 // pred_fallthru
    _
  // Predicated region
  $region10: #{_lambda_.24} parent=0 // pred_check
    _
  $region11: #{_lambda_.24} parent=0 // pred_check_branch
    %14 = sbr.rel (0) target = $region13
  $region12: #{_lambda_.24} parent=0 // pred_region
    _
  $region13: #{_lambda_.24} parent=0 // pred_fallthru
    _
  // Predicated region
  $region14: #{_lambda_.24} parent=0 // pred_check
    _
  $region15: #{_lambda_.24} parent=0 // pred_check_branch
    %16 = sbr.rel (0) target = $region17
  $region16: #{_lambda_.24} parent=0 // pred_region
    _
  $region17: #{_lambda_.24} parent=0 // pred_fallthru
    _
  %v18 = vld [vmem:[%s0] sm:$0xff]
  %v19 = vld [vmem:[%s0 + $0x8] sm:$0xff]
  %v20 = vld [vmem:[%s0 + $0x10] sm:$0xf]
  %v21 = vld [vmem:[%s0 + $0x14] sm:$0xff]
  %v22 = vld [vmem:[%s0 + $0x1c] sm:$0xff]
  %v23 = vld [vmem:[%s0 + $0x24] sm:$0xf]
  %v24 = vld [vmem:[%s0 + $0x28] sm:$0xff]
  %v25 = vld [vmem:[%s0 + $0x30] sm:$0xff]
  %v26 = vld [vmem:[%s0 + $0x38] sm:$0xf]
  %v27 = vld [vmem:[%s0 + $0x3c] sm:$0xff]
  %v28 = vld [vmem:[%s0 + $0x44] sm:$0xff]
  %v29 = vld [vmem:[%s0 + $0x4c] sm:$0xf]
  %v30 = vld [vmem:[%s1] sm:$0xf]
  %v31 = vld [vmem:[%s1 + $0x4] sm:$0xf]
  %v32 = vld [vmem:[%s1 + $0x8] sm:$0xf]
  %v33 = vld [vmem:[%s1 + $0xc] sm:$0xf]
  %v34 = vld [vmem:[%s1 + $0x10] sm:$0xf]
  %v35 = vld [vmem:[%s1 + $0x14] sm:$0xf]
  %v36 = vld [vmem:[%s1 + $0x18] sm:$0xf]
  %v37 = vld [vmem:[%s1 + $0x1c] sm:$0xf]
  %v38 = vld [vmem:[%s1 + $0x20] sm:$0xf]
  %v39 = vld [vmem:[%s1 + $0x24] sm:$0xf]
  %v40 = vld [vmem:[%s1 + $0x28] sm:$0xf]
  %v41 = vld [vmem:[%s1 + $0x2c] sm:$0xf]
  %v42 = vld [vmem:[%s1 + $0x30] sm:$0xf]
  %v43 = vld [vmem:[%s1 + $0x34] sm:$0xf]
  %v44 = vld [vmem:[%s1 + $0x38] sm:$0xf]
  %v45 = vld [vmem:[%s1 + $0x3c] sm:$0xf]
  %v46 = vld [vmem:[%s1 + $0x40] sm:$0xf]
  %v47 = vld [vmem:[%s1 + $0x44] sm:$0xf]
  %v48 = vld [vmem:[%s1 + $0x48] sm:$0xf]
  %v49 = vld [vmem:[%s1 + $0x4c] sm:$0xf]
  %v50 = vld [vmem:[%s1 + $0x50] sm:$0xf]
  %v51 = vld [vmem:[%s1 + $0x54] sm:$0xf]
  %v52 = vld [vmem:[%s1 + $0x58] sm:$0xf]
  %v53 = vld [vmem:[%s1 + $0x5c] sm:$0xf]
  %v54 = vld [vmem:[%s1 + $0x60] sm:$0xf]
  %v55 = vld [vmem:[%s1 + $0x64] sm:$0xf]
  %v56 = vld [vmem:[%s1 + $0x68] sm:$0xf]
  %v57 = vld [vmem:[%s1 + $0x6c] sm:$0xf]
  %v58 = vld [vmem:[%s1 + $0x70] sm:$0xf]
  %v59 = vld [vmem:[%s1 + $0x74] sm:$0xf]
  %v60 = vld [vmem:[%s1 + $0x78] sm:$0xf]
  %v61 = vld [vmem:[%s1 + $0x7c] sm:$0xf]
  %v62 = vld [vmem:[%s1 + $0x80] sm:$0xf]
  %v63 = vld [vmem:[%s1 + $0x84] sm:$0xf]
  %v64 = vld [vmem:[%s1 + $0x88] sm:$0xf]
  %v65 = vld [vmem:[%s1 + $0x8c] sm:$0xf]
  %v66 = vld [vmem:[%s1 + $0x90] sm:$0xf]
  %v67 = vld [vmem:[%s1 + $0x94] sm:$0xf]
  %v68 = vld [vmem:[%s1 + $0x98] sm:$0xf]
  %v69 = vld [vmem:[%s1 + $0x9c] sm:$0xf]
  %v70 = vld [vmem:[%s1 + $0xa0] sm:$0xf]
  %v71 = vld [vmem:[%s1 + $0xa4] sm:$0xf]
  %v72 = vld [vmem:[%s1 + $0xa8] sm:$0xf]
  %v73 = vld [vmem:[%s1 + $0xac] sm:$0xf]
  %v74 = vld [vmem:[%s1 + $0xb0] sm:$0xf]
  %v75 = vld [vmem:[%s1 + $0xb4] sm:$0xf]
  %v76 = vld [vmem:[%s1 + $0xb8] sm:$0xf]
  %v77 = vld [vmem:[%s1 + $0xbc] sm:$0xf]
  %v78 = vld [vmem:[%s1 + $0xc0] sm:$0xf]
  %v79 = vld [vmem:[%s1 + $0xc4] sm:$0xf]
  %v80 = vld [vmem:[%s1 + $0xc8] sm:$0xf]
  %v81 = vld [vmem:[%s1 + $0xcc] sm:$0xf]
  %v82 = vld [vmem:[%s1 + $0xd0] sm:$0xf]
  %v83 = vld [vmem:[%s1 + $0xd4] sm:$0xf]
  %v84 = vld [vmem:[%s1 + $0xd8] sm:$0xf]
  %v85 = vld [vmem:[%s1 + $0xdc] sm:$0xf]
  %v86 = vld [vmem:[%s1 + $0xe0] sm:$0xf]
  %v87 = vld [vmem:[%s1 + $0xe4] sm:$0xf]
  %v88 = vld [vmem:[%s1 + $0xe8] sm:$0xf]
  %v89 = vld [vmem:[%s1 + $0xec] sm:$0xf]
  %v90 = vld [vmem:[%s1 + $0xf0] sm:$0xf]
  %v91 = vld [vmem:[%s1 + $0xf4] sm:$0xf]
  %v92 = vld [vmem:[%s1 + $0xf8] sm:$0xf]
  %v93 = vld [vmem:[%s1 + $0xfc] sm:$0xf]
  %v94 = vld [vmem:[%s1 + $0x100] sm:$0xf]
  %v95 = vld [vmem:[%s1 + $0x104] sm:$0xf]
  %v96 = vld [vmem:[%s1 + $0x108] sm:$0xf]
  %v97 = vld [vmem:[%s1 + $0x10c] sm:$0xf]
  %v98 = vld [vmem:[%s1 + $0x110] sm:$0xf]
  %v99 = vld [vmem:[%s1 + $0x114] sm:$0xf]
  %v100 = vld [vmem:[%s1 + $0x118] sm:$0xf]
  %v101 = vld [vmem:[%s1 + $0x11c] sm:$0xf]
  %v114 = vunpack.c.l.b16 %v18
  %v115 = vunpack.c.h.b16 %v18
  %v116 = vunpack.c.l.b16 %v19
  %v117 = vunpack.c.h.b16 %v19
  %v118 = vunpack.c.l.b16 %v20
  %v119 = vunpack.c.l.b16 %v21
  %v120 = vunpack.c.h.b16 %v21
  %v121 = vunpack.c.l.b16 %v22
  %v122 = vunpack.c.h.b16 %v22
  %v123 = vunpack.c.l.b16 %v23
  %v124 = vunpack.c.l.b16 %v24
  %v125 = vunpack.c.h.b16 %v24
  %v126 = vunpack.c.l.b16 %v25
  %v127 = vunpack.c.h.b16 %v25
  %v128 = vunpack.c.l.b16 %v26
  %v129 = vunpack.c.l.b16 %v27
  %v130 = vunpack.c.h.b16 %v27
  %v131 = vunpack.c.l.b16 %v28
  %v132 = vunpack.c.h.b16 %v28
  %v133 = vunpack.c.l.b16 %v29
  %v134 = vpack.c.b16 %v119, %v114
  %v135 = vpack.c.b16 %v120, %v115
  %v136 = vpack.c.b16 %v121, %v116
  %v137 = vpack.c.b16 %v122, %v117
  %v138 = vpack.c.b16 %v123, %v118
  %v139 = vpack.c.b16 %v129, %v124
  %v140 = vpack.c.b16 %v130, %v125
  %v141 = vpack.c.b16 %v131, %v126
  %v142 = vpack.c.b16 %v132, %v127
  %v143 = vpack.c.b16 %v133, %v128
  %v224 = vunpack.c.l.b16 %v30
  %v225 = vunpack.c.l.b16 %v31
  %v226 = vunpack.c.l.b16 %v32
  %v227 = vunpack.c.l.b16 %v33
  %v228 = vunpack.c.l.b16 %v34
  %v229 = vunpack.c.l.b16 %v35
  %v230 = vunpack.c.l.b16 %v36
  %v231 = vunpack.c.l.b16 %v37
  %v232 = vunpack.c.l.b16 %v38
  %v233 = vunpack.c.l.b16 %v39
  %v234 = vunpack.c.l.b16 %v40
  %v235 = vunpack.c.l.b16 %v41
  %v236 = vunpack.c.l.b16 %v42
  %v237 = vunpack.c.l.b16 %v43
  %v238 = vunpack.c.l.b16 %v44
  %v239 = vunpack.c.l.b16 %v45
  %v240 = vunpack.c.l.b16 %v46
  %v241 = vunpack.c.l.b16 %v47
  %v242 = vunpack.c.l.b16 %v48
  %v243 = vunpack.c.l.b16 %v49
  %v244 = vunpack.c.l.b16 %v50
  %v245 = vunpack.c.l.b16 %v51
  %v246 = vunpack.c.l.b16 %v52
  %v247 = vunpack.c.l.b16 %v53
  %v248 = vunpack.c.l.b16 %v54
  %v249 = vunpack.c.l.b16 %v55
  %v250 = vunpack.c.l.b16 %v56
  %v251 = vunpack.c.l.b16 %v57
  %v252 = vunpack.c.l.b16 %v58
  %v253 = vunpack.c.l.b16 %v59
  %v254 = vunpack.c.l.b16 %v60
  %v255 = vunpack.c.l.b16 %v61
  %v256 = vunpack.c.l.b16 %v62
  %v257 = vunpack.c.l.b16 %v63
  %v258 = vunpack.c.l.b16 %v64
  %v259 = vunpack.c.l.b16 %v65
  %v260 = vunpack.c.l.b16 %v66
  %v261 = vunpack.c.l.b16 %v67
  %v262 = vunpack.c.l.b16 %v68
  %v263 = vunpack.c.l.b16 %v69
  %v264 = vunpack.c.l.b16 %v70
  %v265 = vunpack.c.l.b16 %v71
  %v266 = vunpack.c.l.b16 %v72
  %v267 = vunpack.c.l.b16 %v73
  %v268 = vunpack.c.l.b16 %v74
  %v269 = vunpack.c.l.b16 %v75
  %v270 = vunpack.c.l.b16 %v76
  %v271 = vunpack.c.l.b16 %v77
  %v272 = vunpack.c.l.b16 %v78
  %v273 = vunpack.c.l.b16 %v79
  %v274 = vunpack.c.l.b16 %v80
  %v275 = vunpack.c.l.b16 %v81
  %v276 = vunpack.c.l.b16 %v82
  %v277 = vunpack.c.l.b16 %v83
  %v278 = vunpack.c.l.b16 %v84
  %v279 = vunpack.c.l.b16 %v85
  %v280 = vunpack.c.l.b16 %v86
  %v281 = vunpack.c.l.b16 %v87
  %v282 = vunpack.c.l.b16 %v88
  %v283 = vunpack.c.l.b16 %v89
  %v284 = vunpack.c.l.b16 %v90
  %v285 = vunpack.c.l.b16 %v91
  %v286 = vunpack.c.l.b16 %v92
  %v287 = vunpack.c.l.b16 %v93
  %v288 = vunpack.c.l.b16 %v94
  %v289 = vunpack.c.l.b16 %v95
  %v290 = vunpack.c.l.b16 %v96
  %v291 = vunpack.c.l.b16 %v97
  %v292 = vunpack.c.l.b16 %v98
  %v293 = vunpack.c.l.b16 %v99
  %v294 = vunpack.c.l.b16 %v100
  %v295 = vunpack.c.l.b16 %v101
  %v296 = vpack.c.b16 %v225, %v224
  %v297 = vpack.c.b16 %v227, %v226
  %v298 = vpack.c.b16 %v229, %v228
  %v299 = vpack.c.b16 %v231, %v230
  %v300 = vpack.c.b16 %v233, %v232
  %v301 = vpack.c.b16 %v235, %v234
  %v302 = vpack.c.b16 %v237, %v236
  %v303 = vpack.c.b16 %v239, %v238
  %v304 = vpack.c.b16 %v241, %v240
  %v305 = vpack.c.b16 %v243, %v242
  %v306 = vpack.c.b16 %v245, %v244
  %v307 = vpack.c.b16 %v247, %v246
  %v308 = vpack.c.b16 %v249, %v248
  %v309 = vpack.c.b16 %v251, %v250
  %v310 = vpack.c.b16 %v253, %v252
  %v311 = vpack.c.b16 %v255, %v254
  %v312 = vpack.c.b16 %v257, %v256
  %v313 = vpack.c.b16 %v259, %v258
  %v314 = vpack.c.b16 %v261, %v260
  %v315 = vpack.c.b16 %v263, %v262
  %v316 = vpack.c.b16 %v265, %v264
  %v317 = vpack.c.b16 %v267, %v266
  %v318 = vpack.c.b16 %v269, %v268
  %v319 = vpack.c.b16 %v271, %v270
  %v320 = vpack.c.b16 %v273, %v272
  %v321 = vpack.c.b16 %v275, %v274
  %v322 = vpack.c.b16 %v277, %v276
  %v323 = vpack.c.b16 %v279, %v278
  %v324 = vpack.c.b16 %v281, %v280
  %v325 = vpack.c.b16 %v283, %v282
  %v326 = vpack.c.b16 %v285, %v284
  %v327 = vpack.c.b16 %v287, %v286
  %v328 = vpack.c.b16 %v289, %v288
  %v329 = vpack.c.b16 %v291, %v290
  %v330 = vpack.c.b16 %v293, %v292
  %v331 = vpack.c.b16 %v295, %v294
  %vm368 = vcmask 523264
  %v370 = vsel %vm368, %v138, 0
  %v373 = vsel %vm368, %v143, 0
  %375 = vmatprep.subr.bf16.mxu0 0
  %376 = vmatpush1.bf16.msra.mxu0 %v303
  %377 = vmatprep.subr.bf16.mxu0 0
  %378 = vmatpush1.bf16.msra.mxu0 %v302
  %379 = vmatprep.subr.bf16.mxu0 0
  %380 = vmatpush1.bf16.msra.mxu0 %v301
  %381 = vmatprep.subr.bf16.mxu0 0
  %382 = vmatpush1.bf16.msra.mxu0 %v300
  %383 = vmatprep.subr.bf16.mxu0 0
  %384 = vmatpush1.bf16.msra.mxu0 %v299
  %385 = vmatprep.subr.bf16.mxu0 0
  %386 = vmatpush1.bf16.msra.mxu0 %v298
  %387 = vmatprep.subr.bf16.mxu0 0
  %388 = vmatpush1.bf16.msra.mxu0 %v297
  %389 = vmatprep.subr.bf16.mxu0 0
  %390 = vmatpush1.bf16.msra.mxu0 %v296
  %391 = vmatprep.subr.bf16.mxu0 0
  %392 = vmatpush2.bf16.msra.mxu0 %v311
  %393 = vmatprep.subr.bf16.mxu0 0
  %394 = vmatpush2.bf16.msra.mxu0 %v310
  %395 = vmatprep.subr.bf16.mxu0 0
  %396 = vmatpush2.bf16.msra.mxu0 %v309
  %397 = vmatprep.subr.bf16.mxu0 0
  %398 = vmatpush2.bf16.msra.mxu0 %v308
  %399 = vmatprep.subr.bf16.mxu0 0
  %400 = vmatpush2.bf16.msra.mxu0 %v307
  %401 = vmatprep.subr.bf16.mxu0 0
  %402 = vmatpush2.bf16.msra.mxu0 %v306
  %403 = vmatprep.subr.bf16.mxu0 0
  %404 = vmatpush2.bf16.msra.mxu0 %v305
  %405 = vmatprep.subr.bf16.mxu0 0
  %406 = vmatpush2.bf16.msra.mxu0 %v304
  %407 = vmatprep.mubr.bf16.mxu0 %v135
  %408 = vmatmul.mubr.bf16.gmra.mxu0 %v134
  %v409 = vpop.f32.mrf.mxu0
  %v410 = vadd.f32 0.0, %v409
  %v411 = vpop.f32.mrf.mxu0
  %v412 = vpop.f32.mrf.mxu0
  %v413 = vadd.f32 0.0, %v412
  %v414 = vpop.f32.mrf.mxu0
  %415 = vmatprep.mubr.bf16.mxu0 %v140
  %416 = vmatmul.mubr.bf16.gmra.mxu0 %v139
  %v417 = vpop.f32.mrf.mxu0
  %v418 = vadd.f32 0.0, %v417
  %v419 = vpop.f32.mrf.mxu0
  %v420 = vpop.f32.mrf.mxu0
  %v421 = vadd.f32 0.0, %v420
  %v422 = vpop.f32.mrf.mxu0
  %423 = vdwg.mxu0
  %424 = vmatprep.subr.bf16.mxu0 0
  %425 = vmatpush1.bf16.msra.mxu0 %v319
  %426 = vmatprep.subr.bf16.mxu0 0
  %427 = vmatpush1.bf16.msra.mxu0 %v318
  %428 = vmatprep.subr.bf16.mxu0 0
  %429 = vmatpush1.bf16.msra.mxu0 %v317
  %430 = vmatprep.subr.bf16.mxu0 0
  %431 = vmatpush1.bf16.msra.mxu0 %v316
  %432 = vmatprep.subr.bf16.mxu0 0
  %433 = vmatpush1.bf16.msra.mxu0 %v315
  %434 = vmatprep.subr.bf16.mxu0 0
  %435 = vmatpush1.bf16.msra.mxu0 %v314
  %436 = vmatprep.subr.bf16.mxu0 0
  %437 = vmatpush1.bf16.msra.mxu0 %v313
  %438 = vmatprep.subr.bf16.mxu0 0
  %439 = vmatpush1.bf16.msra.mxu0 %v312
  %440 = vmatprep.subr.bf16.mxu0 0
  %441 = vmatpush2.bf16.msra.mxu0 %v327
  %442 = vmatprep.subr.bf16.mxu0 0
  %443 = vmatpush2.bf16.msra.mxu0 %v326
  %444 = vmatprep.subr.bf16.mxu0 0
  %445 = vmatpush2.bf16.msra.mxu0 %v325
  %446 = vmatprep.subr.bf16.mxu0 0
  %447 = vmatpush2.bf16.msra.mxu0 %v324
  %448 = vmatprep.subr.bf16.mxu0 0
  %449 = vmatpush2.bf16.msra.mxu0 %v323
  %450 = vmatprep.subr.bf16.mxu0 0
  %451 = vmatpush2.bf16.msra.mxu0 %v322
  %452 = vmatprep.subr.bf16.mxu0 0
  %453 = vmatpush2.bf16.msra.mxu0 %v321
  %454 = vmatprep.subr.bf16.mxu0 0
  %455 = vmatpush2.bf16.msra.mxu0 %v320
  %456 = vmatprep.mubr.bf16.mxu0 %v137
  %457 = vmatmul.mubr.bf16.gmra.mxu0 %v136
  %v458 = vpop.f32.mrf.mxu0
  %v459 = vadd.f32 %v410, %v458
  %v460 = vpop.f32.mrf.mxu0
  %v461 = vpop.f32.mrf.mxu0
  %v462 = vadd.f32 %v413, %v461
  %v463 = vpop.f32.mrf.mxu0
  %464 = vmatprep.mubr.bf16.mxu0 %v142
  %465 = vmatmul.mubr.bf16.gmra.mxu0 %v141
  %v466 = vpop.f32.mrf.mxu0
  %v467 = vadd.f32 %v418, %v466
  %v468 = vpop.f32.mrf.mxu0
  %v469 = vpop.f32.mrf.mxu0
  %v470 = vadd.f32 %v421, %v469
  %v471 = vpop.f32.mrf.mxu0
  %472 = vdwg.mxu0
  %473 = vmatprep.subr.bf16.mxu0 0
  %474 = vmatpush1.bf16.msra.mxu0 0
  %475 = vmatprep.subr.bf16.mxu0 0
  %476 = vmatpush1.bf16.msra.mxu0 0
  %477 = vmatprep.subr.bf16.mxu0 0
  %478 = vmatpush1.bf16.msra.mxu0 0
  %479 = vmatprep.subr.bf16.mxu0 0
  %480 = vmatpush1.bf16.msra.mxu0 0
  %481 = vmatprep.subr.bf16.mxu0 0
  %482 = vmatpush1.bf16.msra.mxu0 %v331
  %483 = vmatprep.subr.bf16.mxu0 0
  %484 = vmatpush1.bf16.msra.mxu0 %v330
  %485 = vmatprep.subr.bf16.mxu0 0
  %486 = vmatpush1.bf16.msra.mxu0 %v329
  %487 = vmatprep.subr.bf16.mxu0 0
  %488 = vmatpush1.bf16.msra.mxu0 %v328
  %489 = vmatprep.subr.bf16.mxu0 0
  %490 = vmatpush2.bf16.msra.mxu0 0
  %491 = vmatprep.subr.bf16.mxu0 0
  %492 = vmatpush2.bf16.msra.mxu0 0
  %493 = vmatprep.subr.bf16.mxu0 0
  %494 = vmatpush2.bf16.msra.mxu0 0
  %495 = vmatprep.subr.bf16.mxu0 0
  %496 = vmatpush2.bf16.msra.mxu0 0
  %497 = vmatprep.subr.bf16.mxu0 0
  %498 = vmatpush2.bf16.msra.mxu0 0
  %499 = vmatprep.subr.bf16.mxu0 0
  %500 = vmatpush2.bf16.msra.mxu0 0
  %501 = vmatprep.subr.bf16.mxu0 0
  %502 = vmatpush2.bf16.msra.mxu0 0
  %503 = vmatprep.subr.bf16.mxu0 0
  %504 = vmatpush2.bf16.msra.mxu0 0
  %505 = vmatprep.mubr.bf16.mxu0 0
  %506 = vmatmul.mubr.bf16.gmra.mxu0 %v370
  %v507 = vpop.f32.mrf.mxu0
  %v508 = vadd.f32 %v459, %v507
  %v509 = vpop.f32.mrf.mxu0
  %v510 = vpop.f32.mrf.mxu0
  %v511 = vadd.f32 %v462, %v510
  %v512 = vpop.f32.mrf.mxu0
  %513 = vmatprep.mubr.bf16.mxu0 0
  %514 = vmatmul.mubr.bf16.gmra.mxu0 %v373
  %v515 = vpop.f32.mrf.mxu0
  %v516 = vadd.f32 %v467, %v515
  %v517 = vpop.f32.mrf.mxu0
  %v518 = vpop.f32.mrf.mxu0
  %v519 = vadd.f32 %v470, %v518
  %v520 = vpop.f32.mrf.mxu0
  %521 = vdwg.mxu0
  %v522 = vld [vmem:[%s2] sm:$0x1]
  %v524 = vlaneseq
  %v525 = vshrl.u32 %v524, 7
  %v526 = vsub.s32 0, %v525
  %v527 = vrot.slane %v522, %v526
  %v529 = vmul.f32 %v508, %v527
  %v530 = vmul.f32 %v511, %v527
  %v531 = vmul.f32 %v516, %v527
  %v532 = vmul.f32 %v519, %v527
  %v533 = vld [vmem:[%s3] sm:$0x1]
  %v535 = vlaneseq
  %v536 = vshrl.u32 %v535, 7
  %v537 = vsub.s32 0, %v536
  %v538 = vrot.slane %v533, %v537
  %v540 = vadd.f32 %v529, %v538
  %v541 = vadd.f32 %v530, %v538
  %v542 = vadd.f32 %v531, %v538
  %v543 = vadd.f32 %v532, %v538
  %v544 = vmax.f32 %v540, 0.0
  %v545 = vmax.f32 %v541, 0.0
  %v546 = vmax.f32 %v542, 0.0
  %v547 = vmax.f32 %v543, 0.0
  %v548 = vpack.c.bf16 %v545, %v544
  %v549 = vpack.c.bf16 %v547, %v546
  %v552 = vunpack.c.l.b16 %v548
  %v553 = vunpack.c.h.b16 %v548
  %v554 = vunpack.c.l.b16 %v549
  %v555 = vunpack.c.h.b16 %v549
  %v556 = vpack.c.b16 %v552, %v552
  %v557 = vpack.c.b16 %v553, %v553
  %v558 = vpack.c.b16 %v554, %v554
  %v559 = vpack.c.b16 %v555, %v555
  %564 = vst [vmem:[%s4] sm:$0xf] %v556
  %565 = vst [vmem:[%s4 + $0x4] sm:$0xf] %v557
  %566 = vst [vmem:[%s4 + $0x8] sm:$0xf] %v558
  %567 = vst [vmem:[%s4 + $0xc] sm:$0xf] %v559
  // Predicated region
  $region18: #{_lambda_.24} parent=0 // pred_check
    _
  $region19: #{_lambda_.24} parent=0 // pred_check_branch
    %569 = sbr.rel (0) target = $region21
  $region20: #{_lambda_.24} parent=0 // pred_region
    _
  $region21: #{_lambda_.24} parent=0 // pred_fallthru
    _
  // Predicated region
  $region22: #{_lambda_.24} parent=0 // pred_check
    _
  $region23: #{_lambda_.24} parent=0 // pred_check_branch
    %571 = sbr.rel (0) target = $region25
  $region24: #{_lambda_.24} parent=0 // pred_region
    _
  $region25: #{_lambda_.24} parent=0 // pred_fallthru
    _

// kernel: _lambda_.25
$region0: #{_lambda_.25}
  #allocation0 [shape = 'u32[]', space=smem, size = 0x4, offset = 0x4, fixed_abs, tag = 'smem constant byte address 0x4 - core index']
  #allocation1 [shape = 'u32[144,128]{1,0:T(1,128)}', space=vmem, size = 0x12000, scoped, tag = 'internal scratch']
  %s0 = inlined_call_operand.vmem [shape: bf16[32,64], index: 0, kind: input, shape index: {}]
  %s1 = inlined_call_operand.vmem [shape: bf16[64,128], index: 1, kind: input, shape index: {}]
  %s2 = inlined_call_operand.vmem [shape: f32[1,128], index: 2, kind: input, shape index: {}]
  %s3 = inlined_call_operand.vmem [shape: f32[1,128], index: 3, kind: input, shape index: {}]
  %s4 = inlined_call_operand.vmem [shape: f32[32,128], index: 4, kind: output, shape index: {}]
  %s5 = sld [smem:[#allocation0]]
  $region26: #{_lambda_.25} parent=0
    _
  %s7 = ssub.s32 1, %s5
  %s8 = scalar_select 0, %s7, %s5
  // Predicated region
  $region2: #{_lambda_.25} parent=0 // pred_check
    _
  $region3: #{_lambda_.25} parent=0 // pred_check_branch
    %10 = sbr.rel (0) target = $region5
  $region4: #{_lambda_.25} parent=0 // pred_region
    _
  $region5: #{_lambda_.25} parent=0 // pred_fallthru
    _
  // Predicated region
  $region6: #{_lambda_.25} parent=0 // pred_check
    _
  $region7: #{_lambda_.25} parent=0 // pred_check_branch
    %12 = sbr.rel (0) target = $region9
  $region8: #{_lambda_.25} parent=0 // pred_region
    _
  $region9: #{_lambda_.25} parent=0 // pred_fallthru
    _
  // Predicated region
  $region10: #{_lambda_.25} parent=0 // pred_check
    _
  $region11: #{_lambda_.25} parent=0 // pred_check_branch
    %14 = sbr.rel (0) target = $region13
  $region12: #{_lambda_.25} parent=0 // pred_region
    _
  $region13: #{_lambda_.25} parent=0 // pred_fallthru
    _
  // Predicated region
  $region14: #{_lambda_.25} parent=0 // pred_check
    _
  $region15: #{_lambda_.25} parent=0 // pred_check_branch
    %16 = sbr.rel (0) target = $region17
  $region16: #{_lambda_.25} parent=0 // pred_region
    _
  $region17: #{_lambda_.25} parent=0 // pred_fallthru
    _
  %v18 = vld [vmem:[%s0] sm:$0xf]
  %v19 = vld [vmem:[%s0 + $0x4] sm:$0xf]
  %v20 = vld [vmem:[%s0 + $0x8] sm:$0xf]
  %v21 = vld [vmem:[%s0 + $0xc] sm:$0xf]
  %v22 = vld [vmem:[%s1] sm:$0xf]
  %v23 = vld [vmem:[%s1 + $0x4] sm:$0xf]
  %v24 = vld [vmem:[%s1 + $0x8] sm:$0xf]
  %v25 = vld [vmem:[%s1 + $0xc] sm:$0xf]
  %v26 = vld [vmem:[%s1 + $0x10] sm:$0xf]
  %v27 = vld [vmem:[%s1 + $0x14] sm:$0xf]
  %v28 = vld [vmem:[%s1 + $0x18] sm:$0xf]
  %v29 = vld [vmem:[%s1 + $0x1c] sm:$0xf]
  %v34 = vunpack.c.l.b16 %v18
  %v35 = vunpack.c.l.b16 %v19
  %v36 = vunpack.c.l.b16 %v20
  %v37 = vunpack.c.l.b16 %v21
  %v38 = vpack.c.b16 %v35, %v34
  %v39 = vpack.c.b16 %v37, %v36
  %v48 = vunpack.c.l.b16 %v22
  %v49 = vunpack.c.l.b16 %v23
  %v50 = vunpack.c.l.b16 %v24
  %v51 = vunpack.c.l.b16 %v25
  %v52 = vunpack.c.l.b16 %v26
  %v53 = vunpack.c.l.b16 %v27
  %v54 = vunpack.c.l.b16 %v28
  %v55 = vunpack.c.l.b16 %v29
  %v56 = vpack.c.b16 %v49, %v48
  %v57 = vpack.c.b16 %v51, %v50
  %v58 = vpack.c.b16 %v53, %v52
  %v59 = vpack.c.b16 %v55, %v54
  %vm64 = vcmask 523264
  %v66 = vsel %vm64, %v38, 0
  %v69 = vsel %vm64, %v39, 0
  %71 = vmatprep.subr.bf16.mxu0 0
  %72 = vmatpush1.bf16.msra.mxu0 0
  %73 = vmatprep.subr.bf16.mxu0 0
  %74 = vmatpush1.bf16.msra.mxu0 0
  %75 = vmatprep.subr.bf16.mxu0 0
  %76 = vmatpush1.bf16.msra.mxu0 0
  %77 = vmatprep.subr.bf16.mxu0 0
  %78 = vmatpush1.bf16.msra.mxu0 0
  %79 = vmatprep.subr.bf16.mxu0 0
  %80 = vmatpush1.bf16.msra.mxu0 %v59
  %81 = vmatprep.subr.bf16.mxu0 0
  %82 = vmatpush1.bf16.msra.mxu0 %v58
  %83 = vmatprep.subr.bf16.mxu0 0
  %84 = vmatpush1.bf16.msra.mxu0 %v57
  %85 = vmatprep.subr.bf16.mxu0 0
  %86 = vmatpush1.bf16.msra.mxu0 %v56
  %87 = vmatprep.subr.bf16.mxu0 0
  %88 = vmatpush2.bf16.msra.mxu0 0
  %89 = vmatprep.subr.bf16.mxu0 0
  %90 = vmatpush2.bf16.msra.mxu0 0
  %91 = vmatprep.subr.bf16.mxu0 0
  %92 = vmatpush2.bf16.msra.mxu0 0
  %93 = vmatprep.subr.bf16.mxu0 0
  %94 = vmatpush2.bf16.msra.mxu0 0
  %95 = vmatprep.subr.bf16.mxu0 0
  %96 = vmatpush2.bf16.msra.mxu0 0
  %97 = vmatprep.subr.bf16.mxu0 0
  %98 = vmatpush2.bf16.msra.mxu0 0
  %99 = vmatprep.subr.bf16.mxu0 0
  %100 = vmatpush2.bf16.msra.mxu0 0
  %101 = vmatprep.subr.bf16.mxu0 0
  %102 = vmatpush2.bf16.msra.mxu0 0
  %103 = vmatprep.mubr.bf16.mxu0 0
  %104 = vmatmul.mubr.bf16.gmra.mxu0 %v66
  %v105 = vpop.f32.mrf.mxu0
  %v106 = vadd.f32 0.0, %v105
  %v107 = vpop.f32.mrf.mxu0
  %v108 = vpop.f32.mrf.mxu0
  %v109 = vadd.f32 0.0, %v108
  %v110 = vpop.f32.mrf.mxu0
  %111 = vmatprep.mubr.bf16.mxu0 0
  %112 = vmatmul.mubr.bf16.gmra.mxu0 %v69
  %v113 = vpop.f32.mrf.mxu0
  %v114 = vadd.f32 0.0, %v113
  %v115 = vpop.f32.mrf.mxu0
  %v116 = vpop.f32.mrf.mxu0
  %v117 = vadd.f32 0.0, %v116
  %v118 = vpop.f32.mrf.mxu0
  %119 = vdwg.mxu0
  %v120 = vld [vmem:[%s2] sm:$0x1]
  %v122 = vlaneseq
  %v123 = vshrl.u32 %v122, 7
  %v124 = vsub.s32 0, %v123
  %v125 = vrot.slane %v120, %v124
  %v127 = vmul.f32 %v106, %v125
  %v128 = vmul.f32 %v109, %v125
  %v129 = vmul.f32 %v114, %v125
  %v130 = vmul.f32 %v117, %v125
  %v131 = vld [vmem:[%s3] sm:$0x1]
  %v133 = vlaneseq
  %v134 = vshrl.u32 %v133, 7
  %v135 = vsub.s32 0, %v134
  %v136 = vrot.slane %v131, %v135
  %v138 = vadd.f32 %v127, %v136
  %v139 = vadd.f32 %v128, %v136
  %v140 = vadd.f32 %v129, %v136
  %v141 = vadd.f32 %v130, %v136
  %142 = vst [vmem:[%s4] sm:$0xff] %v138
  %143 = vst [vmem:[%s4 + $0x8] sm:$0xff] %v139
  %144 = vst [vmem:[%s4 + $0x10] sm:$0xff] %v140
  %145 = vst [vmem:[%s4 + $0x18] sm:$0xff] %v141
  // Predicated region
  $region18: #{_lambda_.25} parent=0 // pred_check
    _
  $region19: #{_lambda_.25} parent=0 // pred_check_branch
    %147 = sbr.rel (0) target = $region21
  $region20: #{_lambda_.25} parent=0 // pred_region
    _
  $region21: #{_lambda_.25} parent=0 // pred_fallthru
    _
  // Predicated region
  $region22: #{_lambda_.25} parent=0 // pred_check
    _
  $region23: #{_lambda_.25} parent=0 // pred_check_branch
    %149 = sbr.rel (0) target = $region25
  $region24: #{_lambda_.25} parent=0 // pred_region
    _
  $region25: #{_lambda_.25} parent=0 // pred_fallthru
    _

// kernel: _lambda_.27
$region0: #{_lambda_.27}
  #allocation0 [shape = 'u32[]', space=smem, size = 0x4, offset = 0x4, fixed_abs, tag = 'smem constant byte address 0x4 - core index']
  #allocation1 [shape = 'u32[144,128]{1,0:T(1,128)}', space=vmem, size = 0x12000, scoped, tag = 'internal scratch']
  %s0 = inlined_call_operand.vmem [shape: f32[32,128], index: 0, kind: input, shape index: {}]
  %s1 = inlined_call_operand.vmem [shape: f32[1,128], index: 1, kind: input, shape index: {}]
  %s2 = inlined_call_operand.vmem [shape: f32[1,128], index: 2, kind: input, shape index: {}]
  %s3 = inlined_call_operand.vmem [shape: f32[32,128], index: 3, kind: output, shape index: {}]
  %s4 = sld [smem:[#allocation0]]
  $region22: #{_lambda_.27} parent=0
    _
  %s6 = ssub.s32 1, %s4
  %s7 = scalar_select 0, %s6, %s4
  // Predicated region
  $region2: #{_lambda_.27} parent=0 // pred_check
    _
  $region3: #{_lambda_.27} parent=0 // pred_check_branch
    %9 = sbr.rel (0) target = $region5
  $region4: #{_lambda_.27} parent=0 // pred_region
    _
  $region5: #{_lambda_.27} parent=0 // pred_fallthru
    _
  // Predicated region
  $region6: #{_lambda_.27} parent=0 // pred_check
    _
  $region7: #{_lambda_.27} parent=0 // pred_check_branch
    %11 = sbr.rel (0) target = $region9
  $region8: #{_lambda_.27} parent=0 // pred_region
    _
  $region9: #{_lambda_.27} parent=0 // pred_fallthru
    _
  // Predicated region
  $region10: #{_lambda_.27} parent=0 // pred_check
    _
  $region11: #{_lambda_.27} parent=0 // pred_check_branch
    %13 = sbr.rel (0) target = $region13
  $region12: #{_lambda_.27} parent=0 // pred_region
    _
  $region13: #{_lambda_.27} parent=0 // pred_fallthru
    _
  %v14 = vld [vmem:[%s0] sm:$0xff]
  %v15 = vld [vmem:[%s0 + $0x8] sm:$0xff]
  %v16 = vld [vmem:[%s0 + $0x10] sm:$0xff]
  %v17 = vld [vmem:[%s0 + $0x18] sm:$0xff]
  %v18 = vld [vmem:[%s1] sm:$0x1]
  %v20 = vlaneseq
  %v21 = vshrl.u32 %v20, 7
  %v22 = vsub.s32 0, %v21
  %v23 = vrot.slane %v18, %v22
  %v25 = vmul.f32 %v14, %v23
  %v26 = vmul.f32 %v15, %v23
  %v27 = vmul.f32 %v16, %v23
  %v28 = vmul.f32 %v17, %v23
  %v29 = vld [vmem:[%s2] sm:$0x1]
  %v31 = vlaneseq
  %v32 = vshrl.u32 %v31, 7
  %v33 = vsub.s32 0, %v32
  %v34 = vrot.slane %v29, %v33
  %v36 = vadd.f32 %v25, %v34
  %v37 = vadd.f32 %v26, %v34
  %v38 = vadd.f32 %v27, %v34
  %v39 = vadd.f32 %v28, %v34
  %v40 = vmax.f32 %v36, 0.0
  %v41 = vmax.f32 %v37, 0.0
  %v42 = vmax.f32 %v38, 0.0
  %v43 = vmax.f32 %v39, 0.0
  %44 = vst [vmem:[%s3] sm:$0xff] %v40
  %45 = vst [vmem:[%s3 + $0x8] sm:$0xff] %v41
  %46 = vst [vmem:[%s3 + $0x10] sm:$0xff] %v42
  %47 = vst [vmem:[%s3 + $0x18] sm:$0xff] %v43
  // Predicated region
  $region14: #{_lambda_.27} parent=0 // pred_check
    _
  $region15: #{_lambda_.27} parent=0 // pred_check_branch
    %49 = sbr.rel (0) target = $region17
  $region16: #{_lambda_.27} parent=0 // pred_region
    _
  $region17: #{_lambda_.27} parent=0 // pred_fallthru
    _
  // Predicated region
  $region18: #{_lambda_.27} parent=0 // pred_check
    _
  $region19: #{_lambda_.27} parent=0 // pred_check_branch
    %51 = sbr.rel (0) target = $region21
  $region20: #{_lambda_.27} parent=0 // pred_region
    _
  $region21: #{_lambda_.27} parent=0 // pred_fallthru
    _

// kernel: _lambda_.26
$region0: #{_lambda_.26}
  #allocation0 [shape = 'u32[]', space=smem, size = 0x4, offset = 0x4, fixed_abs, tag = 'smem constant byte address 0x4 - core index']
  #allocation1 [shape = 'u32[144,128]{1,0:T(1,128)}', space=vmem, size = 0x12000, scoped, tag = 'internal scratch']
  %s0 = inlined_call_operand.vmem [shape: bf16[32,1152], index: 0, kind: input, shape index: {}]
  %s1 = inlined_call_operand.vmem [shape: bf16[1152,128], index: 1, kind: input, shape index: {}]
  %s2 = inlined_call_operand.vmem [shape: f32[1,128], index: 2, kind: input, shape index: {}]
  %s3 = inlined_call_operand.vmem [shape: f32[1,128], index: 3, kind: input, shape index: {}]
  %s4 = inlined_call_operand.vmem [shape: f32[32,128], index: 4, kind: input, shape index: {}]
  %s5 = inlined_call_operand.vmem [shape: f32[32,128], index: 5, kind: output, shape index: {}]
  %s6 = sld [smem:[#allocation0]]
  $region30: #{_lambda_.26} parent=0
    _
  %s8 = ssub.s32 1, %s6
  %s9 = scalar_select 0, %s8, %s6
  // Predicated region
  $region2: #{_lambda_.26} parent=0 // pred_check
    _
  $region3: #{_lambda_.26} parent=0 // pred_check_branch
    %11 = sbr.rel (0) target = $region5
  $region4: #{_lambda_.26} parent=0 // pred_region
    _
  $region5: #{_lambda_.26} parent=0 // pred_fallthru
    _
  // Predicated region
  $region6: #{_lambda_.26} parent=0 // pred_check
    _
  $region7: #{_lambda_.26} parent=0 // pred_check_branch
    %13 = sbr.rel (0) target = $region9
  $region8: #{_lambda_.26} parent=0 // pred_region
    _
  $region9: #{_lambda_.26} parent=0 // pred_fallthru
    _
  // Predicated region
  $region10: #{_lambda_.26} parent=0 // pred_check
    _
  $region11: #{_lambda_.26} parent=0 // pred_check_branch
    %15 = sbr.rel (0) target = $region13
  $region12: #{_lambda_.26} parent=0 // pred_region
    _
  $region13: #{_lambda_.26} parent=0 // pred_fallthru
    _
  // Predicated region
  $region14: #{_lambda_.26} parent=0 // pred_check
    _
  $region15: #{_lambda_.26} parent=0 // pred_check_branch
    %17 = sbr.rel (0) target = $region17
  $region16: #{_lambda_.26} parent=0 // pred_region
    _
  $region17: #{_lambda_.26} parent=0 // pred_fallthru
    _
  // Predicated region
  $region18: #{_lambda_.26} parent=0 // pred_check
    _
  $region19: #{_lambda_.26} parent=0 // pred_check_branch
    %19 = sbr.rel (0) target = $region21
  $region20: #{_lambda_.26} parent=0 // pred_region
    _
  $region21: #{_lambda_.26} parent=0 // pred_fallthru
    _
  %v21 = vld [vmem:[%s0] sm:$0xff]
  %v22 = vld [vmem:[%s0 + $0x8] sm:$0xff]
  %v23 = vld [vmem:[%s0 + $0x10] sm:$0xff]
  %v24 = vld [vmem:[%s0 + $0x18] sm:$0xff]
  %v25 = vld [vmem:[%s0 + $0x20] sm:$0xf]
  %v26 = vld [vmem:[%s0 + $0x24] sm:$0xff]
  %v27 = vld [vmem:[%s0 + $0x2c] sm:$0xff]
  %v28 = vld [vmem:[%s0 + $0x34] sm:$0xff]
  %v29 = vld [vmem:[%s0 + $0x3c] sm:$0xff]
  %v30 = vld [vmem:[%s0 + $0x44] sm:$0xf]
  %v31 = vld [vmem:[%s0 + $0x48] sm:$0xff]
  %v32 = vld [vmem:[%s0 + $0x50] sm:$0xff]
  %v33 = vld [vmem:[%s0 + $0x58] sm:$0xff]
  %v34 = vld [vmem:[%s0 + $0x60] sm:$0xff]
  %v35 = vld [vmem:[%s0 + $0x68] sm:$0xf]
  %v36 = vld [vmem:[%s0 + $0x6c] sm:$0xff]
  %v37 = vld [vmem:[%s0 + $0x74] sm:$0xff]
  %v38 = vld [vmem:[%s0 + $0x7c] sm:$0xff]
  %v39 = vld [vmem:[%s0 + $0x84] sm:$0xff]
  %v40 = vld [vmem:[%s0 + $0x8c] sm:$0xf]
  %v41 = vld [vmem:[%s1] sm:$0xf]
  %v42 = vld [vmem:[%s1 + $0x4] sm:$0xf]
  %v43 = vld [vmem:[%s1 + $0x8] sm:$0xf]
  %v44 = vld [vmem:[%s1 + $0xc] sm:$0xf]
  %v45 = vld [vmem:[%s1 + $0x10] sm:$0xf]
  %v46 = vld [vmem:[%s1 + $0x14] sm:$0xf]
  %v47 = vld [vmem:[%s1 + $0x18] sm:$0xf]
  %v48 = vld [vmem:[%s1 + $0x1c] sm:$0xf]
  %v49 = vld [vmem:[%s1 + $0x20] sm:$0xf]
  %v50 = vld [vmem:[%s1 + $0x24] sm:$0xf]
  %v51 = vld [vmem:[%s1 + $0x28] sm:$0xf]
  %v52 = vld [vmem:[%s1 + $0x2c] sm:$0xf]
  %v53 = vld [vmem:[%s1 + $0x30] sm:$0xf]
  %v54 = vld [vmem:[%s1 + $0x34] sm:$0xf]
  %v55 = vld [vmem:[%s1 + $0x38] sm:$0xf]
  %v56 = vld [vmem:[%s1 + $0x3c] sm:$0xf]
  %v57 = vld [vmem:[%s1 + $0x40] sm:$0xf]
  %v58 = vld [vmem:[%s1 + $0x44] sm:$0xf]
  %v59 = vld [vmem:[%s1 + $0x48] sm:$0xf]
  %v60 = vld [vmem:[%s1 + $0x4c] sm:$0xf]
  %v61 = vld [vmem:[%s1 + $0x50] sm:$0xf]
  %v62 = vld [vmem:[%s1 + $0x54] sm:$0xf]
  %v63 = vld [vmem:[%s1 + $0x58] sm:$0xf]
  %v64 = vld [vmem:[%s1 + $0x5c] sm:$0xf]
  %v65 = vld [vmem:[%s1 + $0x60] sm:$0xf]
  %v66 = vld [vmem:[%s1 + $0x64] sm:$0xf]
  %v67 = vld [vmem:[%s1 + $0x68] sm:$0xf]
  %v68 = vld [vmem:[%s1 + $0x6c] sm:$0xf]
  %v69 = vld [vmem:[%s1 + $0x70] sm:$0xf]
  %v70 = vld [vmem:[%s1 + $0x74] sm:$0xf]
  %v71 = vld [vmem:[%s1 + $0x78] sm:$0xf]
  %v72 = vld [vmem:[%s1 + $0x7c] sm:$0xf]
  %v73 = vld [vmem:[%s1 + $0x80] sm:$0xf]
  %v74 = vld [vmem:[%s1 + $0x84] sm:$0xf]
  %v75 = vld [vmem:[%s1 + $0x88] sm:$0xf]
  %v76 = vld [vmem:[%s1 + $0x8c] sm:$0xf]
  %v77 = vld [vmem:[%s1 + $0x90] sm:$0xf]
  %v78 = vld [vmem:[%s1 + $0x94] sm:$0xf]
  %v79 = vld [vmem:[%s1 + $0x98] sm:$0xf]
  %v80 = vld [vmem:[%s1 + $0x9c] sm:$0xf]
  %v81 = vld [vmem:[%s1 + $0xa0] sm:$0xf]
  %v82 = vld [vmem:[%s1 + $0xa4] sm:$0xf]
  %v83 = vld [vmem:[%s1 + $0xa8] sm:$0xf]
  %v84 = vld [vmem:[%s1 + $0xac] sm:$0xf]
  %v85 = vld [vmem:[%s1 + $0xb0] sm:$0xf]
  %v86 = vld [vmem:[%s1 + $0xb4] sm:$0xf]
  %v87 = vld [vmem:[%s1 + $0xb8] sm:$0xf]
  %v88 = vld [vmem:[%s1 + $0xbc] sm:$0xf]
  %v89 = vld [vmem:[%s1 + $0xc0] sm:$0xf]
  %v90 = vld [vmem:[%s1 + $0xc4] sm:$0xf]
  %v91 = vld [vmem:[%s1 + $0xc8] sm:$0xf]
  %v92 = vld [vmem:[%s1 + $0xcc] sm:$0xf]
  %v93 = vld [vmem:[%s1 + $0xd0] sm:$0xf]
  %v94 = vld [vmem:[%s1 + $0xd4] sm:$0xf]
  %v95 = vld [vmem:[%s1 + $0xd8] sm:$0xf]
  %v96 = vld [vmem:[%s1 + $0xdc] sm:$0xf]
  %v97 = vld [vmem:[%s1 + $0xe0] sm:$0xf]
  %v98 = vld [vmem:[%s1 + $0xe4] sm:$0xf]
  %v99 = vld [vmem:[%s1 + $0xe8] sm:$0xf]
  %v100 = vld [vmem:[%s1 + $0xec] sm:$0xf]
  %v101 = vld [vmem:[%s1 + $0xf0] sm:$0xf]
  %v102 = vld [vmem:[%s1 + $0xf4] sm:$0xf]
  %v103 = vld [vmem:[%s1 + $0xf8] sm:$0xf]
  %v104 = vld [vmem:[%s1 + $0xfc] sm:$0xf]
  %v105 = vld [vmem:[%s1 + $0x100] sm:$0xf]
  %v106 = vld [vmem:[%s1 + $0x104] sm:$0xf]
  %v107 = vld [vmem:[%s1 + $0x108] sm:$0xf]
  %v108 = vld [vmem:[%s1 + $0x10c] sm:$0xf]
  %v109 = vld [vmem:[%s1 + $0x110] sm:$0xf]
  %v110 = vld [vmem:[%s1 + $0x114] sm:$0xf]
  %v111 = vld [vmem:[%s1 + $0x118] sm:$0xf]
  %v112 = vld [vmem:[%s1 + $0x11c] sm:$0xf]
  %v113 = vld [vmem:[%s1 + $0x120] sm:$0xf]
  %v114 = vld [vmem:[%s1 + $0x124] sm:$0xf]
  %v115 = vld [vmem:[%s1 + $0x128] sm:$0xf]
  %v116 = vld [vmem:[%s1 + $0x12c] sm:$0xf]
  %v117 = vld [vmem:[%s1 + $0x130] sm:$0xf]
  %v118 = vld [vmem:[%s1 + $0x134] sm:$0xf]
  %v119 = vld [vmem:[%s1 + $0x138] sm:$0xf]
  %v120 = vld [vmem:[%s1 + $0x13c] sm:$0xf]
  %v121 = vld [vmem:[%s1 + $0x140] sm:$0xf]
  %v122 = vld [vmem:[%s1 + $0x144] sm:$0xf]
  %v123 = vld [vmem:[%s1 + $0x148] sm:$0xf]
  %v124 = vld [vmem:[%s1 + $0x14c] sm:$0xf]
  %v125 = vld [vmem:[%s1 + $0x150] sm:$0xf]
  %v126 = vld [vmem:[%s1 + $0x154] sm:$0xf]
  %v127 = vld [vmem:[%s1 + $0x158] sm:$0xf]
  %v128 = vld [vmem:[%s1 + $0x15c] sm:$0xf]
  %v129 = vld [vmem:[%s1 + $0x160] sm:$0xf]
  %v130 = vld [vmem:[%s1 + $0x164] sm:$0xf]
  %v131 = vld [vmem:[%s1 + $0x168] sm:$0xf]
  %v132 = vld [vmem:[%s1 + $0x16c] sm:$0xf]
  %v133 = vld [vmem:[%s1 + $0x170] sm:$0xf]
  %v134 = vld [vmem:[%s1 + $0x174] sm:$0xf]
  %v135 = vld [vmem:[%s1 + $0x178] sm:$0xf]
  %v136 = vld [vmem:[%s1 + $0x17c] sm:$0xf]
  %v137 = vld [vmem:[%s1 + $0x180] sm:$0xf]
  %v138 = vld [vmem:[%s1 + $0x184] sm:$0xf]
  %v139 = vld [vmem:[%s1 + $0x188] sm:$0xf]
  %v140 = vld [vmem:[%s1 + $0x18c] sm:$0xf]
  %v141 = vld [vmem:[%s1 + $0x190] sm:$0xf]
  %v142 = vld [vmem:[%s1 + $0x194] sm:$0xf]
  %v143 = vld [vmem:[%s1 + $0x198] sm:$0xf]
  %v144 = vld [vmem:[%s1 + $0x19c] sm:$0xf]
  %v145 = vld [vmem:[%s1 + $0x1a0] sm:$0xf]
  %v146 = vld [vmem:[%s1 + $0x1a4] sm:$0xf]
  %v147 = vld [vmem:[%s1 + $0x1a8] sm:$0xf]
  %v148 = vld [vmem:[%s1 + $0x1ac] sm:$0xf]
  %v149 = vld [vmem:[%s1 + $0x1b0] sm:$0xf]
  %v150 = vld [vmem:[%s1 + $0x1b4] sm:$0xf]
  %v151 = vld [vmem:[%s1 + $0x1b8] sm:$0xf]
  %v152 = vld [vmem:[%s1 + $0x1bc] sm:$0xf]
  %v153 = vld [vmem:[%s1 + $0x1c0] sm:$0xf]
  %v154 = vld [vmem:[%s1 + $0x1c4] sm:$0xf]
  %v155 = vld [vmem:[%s1 + $0x1c8] sm:$0xf]
  %v156 = vld [vmem:[%s1 + $0x1cc] sm:$0xf]
  %v157 = vld [vmem:[%s1 + $0x1d0] sm:$0xf]
  %v158 = vld [vmem:[%s1 + $0x1d4] sm:$0xf]
  %v159 = vld [vmem:[%s1 + $0x1d8] sm:$0xf]
  %v160 = vld [vmem:[%s1 + $0x1dc] sm:$0xf]
  %v161 = vld [vmem:[%s1 + $0x1e0] sm:$0xf]
  %v162 = vld [vmem:[%s1 + $0x1e4] sm:$0xf]
  %v163 = vld [vmem:[%s1 + $0x1e8] sm:$0xf]
  %v164 = vld [vmem:[%s1 + $0x1ec] sm:$0xf]
  %v165 = vld [vmem:[%s1 + $0x1f0] sm:$0xf]
  %v166 = vld [vmem:[%s1 + $0x1f4] sm:$0xf]
  %v167 = vld [vmem:[%s1 + $0x1f8] sm:$0xf]
  %v168 = vld [vmem:[%s1 + $0x1fc] sm:$0xf]
  %v169 = vld [vmem:[%s1 + $0x200] sm:$0xf]
  %v170 = vld [vmem:[%s1 + $0x204] sm:$0xf]
  %v171 = vld [vmem:[%s1 + $0x208] sm:$0xf]
  %v172 = vld [vmem:[%s1 + $0x20c] sm:$0xf]
  %v173 = vld [vmem:[%s1 + $0x210] sm:$0xf]
  %v174 = vld [vmem:[%s1 + $0x214] sm:$0xf]
  %v175 = vld [vmem:[%s1 + $0x218] sm:$0xf]
  %v176 = vld [vmem:[%s1 + $0x21c] sm:$0xf]
  %v177 = vld [vmem:[%s1 + $0x220] sm:$0xf]
  %v178 = vld [vmem:[%s1 + $0x224] sm:$0xf]
  %v179 = vld [vmem:[%s1 + $0x228] sm:$0xf]
  %v180 = vld [vmem:[%s1 + $0x22c] sm:$0xf]
  %v181 = vld [vmem:[%s1 + $0x230] sm:$0xf]
  %v182 = vld [vmem:[%s1 + $0x234] sm:$0xf]
  %v183 = vld [vmem:[%s1 + $0x238] sm:$0xf]
  %v184 = vld [vmem:[%s1 + $0x23c] sm:$0xf]
  %v205 = vunpack.c.l.b16 %v21
  %v206 = vunpack.c.h.b16 %v21
  %v207 = vunpack.c.l.b16 %v22
  %v208 = vunpack.c.h.b16 %v22
  %v209 = vunpack.c.l.b16 %v23
  %v210 = vunpack.c.h.b16 %v23
  %v211 = vunpack.c.l.b16 %v24
  %v212 = vunpack.c.h.b16 %v24
  %v213 = vunpack.c.l.b16 %v25
  %v214 = vunpack.c.l.b16 %v26
  %v215 = vunpack.c.h.b16 %v26
  %v216 = vunpack.c.l.b16 %v27
  %v217 = vunpack.c.h.b16 %v27
  %v218 = vunpack.c.l.b16 %v28
  %v219 = vunpack.c.h.b16 %v28
  %v220 = vunpack.c.l.b16 %v29
  %v221 = vunpack.c.h.b16 %v29
  %v222 = vunpack.c.l.b16 %v30
  %v223 = vunpack.c.l.b16 %v31
  %v224 = vunpack.c.h.b16 %v31
  %v225 = vunpack.c.l.b16 %v32
  %v226 = vunpack.c.h.b16 %v32
  %v227 = vunpack.c.l.b16 %v33
  %v228 = vunpack.c.h.b16 %v33
  %v229 = vunpack.c.l.b16 %v34
  %v230 = vunpack.c.h.b16 %v34
  %v231 = vunpack.c.l.b16 %v35
  %v232 = vunpack.c.l.b16 %v36
  %v233 = vunpack.c.h.b16 %v36
  %v234 = vunpack.c.l.b16 %v37
  %v235 = vunpack.c.h.b16 %v37
  %v236 = vunpack.c.l.b16 %v38
  %v237 = vunpack.c.h.b16 %v38
  %v238 = vunpack.c.l.b16 %v39
  %v239 = vunpack.c.h.b16 %v39
  %v240 = vunpack.c.l.b16 %v40
  %v241 = vpack.c.b16 %v214, %v205
  %v242 = vpack.c.b16 %v215, %v206
  %v243 = vpack.c.b16 %v216, %v207
  %v244 = vpack.c.b16 %v217, %v208
  %v245 = vpack.c.b16 %v218, %v209
  %v246 = vpack.c.b16 %v219, %v210
  %v247 = vpack.c.b16 %v220, %v211
  %v248 = vpack.c.b16 %v221, %v212
  %v249 = vpack.c.b16 %v222, %v213
  %v250 = vpack.c.b16 %v232, %v223
  %v251 = vpack.c.b16 %v233, %v224
  %v252 = vpack.c.b16 %v234, %v225
  %v253 = vpack.c.b16 %v235, %v226
  %v254 = vpack.c.b16 %v236, %v227
  %v255 = vpack.c.b16 %v237, %v228
  %v256 = vpack.c.b16 %v238, %v229
  %v257 = vpack.c.b16 %v239, %v230
  %v258 = vpack.c.b16 %v240, %v231
  %v421 = vunpack.c.l.b16 %v41
  %v422 = vunpack.c.l.b16 %v42
  %v423 = vunpack.c.l.b16 %v43
  %v424 = vunpack.c.l.b16 %v44
  %v425 = vunpack.c.l.b16 %v45
  %v426 = vunpack.c.l.b16 %v46
  %v427 = vunpack.c.l.b16 %v47
  %v428 = vunpack.c.l.b16 %v48
  %v429 = vunpack.c.l.b16 %v49
  %v430 = vunpack.c.l.b16 %v50
  %v431 = vunpack.c.l.b16 %v51
  %v432 = vunpack.c.l.b16 %v52
  %v433 = vunpack.c.l.b16 %v53
  %v434 = vunpack.c.l.b16 %v54
  %v435 = vunpack.c.l.b16 %v55
  %v436 = vunpack.c.l.b16 %v56
  %v437 = vunpack.c.l.b16 %v57
  %v438 = vunpack.c.l.b16 %v58
  %v439 = vunpack.c.l.b16 %v59
  %v440 = vunpack.c.l.b16 %v60
  %v441 = vunpack.c.l.b16 %v61
  %v442 = vunpack.c.l.b16 %v62
  %v443 = vunpack.c.l.b16 %v63
  %v444 = vunpack.c.l.b16 %v64
  %v445 = vunpack.c.l.b16 %v65
  %v446 = vunpack.c.l.b16 %v66
  %v447 = vunpack.c.l.b16 %v67
  %v448 = vunpack.c.l.b16 %v68
  %v449 = vunpack.c.l.b16 %v69
  %v450 = vunpack.c.l.b16 %v70
  %v451 = vunpack.c.l.b16 %v71
  %v452 = vunpack.c.l.b16 %v72
  %v453 = vunpack.c.l.b16 %v73
  %v454 = vunpack.c.l.b16 %v74
  %v455 = vunpack.c.l.b16 %v75
  %v456 = vunpack.c.l.b16 %v76
  %v457 = vunpack.c.l.b16 %v77
  %v458 = vunpack.c.l.b16 %v78
  %v459 = vunpack.c.l.b16 %v79
  %v460 = vunpack.c.l.b16 %v80
  %v461 = vunpack.c.l.b16 %v81
  %v462 = vunpack.c.l.b16 %v82
  %v463 = vunpack.c.l.b16 %v83
  %v464 = vunpack.c.l.b16 %v84
  %v465 = vunpack.c.l.b16 %v85
  %v466 = vunpack.c.l.b16 %v86
  %v467 = vunpack.c.l.b16 %v87
  %v468 = vunpack.c.l.b16 %v88
  %v469 = vunpack.c.l.b16 %v89
  %v470 = vunpack.c.l.b16 %v90
  %v471 = vunpack.c.l.b16 %v91
  %v472 = vunpack.c.l.b16 %v92
  %v473 = vunpack.c.l.b16 %v93
  %v474 = vunpack.c.l.b16 %v94
  %v475 = vunpack.c.l.b16 %v95
  %v476 = vunpack.c.l.b16 %v96
  %v477 = vunpack.c.l.b16 %v97
  %v478 = vunpack.c.l.b16 %v98
  %v479 = vunpack.c.l.b16 %v99
  %v480 = vunpack.c.l.b16 %v100
  %v481 = vunpack.c.l.b16 %v101
  %v482 = vunpack.c.l.b16 %v102
  %v483 = vunpack.c.l.b16 %v103
  %v484 = vunpack.c.l.b16 %v104
  %v485 = vunpack.c.l.b16 %v105
  %v486 = vunpack.c.l.b16 %v106
  %v487 = vunpack.c.l.b16 %v107
  %v488 = vunpack.c.l.b16 %v108
  %v489 = vunpack.c.l.b16 %v109
  %v490 = vunpack.c.l.b16 %v110
  %v491 = vunpack.c.l.b16 %v111
  %v492 = vunpack.c.l.b16 %v112
  %v493 = vunpack.c.l.b16 %v113
  %v494 = vunpack.c.l.b16 %v114
  %v495 = vunpack.c.l.b16 %v115
  %v496 = vunpack.c.l.b16 %v116
  %v497 = vunpack.c.l.b16 %v117
  %v498 = vunpack.c.l.b16 %v118
  %v499 = vunpack.c.l.b16 %v119
  %v500 = vunpack.c.l.b16 %v120
  %v501 = vunpack.c.l.b16 %v121
  %v502 = vunpack.c.l.b16 %v122
  %v503 = vunpack.c.l.b16 %v123
  %v504 = vunpack.c.l.b16 %v124
  %v505 = vunpack.c.l.b16 %v125
  %v506 = vunpack.c.l.b16 %v126
  %v507 = vunpack.c.l.b16 %v127
  %v508 = vunpack.c.l.b16 %v128
  %v509 = vunpack.c.l.b16 %v129
  %v510 = vunpack.c.l.b16 %v130
  %v511 = vunpack.c.l.b16 %v131
  %v512 = vunpack.c.l.b16 %v132
  %v513 = vunpack.c.l.b16 %v133
  %v514 = vunpack.c.l.b16 %v134
  %v515 = vunpack.c.l.b16 %v135
  %v516 = vunpack.c.l.b16 %v136
  %v517 = vunpack.c.l.b16 %v137
  %v518 = vunpack.c.l.b16 %v138
  %v519 = vunpack.c.l.b16 %v139
  %v520 = vunpack.c.l.b16 %v140
  %v521 = vunpack.c.l.b16 %v141
  %v522 = vunpack.c.l.b16 %v142
  %v523 = vunpack.c.l.b16 %v143
  %v524 = vunpack.c.l.b16 %v144
  %v525 = vunpack.c.l.b16 %v145
  %v526 = vunpack.c.l.b16 %v146
  %v527 = vunpack.c.l.b16 %v147
  %v528 = vunpack.c.l.b16 %v148
  %v529 = vunpack.c.l.b16 %v149
  %v530 = vunpack.c.l.b16 %v150
  %v531 = vunpack.c.l.b16 %v151
  %v532 = vunpack.c.l.b16 %v152
  %v533 = vunpack.c.l.b16 %v153
  %v534 = vunpack.c.l.b16 %v154
  %v535 = vunpack.c.l.b16 %v155
  %v536 = vunpack.c.l.b16 %v156
  %v537 = vunpack.c.l.b16 %v157
  %v538 = vunpack.c.l.b16 %v158
  %v539 = vunpack.c.l.b16 %v159
  %v540 = vunpack.c.l.b16 %v160
  %v541 = vunpack.c.l.b16 %v161
  %v542 = vunpack.c.l.b16 %v162
  %v543 = vunpack.c.l.b16 %v163
  %v544 = vunpack.c.l.b16 %v164
  %v545 = vunpack.c.l.b16 %v165
  %v546 = vunpack.c.l.b16 %v166
  %v547 = vunpack.c.l.b16 %v167
  %v548 = vunpack.c.l.b16 %v168
  %v549 = vunpack.c.l.b16 %v169
  %v550 = vunpack.c.l.b16 %v170
  %v551 = vunpack.c.l.b16 %v171
  %v552 = vunpack.c.l.b16 %v172
  %v553 = vunpack.c.l.b16 %v173
  %v554 = vunpack.c.l.b16 %v174
  %v555 = vunpack.c.l.b16 %v175
  %v556 = vunpack.c.l.b16 %v176
  %v557 = vunpack.c.l.b16 %v177
  %v558 = vunpack.c.l.b16 %v178
  %v559 = vunpack.c.l.b16 %v179
  %v560 = vunpack.c.l.b16 %v180
  %v561 = vunpack.c.l.b16 %v181
  %v562 = vunpack.c.l.b16 %v182
  %v563 = vunpack.c.l.b16 %v183
  %v564 = vunpack.c.l.b16 %v184
  %v565 = vpack.c.b16 %v422, %v421
  %v566 = vpack.c.b16 %v424, %v423
  %v567 = vpack.c.b16 %v426, %v425
  %v568 = vpack.c.b16 %v428, %v427
  %v569 = vpack.c.b16 %v430, %v429
  %v570 = vpack.c.b16 %v432, %v431
  %v571 = vpack.c.b16 %v434, %v433
  %v572 = vpack.c.b16 %v436, %v435
  %v573 = vpack.c.b16 %v438, %v437
  %v574 = vpack.c.b16 %v440, %v439
  %v575 = vpack.c.b16 %v442, %v441
  %v576 = vpack.c.b16 %v444, %v443
  %v577 = vpack.c.b16 %v446, %v445
  %v578 = vpack.c.b16 %v448, %v447
  %v579 = vpack.c.b16 %v450, %v449
  %v580 = vpack.c.b16 %v452, %v451
  %v581 = vpack.c.b16 %v454, %v453
  %v582 = vpack.c.b16 %v456, %v455
  %v583 = vpack.c.b16 %v458, %v457
  %v584 = vpack.c.b16 %v460, %v459
  %v585 = vpack.c.b16 %v462, %v461
  %v586 = vpack.c.b16 %v464, %v463
  %v587 = vpack.c.b16 %v466, %v465
  %v588 = vpack.c.b16 %v468, %v467
  %v589 = vpack.c.b16 %v470, %v469
  %v590 = vpack.c.b16 %v472, %v471
  %v591 = vpack.c.b16 %v474, %v473
  %v592 = vpack.c.b16 %v476, %v475
  %v593 = vpack.c.b16 %v478, %v477
  %v594 = vpack.c.b16 %v480, %v479
  %v595 = vpack.c.b16 %v482, %v481
  %v596 = vpack.c.b16 %v484, %v483
  %v597 = vpack.c.b16 %v486, %v485
  %v598 = vpack.c.b16 %v488, %v487
  %v599 = vpack.c.b16 %v490, %v489
  %v600 = vpack.c.b16 %v492, %v491
  %v601 = vpack.c.b16 %v494, %v493
  %v602 = vpack.c.b16 %v496, %v495
  %v603 = vpack.c.b16 %v498, %v497
  %v604 = vpack.c.b16 %v500, %v499
  %v605 = vpack.c.b16 %v502, %v501
  %v606 = vpack.c.b16 %v504, %v503
  %v607 = vpack.c.b16 %v506, %v505
  %v608 = vpack.c.b16 %v508, %v507
  %v609 = vpack.c.b16 %v510, %v509
  %v610 = vpack.c.b16 %v512, %v511
  %v611 = vpack.c.b16 %v514, %v513
  %v612 = vpack.c.b16 %v516, %v515
  %v613 = vpack.c.b16 %v518, %v517
  %v614 = vpack.c.b16 %v520, %v519
  %v615 = vpack.c.b16 %v522, %v521
  %v616 = vpack.c.b16 %v524, %v523
  %v617 = vpack.c.b16 %v526, %v525
  %v618 = vpack.c.b16 %v528, %v527
  %v619 = vpack.c.b16 %v530, %v529
  %v620 = vpack.c.b16 %v532, %v531
  %v621 = vpack.c.b16 %v534, %v533
  %v622 = vpack.c.b16 %v536, %v535
  %v623 = vpack.c.b16 %v538, %v537
  %v624 = vpack.c.b16 %v540, %v539
  %v625 = vpack.c.b16 %v542, %v541
  %v626 = vpack.c.b16 %v544, %v543
  %v627 = vpack.c.b16 %v546, %v545
  %v628 = vpack.c.b16 %v548, %v547
  %v629 = vpack.c.b16 %v550, %v549
  %v630 = vpack.c.b16 %v552, %v551
  %v631 = vpack.c.b16 %v554, %v553
  %v632 = vpack.c.b16 %v556, %v555
  %v633 = vpack.c.b16 %v558, %v557
  %v634 = vpack.c.b16 %v560, %v559
  %v635 = vpack.c.b16 %v562, %v561
  %v636 = vpack.c.b16 %v564, %v563
  %709 = vmatprep.subr.bf16.mxu0 0
  %710 = vmatpush1.bf16.msra.mxu0 %v572
  %711 = vmatprep.subr.bf16.mxu0 0
  %712 = vmatpush1.bf16.msra.mxu0 %v571
  %713 = vmatprep.subr.bf16.mxu0 0
  %714 = vmatpush1.bf16.msra.mxu0 %v570
  %715 = vmatprep.subr.bf16.mxu0 0
  %716 = vmatpush1.bf16.msra.mxu0 %v569
  %717 = vmatprep.subr.bf16.mxu0 0
  %718 = vmatpush1.bf16.msra.mxu0 %v568
  %719 = vmatprep.subr.bf16.mxu0 0
  %720 = vmatpush1.bf16.msra.mxu0 %v567
  %721 = vmatprep.subr.bf16.mxu0 0
  %722 = vmatpush1.bf16.msra.mxu0 %v566
  %723 = vmatprep.subr.bf16.mxu0 0
  %724 = vmatpush1.bf16.msra.mxu0 %v565
  %725 = vmatprep.subr.bf16.mxu0 0
  %726 = vmatpush2.bf16.msra.mxu0 %v580
  %727 = vmatprep.subr.bf16.mxu0 0
  %728 = vmatpush2.bf16.msra.mxu0 %v579
  %729 = vmatprep.subr.bf16.mxu0 0
  %730 = vmatpush2.bf16.msra.mxu0 %v578
  %731 = vmatprep.subr.bf16.mxu0 0
  %732 = vmatpush2.bf16.msra.mxu0 %v577
  %733 = vmatprep.subr.bf16.mxu0 0
  %734 = vmatpush2.bf16.msra.mxu0 %v576
  %735 = vmatprep.subr.bf16.mxu0 0
  %736 = vmatpush2.bf16.msra.mxu0 %v575
  %737 = vmatprep.subr.bf16.mxu0 0
  %738 = vmatpush2.bf16.msra.mxu0 %v574
  %739 = vmatprep.subr.bf16.mxu0 0
  %740 = vmatpush2.bf16.msra.mxu0 %v573
  %741 = vmatprep.mubr.bf16.mxu0 %v242
  %742 = vmatmul.mubr.bf16.gmra.mxu0 %v241
  %v743 = vpop.f32.mrf.mxu0
  %v744 = vadd.f32 0.0, %v743
  %v745 = vpop.f32.mrf.mxu0
  %v746 = vpop.f32.mrf.mxu0
  %v747 = vadd.f32 0.0, %v746
  %v748 = vpop.f32.mrf.mxu0
  %749 = vmatprep.mubr.bf16.mxu0 %v251
  %750 = vmatmul.mubr.bf16.gmra.mxu0 %v250
  %v751 = vpop.f32.mrf.mxu0
  %v752 = vadd.f32 0.0, %v751
  %v753 = vpop.f32.mrf.mxu0
  %v754 = vpop.f32.mrf.mxu0
  %v755 = vadd.f32 0.0, %v754
  %v756 = vpop.f32.mrf.mxu0
  %757 = vdwg.mxu0
  %758 = vmatprep.subr.bf16.mxu0 0
  %759 = vmatpush1.bf16.msra.mxu0 %v588
  %760 = vmatprep.subr.bf16.mxu0 0
  %761 = vmatpush1.bf16.msra.mxu0 %v587
  %762 = vmatprep.subr.bf16.mxu0 0
  %763 = vmatpush1.bf16.msra.mxu0 %v586
  %764 = vmatprep.subr.bf16.mxu0 0
  %765 = vmatpush1.bf16.msra.mxu0 %v585
  %766 = vmatprep.subr.bf16.mxu0 0
  %767 = vmatpush1.bf16.msra.mxu0 %v584
  %768 = vmatprep.subr.bf16.mxu0 0
  %769 = vmatpush1.bf16.msra.mxu0 %v583
  %770 = vmatprep.subr.bf16.mxu0 0
  %771 = vmatpush1.bf16.msra.mxu0 %v582
  %772 = vmatprep.subr.bf16.mxu0 0
  %773 = vmatpush1.bf16.msra.mxu0 %v581
  %774 = vmatprep.subr.bf16.mxu0 0
  %775 = vmatpush2.bf16.msra.mxu0 %v596
  %776 = vmatprep.subr.bf16.mxu0 0
  %777 = vmatpush2.bf16.msra.mxu0 %v595
  %778 = vmatprep.subr.bf16.mxu0 0
  %779 = vmatpush2.bf16.msra.mxu0 %v594
  %780 = vmatprep.subr.bf16.mxu0 0
  %781 = vmatpush2.bf16.msra.mxu0 %v593
  %782 = vmatprep.subr.bf16.mxu0 0
  %783 = vmatpush2.bf16.msra.mxu0 %v592
  %784 = vmatprep.subr.bf16.mxu0 0
  %785 = vmatpush2.bf16.msra.mxu0 %v591
  %786 = vmatprep.subr.bf16.mxu0 0
  %787 = vmatpush2.bf16.msra.mxu0 %v590
  %788 = vmatprep.subr.bf16.mxu0 0
  %789 = vmatpush2.bf16.msra.mxu0 %v589
  %790 = vmatprep.mubr.bf16.mxu0 %v244
  %791 = vmatmul.mubr.bf16.gmra.mxu0 %v243
  %v792 = vpop.f32.mrf.mxu0
  %v793 = vadd.f32 %v744, %v792
  %v794 = vpop.f32.mrf.mxu0
  %v795 = vpop.f32.mrf.mxu0
  %v796 = vadd.f32 %v747, %v795
  %v797 = vpop.f32.mrf.mxu0
  %798 = vmatprep.mubr.bf16.mxu0 %v253
  %799 = vmatmul.mubr.bf16.gmra.mxu0 %v252
  %v800 = vpop.f32.mrf.mxu0
  %v801 = vadd.f32 %v752, %v800
  %v802 = vpop.f32.mrf.mxu0
  %v803 = vpop.f32.mrf.mxu0
  %v804 = vadd.f32 %v755, %v803
  %v805 = vpop.f32.mrf.mxu0
  %806 = vdwg.mxu0
  %807 = vmatprep.subr.bf16.mxu0 0
  %808 = vmatpush1.bf16.msra.mxu0 %v604
  %809 = vmatprep.subr.bf16.mxu0 0
  %810 = vmatpush1.bf16.msra.mxu0 %v603
  %811 = vmatprep.subr.bf16.mxu0 0
  %812 = vmatpush1.bf16.msra.mxu0 %v602
  %813 = vmatprep.subr.bf16.mxu0 0
  %814 = vmatpush1.bf16.msra.mxu0 %v601
  %815 = vmatprep.subr.bf16.mxu0 0
  %816 = vmatpush1.bf16.msra.mxu0 %v600
  %817 = vmatprep.subr.bf16.mxu0 0
  %818 = vmatpush1.bf16.msra.mxu0 %v599
  %819 = vmatprep.subr.bf16.mxu0 0
  %820 = vmatpush1.bf16.msra.mxu0 %v598
  %821 = vmatprep.subr.bf16.mxu0 0
  %822 = vmatpush1.bf16.msra.mxu0 %v597
  %823 = vmatprep.subr.bf16.mxu0 0
  %824 = vmatpush2.bf16.msra.mxu0 %v612
  %825 = vmatprep.subr.bf16.mxu0 0
  %826 = vmatpush2.bf16.msra.mxu0 %v611
  %827 = vmatprep.subr.bf16.mxu0 0
  %828 = vmatpush2.bf16.msra.mxu0 %v610
  %829 = vmatprep.subr.bf16.mxu0 0
  %830 = vmatpush2.bf16.msra.mxu0 %v609
  %831 = vmatprep.subr.bf16.mxu0 0
  %832 = vmatpush2.bf16.msra.mxu0 %v608
  %833 = vmatprep.subr.bf16.mxu0 0
  %834 = vmatpush2.bf16.msra.mxu0 %v607
  %835 = vmatprep.subr.bf16.mxu0 0
  %836 = vmatpush2.bf16.msra.mxu0 %v606
  %837 = vmatprep.subr.bf16.mxu0 0
  %838 = vmatpush2.bf16.msra.mxu0 %v605
  %839 = vmatprep.mubr.bf16.mxu0 %v246
  %840 = vmatmul.mubr.bf16.gmra.mxu0 %v245
  %v841 = vpop.f32.mrf.mxu0
  %v842 = vadd.f32 %v793, %v841
  %v843 = vpop.f32.mrf.mxu0
  %v844 = vpop.f32.mrf.mxu0
  %v845 = vadd.f32 %v796, %v844
  %v846 = vpop.f32.mrf.mxu0
  %847 = vmatprep.mubr.bf16.mxu0 %v255
  %848 = vmatmul.mubr.bf16.gmra.mxu0 %v254
  %v849 = vpop.f32.mrf.mxu0
  %v850 = vadd.f32 %v801, %v849
  %v851 = vpop.f32.mrf.mxu0
  %v852 = vpop.f32.mrf.mxu0
  %v853 = vadd.f32 %v804, %v852
  %v854 = vpop.f32.mrf.mxu0
  %855 = vdwg.mxu0
  %856 = vmatprep.subr.bf16.mxu0 0
  %857 = vmatpush1.bf16.msra.mxu0 %v620
  %858 = vmatprep.subr.bf16.mxu0 0
  %859 = vmatpush1.bf16.msra.mxu0 %v619
  %860 = vmatprep.subr.bf16.mxu0 0
  %861 = vmatpush1.bf16.msra.mxu0 %v618
  %862 = vmatprep.subr.bf16.mxu0 0
  %863 = vmatpush1.bf16.msra.mxu0 %v617
  %864 = vmatprep.subr.bf16.mxu0 0
  %865 = vmatpush1.bf16.msra.mxu0 %v616
  %866 = vmatprep.subr.bf16.mxu0 0
  %867 = vmatpush1.bf16.msra.mxu0 %v615
  %868 = vmatprep.subr.bf16.mxu0 0
  %869 = vmatpush1.bf16.msra.mxu0 %v614
  %870 = vmatprep.subr.bf16.mxu0 0
  %871 = vmatpush1.bf16.msra.mxu0 %v613
  %872 = vmatprep.subr.bf16.mxu0 0
  %873 = vmatpush2.bf16.msra.mxu0 %v628
  %874 = vmatprep.subr.bf16.mxu0 0
  %875 = vmatpush2.bf16.msra.mxu0 %v627
  %876 = vmatprep.subr.bf16.mxu0 0
  %877 = vmatpush2.bf16.msra.mxu0 %v626
  %878 = vmatprep.subr.bf16.mxu0 0
  %879 = vmatpush2.bf16.msra.mxu0 %v625
  %880 = vmatprep.subr.bf16.mxu0 0
  %881 = vmatpush2.bf16.msra.mxu0 %v624
  %882 = vmatprep.subr.bf16.mxu0 0
  %883 = vmatpush2.bf16.msra.mxu0 %v623
  %884 = vmatprep.subr.bf16.mxu0 0
  %885 = vmatpush2.bf16.msra.mxu0 %v622
  %886 = vmatprep.subr.bf16.mxu0 0
  %887 = vmatpush2.bf16.msra.mxu0 %v621
  %888 = vmatprep.mubr.bf16.mxu0 %v248
  %889 = vmatmul.mubr.bf16.gmra.mxu0 %v247
  %v890 = vpop.f32.mrf.mxu0
  %v891 = vadd.f32 %v842, %v890
  %v892 = vpop.f32.mrf.mxu0
  %v893 = vpop.f32.mrf.mxu0
  %v894 = vadd.f32 %v845, %v893
  %v895 = vpop.f32.mrf.mxu0
  %896 = vmatprep.mubr.bf16.mxu0 %v257
  %897 = vmatmul.mubr.bf16.gmra.mxu0 %v256
  %v898 = vpop.f32.mrf.mxu0
  %v899 = vadd.f32 %v850, %v898
  %v900 = vpop.f32.mrf.mxu0
  %v901 = vpop.f32.mrf.mxu0
  %v902 = vadd.f32 %v853, %v901
  %v903 = vpop.f32.mrf.mxu0
  %904 = vdwg.mxu0
  %905 = vmatprep.subr.bf16.mxu0 0
  %906 = vmatpush1.bf16.msra.mxu0 %v636
  %907 = vmatprep.subr.bf16.mxu0 0
  %908 = vmatpush1.bf16.msra.mxu0 %v635
  %909 = vmatprep.subr.bf16.mxu0 0
  %910 = vmatpush1.bf16.msra.mxu0 %v634
  %911 = vmatprep.subr.bf16.mxu0 0
  %912 = vmatpush1.bf16.msra.mxu0 %v633
  %913 = vmatprep.subr.bf16.mxu0 0
  %914 = vmatpush1.bf16.msra.mxu0 %v632
  %915 = vmatprep.subr.bf16.mxu0 0
  %916 = vmatpush1.bf16.msra.mxu0 %v631
  %917 = vmatprep.subr.bf16.mxu0 0
  %918 = vmatpush1.bf16.msra.mxu0 %v630
  %919 = vmatprep.subr.bf16.mxu0 0
  %920 = vmatpush1.bf16.msra.mxu0 %v629
  %921 = vmatprep.subr.bf16.mxu0 0
  %922 = vmatpush2.bf16.msra.mxu0 0
  %923 = vmatprep.subr.bf16.mxu0 0
  %924 = vmatpush2.bf16.msra.mxu0 0
  %925 = vmatprep.subr.bf16.mxu0 0
  %926 = vmatpush2.bf16.msra.mxu0 0
  %927 = vmatprep.subr.bf16.mxu0 0
  %928 = vmatpush2.bf16.msra.mxu0 0
  %929 = vmatprep.subr.bf16.mxu0 0
  %930 = vmatpush2.bf16.msra.mxu0 0
  %931 = vmatprep.subr.bf16.mxu0 0
  %932 = vmatpush2.bf16.msra.mxu0 0
  %933 = vmatprep.subr.bf16.mxu0 0
  %934 = vmatpush2.bf16.msra.mxu0 0
  %935 = vmatprep.subr.bf16.mxu0 0
  %936 = vmatpush2.bf16.msra.mxu0 0
  %937 = vmatprep.mubr.bf16.mxu0 0
  %938 = vmatmul.mubr.bf16.gmra.mxu0 %v249
  %v939 = vpop.f32.mrf.mxu0
  %v940 = vadd.f32 %v891, %v939
  %v941 = vpop.f32.mrf.mxu0
  %v942 = vpop.f32.mrf.mxu0
  %v943 = vadd.f32 %v894, %v942
  %v944 = vpop.f32.mrf.mxu0
  %945 = vmatprep.mubr.bf16.mxu0 0
  %946 = vmatmul.mubr.bf16.gmra.mxu0 %v258
  %v947 = vpop.f32.mrf.mxu0
  %v948 = vadd.f32 %v899, %v947
  %v949 = vpop.f32.mrf.mxu0
  %v950 = vpop.f32.mrf.mxu0
  %v951 = vadd.f32 %v902, %v950
  %v952 = vpop.f32.mrf.mxu0
  %953 = vdwg.mxu0
  %v954 = vld [vmem:[%s2] sm:$0x1]
  %v956 = vlaneseq
  %v957 = vshrl.u32 %v956, 7
  %v958 = vsub.s32 0, %v957
  %v959 = vrot.slane %v954, %v958
  %v961 = vmul.f32 %v940, %v959
  %v962 = vmul.f32 %v943, %v959
  %v963 = vmul.f32 %v948, %v959
  %v964 = vmul.f32 %v951, %v959
  %v965 = vld [vmem:[%s3] sm:$0x1]
  %v967 = vlaneseq
  %v968 = vshrl.u32 %v967, 7
  %v969 = vsub.s32 0, %v968
  %v970 = vrot.slane %v965, %v969
  %v972 = vadd.f32 %v961, %v970
  %v973 = vadd.f32 %v962, %v970
  %v974 = vadd.f32 %v963, %v970
  %v975 = vadd.f32 %v964, %v970
  %v976 = vld [vmem:[%s4] sm:$0xff]
  %v977 = vld [vmem:[%s4 + $0x8] sm:$0xff]
  %v978 = vld [vmem:[%s4 + $0x10] sm:$0xff]
  %v979 = vld [vmem:[%s4 + $0x18] sm:$0xff]
  %v980 = vadd.f32 %v972, %v976
  %v981 = vadd.f32 %v973, %v977
  %v982 = vadd.f32 %v974, %v978
  %v983 = vadd.f32 %v975, %v979
  %984 = vst [vmem:[%s5] sm:$0xff] %v980
  %985 = vst [vmem:[%s5 + $0x8] sm:$0xff] %v981
  %986 = vst [vmem:[%s5 + $0x10] sm:$0xff] %v982
  %987 = vst [vmem:[%s5 + $0x18] sm:$0xff] %v983
  // Predicated region
  $region22: #{_lambda_.26} parent=0 // pred_check
    _
  $region23: #{_lambda_.26} parent=0 // pred_check_branch
    %989 = sbr.rel (0) target = $region25
  $region24: #{_lambda_.26} parent=0 // pred_region
    _
  $region25: #{_lambda_.26} parent=0 // pred_fallthru
    _
  // Predicated region
  $region26: #{_lambda_.26} parent=0 // pred_check
    _
  $region27: #{_lambda_.26} parent=0 // pred_check_branch
    %991 = sbr.rel (0) target = $region29
  $region28: #{_lambda_.26} parent=0 // pred_region
    _
  $region29: #{_lambda_.26} parent=0 // pred_fallthru
    _

</llo_original>
